<compile_context>
chip_gen: v6e
topology: v6e:2x2x1
jax: 0.10.0
libtpu: 0.0.40
codegen_flags: <defaults>
</compile_context>

<pallas_src>
import functools

import jax
import jax.numpy as jnp
from jax.experimental import pallas as pl
from jax.experimental.pallas import tpu as pltpu

_VMEM = pl.BlockSpec(memory_space=pltpu.MemorySpace.VMEM)


# --------------------------------------------------------------------------
# Fused kernel: 3 encoder LSTMs (merged) + heads + acc-decoder LSTM + acc head.
# Gate layout (columns of the combined gates, each block H wide):
#   [I_h I_l I_r | F_h F_l F_r | O_h O_l O_r | G_h G_l G_r]
# h / c layout: [hist | left | right]  (B, 3H)
# --------------------------------------------------------------------------
def _mixnet_kernel(hist_ref, left_ref, right_ref,
                   w_in_ref, b_in_ref, whh_ref,
                   wm1_ref, bm1_ref, wm2_ref, bm2_ref,
                   wv1_ref, bv1_ref, wv2_ref, bv2_ref,
                   wd_ref, bd_ref,
                   awih_ref, ab_ref, awhh_ref, awo_ref, abo_ref,
                   mix_ref, vel_ref, acc_ref,
                   *, hist_len, bound_len, H, Ha, num_sections,
                   max_vel, max_acc):
    B = hist_ref.shape[0]
    H3 = 3 * H
    T_max = max(hist_len, bound_len)

    hist = hist_ref[...]          # (B, T_h, 2)
    left = left_ref[...]          # (B, T_b, 2)
    right = right_ref[...]        # (B, T_b, 2)
    w_in = w_in_ref[...]          # (6, 12H)  folded input projection (block struct)
    b_in = b_in_ref[...]          # (1, 12H)  folded biases
    whh = whh_ref[...]            # (3H, 12H) block-diagonal recurrent weight

    h = jnp.zeros((B, H3), jnp.float32)
    c = jnp.zeros((B, H3), jnp.float32)
    hist_h = h[:, 0:H]
    left_h = h[:, H:2 * H]
    right_h = h[:, 2 * H:3 * H]

    # -------- merged encoder recurrence (statically unrolled) --------
    for t in range(T_max):
        gates = jnp.dot(h, whh, preferred_element_type=jnp.float32) + b_in
        if t < hist_len:
            gates = (gates
                     + hist[:, t, 0:1] * w_in[0:1, :]
                     + hist[:, t, 1:2] * w_in[1:2, :])
        if t < bound_len:
            gates = (gates
                     + left[:, t, 0:1] * w_in[2:3, :]
                     + left[:, t, 1:2] * w_in[3:4, :]
                     + right[:, t, 0:1] * w_in[4:5, :]
                     + right[:, t, 1:2] * w_in[5:6, :])
        sig = jax.nn.sigmoid(gates[:, 0:3 * H3])       # one wide EUP push (I,F,O)
        i_g = sig[:, 0:H3]
        f_g = sig[:, H3:2 * H3]
        o_g = sig[:, 2 * H3:3 * H3]
        g_g = jnp.tanh(gates[:, 3 * H3:4 * H3])        # one tanh push (G)
        c = f_g * c + i_g * g_g
        h = o_g * jnp.tanh(c)
        if t + 1 == hist_len:                          # snapshot at true length
            hist_h = h[:, 0:H]
        if t + 1 == bound_len:
            left_h = h[:, H:2 * H]
            right_h = h[:, 2 * H:3 * H]

    enc = jnp.concatenate([hist_h, left_h, right_h], axis=1)   # (B, 3H)

    # -------- mixer head: linear -> relu -> linear -> softmax --------
    m = jnp.dot(enc, wm1_ref[...], preferred_element_type=jnp.float32) + bm1_ref[...]
    m = jnp.maximum(m, 0.0)
    logits = jnp.dot(m, wm2_ref[...], preferred_element_type=jnp.float32) + bm2_ref[...]
    logits = logits - jnp.max(logits, axis=1, keepdims=True)
    e = jnp.exp(logits)
    mix_ref[...] = e / jnp.sum(e, axis=1, keepdims=True)

    # -------- init-velocity head: linear -> relu -> linear -> sigmoid*max_vel --------
    v = jnp.dot(hist_h, wv1_ref[...], preferred_element_type=jnp.float32) + bv1_ref[...]
    v = jnp.maximum(v, 0.0)
    v = jnp.dot(v, wv2_ref[...], preferred_element_type=jnp.float32) + bv2_ref[...]
    vel_ref[...] = jax.nn.sigmoid(v) * max_vel

    # -------- dynamics embedder --------
    dec_in = jnp.dot(enc, wd_ref[...], preferred_element_type=jnp.float32) + bd_ref[...]
    dec_in = jnp.maximum(dec_in, 0.0)                  # (B, Da)

    # -------- acc decoder LSTM (repeated input -> hoisted x projection) --------
    awhh = awhh_ref[...]                               # (Ha, 4Ha), permuted cols
    wo_row = awo_ref[...]                              # (1, Ha)
    xc = jnp.dot(dec_in, awih_ref[...], preferred_element_type=jnp.float32) + ab_ref[...]
    ah = jnp.zeros((B, Ha), jnp.float32)
    ac = jnp.zeros((B, Ha), jnp.float32)
    ys = []
    for _ in range(num_sections):
        g2 = xc + jnp.dot(ah, awhh, preferred_element_type=jnp.float32)
        s2 = jax.nn.sigmoid(g2[:, 0:3 * Ha])
        ig = s2[:, 0:Ha]
        fg = s2[:, Ha:2 * Ha]
        og = s2[:, 2 * Ha:3 * Ha]
        gg = jnp.tanh(g2[:, 3 * Ha:4 * Ha])
        ac = fg * ac + ig * gg
        ah = og * jnp.tanh(ac)
        # output head is off the recurrence chain: relu(h) . w_o  ->  (B, 1)
        ys.append(jnp.sum(jnp.maximum(ah, 0.0) * wo_row, axis=1, keepdims=True))
    acc_pre = jnp.concatenate(ys, axis=1) + abo_ref[...]        # (B, N)
    acc_ref[...] = jnp.tanh(acc_pre) * max_acc


# --------------------------------------------------------------------------
# Weight preparation (traced, weight-only ops; run under jit in the wrapper).
# PyTorch gate order (i, f, g, o) is re-ordered to (i, f, o, g).
# --------------------------------------------------------------------------
def _gate_col_slices(H):
    return ((0, H), (H, 2 * H), (3 * H, 4 * H), (2 * H, 3 * H))   # i, f, o, g


def _perm_ifog(w, H):
    return jnp.concatenate(
        [w[..., 0:2 * H], w[..., 3 * H:4 * H], w[..., 2 * H:3 * H]], axis=-1)


def _prep_encoder_weights(p, H):
    names = ("hist", "left", "right")
    wemb, bemb = p["emb_w"], p["emb_b"]
    wf = {n: jnp.dot(wemb, p[f"{n}_wih"]) for n in names}                      # (2, 4H)
    bf = {n: jnp.dot(bemb, p[f"{n}_wih"]) + p[f"{n}_bih"] + p[f"{n}_bhh"]
          for n in names}                                                      # (1, 4H)
    zH = jnp.zeros((H, H), jnp.float32)
    z2 = jnp.zeros((2, H), jnp.float32)
    whh_blocks, win_blocks, b_blocks = [], [], []
    for a, b in _gate_col_slices(H):
        wh = [p[f"{n}_whh"][:, a:b] for n in names]
        whh_blocks.append(jnp.concatenate([
            jnp.concatenate([wh[0], zH, zH], axis=1),
            jnp.concatenate([zH, wh[1], zH], axis=1),
            jnp.concatenate([zH, zH, wh[2]], axis=1)], axis=0))
        wi = [wf[n][:, a:b] for n in names]
        win_blocks.append(jnp.concatenate([
            jnp.concatenate([wi[0], z2, z2], axis=1),
            jnp.concatenate([z2, wi[1], z2], axis=1),
            jnp.concatenate([z2, z2, wi[2]], axis=1)], axis=0))
        b_blocks.append(jnp.concatenate([bf[n][:, a:b] for n in names], axis=1))
    whh_c = jnp.concatenate(whh_blocks, axis=1)    # (3H, 12H) block-diagonal
    w_in_c = jnp.concatenate(win_blocks, axis=1)   # (6, 12H)
    b_c = jnp.concatenate(b_blocks, axis=1)        # (1, 12H)
    return whh_c, w_in_c, b_c


# --------------------------------------------------------------------------
# Full forward pass: one jitted function, one pallas_call.
# --------------------------------------------------------------------------
def make_mixnet_forward(cfg):
    max_vel = float(cfg["init_vel_linear_stack"]["max_vel"])
    max_acc = float(cfg["acc_decoder"]["max_acc"])
    num_sections = int(cfg["acc_decoder"]["num_acc_sections"])

    @jax.jit
    def forward(hist, left_bound, right_bound, p):
        B, hist_len, _ = hist.shape
        bound_len = left_bound.shape[1]
        H = p["hist_whh"].shape[0]
        Ha = p["acc_whh"].shape[0]
        Om = p["mix_w2"].shape[1]
        Ov = p["vel_w2"].shape[1]

        whh_c, w_in_c, b_c = _prep_encoder_weights(p, H)
        awih = _perm_ifog(p["acc_wih"], Ha)
        awhh = _perm_ifog(p["acc_whh"], Ha)
        ab = _perm_ifog(p["acc_bih"] + p["acc_bhh"], Ha)
        awo = jnp.transpose(p["acc_wo"])          # (1, Ha)
        abo = p["acc_bo"]                         # (1, 1)

        kernel = functools.partial(
            _mixnet_kernel,
            hist_len=hist_len, bound_len=bound_len, H=H, Ha=Ha,
            num_sections=num_sections, max_vel=max_vel, max_acc=max_acc)

        out_shape = (
            jax.ShapeDtypeStruct((B, Om), jnp.float32),
            jax.ShapeDtypeStruct((B, Ov), jnp.float32),
            jax.ShapeDtypeStruct((B, num_sections), jnp.float32),
        )
        return pl.pallas_call(
            kernel,
            out_shape=out_shape,
            in_specs=[_VMEM] * 21,
            out_specs=(_VMEM, _VMEM, _VMEM),
        )(hist, left_bound, right_bound,
          w_in_c, b_c, whh_c,
          p["mix_w1"], p["mix_b1"], p["mix_w2"], p["mix_b2"],
          p["vel_w1"], p["vel_b1"], p["vel_w2"], p["vel_b2"],
          p["dyn_w"], p["dyn_b"],
          awih, ab, awhh, awo, abo)

    return forward


# --------------------------------------------------------------------------
# Pure-JAX reference (mirrors the PyTorch module) for correctness checking.
# --------------------------------------------------------------------------
def mixnet_reference(hist, left, right, p, cfg):
    H = p["hist_whh"].shape[0]

    def lstm(x, wih, bih, whh, bhh):
        emb = jnp.dot(x, p["emb_w"]) + p["emb_b"]
        B, T, _ = emb.shape
        h = jnp.zeros((B, H), jnp.float32)
        c = jnp.zeros((B, H), jnp.float32)
        for t in range(T):
            g = jnp.dot(emb[:, t, :], wih) + bih + jnp.dot(h, whh) + bhh
            i = jax.nn.sigmoid(g[:, 0:H])
            f = jax.nn.sigmoid(g[:, H:2 * H])
            gg = jnp.tanh(g[:, 2 * H:3 * H])
            o = jax.nn.sigmoid(g[:, 3 * H:4 * H])
            c = f * c + i * gg
            h = o * jnp.tanh(c)
        return h

    hist_h = lstm(hist, p["hist_wih"], p["hist_bih"], p["hist_whh"], p["hist_bhh"])
    left_h = lstm(left, p["left_wih"], p["left_bih"], p["left_whh"], p["left_bhh"])
    right_h = lstm(right, p["right_wih"], p["right_bih"], p["right_whh"], p["right_bhh"])
    enc = jnp.concatenate([hist_h, left_h, right_h], axis=1)

    mix = jax.nn.softmax(
        jnp.dot(jnp.maximum(jnp.dot(enc, p["mix_w1"]) + p["mix_b1"], 0.0),
                p["mix_w2"]) + p["mix_b2"], axis=1)
    vel = jax.nn.sigmoid(
        jnp.dot(jnp.maximum(jnp.dot(hist_h, p["vel_w1"]) + p["vel_b1"], 0.0),
                p["vel_w2"]) + p["vel_b2"]) * cfg["init_vel_linear_stack"]["max_vel"]
    dec_in = jnp.maximum(jnp.dot(enc, p["dyn_w"]) + p["dyn_b"], 0.0)

    Ha = p["acc_whh"].shape[0]
    ah = jnp.zeros((dec_in.shape[0], Ha), jnp.float32)
    ac = jnp.zeros_like(ah)
    xp = jnp.dot(dec_in, p["acc_wih"]) + p["acc_bih"] + p["acc_bhh"]
    ys = []
    for _ in range(cfg["acc_decoder"]["num_acc_sections"]):
        g = xp + jnp.dot(ah, p["acc_whh"])
        i = jax.nn.sigmoid(g[:, 0:Ha])
        f = jax.nn.sigmoid(g[:, Ha:2 * Ha])
        gg = jnp.tanh(g[:, 2 * Ha:3 * Ha])
        o = jax.nn.sigmoid(g[:, 3 * Ha:4 * Ha])
        ac = f * ac + i * gg
        ah = o * jnp.tanh(ac)
        ys.append(jnp.dot(jnp.maximum(ah, 0.0), p["acc_wo"]) + p["acc_bo"])
    acc = jnp.tanh(jnp.concatenate(ys, axis=1)) * cfg["acc_decoder"]["max_acc"]
    return mix, vel, acc


# --------------------------------------------------------------------------
# Deterministic synthetic parameter initialization (same layout as PyTorch:
# weights pre-transposed to (in, out); LSTM gate column order (i, f, g, o)).
# --------------------------------------------------------------------------
def init_weights(key, cfg):
    E = cfg["encoder"]["in_size"]
    H = cfg["encoder"]["hidden_size"]
    Hm = cfg["mixer_linear_stack"]["hidden_sizes"][0]
    Om = cfg["mixer_linear_stack"]["out_size"]
    Hv = cfg["init_vel_linear_stack"]["hidden_sizes"][0]
    Ov = cfg["init_vel_linear_stack"]["out_size"]
    Da = cfg["acc_decoder"]["in_size"]
    Ha = cfg["acc_decoder"]["hidden_size"]

    keys = iter(jax.random.split(key, 64))

    def w(shape, scale=0.1):
        return (scale * jax.random.normal(next(keys), shape)).astype(jnp.float32)

    p = {
        "emb_w": w((2, E)), "emb_b": w((1, E)),
        "mix_w1": w((3 * H, Hm)), "mix_b1": w((1, Hm)),
        "mix_w2": w((Hm, Om)), "mix_b2": w((1, Om)),
        "vel_w1": w((H, Hv)), "vel_b1": w((1, Hv)),
        "vel_w2": w((Hv, Ov)), "vel_b2": w((1, Ov)),
        "dyn_w": w((3 * H, Da)), "dyn_b": w((1, Da)),
        "acc_wih": w((Da, 4 * Ha)), "acc_bih": w((1, 4 * Ha)),
        "acc_whh": w((Ha, 4 * Ha)), "acc_bhh": w((1, 4 * Ha)),
        "acc_wo": w((Ha, 1)), "acc_bo": w((1, 1)),
    }
    for name in ("hist", "left", "right"):
        p[f"{name}_wih"] = w((E, 4 * H))
        p[f"{name}_bih"] = w((1, 4 * H))
        p[f"{name}_whh"] = w((H, 4 * H))
        p[f"{name}_bhh"] = w((1, 4 * H))
    return p


if __name__ == "__main__":
    cfg = {
        "encoder": {"in_size": 16, "hidden_size": 32},
        "mixer_linear_stack": {"hidden_sizes": [32], "out_size": 4},
        "init_vel_linear_stack": {"hidden_sizes": [32], "out_size": 1, "max_vel": 60.0},
        "acc_decoder": {"in_size": 16, "hidden_size": 32,
                        "num_acc_sections": 8, "max_acc": 10.0},
        "use_cuda": False,
    }
    B, hist_len, bound_len = 8, 8, 12

    key = jax.random.PRNGKey(0)
    k_p, k_h, k_l, k_r = jax.random.split(key, 4)
    params = init_weights(k_p, cfg)

    hist = jax.random.normal(k_h, (B, hist_len, 2), dtype=jnp.float32)
    left_bound = jax.random.normal(k_l, (B, bound_len, 2), dtype=jnp.float32)
    right_bound = jax.random.normal(k_r, (B, bound_len, 2), dtype=jnp.float32)

    forward = make_mixnet_forward(cfg)
    mix_out, vel_out, acc_out = jax.block_until_ready(
        forward(hist, left_bound, right_bound, params))

    assert mix_out.shape == (B, cfg["mixer_linear_stack"]["out_size"])
    assert vel_out.shape == (B, 1)
    assert acc_out.shape == (B, cfg["acc_decoder"]["num_acc_sections"])
    assert bool(jnp.all(jnp.isfinite(mix_out)))
    assert bool(jnp.all(jnp.isfinite(vel_out)))
    assert bool(jnp.all(jnp.isfinite(acc_out)))
    assert bool(jnp.allclose(jnp.sum(mix_out, axis=1), 1.0, atol=1e-5))

    # numerical check against the pure-JAX reference of the PyTorch module
    mix_r, vel_r, acc_r = mixnet_reference(hist, left_bound, right_bound, params, cfg)
    assert bool(jnp.allclose(mix_out, mix_r, atol=1e-3, rtol=1e-3))
    assert bool(jnp.allclose(vel_out, vel_r, atol=1e-3, rtol=1e-3))
    assert bool(jnp.allclose(acc_out, acc_r, atol=1e-3, rtol=1e-3))

    print("KERNEL_OK")
</pallas_src>

<mosaic_0001>
module attributes {stable_mosaic.version = 11 : i64} {
  func.func @_mixnet_kernel(%arg0: memref<8x8x2xf32, #tpu.memory_space<vmem>>, %arg1: memref<8x12x2xf32, #tpu.memory_space<vmem>>, %arg2: memref<8x12x2xf32, #tpu.memory_space<vmem>>, %arg3: memref<6x384xf32, #tpu.memory_space<vmem>>, %arg4: memref<1x384xf32, #tpu.memory_space<vmem>>, %arg5: memref<96x384xf32, #tpu.memory_space<vmem>>, %arg6: memref<96x32xf32, #tpu.memory_space<vmem>>, %arg7: memref<1x32xf32, #tpu.memory_space<vmem>>, %arg8: memref<32x4xf32, #tpu.memory_space<vmem>>, %arg9: memref<1x4xf32, #tpu.memory_space<vmem>>, %arg10: memref<32x32xf32, #tpu.memory_space<vmem>>, %arg11: memref<1x32xf32, #tpu.memory_space<vmem>>, %arg12: memref<32x1xf32, #tpu.memory_space<vmem>>, %arg13: memref<1x1xf32, #tpu.memory_space<vmem>>, %arg14: memref<96x16xf32, #tpu.memory_space<vmem>>, %arg15: memref<1x16xf32, #tpu.memory_space<vmem>>, %arg16: memref<16x128xf32, #tpu.memory_space<vmem>>, %arg17: memref<1x128xf32, #tpu.memory_space<vmem>>, %arg18: memref<32x128xf32, #tpu.memory_space<vmem>>, %arg19: memref<1x32xf32, #tpu.memory_space<vmem>>, %arg20: memref<1x1xf32, #tpu.memory_space<vmem>>, %arg21: memref<8x4xf32, #tpu.memory_space<vmem>>, %arg22: memref<8x1xf32, #tpu.memory_space<vmem>>, %arg23: memref<8x8xf32, #tpu.memory_space<vmem>>) attributes {dimension_semantics = [], scalar_prefetch = 0 : i64, scratch_operands = 0 : i64, tpu.core_type = #tpu.core_type<tc>} {
    %c0 = arith.constant 0 : index
    %c0_0 = arith.constant 0 : index
    %c0_1 = arith.constant 0 : index
    %0 = vector.load %arg0[%c0, %c0_0, %c0_1] : memref<8x8x2xf32, #tpu.memory_space<vmem>>, vector<8x8x2xf32>
    %c0_2 = arith.constant 0 : index
    %c0_3 = arith.constant 0 : index
    %c0_4 = arith.constant 0 : index
    %1 = vector.load %arg1[%c0_2, %c0_3, %c0_4] : memref<8x12x2xf32, #tpu.memory_space<vmem>>, vector<8x12x2xf32>
    %c0_5 = arith.constant 0 : index
    %c0_6 = arith.constant 0 : index
    %c0_7 = arith.constant 0 : index
    %2 = vector.load %arg2[%c0_5, %c0_6, %c0_7] : memref<8x12x2xf32, #tpu.memory_space<vmem>>, vector<8x12x2xf32>
    %c0_8 = arith.constant 0 : index
    %c0_9 = arith.constant 0 : index
    %3 = vector.load %arg3[%c0_8, %c0_9] : memref<6x384xf32, #tpu.memory_space<vmem>>, vector<6x384xf32>
    %c0_10 = arith.constant 0 : index
    %c0_11 = arith.constant 0 : index
    %4 = vector.load %arg4[%c0_10, %c0_11] : memref<1x384xf32, #tpu.memory_space<vmem>>, vector<1x384xf32>
    %c0_12 = arith.constant 0 : index
    %c0_13 = arith.constant 0 : index
    %5 = vector.load %arg5[%c0_12, %c0_13] : memref<96x384xf32, #tpu.memory_space<vmem>>, vector<96x384xf32>
    %cst = arith.constant 0.000000e+00 : f32
    %6 = vector.broadcast %cst : f32 to vector<8x96xf32>
    %cst_14 = arith.constant 0.000000e+00 : f32
    %7 = vector.broadcast %cst_14 : f32 to vector<8x96xf32>
    %cst_15 = arith.constant dense<0.000000e+00> : vector<8x384xf32>
    %8 = tpu.matmul %6, %5, %cst_15 {dimension_numbers = #tpu.dot_dimension_numbers<[1], [0], [0], [1], [0, 0, 1, 1], [], []>} : vector<8x96xf32>, vector<96x384xf32>, vector<8x384xf32> -> vector<8x384xf32>
    %9 = vector.broadcast %4 : vector<1x384xf32> to vector<8x384xf32>
    %10 = arith.addf %8, %9 : vector<8x384xf32>
    %11 = vector.extract_strided_slice %0 {offsets = [0, 0, 0], sizes = [8, 1, 1], strides = [1, 1, 1]} : vector<8x8x2xf32> to vector<8x1x1xf32>
    %12 = vector.shape_cast %11 : vector<8x1x1xf32> to vector<8x1xf32>
    %13 = vector.extract_strided_slice %3 {offsets = [0, 0], sizes = [1, 384], strides = [1, 1]} : vector<6x384xf32> to vector<1x384xf32>
    %14 = vector.broadcast %12 : vector<8x1xf32> to vector<8x384xf32>
    %15 = vector.broadcast %13 : vector<1x384xf32> to vector<8x384xf32>
    %16 = arith.mulf %14, %15 : vector<8x384xf32>
    %17 = arith.addf %10, %16 : vector<8x384xf32>
    %18 = vector.extract_strided_slice %0 {offsets = [0, 0, 1], sizes = [8, 1, 1], strides = [1, 1, 1]} : vector<8x8x2xf32> to vector<8x1x1xf32>
    %19 = vector.shape_cast %18 : vector<8x1x1xf32> to vector<8x1xf32>
    %20 = vector.extract_strided_slice %3 {offsets = [1, 0], sizes = [1, 384], strides = [1, 1]} : vector<6x384xf32> to vector<1x384xf32>
    %21 = vector.broadcast %19 : vector<8x1xf32> to vector<8x384xf32>
    %22 = vector.broadcast %20 : vector<1x384xf32> to vector<8x384xf32>
    %23 = arith.mulf %21, %22 : vector<8x384xf32>
    %24 = arith.addf %17, %23 : vector<8x384xf32>
    %25 = vector.extract_strided_slice %1 {offsets = [0, 0, 0], sizes = [8, 1, 1], strides = [1, 1, 1]} : vector<8x12x2xf32> to vector<8x1x1xf32>
    %26 = vector.shape_cast %25 : vector<8x1x1xf32> to vector<8x1xf32>
    %27 = vector.extract_strided_slice %3 {offsets = [2, 0], sizes = [1, 384], strides = [1, 1]} : vector<6x384xf32> to vector<1x384xf32>
    %28 = vector.broadcast %26 : vector<8x1xf32> to vector<8x384xf32>
    %29 = vector.broadcast %27 : vector<1x384xf32> to vector<8x384xf32>
    %30 = arith.mulf %28, %29 : vector<8x384xf32>
    %31 = arith.addf %24, %30 : vector<8x384xf32>
    %32 = vector.extract_strided_slice %1 {offsets = [0, 0, 1], sizes = [8, 1, 1], strides = [1, 1, 1]} : vector<8x12x2xf32> to vector<8x1x1xf32>
    %33 = vector.shape_cast %32 : vector<8x1x1xf32> to vector<8x1xf32>
    %34 = vector.extract_strided_slice %3 {offsets = [3, 0], sizes = [1, 384], strides = [1, 1]} : vector<6x384xf32> to vector<1x384xf32>
    %35 = vector.broadcast %33 : vector<8x1xf32> to vector<8x384xf32>
    %36 = vector.broadcast %34 : vector<1x384xf32> to vector<8x384xf32>
    %37 = arith.mulf %35, %36 : vector<8x384xf32>
    %38 = arith.addf %31, %37 : vector<8x384xf32>
    %39 = vector.extract_strided_slice %2 {offsets = [0, 0, 0], sizes = [8, 1, 1], strides = [1, 1, 1]} : vector<8x12x2xf32> to vector<8x1x1xf32>
    %40 = vector.shape_cast %39 : vector<8x1x1xf32> to vector<8x1xf32>
    %41 = vector.extract_strided_slice %3 {offsets = [4, 0], sizes = [1, 384], strides = [1, 1]} : vector<6x384xf32> to vector<1x384xf32>
    %42 = vector.broadcast %40 : vector<8x1xf32> to vector<8x384xf32>
    %43 = vector.broadcast %41 : vector<1x384xf32> to vector<8x384xf32>
    %44 = arith.mulf %42, %43 : vector<8x384xf32>
    %45 = arith.addf %38, %44 : vector<8x384xf32>
    %46 = vector.extract_strided_slice %2 {offsets = [0, 0, 1], sizes = [8, 1, 1], strides = [1, 1, 1]} : vector<8x12x2xf32> to vector<8x1x1xf32>
    %47 = vector.shape_cast %46 : vector<8x1x1xf32> to vector<8x1xf32>
    %48 = vector.extract_strided_slice %3 {offsets = [5, 0], sizes = [1, 384], strides = [1, 1]} : vector<6x384xf32> to vector<1x384xf32>
    %49 = vector.broadcast %47 : vector<8x1xf32> to vector<8x384xf32>
    %50 = vector.broadcast %48 : vector<1x384xf32> to vector<8x384xf32>
    %51 = arith.mulf %49, %50 : vector<8x384xf32>
    %52 = arith.addf %45, %51 : vector<8x384xf32>
    %53 = vector.extract_strided_slice %52 {offsets = [0, 0], sizes = [8, 288], strides = [1, 1]} : vector<8x384xf32> to vector<8x288xf32>
    %54 = arith.negf %53 : vector<8x288xf32>
    %55 = math.exp %54 : vector<8x288xf32>
    %cst_16 = arith.constant 1.000000e+00 : f32
    %56 = vector.broadcast %cst_16 : f32 to vector<8x288xf32>
    %57 = arith.addf %56, %55 : vector<8x288xf32>
    %58 = arith.divf %56, %57 : vector<8x288xf32>
    %59 = vector.extract_strided_slice %58 {offsets = [0, 0], sizes = [8, 96], strides = [1, 1]} : vector<8x288xf32> to vector<8x96xf32>
    %60 = vector.extract_strided_slice %58 {offsets = [0, 96], sizes = [8, 96], strides = [1, 1]} : vector<8x288xf32> to vector<8x96xf32>
    %61 = vector.extract_strided_slice %58 {offsets = [0, 192], sizes = [8, 96], strides = [1, 1]} : vector<8x288xf32> to vector<8x96xf32>
    %62 = vector.extract_strided_slice %52 {offsets = [0, 288], sizes = [8, 96], strides = [1, 1]} : vector<8x384xf32> to vector<8x96xf32>
    %63 = math.tanh %62 : vector<8x96xf32>
    %64 = arith.mulf %60, %7 : vector<8x96xf32>
    %65 = arith.mulf %59, %63 : vector<8x96xf32>
    %66 = arith.addf %64, %65 : vector<8x96xf32>
    %67 = math.tanh %66 : vector<8x96xf32>
    %68 = arith.mulf %61, %67 : vector<8x96xf32>
    %cst_17 = arith.constant dense<0.000000e+00> : vector<8x384xf32>
    %69 = tpu.matmul %68, %5, %cst_17 {dimension_numbers = #tpu.dot_dimension_numbers<[1], [0], [0], [1], [0, 0, 1, 1], [], []>} : vector<8x96xf32>, vector<96x384xf32>, vector<8x384xf32> -> vector<8x384xf32>
    %70 = vector.broadcast %4 : vector<1x384xf32> to vector<8x384xf32>
    %71 = arith.addf %69, %70 : vector<8x384xf32>
    %72 = vector.extract_strided_slice %0 {offsets = [0, 1, 0], sizes = [8, 1, 1], strides = [1, 1, 1]} : vector<8x8x2xf32> to vector<8x1x1xf32>
    %73 = vector.shape_cast %72 : vector<8x1x1xf32> to vector<8x1xf32>
    %74 = vector.extract_strided_slice %3 {offsets = [0, 0], sizes = [1, 384], strides = [1, 1]} : vector<6x384xf32> to vector<1x384xf32>
    %75 = vector.broadcast %73 : vector<8x1xf32> to vector<8x384xf32>
    %76 = vector.broadcast %74 : vector<1x384xf32> to vector<8x384xf32>
    %77 = arith.mulf %75, %76 : vector<8x384xf32>
    %78 = arith.addf %71, %77 : vector<8x384xf32>
    %79 = vector.extract_strided_slice %0 {offsets = [0, 1, 1], sizes = [8, 1, 1], strides = [1, 1, 1]} : vector<8x8x2xf32> to vector<8x1x1xf32>
    %80 = vector.shape_cast %79 : vector<8x1x1xf32> to vector<8x1xf32>
    %81 = vector.extract_strided_slice %3 {offsets = [1, 0], sizes = [1, 384], strides = [1, 1]} : vector<6x384xf32> to vector<1x384xf32>
    %82 = vector.broadcast %80 : vector<8x1xf32> to vector<8x384xf32>
    %83 = vector.broadcast %81 : vector<1x384xf32> to vector<8x384xf32>
    %84 = arith.mulf %82, %83 : vector<8x384xf32>
    %85 = arith.addf %78, %84 : vector<8x384xf32>
    %86 = vector.extract_strided_slice %1 {offsets = [0, 1, 0], sizes = [8, 1, 1], strides = [1, 1, 1]} : vector<8x12x2xf32> to vector<8x1x1xf32>
    %87 = vector.shape_cast %86 : vector<8x1x1xf32> to vector<8x1xf32>
    %88 = vector.extract_strided_slice %3 {offsets = [2, 0], sizes = [1, 384], strides = [1, 1]} : vector<6x384xf32> to vector<1x384xf32>
    %89 = vector.broadcast %87 : vector<8x1xf32> to vector<8x384xf32>
    %90 = vector.broadcast %88 : vector<1x384xf32> to vector<8x384xf32>
    %91 = arith.mulf %89, %90 : vector<8x384xf32>
    %92 = arith.addf %85, %91 : vector<8x384xf32>
    %93 = vector.extract_strided_slice %1 {offsets = [0, 1, 1], sizes = [8, 1, 1], strides = [1, 1, 1]} : vector<8x12x2xf32> to vector<8x1x1xf32>
    %94 = vector.shape_cast %93 : vector<8x1x1xf32> to vector<8x1xf32>
    %95 = vector.extract_strided_slice %3 {offsets = [3, 0], sizes = [1, 384], strides = [1, 1]} : vector<6x384xf32> to vector<1x384xf32>
    %96 = vector.broadcast %94 : vector<8x1xf32> to vector<8x384xf32>
    %97 = vector.broadcast %95 : vector<1x384xf32> to vector<8x384xf32>
    %98 = arith.mulf %96, %97 : vector<8x384xf32>
    %99 = arith.addf %92, %98 : vector<8x384xf32>
    %100 = vector.extract_strided_slice %2 {offsets = [0, 1, 0], sizes = [8, 1, 1], strides = [1, 1, 1]} : vector<8x12x2xf32> to vector<8x1x1xf32>
    %101 = vector.shape_cast %100 : vector<8x1x1xf32> to vector<8x1xf32>
    %102 = vector.extract_strided_slice %3 {offsets = [4, 0], sizes = [1, 384], strides = [1, 1]} : vector<6x384xf32> to vector<1x384xf32>
    %103 = vector.broadcast %101 : vector<8x1xf32> to vector<8x384xf32>
    %104 = vector.broadcast %102 : vector<1x384xf32> to vector<8x384xf32>
    %105 = arith.mulf %103, %104 : vector<8x384xf32>
    %106 = arith.addf %99, %105 : vector<8x384xf32>
    %107 = vector.extract_strided_slice %2 {offsets = [0, 1, 1], sizes = [8, 1, 1], strides = [1, 1, 1]} : vector<8x12x2xf32> to vector<8x1x1xf32>
    %108 = vector.shape_cast %107 : vector<8x1x1xf32> to vector<8x1xf32>
    %109 = vector.extract_strided_slice %3 {offsets = [5, 0], sizes = [1, 384], strides = [1, 1]} : vector<6x384xf32> to vector<1x384xf32>
    %110 = vector.broadcast %108 : vector<8x1xf32> to vector<8x384xf32>
    %111 = vector.broadcast %109 : vector<1x384xf32> to vector<8x384xf32>
    %112 = arith.mulf %110, %111 : vector<8x384xf32>
    %113 = arith.addf %106, %112 : vector<8x384xf32>
    %114 = vector.extract_strided_slice %113 {offsets = [0, 0], sizes = [8, 288], strides = [1, 1]} : vector<8x384xf32> to vector<8x288xf32>
    %115 = arith.negf %114 : vector<8x288xf32>
    %116 = math.exp %115 : vector<8x288xf32>
    %cst_18 = arith.constant 1.000000e+00 : f32
    %117 = vector.broadcast %cst_18 : f32 to vector<8x288xf32>
    %118 = arith.addf %117, %116 : vector<8x288xf32>
    %119 = arith.divf %117, %118 : vector<8x288xf32>
    %120 = vector.extract_strided_slice %119 {offsets = [0, 0], sizes = [8, 96], strides = [1, 1]} : vector<8x288xf32> to vector<8x96xf32>
    %121 = vector.extract_strided_slice %119 {offsets = [0, 96], sizes = [8, 96], strides = [1, 1]} : vector<8x288xf32> to vector<8x96xf32>
    %122 = vector.extract_strided_slice %119 {offsets = [0, 192], sizes = [8, 96], strides = [1, 1]} : vector<8x288xf32> to vector<8x96xf32>
    %123 = vector.extract_strided_slice %113 {offsets = [0, 288], sizes = [8, 96], strides = [1, 1]} : vector<8x384xf32> to vector<8x96xf32>
    %124 = math.tanh %123 : vector<8x96xf32>
    %125 = arith.mulf %121, %66 : vector<8x96xf32>
    %126 = arith.mulf %120, %124 : vector<8x96xf32>
    %127 = arith.addf %125, %126 : vector<8x96xf32>
    %128 = math.tanh %127 : vector<8x96xf32>
    %129 = arith.mulf %122, %128 : vector<8x96xf32>
    %cst_19 = arith.constant dense<0.000000e+00> : vector<8x384xf32>
    %130 = tpu.matmul %129, %5, %cst_19 {dimension_numbers = #tpu.dot_dimension_numbers<[1], [0], [0], [1], [0, 0, 1, 1], [], []>} : vector<8x96xf32>, vector<96x384xf32>, vector<8x384xf32> -> vector<8x384xf32>
    %131 = vector.broadcast %4 : vector<1x384xf32> to vector<8x384xf32>
    %132 = arith.addf %130, %131 : vector<8x384xf32>
    %133 = vector.extract_strided_slice %0 {offsets = [0, 2, 0], sizes = [8, 1, 1], strides = [1, 1, 1]} : vector<8x8x2xf32> to vector<8x1x1xf32>
    %134 = vector.shape_cast %133 : vector<8x1x1xf32> to vector<8x1xf32>
    %135 = vector.extract_strided_slice %3 {offsets = [0, 0], sizes = [1, 384], strides = [1, 1]} : vector<6x384xf32> to vector<1x384xf32>
    %136 = vector.broadcast %134 : vector<8x1xf32> to vector<8x384xf32>
    %137 = vector.broadcast %135 : vector<1x384xf32> to vector<8x384xf32>
    %138 = arith.mulf %136, %137 : vector<8x384xf32>
    %139 = arith.addf %132, %138 : vector<8x384xf32>
    %140 = vector.extract_strided_slice %0 {offsets = [0, 2, 1], sizes = [8, 1, 1], strides = [1, 1, 1]} : vector<8x8x2xf32> to vector<8x1x1xf32>
    %141 = vector.shape_cast %140 : vector<8x1x1xf32> to vector<8x1xf32>
    %142 = vector.extract_strided_slice %3 {offsets = [1, 0], sizes = [1, 384], strides = [1, 1]} : vector<6x384xf32> to vector<1x384xf32>
    %143 = vector.broadcast %141 : vector<8x1xf32> to vector<8x384xf32>
    %144 = vector.broadcast %142 : vector<1x384xf32> to vector<8x384xf32>
    %145 = arith.mulf %143, %144 : vector<8x384xf32>
    %146 = arith.addf %139, %145 : vector<8x384xf32>
    %147 = vector.extract_strided_slice %1 {offsets = [0, 2, 0], sizes = [8, 1, 1], strides = [1, 1, 1]} : vector<8x12x2xf32> to vector<8x1x1xf32>
    %148 = vector.shape_cast %147 : vector<8x1x1xf32> to vector<8x1xf32>
    %149 = vector.extract_strided_slice %3 {offsets = [2, 0], sizes = [1, 384], strides = [1, 1]} : vector<6x384xf32> to vector<1x384xf32>
    %150 = vector.broadcast %148 : vector<8x1xf32> to vector<8x384xf32>
    %151 = vector.broadcast %149 : vector<1x384xf32> to vector<8x384xf32>
    %152 = arith.mulf %150, %151 : vector<8x384xf32>
    %153 = arith.addf %146, %152 : vector<8x384xf32>
    %154 = vector.extract_strided_slice %1 {offsets = [0, 2, 1], sizes = [8, 1, 1], strides = [1, 1, 1]} : vector<8x12x2xf32> to vector<8x1x1xf32>
    %155 = vector.shape_cast %154 : vector<8x1x1xf32> to vector<8x1xf32>
    %156 = vector.extract_strided_slice %3 {offsets = [3, 0], sizes = [1, 384], strides = [1, 1]} : vector<6x384xf32> to vector<1x384xf32>
    %157 = vector.broadcast %155 : vector<8x1xf32> to vector<8x384xf32>
    %158 = vector.broadcast %156 : vector<1x384xf32> to vector<8x384xf32>
    %159 = arith.mulf %157, %158 : vector<8x384xf32>
    %160 = arith.addf %153, %159 : vector<8x384xf32>
    %161 = vector.extract_strided_slice %2 {offsets = [0, 2, 0], sizes = [8, 1, 1], strides = [1, 1, 1]} : vector<8x12x2xf32> to vector<8x1x1xf32>
    %162 = vector.shape_cast %161 : vector<8x1x1xf32> to vector<8x1xf32>
    %163 = vector.extract_strided_slice %3 {offsets = [4, 0], sizes = [1, 384], strides = [1, 1]} : vector<6x384xf32> to vector<1x384xf32>
    %164 = vector.broadcast %162 : vector<8x1xf32> to vector<8x384xf32>
    %165 = vector.broadcast %163 : vector<1x384xf32> to vector<8x384xf32>
    %166 = arith.mulf %164, %165 : vector<8x384xf32>
    %167 = arith.addf %160, %166 : vector<8x384xf32>
    %168 = vector.extract_strided_slice %2 {offsets = [0, 2, 1], sizes = [8, 1, 1], strides = [1, 1, 1]} : vector<8x12x2xf32> to vector<8x1x1xf32>
    %169 = vector.shape_cast %168 : vector<8x1x1xf32> to vector<8x1xf32>
    %170 = vector.extract_strided_slice %3 {offsets = [5, 0], sizes = [1, 384], strides = [1, 1]} : vector<6x384xf32> to vector<1x384xf32>
    %171 = vector.broadcast %169 : vector<8x1xf32> to vector<8x384xf32>
    %172 = vector.broadcast %170 : vector<1x384xf32> to vector<8x384xf32>
    %173 = arith.mulf %171, %172 : vector<8x384xf32>
    %174 = arith.addf %167, %173 : vector<8x384xf32>
    %175 = vector.extract_strided_slice %174 {offsets = [0, 0], sizes = [8, 288], strides = [1, 1]} : vector<8x384xf32> to vector<8x288xf32>
    %176 = arith.negf %175 : vector<8x288xf32>
    %177 = math.exp %176 : vector<8x288xf32>
    %cst_20 = arith.constant 1.000000e+00 : f32
    %178 = vector.broadcast %cst_20 : f32 to vector<8x288xf32>
    %179 = arith.addf %178, %177 : vector<8x288xf32>
    %180 = arith.divf %178, %179 : vector<8x288xf32>
    %181 = vector.extract_strided_slice %180 {offsets = [0, 0], sizes = [8, 96], strides = [1, 1]} : vector<8x288xf32> to vector<8x96xf32>
    %182 = vector.extract_strided_slice %180 {offsets = [0, 96], sizes = [8, 96], strides = [1, 1]} : vector<8x288xf32> to vector<8x96xf32>
    %183 = vector.extract_strided_slice %180 {offsets = [0, 192], sizes = [8, 96], strides = [1, 1]} : vector<8x288xf32> to vector<8x96xf32>
    %184 = vector.extract_strided_slice %174 {offsets = [0, 288], sizes = [8, 96], strides = [1, 1]} : vector<8x384xf32> to vector<8x96xf32>
    %185 = math.tanh %184 : vector<8x96xf32>
    %186 = arith.mulf %182, %127 : vector<8x96xf32>
    %187 = arith.mulf %181, %185 : vector<8x96xf32>
    %188 = arith.addf %186, %187 : vector<8x96xf32>
    %189 = math.tanh %188 : vector<8x96xf32>
    %190 = arith.mulf %183, %189 : vector<8x96xf32>
    %cst_21 = arith.constant dense<0.000000e+00> : vector<8x384xf32>
    %191 = tpu.matmul %190, %5, %cst_21 {dimension_numbers = #tpu.dot_dimension_numbers<[1], [0], [0], [1], [0, 0, 1, 1], [], []>} : vector<8x96xf32>, vector<96x384xf32>, vector<8x384xf32> -> vector<8x384xf32>
    %192 = vector.broadcast %4 : vector<1x384xf32> to vector<8x384xf32>
    %193 = arith.addf %191, %192 : vector<8x384xf32>
    %194 = vector.extract_strided_slice %0 {offsets = [0, 3, 0], sizes = [8, 1, 1], strides = [1, 1, 1]} : vector<8x8x2xf32> to vector<8x1x1xf32>
    %195 = vector.shape_cast %194 : vector<8x1x1xf32> to vector<8x1xf32>
    %196 = vector.extract_strided_slice %3 {offsets = [0, 0], sizes = [1, 384], strides = [1, 1]} : vector<6x384xf32> to vector<1x384xf32>
    %197 = vector.broadcast %195 : vector<8x1xf32> to vector<8x384xf32>
    %198 = vector.broadcast %196 : vector<1x384xf32> to vector<8x384xf32>
    %199 = arith.mulf %197, %198 : vector<8x384xf32>
    %200 = arith.addf %193, %199 : vector<8x384xf32>
    %201 = vector.extract_strided_slice %0 {offsets = [0, 3, 1], sizes = [8, 1, 1], strides = [1, 1, 1]} : vector<8x8x2xf32> to vector<8x1x1xf32>
    %202 = vector.shape_cast %201 : vector<8x1x1xf32> to vector<8x1xf32>
    %203 = vector.extract_strided_slice %3 {offsets = [1, 0], sizes = [1, 384], strides = [1, 1]} : vector<6x384xf32> to vector<1x384xf32>
    %204 = vector.broadcast %202 : vector<8x1xf32> to vector<8x384xf32>
    %205 = vector.broadcast %203 : vector<1x384xf32> to vector<8x384xf32>
    %206 = arith.mulf %204, %205 : vector<8x384xf32>
    %207 = arith.addf %200, %206 : vector<8x384xf32>
    %208 = vector.extract_strided_slice %1 {offsets = [0, 3, 0], sizes = [8, 1, 1], strides = [1, 1, 1]} : vector<8x12x2xf32> to vector<8x1x1xf32>
    %209 = vector.shape_cast %208 : vector<8x1x1xf32> to vector<8x1xf32>
    %210 = vector.extract_strided_slice %3 {offsets = [2, 0], sizes = [1, 384], strides = [1, 1]} : vector<6x384xf32> to vector<1x384xf32>
    %211 = vector.broadcast %209 : vector<8x1xf32> to vector<8x384xf32>
    %212 = vector.broadcast %210 : vector<1x384xf32> to vector<8x384xf32>
    %213 = arith.mulf %211, %212 : vector<8x384xf32>
    %214 = arith.addf %207, %213 : vector<8x384xf32>
    %215 = vector.extract_strided_slice %1 {offsets = [0, 3, 1], sizes = [8, 1, 1], strides = [1, 1, 1]} : vector<8x12x2xf32> to vector<8x1x1xf32>
    %216 = vector.shape_cast %215 : vector<8x1x1xf32> to vector<8x1xf32>
    %217 = vector.extract_strided_slice %3 {offsets = [3, 0], sizes = [1, 384], strides = [1, 1]} : vector<6x384xf32> to vector<1x384xf32>
    %218 = vector.broadcast %216 : vector<8x1xf32> to vector<8x384xf32>
    %219 = vector.broadcast %217 : vector<1x384xf32> to vector<8x384xf32>
    %220 = arith.mulf %218, %219 : vector<8x384xf32>
    %221 = arith.addf %214, %220 : vector<8x384xf32>
    %222 = vector.extract_strided_slice %2 {offsets = [0, 3, 0], sizes = [8, 1, 1], strides = [1, 1, 1]} : vector<8x12x2xf32> to vector<8x1x1xf32>
    %223 = vector.shape_cast %222 : vector<8x1x1xf32> to vector<8x1xf32>
    %224 = vector.extract_strided_slice %3 {offsets = [4, 0], sizes = [1, 384], strides = [1, 1]} : vector<6x384xf32> to vector<1x384xf32>
    %225 = vector.broadcast %223 : vector<8x1xf32> to vector<8x384xf32>
    %226 = vector.broadcast %224 : vector<1x384xf32> to vector<8x384xf32>
    %227 = arith.mulf %225, %226 : vector<8x384xf32>
    %228 = arith.addf %221, %227 : vector<8x384xf32>
    %229 = vector.extract_strided_slice %2 {offsets = [0, 3, 1], sizes = [8, 1, 1], strides = [1, 1, 1]} : vector<8x12x2xf32> to vector<8x1x1xf32>
    %230 = vector.shape_cast %229 : vector<8x1x1xf32> to vector<8x1xf32>
    %231 = vector.extract_strided_slice %3 {offsets = [5, 0], sizes = [1, 384], strides = [1, 1]} : vector<6x384xf32> to vector<1x384xf32>
    %232 = vector.broadcast %230 : vector<8x1xf32> to vector<8x384xf32>
    %233 = vector.broadcast %231 : vector<1x384xf32> to vector<8x384xf32>
    %234 = arith.mulf %232, %233 : vector<8x384xf32>
    %235 = arith.addf %228, %234 : vector<8x384xf32>
    %236 = vector.extract_strided_slice %235 {offsets = [0, 0], sizes = [8, 288], strides = [1, 1]} : vector<8x384xf32> to vector<8x288xf32>
    %237 = arith.negf %236 : vector<8x288xf32>
    %238 = math.exp %237 : vector<8x288xf32>
    %cst_22 = arith.constant 1.000000e+00 : f32
    %239 = vector.broadcast %cst_22 : f32 to vector<8x288xf32>
    %240 = arith.addf %239, %238 : vector<8x288xf32>
    %241 = arith.divf %239, %240 : vector<8x288xf32>
    %242 = vector.extract_strided_slice %241 {offsets = [0, 0], sizes = [8, 96], strides = [1, 1]} : vector<8x288xf32> to vector<8x96xf32>
    %243 = vector.extract_strided_slice %241 {offsets = [0, 96], sizes = [8, 96], strides = [1, 1]} : vector<8x288xf32> to vector<8x96xf32>
    %244 = vector.extract_strided_slice %241 {offsets = [0, 192], sizes = [8, 96], strides = [1, 1]} : vector<8x288xf32> to vector<8x96xf32>
    %245 = vector.extract_strided_slice %235 {offsets = [0, 288], sizes = [8, 96], strides = [1, 1]} : vector<8x384xf32> to vector<8x96xf32>
    %246 = math.tanh %245 : vector<8x96xf32>
    %247 = arith.mulf %243, %188 : vector<8x96xf32>
    %248 = arith.mulf %242, %246 : vector<8x96xf32>
    %249 = arith.addf %247, %248 : vector<8x96xf32>
    %250 = math.tanh %249 : vector<8x96xf32>
    %251 = arith.mulf %244, %250 : vector<8x96xf32>
    %cst_23 = arith.constant dense<0.000000e+00> : vector<8x384xf32>
    %252 = tpu.matmul %251, %5, %cst_23 {dimension_numbers = #tpu.dot_dimension_numbers<[1], [0], [0], [1], [0, 0, 1, 1], [], []>} : vector<8x96xf32>, vector<96x384xf32>, vector<8x384xf32> -> vector<8x384xf32>
    %253 = vector.broadcast %4 : vector<1x384xf32> to vector<8x384xf32>
    %254 = arith.addf %252, %253 : vector<8x384xf32>
    %255 = vector.extract_strided_slice %0 {offsets = [0, 4, 0], sizes = [8, 1, 1], strides = [1, 1, 1]} : vector<8x8x2xf32> to vector<8x1x1xf32>
    %256 = vector.shape_cast %255 : vector<8x1x1xf32> to vector<8x1xf32>
    %257 = vector.extract_strided_slice %3 {offsets = [0, 0], sizes = [1, 384], strides = [1, 1]} : vector<6x384xf32> to vector<1x384xf32>
    %258 = vector.broadcast %256 : vector<8x1xf32> to vector<8x384xf32>
    %259 = vector.broadcast %257 : vector<1x384xf32> to vector<8x384xf32>
    %260 = arith.mulf %258, %259 : vector<8x384xf32>
    %261 = arith.addf %254, %260 : vector<8x384xf32>
    %262 = vector.extract_strided_slice %0 {offsets = [0, 4, 1], sizes = [8, 1, 1], strides = [1, 1, 1]} : vector<8x8x2xf32> to vector<8x1x1xf32>
    %263 = vector.shape_cast %262 : vector<8x1x1xf32> to vector<8x1xf32>
    %264 = vector.extract_strided_slice %3 {offsets = [1, 0], sizes = [1, 384], strides = [1, 1]} : vector<6x384xf32> to vector<1x384xf32>
    %265 = vector.broadcast %263 : vector<8x1xf32> to vector<8x384xf32>
    %266 = vector.broadcast %264 : vector<1x384xf32> to vector<8x384xf32>
    %267 = arith.mulf %265, %266 : vector<8x384xf32>
    %268 = arith.addf %261, %267 : vector<8x384xf32>
    %269 = vector.extract_strided_slice %1 {offsets = [0, 4, 0], sizes = [8, 1, 1], strides = [1, 1, 1]} : vector<8x12x2xf32> to vector<8x1x1xf32>
    %270 = vector.shape_cast %269 : vector<8x1x1xf32> to vector<8x1xf32>
    %271 = vector.extract_strided_slice %3 {offsets = [2, 0], sizes = [1, 384], strides = [1, 1]} : vector<6x384xf32> to vector<1x384xf32>
    %272 = vector.broadcast %270 : vector<8x1xf32> to vector<8x384xf32>
    %273 = vector.broadcast %271 : vector<1x384xf32> to vector<8x384xf32>
    %274 = arith.mulf %272, %273 : vector<8x384xf32>
    %275 = arith.addf %268, %274 : vector<8x384xf32>
    %276 = vector.extract_strided_slice %1 {offsets = [0, 4, 1], sizes = [8, 1, 1], strides = [1, 1, 1]} : vector<8x12x2xf32> to vector<8x1x1xf32>
    %277 = vector.shape_cast %276 : vector<8x1x1xf32> to vector<8x1xf32>
    %278 = vector.extract_strided_slice %3 {offsets = [3, 0], sizes = [1, 384], strides = [1, 1]} : vector<6x384xf32> to vector<1x384xf32>
    %279 = vector.broadcast %277 : vector<8x1xf32> to vector<8x384xf32>
    %280 = vector.broadcast %278 : vector<1x384xf32> to vector<8x384xf32>
    %281 = arith.mulf %279, %280 : vector<8x384xf32>
    %282 = arith.addf %275, %281 : vector<8x384xf32>
    %283 = vector.extract_strided_slice %2 {offsets = [0, 4, 0], sizes = [8, 1, 1], strides = [1, 1, 1]} : vector<8x12x2xf32> to vector<8x1x1xf32>
    %284 = vector.shape_cast %283 : vector<8x1x1xf32> to vector<8x1xf32>
    %285 = vector.extract_strided_slice %3 {offsets = [4, 0], sizes = [1, 384], strides = [1, 1]} : vector<6x384xf32> to vector<1x384xf32>
    %286 = vector.broadcast %284 : vector<8x1xf32> to vector<8x384xf32>
    %287 = vector.broadcast %285 : vector<1x384xf32> to vector<8x384xf32>
    %288 = arith.mulf %286, %287 : vector<8x384xf32>
    %289 = arith.addf %282, %288 : vector<8x384xf32>
    %290 = vector.extract_strided_slice %2 {offsets = [0, 4, 1], sizes = [8, 1, 1], strides = [1, 1, 1]} : vector<8x12x2xf32> to vector<8x1x1xf32>
    %291 = vector.shape_cast %290 : vector<8x1x1xf32> to vector<8x1xf32>
    %292 = vector.extract_strided_slice %3 {offsets = [5, 0], sizes = [1, 384], strides = [1, 1]} : vector<6x384xf32> to vector<1x384xf32>
    %293 = vector.broadcast %291 : vector<8x1xf32> to vector<8x384xf32>
    %294 = vector.broadcast %292 : vector<1x384xf32> to vector<8x384xf32>
    %295 = arith.mulf %293, %294 : vector<8x384xf32>
    %296 = arith.addf %289, %295 : vector<8x384xf32>
    %297 = vector.extract_strided_slice %296 {offsets = [0, 0], sizes = [8, 288], strides = [1, 1]} : vector<8x384xf32> to vector<8x288xf32>
    %298 = arith.negf %297 : vector<8x288xf32>
    %299 = math.exp %298 : vector<8x288xf32>
    %cst_24 = arith.constant 1.000000e+00 : f32
    %300 = vector.broadcast %cst_24 : f32 to vector<8x288xf32>
    %301 = arith.addf %300, %299 : vector<8x288xf32>
    %302 = arith.divf %300, %301 : vector<8x288xf32>
    %303 = vector.extract_strided_slice %302 {offsets = [0, 0], sizes = [8, 96], strides = [1, 1]} : vector<8x288xf32> to vector<8x96xf32>
    %304 = vector.extract_strided_slice %302 {offsets = [0, 96], sizes = [8, 96], strides = [1, 1]} : vector<8x288xf32> to vector<8x96xf32>
    %305 = vector.extract_strided_slice %302 {offsets = [0, 192], sizes = [8, 96], strides = [1, 1]} : vector<8x288xf32> to vector<8x96xf32>
    %306 = vector.extract_strided_slice %296 {offsets = [0, 288], sizes = [8, 96], strides = [1, 1]} : vector<8x384xf32> to vector<8x96xf32>
    %307 = math.tanh %306 : vector<8x96xf32>
    %308 = arith.mulf %304, %249 : vector<8x96xf32>
    %309 = arith.mulf %303, %307 : vector<8x96xf32>
    %310 = arith.addf %308, %309 : vector<8x96xf32>
    %311 = math.tanh %310 : vector<8x96xf32>
    %312 = arith.mulf %305, %311 : vector<8x96xf32>
    %cst_25 = arith.constant dense<0.000000e+00> : vector<8x384xf32>
    %313 = tpu.matmul %312, %5, %cst_25 {dimension_numbers = #tpu.dot_dimension_numbers<[1], [0], [0], [1], [0, 0, 1, 1], [], []>} : vector<8x96xf32>, vector<96x384xf32>, vector<8x384xf32> -> vector<8x384xf32>
    %314 = vector.broadcast %4 : vector<1x384xf32> to vector<8x384xf32>
    %315 = arith.addf %313, %314 : vector<8x384xf32>
    %316 = vector.extract_strided_slice %0 {offsets = [0, 5, 0], sizes = [8, 1, 1], strides = [1, 1, 1]} : vector<8x8x2xf32> to vector<8x1x1xf32>
    %317 = vector.shape_cast %316 : vector<8x1x1xf32> to vector<8x1xf32>
    %318 = vector.extract_strided_slice %3 {offsets = [0, 0], sizes = [1, 384], strides = [1, 1]} : vector<6x384xf32> to vector<1x384xf32>
    %319 = vector.broadcast %317 : vector<8x1xf32> to vector<8x384xf32>
    %320 = vector.broadcast %318 : vector<1x384xf32> to vector<8x384xf32>
    %321 = arith.mulf %319, %320 : vector<8x384xf32>
    %322 = arith.addf %315, %321 : vector<8x384xf32>
    %323 = vector.extract_strided_slice %0 {offsets = [0, 5, 1], sizes = [8, 1, 1], strides = [1, 1, 1]} : vector<8x8x2xf32> to vector<8x1x1xf32>
    %324 = vector.shape_cast %323 : vector<8x1x1xf32> to vector<8x1xf32>
    %325 = vector.extract_strided_slice %3 {offsets = [1, 0], sizes = [1, 384], strides = [1, 1]} : vector<6x384xf32> to vector<1x384xf32>
    %326 = vector.broadcast %324 : vector<8x1xf32> to vector<8x384xf32>
    %327 = vector.broadcast %325 : vector<1x384xf32> to vector<8x384xf32>
    %328 = arith.mulf %326, %327 : vector<8x384xf32>
    %329 = arith.addf %322, %328 : vector<8x384xf32>
    %330 = vector.extract_strided_slice %1 {offsets = [0, 5, 0], sizes = [8, 1, 1], strides = [1, 1, 1]} : vector<8x12x2xf32> to vector<8x1x1xf32>
    %331 = vector.shape_cast %330 : vector<8x1x1xf32> to vector<8x1xf32>
    %332 = vector.extract_strided_slice %3 {offsets = [2, 0], sizes = [1, 384], strides = [1, 1]} : vector<6x384xf32> to vector<1x384xf32>
    %333 = vector.broadcast %331 : vector<8x1xf32> to vector<8x384xf32>
    %334 = vector.broadcast %332 : vector<1x384xf32> to vector<8x384xf32>
    %335 = arith.mulf %333, %334 : vector<8x384xf32>
    %336 = arith.addf %329, %335 : vector<8x384xf32>
    %337 = vector.extract_strided_slice %1 {offsets = [0, 5, 1], sizes = [8, 1, 1], strides = [1, 1, 1]} : vector<8x12x2xf32> to vector<8x1x1xf32>
    %338 = vector.shape_cast %337 : vector<8x1x1xf32> to vector<8x1xf32>
    %339 = vector.extract_strided_slice %3 {offsets = [3, 0], sizes = [1, 384], strides = [1, 1]} : vector<6x384xf32> to vector<1x384xf32>
    %340 = vector.broadcast %338 : vector<8x1xf32> to vector<8x384xf32>
    %341 = vector.broadcast %339 : vector<1x384xf32> to vector<8x384xf32>
    %342 = arith.mulf %340, %341 : vector<8x384xf32>
    %343 = arith.addf %336, %342 : vector<8x384xf32>
    %344 = vector.extract_strided_slice %2 {offsets = [0, 5, 0], sizes = [8, 1, 1], strides = [1, 1, 1]} : vector<8x12x2xf32> to vector<8x1x1xf32>
    %345 = vector.shape_cast %344 : vector<8x1x1xf32> to vector<8x1xf32>
    %346 = vector.extract_strided_slice %3 {offsets = [4, 0], sizes = [1, 384], strides = [1, 1]} : vector<6x384xf32> to vector<1x384xf32>
    %347 = vector.broadcast %345 : vector<8x1xf32> to vector<8x384xf32>
    %348 = vector.broadcast %346 : vector<1x384xf32> to vector<8x384xf32>
    %349 = arith.mulf %347, %348 : vector<8x384xf32>
    %350 = arith.addf %343, %349 : vector<8x384xf32>
    %351 = vector.extract_strided_slice %2 {offsets = [0, 5, 1], sizes = [8, 1, 1], strides = [1, 1, 1]} : vector<8x12x2xf32> to vector<8x1x1xf32>
    %352 = vector.shape_cast %351 : vector<8x1x1xf32> to vector<8x1xf32>
    %353 = vector.extract_strided_slice %3 {offsets = [5, 0], sizes = [1, 384], strides = [1, 1]} : vector<6x384xf32> to vector<1x384xf32>
    %354 = vector.broadcast %352 : vector<8x1xf32> to vector<8x384xf32>
    %355 = vector.broadcast %353 : vector<1x384xf32> to vector<8x384xf32>
    %356 = arith.mulf %354, %355 : vector<8x384xf32>
    %357 = arith.addf %350, %356 : vector<8x384xf32>
    %358 = vector.extract_strided_slice %357 {offsets = [0, 0], sizes = [8, 288], strides = [1, 1]} : vector<8x384xf32> to vector<8x288xf32>
    %359 = arith.negf %358 : vector<8x288xf32>
    %360 = math.exp %359 : vector<8x288xf32>
    %cst_26 = arith.constant 1.000000e+00 : f32
    %361 = vector.broadcast %cst_26 : f32 to vector<8x288xf32>
    %362 = arith.addf %361, %360 : vector<8x288xf32>
    %363 = arith.divf %361, %362 : vector<8x288xf32>
    %364 = vector.extract_strided_slice %363 {offsets = [0, 0], sizes = [8, 96], strides = [1, 1]} : vector<8x288xf32> to vector<8x96xf32>
    %365 = vector.extract_strided_slice %363 {offsets = [0, 96], sizes = [8, 96], strides = [1, 1]} : vector<8x288xf32> to vector<8x96xf32>
    %366 = vector.extract_strided_slice %363 {offsets = [0, 192], sizes = [8, 96], strides = [1, 1]} : vector<8x288xf32> to vector<8x96xf32>
    %367 = vector.extract_strided_slice %357 {offsets = [0, 288], sizes = [8, 96], strides = [1, 1]} : vector<8x384xf32> to vector<8x96xf32>
    %368 = math.tanh %367 : vector<8x96xf32>
    %369 = arith.mulf %365, %310 : vector<8x96xf32>
    %370 = arith.mulf %364, %368 : vector<8x96xf32>
    %371 = arith.addf %369, %370 : vector<8x96xf32>
    %372 = math.tanh %371 : vector<8x96xf32>
    %373 = arith.mulf %366, %372 : vector<8x96xf32>
    %cst_27 = arith.constant dense<0.000000e+00> : vector<8x384xf32>
    %374 = tpu.matmul %373, %5, %cst_27 {dimension_numbers = #tpu.dot_dimension_numbers<[1], [0], [0], [1], [0, 0, 1, 1], [], []>} : vector<8x96xf32>, vector<96x384xf32>, vector<8x384xf32> -> vector<8x384xf32>
    %375 = vector.broadcast %4 : vector<1x384xf32> to vector<8x384xf32>
    %376 = arith.addf %374, %375 : vector<8x384xf32>
    %377 = vector.extract_strided_slice %0 {offsets = [0, 6, 0], sizes = [8, 1, 1], strides = [1, 1, 1]} : vector<8x8x2xf32> to vector<8x1x1xf32>
    %378 = vector.shape_cast %377 : vector<8x1x1xf32> to vector<8x1xf32>
    %379 = vector.extract_strided_slice %3 {offsets = [0, 0], sizes = [1, 384], strides = [1, 1]} : vector<6x384xf32> to vector<1x384xf32>
    %380 = vector.broadcast %378 : vector<8x1xf32> to vector<8x384xf32>
    %381 = vector.broadcast %379 : vector<1x384xf32> to vector<8x384xf32>
    %382 = arith.mulf %380, %381 : vector<8x384xf32>
    %383 = arith.addf %376, %382 : vector<8x384xf32>
    %384 = vector.extract_strided_slice %0 {offsets = [0, 6, 1], sizes = [8, 1, 1], strides = [1, 1, 1]} : vector<8x8x2xf32> to vector<8x1x1xf32>
    %385 = vector.shape_cast %384 : vector<8x1x1xf32> to vector<8x1xf32>
    %386 = vector.extract_strided_slice %3 {offsets = [1, 0], sizes = [1, 384], strides = [1, 1]} : vector<6x384xf32> to vector<1x384xf32>
    %387 = vector.broadcast %385 : vector<8x1xf32> to vector<8x384xf32>
    %388 = vector.broadcast %386 : vector<1x384xf32> to vector<8x384xf32>
    %389 = arith.mulf %387, %388 : vector<8x384xf32>
    %390 = arith.addf %383, %389 : vector<8x384xf32>
    %391 = vector.extract_strided_slice %1 {offsets = [0, 6, 0], sizes = [8, 1, 1], strides = [1, 1, 1]} : vector<8x12x2xf32> to vector<8x1x1xf32>
    %392 = vector.shape_cast %391 : vector<8x1x1xf32> to vector<8x1xf32>
    %393 = vector.extract_strided_slice %3 {offsets = [2, 0], sizes = [1, 384], strides = [1, 1]} : vector<6x384xf32> to vector<1x384xf32>
    %394 = vector.broadcast %392 : vector<8x1xf32> to vector<8x384xf32>
    %395 = vector.broadcast %393 : vector<1x384xf32> to vector<8x384xf32>
    %396 = arith.mulf %394, %395 : vector<8x384xf32>
    %397 = arith.addf %390, %396 : vector<8x384xf32>
    %398 = vector.extract_strided_slice %1 {offsets = [0, 6, 1], sizes = [8, 1, 1], strides = [1, 1, 1]} : vector<8x12x2xf32> to vector<8x1x1xf32>
    %399 = vector.shape_cast %398 : vector<8x1x1xf32> to vector<8x1xf32>
    %400 = vector.extract_strided_slice %3 {offsets = [3, 0], sizes = [1, 384], strides = [1, 1]} : vector<6x384xf32> to vector<1x384xf32>
    %401 = vector.broadcast %399 : vector<8x1xf32> to vector<8x384xf32>
    %402 = vector.broadcast %400 : vector<1x384xf32> to vector<8x384xf32>
    %403 = arith.mulf %401, %402 : vector<8x384xf32>
    %404 = arith.addf %397, %403 : vector<8x384xf32>
    %405 = vector.extract_strided_slice %2 {offsets = [0, 6, 0], sizes = [8, 1, 1], strides = [1, 1, 1]} : vector<8x12x2xf32> to vector<8x1x1xf32>
    %406 = vector.shape_cast %405 : vector<8x1x1xf32> to vector<8x1xf32>
    %407 = vector.extract_strided_slice %3 {offsets = [4, 0], sizes = [1, 384], strides = [1, 1]} : vector<6x384xf32> to vector<1x384xf32>
    %408 = vector.broadcast %406 : vector<8x1xf32> to vector<8x384xf32>
    %409 = vector.broadcast %407 : vector<1x384xf32> to vector<8x384xf32>
    %410 = arith.mulf %408, %409 : vector<8x384xf32>
    %411 = arith.addf %404, %410 : vector<8x384xf32>
    %412 = vector.extract_strided_slice %2 {offsets = [0, 6, 1], sizes = [8, 1, 1], strides = [1, 1, 1]} : vector<8x12x2xf32> to vector<8x1x1xf32>
    %413 = vector.shape_cast %412 : vector<8x1x1xf32> to vector<8x1xf32>
    %414 = vector.extract_strided_slice %3 {offsets = [5, 0], sizes = [1, 384], strides = [1, 1]} : vector<6x384xf32> to vector<1x384xf32>
    %415 = vector.broadcast %413 : vector<8x1xf32> to vector<8x384xf32>
    %416 = vector.broadcast %414 : vector<1x384xf32> to vector<8x384xf32>
    %417 = arith.mulf %415, %416 : vector<8x384xf32>
    %418 = arith.addf %411, %417 : vector<8x384xf32>
    %419 = vector.extract_strided_slice %418 {offsets = [0, 0], sizes = [8, 288], strides = [1, 1]} : vector<8x384xf32> to vector<8x288xf32>
    %420 = arith.negf %419 : vector<8x288xf32>
    %421 = math.exp %420 : vector<8x288xf32>
    %cst_28 = arith.constant 1.000000e+00 : f32
    %422 = vector.broadcast %cst_28 : f32 to vector<8x288xf32>
    %423 = arith.addf %422, %421 : vector<8x288xf32>
    %424 = arith.divf %422, %423 : vector<8x288xf32>
    %425 = vector.extract_strided_slice %424 {offsets = [0, 0], sizes = [8, 96], strides = [1, 1]} : vector<8x288xf32> to vector<8x96xf32>
    %426 = vector.extract_strided_slice %424 {offsets = [0, 96], sizes = [8, 96], strides = [1, 1]} : vector<8x288xf32> to vector<8x96xf32>
    %427 = vector.extract_strided_slice %424 {offsets = [0, 192], sizes = [8, 96], strides = [1, 1]} : vector<8x288xf32> to vector<8x96xf32>
    %428 = vector.extract_strided_slice %418 {offsets = [0, 288], sizes = [8, 96], strides = [1, 1]} : vector<8x384xf32> to vector<8x96xf32>
    %429 = math.tanh %428 : vector<8x96xf32>
    %430 = arith.mulf %426, %371 : vector<8x96xf32>
    %431 = arith.mulf %425, %429 : vector<8x96xf32>
    %432 = arith.addf %430, %431 : vector<8x96xf32>
    %433 = math.tanh %432 : vector<8x96xf32>
    %434 = arith.mulf %427, %433 : vector<8x96xf32>
    %cst_29 = arith.constant dense<0.000000e+00> : vector<8x384xf32>
    %435 = tpu.matmul %434, %5, %cst_29 {dimension_numbers = #tpu.dot_dimension_numbers<[1], [0], [0], [1], [0, 0, 1, 1], [], []>} : vector<8x96xf32>, vector<96x384xf32>, vector<8x384xf32> -> vector<8x384xf32>
    %436 = vector.broadcast %4 : vector<1x384xf32> to vector<8x384xf32>
    %437 = arith.addf %435, %436 : vector<8x384xf32>
    %438 = vector.extract_strided_slice %0 {offsets = [0, 7, 0], sizes = [8, 1, 1], strides = [1, 1, 1]} : vector<8x8x2xf32> to vector<8x1x1xf32>
    %439 = vector.shape_cast %438 : vector<8x1x1xf32> to vector<8x1xf32>
    %440 = vector.extract_strided_slice %3 {offsets = [0, 0], sizes = [1, 384], strides = [1, 1]} : vector<6x384xf32> to vector<1x384xf32>
    %441 = vector.broadcast %439 : vector<8x1xf32> to vector<8x384xf32>
    %442 = vector.broadcast %440 : vector<1x384xf32> to vector<8x384xf32>
    %443 = arith.mulf %441, %442 : vector<8x384xf32>
    %444 = arith.addf %437, %443 : vector<8x384xf32>
    %445 = vector.extract_strided_slice %0 {offsets = [0, 7, 1], sizes = [8, 1, 1], strides = [1, 1, 1]} : vector<8x8x2xf32> to vector<8x1x1xf32>
    %446 = vector.shape_cast %445 : vector<8x1x1xf32> to vector<8x1xf32>
    %447 = vector.extract_strided_slice %3 {offsets = [1, 0], sizes = [1, 384], strides = [1, 1]} : vector<6x384xf32> to vector<1x384xf32>
    %448 = vector.broadcast %446 : vector<8x1xf32> to vector<8x384xf32>
    %449 = vector.broadcast %447 : vector<1x384xf32> to vector<8x384xf32>
    %450 = arith.mulf %448, %449 : vector<8x384xf32>
    %451 = arith.addf %444, %450 : vector<8x384xf32>
    %452 = vector.extract_strided_slice %1 {offsets = [0, 7, 0], sizes = [8, 1, 1], strides = [1, 1, 1]} : vector<8x12x2xf32> to vector<8x1x1xf32>
    %453 = vector.shape_cast %452 : vector<8x1x1xf32> to vector<8x1xf32>
    %454 = vector.extract_strided_slice %3 {offsets = [2, 0], sizes = [1, 384], strides = [1, 1]} : vector<6x384xf32> to vector<1x384xf32>
    %455 = vector.broadcast %453 : vector<8x1xf32> to vector<8x384xf32>
    %456 = vector.broadcast %454 : vector<1x384xf32> to vector<8x384xf32>
    %457 = arith.mulf %455, %456 : vector<8x384xf32>
    %458 = arith.addf %451, %457 : vector<8x384xf32>
    %459 = vector.extract_strided_slice %1 {offsets = [0, 7, 1], sizes = [8, 1, 1], strides = [1, 1, 1]} : vector<8x12x2xf32> to vector<8x1x1xf32>
    %460 = vector.shape_cast %459 : vector<8x1x1xf32> to vector<8x1xf32>
    %461 = vector.extract_strided_slice %3 {offsets = [3, 0], sizes = [1, 384], strides = [1, 1]} : vector<6x384xf32> to vector<1x384xf32>
    %462 = vector.broadcast %460 : vector<8x1xf32> to vector<8x384xf32>
    %463 = vector.broadcast %461 : vector<1x384xf32> to vector<8x384xf32>
    %464 = arith.mulf %462, %463 : vector<8x384xf32>
    %465 = arith.addf %458, %464 : vector<8x384xf32>
    %466 = vector.extract_strided_slice %2 {offsets = [0, 7, 0], sizes = [8, 1, 1], strides = [1, 1, 1]} : vector<8x12x2xf32> to vector<8x1x1xf32>
    %467 = vector.shape_cast %466 : vector<8x1x1xf32> to vector<8x1xf32>
    %468 = vector.extract_strided_slice %3 {offsets = [4, 0], sizes = [1, 384], strides = [1, 1]} : vector<6x384xf32> to vector<1x384xf32>
    %469 = vector.broadcast %467 : vector<8x1xf32> to vector<8x384xf32>
    %470 = vector.broadcast %468 : vector<1x384xf32> to vector<8x384xf32>
    %471 = arith.mulf %469, %470 : vector<8x384xf32>
    %472 = arith.addf %465, %471 : vector<8x384xf32>
    %473 = vector.extract_strided_slice %2 {offsets = [0, 7, 1], sizes = [8, 1, 1], strides = [1, 1, 1]} : vector<8x12x2xf32> to vector<8x1x1xf32>
    %474 = vector.shape_cast %473 : vector<8x1x1xf32> to vector<8x1xf32>
    %475 = vector.extract_strided_slice %3 {offsets = [5, 0], sizes = [1, 384], strides = [1, 1]} : vector<6x384xf32> to vector<1x384xf32>
    %476 = vector.broadcast %474 : vector<8x1xf32> to vector<8x384xf32>
    %477 = vector.broadcast %475 : vector<1x384xf32> to vector<8x384xf32>
    %478 = arith.mulf %476, %477 : vector<8x384xf32>
    %479 = arith.addf %472, %478 : vector<8x384xf32>
    %480 = vector.extract_strided_slice %479 {offsets = [0, 0], sizes = [8, 288], strides = [1, 1]} : vector<8x384xf32> to vector<8x288xf32>
    %481 = arith.negf %480 : vector<8x288xf32>
    %482 = math.exp %481 : vector<8x288xf32>
    %cst_30 = arith.constant 1.000000e+00 : f32
    %483 = vector.broadcast %cst_30 : f32 to vector<8x288xf32>
    %484 = arith.addf %483, %482 : vector<8x288xf32>
    %485 = arith.divf %483, %484 : vector<8x288xf32>
    %486 = vector.extract_strided_slice %485 {offsets = [0, 0], sizes = [8, 96], strides = [1, 1]} : vector<8x288xf32> to vector<8x96xf32>
    %487 = vector.extract_strided_slice %485 {offsets = [0, 96], sizes = [8, 96], strides = [1, 1]} : vector<8x288xf32> to vector<8x96xf32>
    %488 = vector.extract_strided_slice %485 {offsets = [0, 192], sizes = [8, 96], strides = [1, 1]} : vector<8x288xf32> to vector<8x96xf32>
    %489 = vector.extract_strided_slice %479 {offsets = [0, 288], sizes = [8, 96], strides = [1, 1]} : vector<8x384xf32> to vector<8x96xf32>
    %490 = math.tanh %489 : vector<8x96xf32>
    %491 = arith.mulf %487, %432 : vector<8x96xf32>
    %492 = arith.mulf %486, %490 : vector<8x96xf32>
    %493 = arith.addf %491, %492 : vector<8x96xf32>
    %494 = math.tanh %493 : vector<8x96xf32>
    %495 = arith.mulf %488, %494 : vector<8x96xf32>
    %496 = vector.extract_strided_slice %495 {offsets = [0, 0], sizes = [8, 32], strides = [1, 1]} : vector<8x96xf32> to vector<8x32xf32>
    %cst_31 = arith.constant dense<0.000000e+00> : vector<8x384xf32>
    %497 = tpu.matmul %495, %5, %cst_31 {dimension_numbers = #tpu.dot_dimension_numbers<[1], [0], [0], [1], [0, 0, 1, 1], [], []>} : vector<8x96xf32>, vector<96x384xf32>, vector<8x384xf32> -> vector<8x384xf32>
    %498 = vector.broadcast %4 : vector<1x384xf32> to vector<8x384xf32>
    %499 = arith.addf %497, %498 : vector<8x384xf32>
    %500 = vector.extract_strided_slice %1 {offsets = [0, 8, 0], sizes = [8, 1, 1], strides = [1, 1, 1]} : vector<8x12x2xf32> to vector<8x1x1xf32>
    %501 = vector.shape_cast %500 : vector<8x1x1xf32> to vector<8x1xf32>
    %502 = vector.extract_strided_slice %3 {offsets = [2, 0], sizes = [1, 384], strides = [1, 1]} : vector<6x384xf32> to vector<1x384xf32>
    %503 = vector.broadcast %501 : vector<8x1xf32> to vector<8x384xf32>
    %504 = vector.broadcast %502 : vector<1x384xf32> to vector<8x384xf32>
    %505 = arith.mulf %503, %504 : vector<8x384xf32>
    %506 = arith.addf %499, %505 : vector<8x384xf32>
    %507 = vector.extract_strided_slice %1 {offsets = [0, 8, 1], sizes = [8, 1, 1], strides = [1, 1, 1]} : vector<8x12x2xf32> to vector<8x1x1xf32>
    %508 = vector.shape_cast %507 : vector<8x1x1xf32> to vector<8x1xf32>
    %509 = vector.extract_strided_slice %3 {offsets = [3, 0], sizes = [1, 384], strides = [1, 1]} : vector<6x384xf32> to vector<1x384xf32>
    %510 = vector.broadcast %508 : vector<8x1xf32> to vector<8x384xf32>
    %511 = vector.broadcast %509 : vector<1x384xf32> to vector<8x384xf32>
    %512 = arith.mulf %510, %511 : vector<8x384xf32>
    %513 = arith.addf %506, %512 : vector<8x384xf32>
    %514 = vector.extract_strided_slice %2 {offsets = [0, 8, 0], sizes = [8, 1, 1], strides = [1, 1, 1]} : vector<8x12x2xf32> to vector<8x1x1xf32>
    %515 = vector.shape_cast %514 : vector<8x1x1xf32> to vector<8x1xf32>
    %516 = vector.extract_strided_slice %3 {offsets = [4, 0], sizes = [1, 384], strides = [1, 1]} : vector<6x384xf32> to vector<1x384xf32>
    %517 = vector.broadcast %515 : vector<8x1xf32> to vector<8x384xf32>
    %518 = vector.broadcast %516 : vector<1x384xf32> to vector<8x384xf32>
    %519 = arith.mulf %517, %518 : vector<8x384xf32>
    %520 = arith.addf %513, %519 : vector<8x384xf32>
    %521 = vector.extract_strided_slice %2 {offsets = [0, 8, 1], sizes = [8, 1, 1], strides = [1, 1, 1]} : vector<8x12x2xf32> to vector<8x1x1xf32>
    %522 = vector.shape_cast %521 : vector<8x1x1xf32> to vector<8x1xf32>
    %523 = vector.extract_strided_slice %3 {offsets = [5, 0], sizes = [1, 384], strides = [1, 1]} : vector<6x384xf32> to vector<1x384xf32>
    %524 = vector.broadcast %522 : vector<8x1xf32> to vector<8x384xf32>
    %525 = vector.broadcast %523 : vector<1x384xf32> to vector<8x384xf32>
    %526 = arith.mulf %524, %525 : vector<8x384xf32>
    %527 = arith.addf %520, %526 : vector<8x384xf32>
    %528 = vector.extract_strided_slice %527 {offsets = [0, 0], sizes = [8, 288], strides = [1, 1]} : vector<8x384xf32> to vector<8x288xf32>
    %529 = arith.negf %528 : vector<8x288xf32>
    %530 = math.exp %529 : vector<8x288xf32>
    %cst_32 = arith.constant 1.000000e+00 : f32
    %531 = vector.broadcast %cst_32 : f32 to vector<8x288xf32>
    %532 = arith.addf %531, %530 : vector<8x288xf32>
    %533 = arith.divf %531, %532 : vector<8x288xf32>
    %534 = vector.extract_strided_slice %533 {offsets = [0, 0], sizes = [8, 96], strides = [1, 1]} : vector<8x288xf32> to vector<8x96xf32>
    %535 = vector.extract_strided_slice %533 {offsets = [0, 96], sizes = [8, 96], strides = [1, 1]} : vector<8x288xf32> to vector<8x96xf32>
    %536 = vector.extract_strided_slice %533 {offsets = [0, 192], sizes = [8, 96], strides = [1, 1]} : vector<8x288xf32> to vector<8x96xf32>
    %537 = vector.extract_strided_slice %527 {offsets = [0, 288], sizes = [8, 96], strides = [1, 1]} : vector<8x384xf32> to vector<8x96xf32>
    %538 = math.tanh %537 : vector<8x96xf32>
    %539 = arith.mulf %535, %493 : vector<8x96xf32>
    %540 = arith.mulf %534, %538 : vector<8x96xf32>
    %541 = arith.addf %539, %540 : vector<8x96xf32>
    %542 = math.tanh %541 : vector<8x96xf32>
    %543 = arith.mulf %536, %542 : vector<8x96xf32>
    %cst_33 = arith.constant dense<0.000000e+00> : vector<8x384xf32>
    %544 = tpu.matmul %543, %5, %cst_33 {dimension_numbers = #tpu.dot_dimension_numbers<[1], [0], [0], [1], [0, 0, 1, 1], [], []>} : vector<8x96xf32>, vector<96x384xf32>, vector<8x384xf32> -> vector<8x384xf32>
    %545 = vector.broadcast %4 : vector<1x384xf32> to vector<8x384xf32>
    %546 = arith.addf %544, %545 : vector<8x384xf32>
    %547 = vector.extract_strided_slice %1 {offsets = [0, 9, 0], sizes = [8, 1, 1], strides = [1, 1, 1]} : vector<8x12x2xf32> to vector<8x1x1xf32>
    %548 = vector.shape_cast %547 : vector<8x1x1xf32> to vector<8x1xf32>
    %549 = vector.extract_strided_slice %3 {offsets = [2, 0], sizes = [1, 384], strides = [1, 1]} : vector<6x384xf32> to vector<1x384xf32>
    %550 = vector.broadcast %548 : vector<8x1xf32> to vector<8x384xf32>
    %551 = vector.broadcast %549 : vector<1x384xf32> to vector<8x384xf32>
    %552 = arith.mulf %550, %551 : vector<8x384xf32>
    %553 = arith.addf %546, %552 : vector<8x384xf32>
    %554 = vector.extract_strided_slice %1 {offsets = [0, 9, 1], sizes = [8, 1, 1], strides = [1, 1, 1]} : vector<8x12x2xf32> to vector<8x1x1xf32>
    %555 = vector.shape_cast %554 : vector<8x1x1xf32> to vector<8x1xf32>
    %556 = vector.extract_strided_slice %3 {offsets = [3, 0], sizes = [1, 384], strides = [1, 1]} : vector<6x384xf32> to vector<1x384xf32>
    %557 = vector.broadcast %555 : vector<8x1xf32> to vector<8x384xf32>
    %558 = vector.broadcast %556 : vector<1x384xf32> to vector<8x384xf32>
    %559 = arith.mulf %557, %558 : vector<8x384xf32>
    %560 = arith.addf %553, %559 : vector<8x384xf32>
    %561 = vector.extract_strided_slice %2 {offsets = [0, 9, 0], sizes = [8, 1, 1], strides = [1, 1, 1]} : vector<8x12x2xf32> to vector<8x1x1xf32>
    %562 = vector.shape_cast %561 : vector<8x1x1xf32> to vector<8x1xf32>
    %563 = vector.extract_strided_slice %3 {offsets = [4, 0], sizes = [1, 384], strides = [1, 1]} : vector<6x384xf32> to vector<1x384xf32>
    %564 = vector.broadcast %562 : vector<8x1xf32> to vector<8x384xf32>
    %565 = vector.broadcast %563 : vector<1x384xf32> to vector<8x384xf32>
    %566 = arith.mulf %564, %565 : vector<8x384xf32>
    %567 = arith.addf %560, %566 : vector<8x384xf32>
    %568 = vector.extract_strided_slice %2 {offsets = [0, 9, 1], sizes = [8, 1, 1], strides = [1, 1, 1]} : vector<8x12x2xf32> to vector<8x1x1xf32>
    %569 = vector.shape_cast %568 : vector<8x1x1xf32> to vector<8x1xf32>
    %570 = vector.extract_strided_slice %3 {offsets = [5, 0], sizes = [1, 384], strides = [1, 1]} : vector<6x384xf32> to vector<1x384xf32>
    %571 = vector.broadcast %569 : vector<8x1xf32> to vector<8x384xf32>
    %572 = vector.broadcast %570 : vector<1x384xf32> to vector<8x384xf32>
    %573 = arith.mulf %571, %572 : vector<8x384xf32>
    %574 = arith.addf %567, %573 : vector<8x384xf32>
    %575 = vector.extract_strided_slice %574 {offsets = [0, 0], sizes = [8, 288], strides = [1, 1]} : vector<8x384xf32> to vector<8x288xf32>
    %576 = arith.negf %575 : vector<8x288xf32>
    %577 = math.exp %576 : vector<8x288xf32>
    %cst_34 = arith.constant 1.000000e+00 : f32
    %578 = vector.broadcast %cst_34 : f32 to vector<8x288xf32>
    %579 = arith.addf %578, %577 : vector<8x288xf32>
    %580 = arith.divf %578, %579 : vector<8x288xf32>
    %581 = vector.extract_strided_slice %580 {offsets = [0, 0], sizes = [8, 96], strides = [1, 1]} : vector<8x288xf32> to vector<8x96xf32>
    %582 = vector.extract_strided_slice %580 {offsets = [0, 96], sizes = [8, 96], strides = [1, 1]} : vector<8x288xf32> to vector<8x96xf32>
    %583 = vector.extract_strided_slice %580 {offsets = [0, 192], sizes = [8, 96], strides = [1, 1]} : vector<8x288xf32> to vector<8x96xf32>
    %584 = vector.extract_strided_slice %574 {offsets = [0, 288], sizes = [8, 96], strides = [1, 1]} : vector<8x384xf32> to vector<8x96xf32>
    %585 = math.tanh %584 : vector<8x96xf32>
    %586 = arith.mulf %582, %541 : vector<8x96xf32>
    %587 = arith.mulf %581, %585 : vector<8x96xf32>
    %588 = arith.addf %586, %587 : vector<8x96xf32>
    %589 = math.tanh %588 : vector<8x96xf32>
    %590 = arith.mulf %583, %589 : vector<8x96xf32>
    %cst_35 = arith.constant dense<0.000000e+00> : vector<8x384xf32>
    %591 = tpu.matmul %590, %5, %cst_35 {dimension_numbers = #tpu.dot_dimension_numbers<[1], [0], [0], [1], [0, 0, 1, 1], [], []>} : vector<8x96xf32>, vector<96x384xf32>, vector<8x384xf32> -> vector<8x384xf32>
    %592 = vector.broadcast %4 : vector<1x384xf32> to vector<8x384xf32>
    %593 = arith.addf %591, %592 : vector<8x384xf32>
    %594 = vector.extract_strided_slice %1 {offsets = [0, 10, 0], sizes = [8, 1, 1], strides = [1, 1, 1]} : vector<8x12x2xf32> to vector<8x1x1xf32>
    %595 = vector.shape_cast %594 : vector<8x1x1xf32> to vector<8x1xf32>
    %596 = vector.extract_strided_slice %3 {offsets = [2, 0], sizes = [1, 384], strides = [1, 1]} : vector<6x384xf32> to vector<1x384xf32>
    %597 = vector.broadcast %595 : vector<8x1xf32> to vector<8x384xf32>
    %598 = vector.broadcast %596 : vector<1x384xf32> to vector<8x384xf32>
    %599 = arith.mulf %597, %598 : vector<8x384xf32>
    %600 = arith.addf %593, %599 : vector<8x384xf32>
    %601 = vector.extract_strided_slice %1 {offsets = [0, 10, 1], sizes = [8, 1, 1], strides = [1, 1, 1]} : vector<8x12x2xf32> to vector<8x1x1xf32>
    %602 = vector.shape_cast %601 : vector<8x1x1xf32> to vector<8x1xf32>
    %603 = vector.extract_strided_slice %3 {offsets = [3, 0], sizes = [1, 384], strides = [1, 1]} : vector<6x384xf32> to vector<1x384xf32>
    %604 = vector.broadcast %602 : vector<8x1xf32> to vector<8x384xf32>
    %605 = vector.broadcast %603 : vector<1x384xf32> to vector<8x384xf32>
    %606 = arith.mulf %604, %605 : vector<8x384xf32>
    %607 = arith.addf %600, %606 : vector<8x384xf32>
    %608 = vector.extract_strided_slice %2 {offsets = [0, 10, 0], sizes = [8, 1, 1], strides = [1, 1, 1]} : vector<8x12x2xf32> to vector<8x1x1xf32>
    %609 = vector.shape_cast %608 : vector<8x1x1xf32> to vector<8x1xf32>
    %610 = vector.extract_strided_slice %3 {offsets = [4, 0], sizes = [1, 384], strides = [1, 1]} : vector<6x384xf32> to vector<1x384xf32>
    %611 = vector.broadcast %609 : vector<8x1xf32> to vector<8x384xf32>
    %612 = vector.broadcast %610 : vector<1x384xf32> to vector<8x384xf32>
    %613 = arith.mulf %611, %612 : vector<8x384xf32>
    %614 = arith.addf %607, %613 : vector<8x384xf32>
    %615 = vector.extract_strided_slice %2 {offsets = [0, 10, 1], sizes = [8, 1, 1], strides = [1, 1, 1]} : vector<8x12x2xf32> to vector<8x1x1xf32>
    %616 = vector.shape_cast %615 : vector<8x1x1xf32> to vector<8x1xf32>
    %617 = vector.extract_strided_slice %3 {offsets = [5, 0], sizes = [1, 384], strides = [1, 1]} : vector<6x384xf32> to vector<1x384xf32>
    %618 = vector.broadcast %616 : vector<8x1xf32> to vector<8x384xf32>
    %619 = vector.broadcast %617 : vector<1x384xf32> to vector<8x384xf32>
    %620 = arith.mulf %618, %619 : vector<8x384xf32>
    %621 = arith.addf %614, %620 : vector<8x384xf32>
    %622 = vector.extract_strided_slice %621 {offsets = [0, 0], sizes = [8, 288], strides = [1, 1]} : vector<8x384xf32> to vector<8x288xf32>
    %623 = arith.negf %622 : vector<8x288xf32>
    %624 = math.exp %623 : vector<8x288xf32>
    %cst_36 = arith.constant 1.000000e+00 : f32
    %625 = vector.broadcast %cst_36 : f32 to vector<8x288xf32>
    %626 = arith.addf %625, %624 : vector<8x288xf32>
    %627 = arith.divf %625, %626 : vector<8x288xf32>
    %628 = vector.extract_strided_slice %627 {offsets = [0, 0], sizes = [8, 96], strides = [1, 1]} : vector<8x288xf32> to vector<8x96xf32>
    %629 = vector.extract_strided_slice %627 {offsets = [0, 96], sizes = [8, 96], strides = [1, 1]} : vector<8x288xf32> to vector<8x96xf32>
    %630 = vector.extract_strided_slice %627 {offsets = [0, 192], sizes = [8, 96], strides = [1, 1]} : vector<8x288xf32> to vector<8x96xf32>
    %631 = vector.extract_strided_slice %621 {offsets = [0, 288], sizes = [8, 96], strides = [1, 1]} : vector<8x384xf32> to vector<8x96xf32>
    %632 = math.tanh %631 : vector<8x96xf32>
    %633 = arith.mulf %629, %588 : vector<8x96xf32>
    %634 = arith.mulf %628, %632 : vector<8x96xf32>
    %635 = arith.addf %633, %634 : vector<8x96xf32>
    %636 = math.tanh %635 : vector<8x96xf32>
    %637 = arith.mulf %630, %636 : vector<8x96xf32>
    %cst_37 = arith.constant dense<0.000000e+00> : vector<8x384xf32>
    %638 = tpu.matmul %637, %5, %cst_37 {dimension_numbers = #tpu.dot_dimension_numbers<[1], [0], [0], [1], [0, 0, 1, 1], [], []>} : vector<8x96xf32>, vector<96x384xf32>, vector<8x384xf32> -> vector<8x384xf32>
    %639 = vector.broadcast %4 : vector<1x384xf32> to vector<8x384xf32>
    %640 = arith.addf %638, %639 : vector<8x384xf32>
    %641 = vector.extract_strided_slice %1 {offsets = [0, 11, 0], sizes = [8, 1, 1], strides = [1, 1, 1]} : vector<8x12x2xf32> to vector<8x1x1xf32>
    %642 = vector.shape_cast %641 : vector<8x1x1xf32> to vector<8x1xf32>
    %643 = vector.extract_strided_slice %3 {offsets = [2, 0], sizes = [1, 384], strides = [1, 1]} : vector<6x384xf32> to vector<1x384xf32>
    %644 = vector.broadcast %642 : vector<8x1xf32> to vector<8x384xf32>
    %645 = vector.broadcast %643 : vector<1x384xf32> to vector<8x384xf32>
    %646 = arith.mulf %644, %645 : vector<8x384xf32>
    %647 = arith.addf %640, %646 : vector<8x384xf32>
    %648 = vector.extract_strided_slice %1 {offsets = [0, 11, 1], sizes = [8, 1, 1], strides = [1, 1, 1]} : vector<8x12x2xf32> to vector<8x1x1xf32>
    %649 = vector.shape_cast %648 : vector<8x1x1xf32> to vector<8x1xf32>
    %650 = vector.extract_strided_slice %3 {offsets = [3, 0], sizes = [1, 384], strides = [1, 1]} : vector<6x384xf32> to vector<1x384xf32>
    %651 = vector.broadcast %649 : vector<8x1xf32> to vector<8x384xf32>
    %652 = vector.broadcast %650 : vector<1x384xf32> to vector<8x384xf32>
    %653 = arith.mulf %651, %652 : vector<8x384xf32>
    %654 = arith.addf %647, %653 : vector<8x384xf32>
    %655 = vector.extract_strided_slice %2 {offsets = [0, 11, 0], sizes = [8, 1, 1], strides = [1, 1, 1]} : vector<8x12x2xf32> to vector<8x1x1xf32>
    %656 = vector.shape_cast %655 : vector<8x1x1xf32> to vector<8x1xf32>
    %657 = vector.extract_strided_slice %3 {offsets = [4, 0], sizes = [1, 384], strides = [1, 1]} : vector<6x384xf32> to vector<1x384xf32>
    %658 = vector.broadcast %656 : vector<8x1xf32> to vector<8x384xf32>
    %659 = vector.broadcast %657 : vector<1x384xf32> to vector<8x384xf32>
    %660 = arith.mulf %658, %659 : vector<8x384xf32>
    %661 = arith.addf %654, %660 : vector<8x384xf32>
    %662 = vector.extract_strided_slice %2 {offsets = [0, 11, 1], sizes = [8, 1, 1], strides = [1, 1, 1]} : vector<8x12x2xf32> to vector<8x1x1xf32>
    %663 = vector.shape_cast %662 : vector<8x1x1xf32> to vector<8x1xf32>
    %664 = vector.extract_strided_slice %3 {offsets = [5, 0], sizes = [1, 384], strides = [1, 1]} : vector<6x384xf32> to vector<1x384xf32>
    %665 = vector.broadcast %663 : vector<8x1xf32> to vector<8x384xf32>
    %666 = vector.broadcast %664 : vector<1x384xf32> to vector<8x384xf32>
    %667 = arith.mulf %665, %666 : vector<8x384xf32>
    %668 = arith.addf %661, %667 : vector<8x384xf32>
    %669 = vector.extract_strided_slice %668 {offsets = [0, 0], sizes = [8, 288], strides = [1, 1]} : vector<8x384xf32> to vector<8x288xf32>
    %670 = arith.negf %669 : vector<8x288xf32>
    %671 = math.exp %670 : vector<8x288xf32>
    %cst_38 = arith.constant 1.000000e+00 : f32
    %672 = vector.broadcast %cst_38 : f32 to vector<8x288xf32>
    %673 = arith.addf %672, %671 : vector<8x288xf32>
    %674 = arith.divf %672, %673 : vector<8x288xf32>
    %675 = vector.extract_strided_slice %674 {offsets = [0, 0], sizes = [8, 96], strides = [1, 1]} : vector<8x288xf32> to vector<8x96xf32>
    %676 = vector.extract_strided_slice %674 {offsets = [0, 96], sizes = [8, 96], strides = [1, 1]} : vector<8x288xf32> to vector<8x96xf32>
    %677 = vector.extract_strided_slice %674 {offsets = [0, 192], sizes = [8, 96], strides = [1, 1]} : vector<8x288xf32> to vector<8x96xf32>
    %678 = vector.extract_strided_slice %668 {offsets = [0, 288], sizes = [8, 96], strides = [1, 1]} : vector<8x384xf32> to vector<8x96xf32>
    %679 = math.tanh %678 : vector<8x96xf32>
    %680 = arith.mulf %676, %635 : vector<8x96xf32>
    %681 = arith.mulf %675, %679 : vector<8x96xf32>
    %682 = arith.addf %680, %681 : vector<8x96xf32>
    %683 = math.tanh %682 : vector<8x96xf32>
    %684 = arith.mulf %677, %683 : vector<8x96xf32>
    %685 = vector.extract_strided_slice %684 {offsets = [0, 32], sizes = [8, 32], strides = [1, 1]} : vector<8x96xf32> to vector<8x32xf32>
    %686 = vector.extract_strided_slice %684 {offsets = [0, 64], sizes = [8, 32], strides = [1, 1]} : vector<8x96xf32> to vector<8x32xf32>
    %687 = tpu.concatenate %496, %685, %686 in 1 : vector<8x32xf32>, vector<8x32xf32>, vector<8x32xf32> -> vector<8x96xf32>
    %c0_39 = arith.constant 0 : index
    %c0_40 = arith.constant 0 : index
    %688 = vector.load %arg6[%c0_39, %c0_40] : memref<96x32xf32, #tpu.memory_space<vmem>>, vector<96x32xf32>
    %cst_41 = arith.constant dense<0.000000e+00> : vector<8x32xf32>
    %689 = tpu.matmul %687, %688, %cst_41 {dimension_numbers = #tpu.dot_dimension_numbers<[1], [0], [0], [1], [0, 0, 1, 1], [], []>} : vector<8x96xf32>, vector<96x32xf32>, vector<8x32xf32> -> vector<8x32xf32>
    %c0_42 = arith.constant 0 : index
    %c0_43 = arith.constant 0 : index
    %690 = vector.load %arg7[%c0_42, %c0_43] : memref<1x32xf32, #tpu.memory_space<vmem>>, vector<1x32xf32>
    %691 = vector.broadcast %690 : vector<1x32xf32> to vector<8x32xf32>
    %692 = arith.addf %689, %691 : vector<8x32xf32>
    %cst_44 = arith.constant 0.000000e+00 : f32
    %693 = vector.broadcast %cst_44 : f32 to vector<8x32xf32>
    %694 = arith.maximumf %692, %693 : vector<8x32xf32>
    %c0_45 = arith.constant 0 : index
    %c0_46 = arith.constant 0 : index
    %695 = vector.load %arg8[%c0_45, %c0_46] : memref<32x4xf32, #tpu.memory_space<vmem>>, vector<32x4xf32>
    %cst_47 = arith.constant dense<0.000000e+00> : vector<8x4xf32>
    %696 = tpu.matmul %694, %695, %cst_47 {dimension_numbers = #tpu.dot_dimension_numbers<[1], [0], [0], [1], [0, 0, 1, 1], [], []>} : vector<8x32xf32>, vector<32x4xf32>, vector<8x4xf32> -> vector<8x4xf32>
    %c0_48 = arith.constant 0 : index
    %c0_49 = arith.constant 0 : index
    %697 = vector.load %arg9[%c0_48, %c0_49] : memref<1x4xf32, #tpu.memory_space<vmem>>, vector<1x4xf32>
    %698 = vector.broadcast %697 : vector<1x4xf32> to vector<8x4xf32>
    %699 = arith.addf %696, %698 : vector<8x4xf32>
    %cst_50 = arith.constant dense<0xFF800000> : vector<8xf32>
    %700 = vector.multi_reduction <maximumf>, %699, %cst_50 [1] : vector<8x4xf32> to vector<8xf32>
    %701 = vector.shape_cast %700 : vector<8xf32> to vector<8x1xf32>
    %702 = vector.broadcast %701 : vector<8x1xf32> to vector<8x4xf32>
    %703 = arith.subf %699, %702 : vector<8x4xf32>
    %704 = math.exp %703 : vector<8x4xf32>
    %cst_51 = arith.constant dense<0.000000e+00> : vector<8xf32>
    %705 = vector.multi_reduction <add>, %704, %cst_51 [1] : vector<8x4xf32> to vector<8xf32>
    %706 = vector.shape_cast %705 : vector<8xf32> to vector<8x1xf32>
    %707 = vector.broadcast %706 : vector<8x1xf32> to vector<8x4xf32>
    %708 = arith.divf %704, %707 : vector<8x4xf32>
    %c0_52 = arith.constant 0 : index
    %c0_53 = arith.constant 0 : index
    %709 = vector.load %arg21[%c0_52, %c0_53] : memref<8x4xf32, #tpu.memory_space<vmem>>, vector<8x4xf32>
    tpu.vector_store %arg21[%c0_52, %c0_53], %708 {strides = array<i32>} : memref<8x4xf32, #tpu.memory_space<vmem>>, vector<8x4xf32>,
    %c0_54 = arith.constant 0 : index
    %c0_55 = arith.constant 0 : index
    %710 = vector.load %arg10[%c0_54, %c0_55] : memref<32x32xf32, #tpu.memory_space<vmem>>, vector<32x32xf32>
    %cst_56 = arith.constant dense<0.000000e+00> : vector<8x32xf32>
    %711 = tpu.matmul %496, %710, %cst_56 {dimension_numbers = #tpu.dot_dimension_numbers<[1], [0], [0], [1], [0, 0, 1, 1], [], []>} : vector<8x32xf32>, vector<32x32xf32>, vector<8x32xf32> -> vector<8x32xf32>
    %c0_57 = arith.constant 0 : index
    %c0_58 = arith.constant 0 : index
    %712 = vector.load %arg11[%c0_57, %c0_58] : memref<1x32xf32, #tpu.memory_space<vmem>>, vector<1x32xf32>
    %713 = vector.broadcast %712 : vector<1x32xf32> to vector<8x32xf32>
    %714 = arith.addf %711, %713 : vector<8x32xf32>
    %cst_59 = arith.constant 0.000000e+00 : f32
    %715 = vector.broadcast %cst_59 : f32 to vector<8x32xf32>
    %716 = arith.maximumf %714, %715 : vector<8x32xf32>
    %c0_60 = arith.constant 0 : index
    %c0_61 = arith.constant 0 : index
    %717 = vector.load %arg12[%c0_60, %c0_61] : memref<32x1xf32, #tpu.memory_space<vmem>>, vector<32x1xf32>
    %cst_62 = arith.constant dense<0.000000e+00> : vector<8x1xf32>
    %718 = tpu.matmul %716, %717, %cst_62 {dimension_numbers = #tpu.dot_dimension_numbers<[1], [0], [0], [1], [0, 0, 1, 1], [], []>} : vector<8x32xf32>, vector<32x1xf32>, vector<8x1xf32> -> vector<8x1xf32>
    %c0_63 = arith.constant 0 : index
    %c0_64 = arith.constant 0 : index
    %719 = vector.load %arg13[%c0_63, %c0_64] : memref<1x1xf32, #tpu.memory_space<vmem>>, vector<1x1xf32>
    %720 = vector.broadcast %719 : vector<1x1xf32> to vector<8x1xf32>
    %721 = arith.addf %718, %720 : vector<8x1xf32>
    %722 = arith.negf %721 : vector<8x1xf32>
    %723 = math.exp %722 : vector<8x1xf32>
    %cst_65 = arith.constant 1.000000e+00 : f32
    %724 = vector.broadcast %cst_65 : f32 to vector<8x1xf32>
    %725 = arith.addf %724, %723 : vector<8x1xf32>
    %726 = arith.divf %724, %725 : vector<8x1xf32>
    %cst_66 = arith.constant 6.000000e+01 : f32
    %727 = vector.broadcast %cst_66 : f32 to vector<8x1xf32>
    %728 = arith.mulf %726, %727 : vector<8x1xf32>
    %c0_67 = arith.constant 0 : index
    %c0_68 = arith.constant 0 : index
    %729 = vector.load %arg22[%c0_67, %c0_68] : memref<8x1xf32, #tpu.memory_space<vmem>>, vector<8x1xf32>
    tpu.vector_store %arg22[%c0_67, %c0_68], %728 {strides = array<i32>} : memref<8x1xf32, #tpu.memory_space<vmem>>, vector<8x1xf32>,
    %c0_69 = arith.constant 0 : index
    %c0_70 = arith.constant 0 : index
    %730 = vector.load %arg14[%c0_69, %c0_70] : memref<96x16xf32, #tpu.memory_space<vmem>>, vector<96x16xf32>
    %cst_71 = arith.constant dense<0.000000e+00> : vector<8x16xf32>
    %731 = tpu.matmul %687, %730, %cst_71 {dimension_numbers = #tpu.dot_dimension_numbers<[1], [0], [0], [1], [0, 0, 1, 1], [], []>} : vector<8x96xf32>, vector<96x16xf32>, vector<8x16xf32> -> vector<8x16xf32>
    %c0_72 = arith.constant 0 : index
    %c0_73 = arith.constant 0 : index
    %732 = vector.load %arg15[%c0_72, %c0_73] : memref<1x16xf32, #tpu.memory_space<vmem>>, vector<1x16xf32>
    %733 = vector.broadcast %732 : vector<1x16xf32> to vector<8x16xf32>
    %734 = arith.addf %731, %733 : vector<8x16xf32>
    %cst_74 = arith.constant 0.000000e+00 : f32
    %735 = vector.broadcast %cst_74 : f32 to vector<8x16xf32>
    %736 = arith.maximumf %734, %735 : vector<8x16xf32>
    %c0_75 = arith.constant 0 : index
    %c0_76 = arith.constant 0 : index
    %737 = vector.load %arg18[%c0_75, %c0_76] : memref<32x128xf32, #tpu.memory_space<vmem>>, vector<32x128xf32>
    %c0_77 = arith.constant 0 : index
    %c0_78 = arith.constant 0 : index
    %738 = vector.load %arg19[%c0_77, %c0_78] : memref<1x32xf32, #tpu.memory_space<vmem>>, vector<1x32xf32>
    %c0_79 = arith.constant 0 : index
    %c0_80 = arith.constant 0 : index
    %739 = vector.load %arg16[%c0_79, %c0_80] : memref<16x128xf32, #tpu.memory_space<vmem>>, vector<16x128xf32>
    %cst_81 = arith.constant dense<0.000000e+00> : vector<8x128xf32>
    %740 = tpu.matmul %736, %739, %cst_81 {dimension_numbers = #tpu.dot_dimension_numbers<[1], [0], [0], [1], [0, 0, 1, 1], [], []>} : vector<8x16xf32>, vector<16x128xf32>, vector<8x128xf32> -> vector<8x128xf32>
    %c0_82 = arith.constant 0 : index
    %c0_83 = arith.constant 0 : index
    %741 = vector.load %arg17[%c0_82, %c0_83] : memref<1x128xf32, #tpu.memory_space<vmem>>, vector<1x128xf32>
    %742 = vector.broadcast %741 : vector<1x128xf32> to vector<8x128xf32>
    %743 = arith.addf %740, %742 : vector<8x128xf32>
    %cst_84 = arith.constant 0.000000e+00 : f32
    %744 = vector.broadcast %cst_84 : f32 to vector<8x32xf32>
    %cst_85 = arith.constant 0.000000e+00 : f32
    %745 = vector.broadcast %cst_85 : f32 to vector<8x32xf32>
    %cst_86 = arith.constant dense<0.000000e+00> : vector<8x128xf32>
    %746 = tpu.matmul %744, %737, %cst_86 {dimension_numbers = #tpu.dot_dimension_numbers<[1], [0], [0], [1], [0, 0, 1, 1], [], []>} : vector<8x32xf32>, vector<32x128xf32>, vector<8x128xf32> -> vector<8x128xf32>
    %747 = arith.addf %743, %746 : vector<8x128xf32>
    %748 = vector.extract_strided_slice %747 {offsets = [0, 0], sizes = [8, 96], strides = [1, 1]} : vector<8x128xf32> to vector<8x96xf32>
    %749 = arith.negf %748 : vector<8x96xf32>
    %750 = math.exp %749 : vector<8x96xf32>
    %cst_87 = arith.constant 1.000000e+00 : f32
    %751 = vector.broadcast %cst_87 : f32 to vector<8x96xf32>
    %752 = arith.addf %751, %750 : vector<8x96xf32>
    %753 = arith.divf %751, %752 : vector<8x96xf32>
    %754 = vector.extract_strided_slice %753 {offsets = [0, 0], sizes = [8, 32], strides = [1, 1]} : vector<8x96xf32> to vector<8x32xf32>
    %755 = vector.extract_strided_slice %753 {offsets = [0, 32], sizes = [8, 32], strides = [1, 1]} : vector<8x96xf32> to vector<8x32xf32>
    %756 = vector.extract_strided_slice %753 {offsets = [0, 64], sizes = [8, 32], strides = [1, 1]} : vector<8x96xf32> to vector<8x32xf32>
    %757 = vector.extract_strided_slice %747 {offsets = [0, 96], sizes = [8, 32], strides = [1, 1]} : vector<8x128xf32> to vector<8x32xf32>
    %758 = math.tanh %757 : vector<8x32xf32>
    %759 = arith.mulf %755, %745 : vector<8x32xf32>
    %760 = arith.mulf %754, %758 : vector<8x32xf32>
    %761 = arith.addf %759, %760 : vector<8x32xf32>
    %762 = math.tanh %761 : vector<8x32xf32>
    %763 = arith.mulf %756, %762 : vector<8x32xf32>
    %cst_88 = arith.constant 0.000000e+00 : f32
    %764 = vector.broadcast %cst_88 : f32 to vector<8x32xf32>
    %765 = arith.maximumf %763, %764 : vector<8x32xf32>
    %766 = vector.broadcast %738 : vector<1x32xf32> to vector<8x32xf32>
    %767 = arith.mulf %765, %766 : vector<8x32xf32>
    %cst_89 = arith.constant dense<0.000000e+00> : vector<8xf32>
    %768 = vector.multi_reduction <add>, %767, %cst_89 [1] : vector<8x32xf32> to vector<8xf32>
    %769 = vector.shape_cast %768 : vector<8xf32> to vector<8x1xf32>
    %cst_90 = arith.constant dense<0.000000e+00> : vector<8x128xf32>
    %770 = tpu.matmul %763, %737, %cst_90 {dimension_numbers = #tpu.dot_dimension_numbers<[1], [0], [0], [1], [0, 0, 1, 1], [], []>} : vector<8x32xf32>, vector<32x128xf32>, vector<8x128xf32> -> vector<8x128xf32>
    %771 = arith.addf %743, %770 : vector<8x128xf32>
    %772 = vector.extract_strided_slice %771 {offsets = [0, 0], sizes = [8, 96], strides = [1, 1]} : vector<8x128xf32> to vector<8x96xf32>
    %773 = arith.negf %772 : vector<8x96xf32>
    %774 = math.exp %773 : vector<8x96xf32>
    %cst_91 = arith.constant 1.000000e+00 : f32
    %775 = vector.broadcast %cst_91 : f32 to vector<8x96xf32>
    %776 = arith.addf %775, %774 : vector<8x96xf32>
    %777 = arith.divf %775, %776 : vector<8x96xf32>
    %778 = vector.extract_strided_slice %777 {offsets = [0, 0], sizes = [8, 32], strides = [1, 1]} : vector<8x96xf32> to vector<8x32xf32>
    %779 = vector.extract_strided_slice %777 {offsets = [0, 32], sizes = [8, 32], strides = [1, 1]} : vector<8x96xf32> to vector<8x32xf32>
    %780 = vector.extract_strided_slice %777 {offsets = [0, 64], sizes = [8, 32], strides = [1, 1]} : vector<8x96xf32> to vector<8x32xf32>
    %781 = vector.extract_strided_slice %771 {offsets = [0, 96], sizes = [8, 32], strides = [1, 1]} : vector<8x128xf32> to vector<8x32xf32>
    %782 = math.tanh %781 : vector<8x32xf32>
    %783 = arith.mulf %779, %761 : vector<8x32xf32>
    %784 = arith.mulf %778, %782 : vector<8x32xf32>
    %785 = arith.addf %783, %784 : vector<8x32xf32>
    %786 = math.tanh %785 : vector<8x32xf32>
    %787 = arith.mulf %780, %786 : vector<8x32xf32>
    %cst_92 = arith.constant 0.000000e+00 : f32
    %788 = vector.broadcast %cst_92 : f32 to vector<8x32xf32>
    %789 = arith.maximumf %787, %788 : vector<8x32xf32>
    %790 = vector.broadcast %738 : vector<1x32xf32> to vector<8x32xf32>
    %791 = arith.mulf %789, %790 : vector<8x32xf32>
    %cst_93 = arith.constant dense<0.000000e+00> : vector<8xf32>
    %792 = vector.multi_reduction <add>, %791, %cst_93 [1] : vector<8x32xf32> to vector<8xf32>
    %793 = vector.shape_cast %792 : vector<8xf32> to vector<8x1xf32>
    %cst_94 = arith.constant dense<0.000000e+00> : vector<8x128xf32>
    %794 = tpu.matmul %787, %737, %cst_94 {dimension_numbers = #tpu.dot_dimension_numbers<[1], [0], [0], [1], [0, 0, 1, 1], [], []>} : vector<8x32xf32>, vector<32x128xf32>, vector<8x128xf32> -> vector<8x128xf32>
    %795 = arith.addf %743, %794 : vector<8x128xf32>
    %796 = vector.extract_strided_slice %795 {offsets = [0, 0], sizes = [8, 96], strides = [1, 1]} : vector<8x128xf32> to vector<8x96xf32>
    %797 = arith.negf %796 : vector<8x96xf32>
    %798 = math.exp %797 : vector<8x96xf32>
    %cst_95 = arith.constant 1.000000e+00 : f32
    %799 = vector.broadcast %cst_95 : f32 to vector<8x96xf32>
    %800 = arith.addf %799, %798 : vector<8x96xf32>
    %801 = arith.divf %799, %800 : vector<8x96xf32>
    %802 = vector.extract_strided_slice %801 {offsets = [0, 0], sizes = [8, 32], strides = [1, 1]} : vector<8x96xf32> to vector<8x32xf32>
    %803 = vector.extract_strided_slice %801 {offsets = [0, 32], sizes = [8, 32], strides = [1, 1]} : vector<8x96xf32> to vector<8x32xf32>
    %804 = vector.extract_strided_slice %801 {offsets = [0, 64], sizes = [8, 32], strides = [1, 1]} : vector<8x96xf32> to vector<8x32xf32>
    %805 = vector.extract_strided_slice %795 {offsets = [0, 96], sizes = [8, 32], strides = [1, 1]} : vector<8x128xf32> to vector<8x32xf32>
    %806 = math.tanh %805 : vector<8x32xf32>
    %807 = arith.mulf %803, %785 : vector<8x32xf32>
    %808 = arith.mulf %802, %806 : vector<8x32xf32>
    %809 = arith.addf %807, %808 : vector<8x32xf32>
    %810 = math.tanh %809 : vector<8x32xf32>
    %811 = arith.mulf %804, %810 : vector<8x32xf32>
    %cst_96 = arith.constant 0.000000e+00 : f32
    %812 = vector.broadcast %cst_96 : f32 to vector<8x32xf32>
    %813 = arith.maximumf %811, %812 : vector<8x32xf32>
    %814 = vector.broadcast %738 : vector<1x32xf32> to vector<8x32xf32>
    %815 = arith.mulf %813, %814 : vector<8x32xf32>
    %cst_97 = arith.constant dense<0.000000e+00> : vector<8xf32>
    %816 = vector.multi_reduction <add>, %815, %cst_97 [1] : vector<8x32xf32> to vector<8xf32>
    %817 = vector.shape_cast %816 : vector<8xf32> to vector<8x1xf32>
    %cst_98 = arith.constant dense<0.000000e+00> : vector<8x128xf32>
    %818 = tpu.matmul %811, %737, %cst_98 {dimension_numbers = #tpu.dot_dimension_numbers<[1], [0], [0], [1], [0, 0, 1, 1], [], []>} : vector<8x32xf32>, vector<32x128xf32>, vector<8x128xf32> -> vector<8x128xf32>
    %819 = arith.addf %743, %818 : vector<8x128xf32>
    %820 = vector.extract_strided_slice %819 {offsets = [0, 0], sizes = [8, 96], strides = [1, 1]} : vector<8x128xf32> to vector<8x96xf32>
    %821 = arith.negf %820 : vector<8x96xf32>
    %822 = math.exp %821 : vector<8x96xf32>
    %cst_99 = arith.constant 1.000000e+00 : f32
    %823 = vector.broadcast %cst_99 : f32 to vector<8x96xf32>
    %824 = arith.addf %823, %822 : vector<8x96xf32>
    %825 = arith.divf %823, %824 : vector<8x96xf32>
    %826 = vector.extract_strided_slice %825 {offsets = [0, 0], sizes = [8, 32], strides = [1, 1]} : vector<8x96xf32> to vector<8x32xf32>
    %827 = vector.extract_strided_slice %825 {offsets = [0, 32], sizes = [8, 32], strides = [1, 1]} : vector<8x96xf32> to vector<8x32xf32>
    %828 = vector.extract_strided_slice %825 {offsets = [0, 64], sizes = [8, 32], strides = [1, 1]} : vector<8x96xf32> to vector<8x32xf32>
    %829 = vector.extract_strided_slice %819 {offsets = [0, 96], sizes = [8, 32], strides = [1, 1]} : vector<8x128xf32> to vector<8x32xf32>
    %830 = math.tanh %829 : vector<8x32xf32>
    %831 = arith.mulf %827, %809 : vector<8x32xf32>
    %832 = arith.mulf %826, %830 : vector<8x32xf32>
    %833 = arith.addf %831, %832 : vector<8x32xf32>
    %834 = math.tanh %833 : vector<8x32xf32>
    %835 = arith.mulf %828, %834 : vector<8x32xf32>
    %cst_100 = arith.constant 0.000000e+00 : f32
    %836 = vector.broadcast %cst_100 : f32 to vector<8x32xf32>
    %837 = arith.maximumf %835, %836 : vector<8x32xf32>
    %838 = vector.broadcast %738 : vector<1x32xf32> to vector<8x32xf32>
    %839 = arith.mulf %837, %838 : vector<8x32xf32>
    %cst_101 = arith.constant dense<0.000000e+00> : vector<8xf32>
    %840 = vector.multi_reduction <add>, %839, %cst_101 [1] : vector<8x32xf32> to vector<8xf32>
    %841 = vector.shape_cast %840 : vector<8xf32> to vector<8x1xf32>
    %cst_102 = arith.constant dense<0.000000e+00> : vector<8x128xf32>
    %842 = tpu.matmul %835, %737, %cst_102 {dimension_numbers = #tpu.dot_dimension_numbers<[1], [0], [0], [1], [0, 0, 1, 1], [], []>} : vector<8x32xf32>, vector<32x128xf32>, vector<8x128xf32> -> vector<8x128xf32>
    %843 = arith.addf %743, %842 : vector<8x128xf32>
    %844 = vector.extract_strided_slice %843 {offsets = [0, 0], sizes = [8, 96], strides = [1, 1]} : vector<8x128xf32> to vector<8x96xf32>
    %845 = arith.negf %844 : vector<8x96xf32>
    %846 = math.exp %845 : vector<8x96xf32>
    %cst_103 = arith.constant 1.000000e+00 : f32
    %847 = vector.broadcast %cst_103 : f32 to vector<8x96xf32>
    %848 = arith.addf %847, %846 : vector<8x96xf32>
    %849 = arith.divf %847, %848 : vector<8x96xf32>
    %850 = vector.extract_strided_slice %849 {offsets = [0, 0], sizes = [8, 32], strides = [1, 1]} : vector<8x96xf32> to vector<8x32xf32>
    %851 = vector.extract_strided_slice %849 {offsets = [0, 32], sizes = [8, 32], strides = [1, 1]} : vector<8x96xf32> to vector<8x32xf32>
    %852 = vector.extract_strided_slice %849 {offsets = [0, 64], sizes = [8, 32], strides = [1, 1]} : vector<8x96xf32> to vector<8x32xf32>
    %853 = vector.extract_strided_slice %843 {offsets = [0, 96], sizes = [8, 32], strides = [1, 1]} : vector<8x128xf32> to vector<8x32xf32>
    %854 = math.tanh %853 : vector<8x32xf32>
    %855 = arith.mulf %851, %833 : vector<8x32xf32>
    %856 = arith.mulf %850, %854 : vector<8x32xf32>
    %857 = arith.addf %855, %856 : vector<8x32xf32>
    %858 = math.tanh %857 : vector<8x32xf32>
    %859 = arith.mulf %852, %858 : vector<8x32xf32>
    %cst_104 = arith.constant 0.000000e+00 : f32
    %860 = vector.broadcast %cst_104 : f32 to vector<8x32xf32>
    %861 = arith.maximumf %859, %860 : vector<8x32xf32>
    %862 = vector.broadcast %738 : vector<1x32xf32> to vector<8x32xf32>
    %863 = arith.mulf %861, %862 : vector<8x32xf32>
    %cst_105 = arith.constant dense<0.000000e+00> : vector<8xf32>
    %864 = vector.multi_reduction <add>, %863, %cst_105 [1] : vector<8x32xf32> to vector<8xf32>
    %865 = vector.shape_cast %864 : vector<8xf32> to vector<8x1xf32>
    %cst_106 = arith.constant dense<0.000000e+00> : vector<8x128xf32>
    %866 = tpu.matmul %859, %737, %cst_106 {dimension_numbers = #tpu.dot_dimension_numbers<[1], [0], [0], [1], [0, 0, 1, 1], [], []>} : vector<8x32xf32>, vector<32x128xf32>, vector<8x128xf32> -> vector<8x128xf32>
    %867 = arith.addf %743, %866 : vector<8x128xf32>
    %868 = vector.extract_strided_slice %867 {offsets = [0, 0], sizes = [8, 96], strides = [1, 1]} : vector<8x128xf32> to vector<8x96xf32>
    %869 = arith.negf %868 : vector<8x96xf32>
    %870 = math.exp %869 : vector<8x96xf32>
    %cst_107 = arith.constant 1.000000e+00 : f32
    %871 = vector.broadcast %cst_107 : f32 to vector<8x96xf32>
    %872 = arith.addf %871, %870 : vector<8x96xf32>
    %873 = arith.divf %871, %872 : vector<8x96xf32>
    %874 = vector.extract_strided_slice %873 {offsets = [0, 0], sizes = [8, 32], strides = [1, 1]} : vector<8x96xf32> to vector<8x32xf32>
    %875 = vector.extract_strided_slice %873 {offsets = [0, 32], sizes = [8, 32], strides = [1, 1]} : vector<8x96xf32> to vector<8x32xf32>
    %876 = vector.extract_strided_slice %873 {offsets = [0, 64], sizes = [8, 32], strides = [1, 1]} : vector<8x96xf32> to vector<8x32xf32>
    %877 = vector.extract_strided_slice %867 {offsets = [0, 96], sizes = [8, 32], strides = [1, 1]} : vector<8x128xf32> to vector<8x32xf32>
    %878 = math.tanh %877 : vector<8x32xf32>
    %879 = arith.mulf %875, %857 : vector<8x32xf32>
    %880 = arith.mulf %874, %878 : vector<8x32xf32>
    %881 = arith.addf %879, %880 : vector<8x32xf32>
    %882 = math.tanh %881 : vector<8x32xf32>
    %883 = arith.mulf %876, %882 : vector<8x32xf32>
    %cst_108 = arith.constant 0.000000e+00 : f32
    %884 = vector.broadcast %cst_108 : f32 to vector<8x32xf32>
    %885 = arith.maximumf %883, %884 : vector<8x32xf32>
    %886 = vector.broadcast %738 : vector<1x32xf32> to vector<8x32xf32>
    %887 = arith.mulf %885, %886 : vector<8x32xf32>
    %cst_109 = arith.constant dense<0.000000e+00> : vector<8xf32>
    %888 = vector.multi_reduction <add>, %887, %cst_109 [1] : vector<8x32xf32> to vector<8xf32>
    %889 = vector.shape_cast %888 : vector<8xf32> to vector<8x1xf32>
    %cst_110 = arith.constant dense<0.000000e+00> : vector<8x128xf32>
    %890 = tpu.matmul %883, %737, %cst_110 {dimension_numbers = #tpu.dot_dimension_numbers<[1], [0], [0], [1], [0, 0, 1, 1], [], []>} : vector<8x32xf32>, vector<32x128xf32>, vector<8x128xf32> -> vector<8x128xf32>
    %891 = arith.addf %743, %890 : vector<8x128xf32>
    %892 = vector.extract_strided_slice %891 {offsets = [0, 0], sizes = [8, 96], strides = [1, 1]} : vector<8x128xf32> to vector<8x96xf32>
    %893 = arith.negf %892 : vector<8x96xf32>
    %894 = math.exp %893 : vector<8x96xf32>
    %cst_111 = arith.constant 1.000000e+00 : f32
    %895 = vector.broadcast %cst_111 : f32 to vector<8x96xf32>
    %896 = arith.addf %895, %894 : vector<8x96xf32>
    %897 = arith.divf %895, %896 : vector<8x96xf32>
    %898 = vector.extract_strided_slice %897 {offsets = [0, 0], sizes = [8, 32], strides = [1, 1]} : vector<8x96xf32> to vector<8x32xf32>
    %899 = vector.extract_strided_slice %897 {offsets = [0, 32], sizes = [8, 32], strides = [1, 1]} : vector<8x96xf32> to vector<8x32xf32>
    %900 = vector.extract_strided_slice %897 {offsets = [0, 64], sizes = [8, 32], strides = [1, 1]} : vector<8x96xf32> to vector<8x32xf32>
    %901 = vector.extract_strided_slice %891 {offsets = [0, 96], sizes = [8, 32], strides = [1, 1]} : vector<8x128xf32> to vector<8x32xf32>
    %902 = math.tanh %901 : vector<8x32xf32>
    %903 = arith.mulf %899, %881 : vector<8x32xf32>
    %904 = arith.mulf %898, %902 : vector<8x32xf32>
    %905 = arith.addf %903, %904 : vector<8x32xf32>
    %906 = math.tanh %905 : vector<8x32xf32>
    %907 = arith.mulf %900, %906 : vector<8x32xf32>
    %cst_112 = arith.constant 0.000000e+00 : f32
    %908 = vector.broadcast %cst_112 : f32 to vector<8x32xf32>
    %909 = arith.maximumf %907, %908 : vector<8x32xf32>
    %910 = vector.broadcast %738 : vector<1x32xf32> to vector<8x32xf32>
    %911 = arith.mulf %909, %910 : vector<8x32xf32>
    %cst_113 = arith.constant dense<0.000000e+00> : vector<8xf32>
    %912 = vector.multi_reduction <add>, %911, %cst_113 [1] : vector<8x32xf32> to vector<8xf32>
    %913 = vector.shape_cast %912 : vector<8xf32> to vector<8x1xf32>
    %cst_114 = arith.constant dense<0.000000e+00> : vector<8x128xf32>
    %914 = tpu.matmul %907, %737, %cst_114 {dimension_numbers = #tpu.dot_dimension_numbers<[1], [0], [0], [1], [0, 0, 1, 1], [], []>} : vector<8x32xf32>, vector<32x128xf32>, vector<8x128xf32> -> vector<8x128xf32>
    %915 = arith.addf %743, %914 : vector<8x128xf32>
    %916 = vector.extract_strided_slice %915 {offsets = [0, 0], sizes = [8, 96], strides = [1, 1]} : vector<8x128xf32> to vector<8x96xf32>
    %917 = arith.negf %916 : vector<8x96xf32>
    %918 = math.exp %917 : vector<8x96xf32>
    %cst_115 = arith.constant 1.000000e+00 : f32
    %919 = vector.broadcast %cst_115 : f32 to vector<8x96xf32>
    %920 = arith.addf %919, %918 : vector<8x96xf32>
    %921 = arith.divf %919, %920 : vector<8x96xf32>
    %922 = vector.extract_strided_slice %921 {offsets = [0, 0], sizes = [8, 32], strides = [1, 1]} : vector<8x96xf32> to vector<8x32xf32>
    %923 = vector.extract_strided_slice %921 {offsets = [0, 32], sizes = [8, 32], strides = [1, 1]} : vector<8x96xf32> to vector<8x32xf32>
    %924 = vector.extract_strided_slice %921 {offsets = [0, 64], sizes = [8, 32], strides = [1, 1]} : vector<8x96xf32> to vector<8x32xf32>
    %925 = vector.extract_strided_slice %915 {offsets = [0, 96], sizes = [8, 32], strides = [1, 1]} : vector<8x128xf32> to vector<8x32xf32>
    %926 = math.tanh %925 : vector<8x32xf32>
    %927 = arith.mulf %923, %905 : vector<8x32xf32>
    %928 = arith.mulf %922, %926 : vector<8x32xf32>
    %929 = arith.addf %927, %928 : vector<8x32xf32>
    %930 = math.tanh %929 : vector<8x32xf32>
    %931 = arith.mulf %924, %930 : vector<8x32xf32>
    %cst_116 = arith.constant 0.000000e+00 : f32
    %932 = vector.broadcast %cst_116 : f32 to vector<8x32xf32>
    %933 = arith.maximumf %931, %932 : vector<8x32xf32>
    %934 = vector.broadcast %738 : vector<1x32xf32> to vector<8x32xf32>
    %935 = arith.mulf %933, %934 : vector<8x32xf32>
    %cst_117 = arith.constant dense<0.000000e+00> : vector<8xf32>
    %936 = vector.multi_reduction <add>, %935, %cst_117 [1] : vector<8x32xf32> to vector<8xf32>
    %937 = vector.shape_cast %936 : vector<8xf32> to vector<8x1xf32>
    %938 = tpu.concatenate %769, %793, %817, %841, %865, %889, %913, %937 in 1 : vector<8x1xf32>, vector<8x1xf32>, vector<8x1xf32>, vector<8x1xf32>, vector<8x1xf32>, vector<8x1xf32>, vector<8x1xf32>, vector<8x1xf32> -> vector<8x8xf32>
    %c0_118 = arith.constant 0 : index
    %c0_119 = arith.constant 0 : index
    %939 = vector.load %arg20[%c0_118, %c0_119] : memref<1x1xf32, #tpu.memory_space<vmem>>, vector<1x1xf32>
    %940 = vector.broadcast %939 : vector<1x1xf32> to vector<8x8xf32>
    %941 = arith.addf %938, %940 : vector<8x8xf32>
    %942 = math.tanh %941 : vector<8x8xf32>
    %cst_120 = arith.constant 1.000000e+01 : f32
    %943 = vector.broadcast %cst_120 : f32 to vector<8x8xf32>
    %944 = arith.mulf %942, %943 : vector<8x8xf32>
    %c0_121 = arith.constant 0 : index
    %c0_122 = arith.constant 0 : index
    %945 = vector.load %arg23[%c0_121, %c0_122] : memref<8x8xf32, #tpu.memory_space<vmem>>, vector<8x8xf32>
    tpu.vector_store %arg23[%c0_121, %c0_122], %944 {strides = array<i32>} : memref<8x8xf32, #tpu.memory_space<vmem>>, vector<8x8xf32>,
    return
  }
}

</mosaic_0001>

<llo_original>
// kernel: forward.1
$region0: #{forward.1}
  #allocation0 [shape = 'u32[]', space=smem, size = 0x4, offset = 0x4, fixed_abs, tag = 'smem constant byte address 0x4 - core index']
  #allocation1 [shape = 'u32[144,128]{1,0:T(1,128)}', space=vmem, size = 0x12000, scoped, tag = 'internal scratch']
  #allocation2 [shape = 'f32[1,1]{1,0:T(1,128)S(1)}', space=vmem, size = 0x200, scoped, tag = 'scoped memory for forward.1']
  #allocation3 [shape = 'f32[1,1]{1,0:T(1,128)S(1)}', space=vmem, size = 0x200, scoped, tag = 'scoped memory for forward.1']
  %s0 = inlined_call_operand.vmem [shape: f32[8,8,2], index: 0, kind: input, shape index: {}]
  %s1 = inlined_call_operand.vmem [shape: f32[8,12,2], index: 1, kind: input, shape index: {}]
  %s2 = inlined_call_operand.vmem [shape: f32[8,12,2], index: 2, kind: input, shape index: {}]
  %s3 = inlined_call_operand.vmem [shape: f32[6,384], index: 3, kind: input, shape index: {}]
  %s4 = inlined_call_operand.vmem [shape: f32[1,384], index: 4, kind: input, shape index: {}]
  %s5 = inlined_call_operand.vmem [shape: f32[96,384], index: 5, kind: input, shape index: {}]
  %s6 = inlined_call_operand.vmem [shape: f32[96,32], index: 6, kind: input, shape index: {}]
  %s7 = inlined_call_operand.vmem [shape: f32[1,32], index: 7, kind: input, shape index: {}]
  %s8 = inlined_call_operand.vmem [shape: f32[32,4], index: 8, kind: input, shape index: {}]
  %s9 = inlined_call_operand.vmem [shape: f32[1,4], index: 9, kind: input, shape index: {}]
  %s10 = inlined_call_operand.vmem [shape: f32[32,32], index: 10, kind: input, shape index: {}]
  %s11 = inlined_call_operand.vmem [shape: f32[1,32], index: 11, kind: input, shape index: {}]
  %s12 = inlined_call_operand.vmem [shape: f32[32,1], index: 12, kind: input, shape index: {}]
  %s13 = inlined_call_operand.<no memory space> [shape: f32[1,1], index: 13, kind: input, shape index: {}]
  %s14 = inlined_call_operand.vmem [shape: f32[96,16], index: 14, kind: input, shape index: {}]
  %s15 = inlined_call_operand.vmem [shape: f32[1,16], index: 15, kind: input, shape index: {}]
  %s16 = inlined_call_operand.vmem [shape: f32[16,128], index: 16, kind: input, shape index: {}]
  %s17 = inlined_call_operand.vmem [shape: f32[1,128], index: 17, kind: input, shape index: {}]
  %s18 = inlined_call_operand.vmem [shape: f32[32,128], index: 18, kind: input, shape index: {}]
  %s19 = inlined_call_operand.vmem [shape: f32[1,32], index: 19, kind: input, shape index: {}]
  %s20 = inlined_call_operand.<no memory space> [shape: f32[1,1], index: 20, kind: input, shape index: {}]
  %s21 = inlined_call_operand.vmem [shape: f32[8,4], index: 21, kind: output, shape index: {0}]
  %s22 = inlined_call_operand.vmem [shape: f32[8,1], index: 22, kind: output, shape index: {1}]
  %s23 = inlined_call_operand.hbm [shape: f32[8,8], index: 23, kind: output, shape index: {2}]
  %24 = xla_tuple %s21, %s22, %s23
  %s25 = sld [smem:[#allocation0]]
  $region110: #{forward.1} parent=0
    _
  %s27 = ssub.s32 1, %s25
  %s28 = scalar_select 0, %s27, %s25
  %v29 = vstv %s13
  %30 = vst [vmem:[#allocation2] sm:$0x1] %v29
  %v31 = vstv %s20
  %32 = vst [vmem:[#allocation3] sm:$0x1] %v31
  $region1: #{forward.1} parent=0
    #allocation4 [shape = 'u8[4096]{0}', space=vmem, size = 0x1000, scoped, tag = 'output window, operand 2, single buffered']
    #allocation5 [shape = 's32[1]{0}', space=sflag, size = 0x4, scoped, tag = 'scoped memory for forward.1']
    %33 = vsyncpa [#allocation5], 0
    // Predicated region
    $region2: #{forward.1} parent=1 // pred_check
      _
    $region3: #{forward.1} parent=1 // pred_check_branch
      %35 = sbr.rel (0) target = $region5
    $region4: #{forward.1} parent=1 // pred_region
      _
    $region5: #{forward.1} parent=1 // pred_fallthru
      _
    // Predicated region
    $region6: #{forward.1} parent=1 // pred_check
      _
    $region7: #{forward.1} parent=1 // pred_check_branch
      %37 = sbr.rel (0) target = $region9
    $region8: #{forward.1} parent=1 // pred_region
      _
    $region9: #{forward.1} parent=1 // pred_fallthru
      _
    // Predicated region
    $region10: #{forward.1} parent=1 // pred_check
      _
    $region11: #{forward.1} parent=1 // pred_check_branch
      %39 = sbr.rel (0) target = $region13
    $region12: #{forward.1} parent=1 // pred_region
      _
    $region13: #{forward.1} parent=1 // pred_fallthru
      _
    // Predicated region
    $region14: #{forward.1} parent=1 // pred_check
      _
    $region15: #{forward.1} parent=1 // pred_check_branch
      %41 = sbr.rel (0) target = $region17
    $region16: #{forward.1} parent=1 // pred_region
      _
    $region17: #{forward.1} parent=1 // pred_fallthru
      _
    // Predicated region
    $region18: #{forward.1} parent=1 // pred_check
      _
    $region19: #{forward.1} parent=1 // pred_check_branch
      %43 = sbr.rel (0) target = $region21
    $region20: #{forward.1} parent=1 // pred_region
      _
    $region21: #{forward.1} parent=1 // pred_fallthru
      _
    // Predicated region
    $region22: #{forward.1} parent=1 // pred_check
      _
    $region23: #{forward.1} parent=1 // pred_check_branch
      %45 = sbr.rel (0) target = $region25
    $region24: #{forward.1} parent=1 // pred_region
      _
    $region25: #{forward.1} parent=1 // pred_fallthru
      _
    // Predicated region
    $region26: #{forward.1} parent=1 // pred_check
      _
    $region27: #{forward.1} parent=1 // pred_check_branch
      %47 = sbr.rel (0) target = $region29
    $region28: #{forward.1} parent=1 // pred_region
      _
    $region29: #{forward.1} parent=1 // pred_fallthru
      _
    // Predicated region
    $region30: #{forward.1} parent=1 // pred_check
      _
    $region31: #{forward.1} parent=1 // pred_check_branch
      %49 = sbr.rel (0) target = $region33
    $region32: #{forward.1} parent=1 // pred_region
      _
    $region33: #{forward.1} parent=1 // pred_fallthru
      _
    // Predicated region
    $region34: #{forward.1} parent=1 // pred_check
      _
    $region35: #{forward.1} parent=1 // pred_check_branch
      %51 = sbr.rel (0) target = $region37
    $region36: #{forward.1} parent=1 // pred_region
      _
    $region37: #{forward.1} parent=1 // pred_fallthru
      _
    // Predicated region
    $region38: #{forward.1} parent=1 // pred_check
      _
    $region39: #{forward.1} parent=1 // pred_check_branch
      %53 = sbr.rel (0) target = $region41
    $region40: #{forward.1} parent=1 // pred_region
      _
    $region41: #{forward.1} parent=1 // pred_fallthru
      _
    // Predicated region
    $region42: #{forward.1} parent=1 // pred_check
      _
    $region43: #{forward.1} parent=1 // pred_check_branch
      %55 = sbr.rel (0) target = $region45
    $region44: #{forward.1} parent=1 // pred_region
      _
    $region45: #{forward.1} parent=1 // pred_fallthru
      _
    // Predicated region
    $region46: #{forward.1} parent=1 // pred_check
      _
    $region47: #{forward.1} parent=1 // pred_check_branch
      %57 = sbr.rel (0) target = $region49
    $region48: #{forward.1} parent=1 // pred_region
      _
    $region49: #{forward.1} parent=1 // pred_fallthru
      _
    // Predicated region
    $region50: #{forward.1} parent=1 // pred_check
      _
    $region51: #{forward.1} parent=1 // pred_check_branch
      %59 = sbr.rel (0) target = $region53
    $region52: #{forward.1} parent=1 // pred_region
      _
    $region53: #{forward.1} parent=1 // pred_fallthru
      _
    // Predicated region
    $region54: #{forward.1} parent=1 // pred_check
      _
    $region55: #{forward.1} parent=1 // pred_check_branch
      %61 = sbr.rel (0) target = $region57
    $region56: #{forward.1} parent=1 // pred_region
      _
    $region57: #{forward.1} parent=1 // pred_fallthru
      _
    // Predicated region
    $region58: #{forward.1} parent=1 // pred_check
      _
    $region59: #{forward.1} parent=1 // pred_check_branch
      %63 = sbr.rel (0) target = $region61
    $region60: #{forward.1} parent=1 // pred_region
      _
    $region61: #{forward.1} parent=1 // pred_fallthru
      _
    // Predicated region
    $region62: #{forward.1} parent=1 // pred_check
      _
    $region63: #{forward.1} parent=1 // pred_check_branch
      %65 = sbr.rel (0) target = $region65
    $region64: #{forward.1} parent=1 // pred_region
      _
    $region65: #{forward.1} parent=1 // pred_fallthru
      _
    // Predicated region
    $region66: #{forward.1} parent=1 // pred_check
      _
    $region67: #{forward.1} parent=1 // pred_check_branch
      %67 = sbr.rel (0) target = $region69
    $region68: #{forward.1} parent=1 // pred_region
      _
    $region69: #{forward.1} parent=1 // pred_fallthru
      _
    // Predicated region
    $region70: #{forward.1} parent=1 // pred_check
      _
    $region71: #{forward.1} parent=1 // pred_check_branch
      %69 = sbr.rel (0) target = $region73
    $region72: #{forward.1} parent=1 // pred_region
      _
    $region73: #{forward.1} parent=1 // pred_fallthru
      _
    // Predicated region
    $region74: #{forward.1} parent=1 // pred_check
      _
    $region75: #{forward.1} parent=1 // pred_check_branch
      %71 = sbr.rel (0) target = $region77
    $region76: #{forward.1} parent=1 // pred_region
      _
    $region77: #{forward.1} parent=1 // pred_fallthru
      _
    // Predicated region
    $region78: #{forward.1} parent=1 // pred_check
      _
    $region79: #{forward.1} parent=1 // pred_check_branch
      %73 = sbr.rel (0) target = $region81
    $region80: #{forward.1} parent=1 // pred_region
      _
    $region81: #{forward.1} parent=1 // pred_fallthru
      _
    // Predicated region
    $region82: #{forward.1} parent=1 // pred_check
      _
    $region83: #{forward.1} parent=1 // pred_check_branch
      %75 = sbr.rel (0) target = $region85
    $region84: #{forward.1} parent=1 // pred_region
      _
    $region85: #{forward.1} parent=1 // pred_fallthru
      _
    %v76 = vld [vmem:[%s0] sm:$0xff]
    %v77 = vld [vmem:[%s0 + $0x8] sm:$0xff]
    %v78 = vld [vmem:[%s0 + $0x10] sm:$0xff]
    %v79 = vld [vmem:[%s0 + $0x18] sm:$0xff]
    %v80 = vld [vmem:[%s0 + $0x20] sm:$0xff]
    %v81 = vld [vmem:[%s0 + $0x28] sm:$0xff]
    %v82 = vld [vmem:[%s0 + $0x30] sm:$0xff]
    %v83 = vld [vmem:[%s0 + $0x38] sm:$0xff]
    %v84 = vld [vmem:[%s1] sm:$0xff]
    %v85 = vld [vmem:[%s1 + $0x8] sm:$0xf]
    %v86 = vld [vmem:[%s1 + $0x10] sm:$0xff]
    %v87 = vld [vmem:[%s1 + $0x18] sm:$0xf]
    %v88 = vld [vmem:[%s1 + $0x20] sm:$0xff]
    %v89 = vld [vmem:[%s1 + $0x28] sm:$0xf]
    %v90 = vld [vmem:[%s1 + $0x30] sm:$0xff]
    %v91 = vld [vmem:[%s1 + $0x38] sm:$0xf]
    %v92 = vld [vmem:[%s1 + $0x40] sm:$0xff]
    %v93 = vld [vmem:[%s1 + $0x48] sm:$0xf]
    %v94 = vld [vmem:[%s1 + $0x50] sm:$0xff]
    %v95 = vld [vmem:[%s1 + $0x58] sm:$0xf]
    %v96 = vld [vmem:[%s1 + $0x60] sm:$0xff]
    %v97 = vld [vmem:[%s1 + $0x68] sm:$0xf]
    %v98 = vld [vmem:[%s1 + $0x70] sm:$0xff]
    %v99 = vld [vmem:[%s1 + $0x78] sm:$0xf]
    %v100 = vld [vmem:[%s2] sm:$0xff]
    %v101 = vld [vmem:[%s2 + $0x8] sm:$0xf]
    %v102 = vld [vmem:[%s2 + $0x10] sm:$0xff]
    %v103 = vld [vmem:[%s2 + $0x18] sm:$0xf]
    %v104 = vld [vmem:[%s2 + $0x20] sm:$0xff]
    %v105 = vld [vmem:[%s2 + $0x28] sm:$0xf]
    %v106 = vld [vmem:[%s2 + $0x30] sm:$0xff]
    %v107 = vld [vmem:[%s2 + $0x38] sm:$0xf]
    %v108 = vld [vmem:[%s2 + $0x40] sm:$0xff]
    %v109 = vld [vmem:[%s2 + $0x48] sm:$0xf]
    %v110 = vld [vmem:[%s2 + $0x50] sm:$0xff]
    %v111 = vld [vmem:[%s2 + $0x58] sm:$0xf]
    %v112 = vld [vmem:[%s2 + $0x60] sm:$0xff]
    %v113 = vld [vmem:[%s2 + $0x68] sm:$0xf]
    %v114 = vld [vmem:[%s2 + $0x70] sm:$0xff]
    %v115 = vld [vmem:[%s2 + $0x78] sm:$0xf]
    %v116 = vld [vmem:[%s3] sm:$0x3f]
    %v117 = vld [vmem:[%s3 + $0x8] sm:$0x3f]
    %v118 = vld [vmem:[%s3 + $0x10] sm:$0x3f]
    %v119 = vld [vmem:[%s4] sm:$0x7]
    %v120 = vld [vmem:[%s5] sm:$0xff]
    %v121 = vld [vmem:[%s5 + $0x8] sm:$0xff]
    %v122 = vld [vmem:[%s5 + $0x10] sm:$0xff]
    %v123 = vld [vmem:[%s5 + $0x18] sm:$0xff]
    %v124 = vld [vmem:[%s5 + $0x20] sm:$0xff]
    %v125 = vld [vmem:[%s5 + $0x28] sm:$0xff]
    %v126 = vld [vmem:[%s5 + $0x30] sm:$0xff]
    %v127 = vld [vmem:[%s5 + $0x38] sm:$0xff]
    %v128 = vld [vmem:[%s5 + $0x40] sm:$0xff]
    %v129 = vld [vmem:[%s5 + $0x48] sm:$0xff]
    %v130 = vld [vmem:[%s5 + $0x50] sm:$0xff]
    %v131 = vld [vmem:[%s5 + $0x58] sm:$0xff]
    %v132 = vld [vmem:[%s5 + $0x60] sm:$0xff]
    %v133 = vld [vmem:[%s5 + $0x68] sm:$0xff]
    %v134 = vld [vmem:[%s5 + $0x70] sm:$0xff]
    %v135 = vld [vmem:[%s5 + $0x78] sm:$0xff]
    %v136 = vld [vmem:[%s5 + $0x80] sm:$0xff]
    %v137 = vld [vmem:[%s5 + $0x88] sm:$0xff]
    %v138 = vld [vmem:[%s5 + $0x90] sm:$0xff]
    %v139 = vld [vmem:[%s5 + $0x98] sm:$0xff]
    %v140 = vld [vmem:[%s5 + $0xa0] sm:$0xff]
    %v141 = vld [vmem:[%s5 + $0xa8] sm:$0xff]
    %v142 = vld [vmem:[%s5 + $0xb0] sm:$0xff]
    %v143 = vld [vmem:[%s5 + $0xb8] sm:$0xff]
    %v144 = vld [vmem:[%s5 + $0xc0] sm:$0xff]
    %v145 = vld [vmem:[%s5 + $0xc8] sm:$0xff]
    %v146 = vld [vmem:[%s5 + $0xd0] sm:$0xff]
    %v147 = vld [vmem:[%s5 + $0xd8] sm:$0xff]
    %v148 = vld [vmem:[%s5 + $0xe0] sm:$0xff]
    %v149 = vld [vmem:[%s5 + $0xe8] sm:$0xff]
    %v150 = vld [vmem:[%s5 + $0xf0] sm:$0xff]
    %v151 = vld [vmem:[%s5 + $0xf8] sm:$0xff]
    %v152 = vld [vmem:[%s5 + $0x100] sm:$0xff]
    %v153 = vld [vmem:[%s5 + $0x108] sm:$0xff]
    %v154 = vld [vmem:[%s5 + $0x110] sm:$0xff]
    %v155 = vld [vmem:[%s5 + $0x118] sm:$0xff]
    %v157 = vlaneseq
    %v158 = vshrl.u32 %v157, 7
    %v159 = vsub.s32 0, %v158
    %v160 = vrot.slane %v119, %v159
    %v161 = vlaneseq
    %v162 = vshrl.u32 %v161, 7
    %v163 = vsub.s32 1, %v162
    %v164 = vrot.slane %v119, %v163
    %v165 = vlaneseq
    %v166 = vshrl.u32 %v165, 7
    %v167 = vsub.s32 2, %v166
    %v168 = vrot.slane %v119, %v167
    %vm172 = vcmask 785408
    %v174 = vsel %vm172, 0.0, 0
    %176 = vmatprep.subr.mxu0 0.0
    %177 = vmatpush1.msra.mxu0 0.0
    %178 = vmatprep.subr.mxu0 0.0
    %179 = vmatpush1.msra.mxu0 0.0
    %180 = vmatprep.subr.mxu0 0.0
    %181 = vmatpush1.msra.mxu0 0.0
    %182 = vmatprep.subr.mxu0 0.0
    %183 = vmatpush1.msra.mxu0 0.0
    %184 = vmatprep.subr.mxu0 %v154
    %185 = vmatpush1.msra.mxu0 %v153
    %186 = vmatprep.subr.mxu0 %v151
    %187 = vmatpush1.msra.mxu0 %v150
    %188 = vmatprep.subr.mxu0 %v148
    %189 = vmatpush1.msra.mxu0 %v147
    %190 = vmatprep.subr.mxu0 %v145
    %191 = vmatpush1.msra.mxu0 %v144
    %192 = vmatprep.subr.mxu0 %v142
    %193 = vmatpush1.msra.mxu0 %v141
    %194 = vmatprep.subr.mxu0 %v139
    %195 = vmatpush1.msra.mxu0 %v138
    %196 = vmatprep.subr.mxu0 %v136
    %197 = vmatpush1.msra.mxu0 %v135
    %198 = vmatprep.subr.mxu0 %v133
    %199 = vmatpush1.msra.mxu0 %v132
    %200 = vmatprep.subr.mxu0 %v130
    %201 = vmatpush1.msra.mxu0 %v129
    %202 = vmatprep.subr.mxu0 %v127
    %203 = vmatpush1.msra.mxu0 %v126
    %204 = vmatprep.subr.mxu0 %v124
    %205 = vmatpush1.msra.mxu0 %v123
    %206 = vmatprep.subr.mxu0 %v121
    %207 = vmatpush1.msra.mxu0 %v120
    %208 = vmatprep.subr.mxu0 0.0
    %209 = vmatpush2.msra.mxu0 0.0
    %210 = vmatprep.subr.mxu0 0.0
    %211 = vmatpush2.msra.mxu0 0.0
    %212 = vmatprep.subr.mxu0 0.0
    %213 = vmatpush2.msra.mxu0 0.0
    %214 = vmatprep.subr.mxu0 0.0
    %215 = vmatpush2.msra.mxu0 0.0
    %216 = vmatprep.subr.mxu0 0.0
    %217 = vmatpush2.msra.mxu0 0.0
    %218 = vmatprep.subr.mxu0 0.0
    %219 = vmatpush2.msra.mxu0 0.0
    %220 = vmatprep.subr.mxu0 0.0
    %221 = vmatpush2.msra.mxu0 0.0
    %222 = vmatprep.subr.mxu0 0.0
    %223 = vmatpush2.msra.mxu0 0.0
    %224 = vmatprep.subr.mxu0 0.0
    %225 = vmatpush2.msra.mxu0 0.0
    %226 = vmatprep.subr.mxu0 0.0
    %227 = vmatpush2.msra.mxu0 0.0
    %228 = vmatprep.subr.mxu0 0.0
    %229 = vmatpush2.msra.mxu0 0.0
    %230 = vmatprep.subr.mxu0 0.0
    %231 = vmatpush2.msra.mxu0 0.0
    %232 = vmatprep.subr.mxu0 0.0
    %233 = vmatpush2.msra.mxu0 0.0
    %234 = vmatprep.subr.mxu0 0.0
    %235 = vmatpush2.msra.mxu0 0.0
    %236 = vmatprep.subr.mxu0 0.0
    %237 = vmatpush2.msra.mxu0 0.0
    %238 = vmatprep.subr.mxu0 0.0
    %239 = vmatpush2.msra.mxu0 0.0
    %240 = vmatprep.mubr.f32.mxu0 0.0
    %241 = vmatmul.mubr.f32.gmra.mxu0 %v174
    %v242 = vpop.f32.mrf.mxu0
    %v243 = vadd.f32 %v160, %v242
    %v244 = vpop.f32.mrf.mxu0
    %v245 = vadd.f32 %v164, %v244
    %246 = vdwg.mxu0
    %247 = vmatprep.subr.mxu0 0.0
    %248 = vmatpush1.msra.mxu0 0.0
    %249 = vmatprep.subr.mxu0 0.0
    %250 = vmatpush1.msra.mxu0 0.0
    %251 = vmatprep.subr.mxu0 0.0
    %252 = vmatpush1.msra.mxu0 0.0
    %253 = vmatprep.subr.mxu0 0.0
    %254 = vmatpush1.msra.mxu0 0.0
    %255 = vmatprep.subr.mxu0 0.0
    %256 = vmatpush1.msra.mxu0 %v155
    %257 = vmatprep.subr.mxu0 0.0
    %258 = vmatpush1.msra.mxu0 %v152
    %259 = vmatprep.subr.mxu0 0.0
    %260 = vmatpush1.msra.mxu0 %v149
    %261 = vmatprep.subr.mxu0 0.0
    %262 = vmatpush1.msra.mxu0 %v146
    %263 = vmatprep.subr.mxu0 0.0
    %264 = vmatpush1.msra.mxu0 %v143
    %265 = vmatprep.subr.mxu0 0.0
    %266 = vmatpush1.msra.mxu0 %v140
    %267 = vmatprep.subr.mxu0 0.0
    %268 = vmatpush1.msra.mxu0 %v137
    %269 = vmatprep.subr.mxu0 0.0
    %270 = vmatpush1.msra.mxu0 %v134
    %271 = vmatprep.subr.mxu0 0.0
    %272 = vmatpush1.msra.mxu0 %v131
    %273 = vmatprep.subr.mxu0 0.0
    %274 = vmatpush1.msra.mxu0 %v128
    %275 = vmatprep.subr.mxu0 0.0
    %276 = vmatpush1.msra.mxu0 %v125
    %277 = vmatprep.subr.mxu0 0.0
    %278 = vmatpush1.msra.mxu0 %v122
    %279 = vmatprep.subr.mxu0 0.0
    %280 = vmatpush2.msra.mxu0 0.0
    %281 = vmatprep.subr.mxu0 0.0
    %282 = vmatpush2.msra.mxu0 0.0
    %283 = vmatprep.subr.mxu0 0.0
    %284 = vmatpush2.msra.mxu0 0.0
    %285 = vmatprep.subr.mxu0 0.0
    %286 = vmatpush2.msra.mxu0 0.0
    %287 = vmatprep.subr.mxu0 0.0
    %288 = vmatpush2.msra.mxu0 0.0
    %289 = vmatprep.subr.mxu0 0.0
    %290 = vmatpush2.msra.mxu0 0.0
    %291 = vmatprep.subr.mxu0 0.0
    %292 = vmatpush2.msra.mxu0 0.0
    %293 = vmatprep.subr.mxu0 0.0
    %294 = vmatpush2.msra.mxu0 0.0
    %295 = vmatprep.subr.mxu0 0.0
    %296 = vmatpush2.msra.mxu0 0.0
    %297 = vmatprep.subr.mxu0 0.0
    %298 = vmatpush2.msra.mxu0 0.0
    %299 = vmatprep.subr.mxu0 0.0
    %300 = vmatpush2.msra.mxu0 0.0
    %301 = vmatprep.subr.mxu0 0.0
    %302 = vmatpush2.msra.mxu0 0.0
    %303 = vmatprep.subr.mxu0 0.0
    %304 = vmatpush2.msra.mxu0 0.0
    %305 = vmatprep.subr.mxu0 0.0
    %306 = vmatpush2.msra.mxu0 0.0
    %307 = vmatprep.subr.mxu0 0.0
    %308 = vmatpush2.msra.mxu0 0.0
    %309 = vmatprep.subr.mxu0 0.0
    %310 = vmatpush2.msra.mxu0 0.0
    %311 = vmatprep.mubr.f32.mxu0 0.0
    %312 = vmatmul.mubr.f32.gmra.mxu0 %v174
    %v313 = vpop.f32.mrf.mxu0
    %v314 = vadd.f32 %v168, %v313
    %v315 = vpop.f32.mrf.mxu0
    %316 = vdwg.mxu0
    %318 = vset.pattern.permute.xlu0 0
    %319 = vperm.xlu0 %318, %v76
    %v320 = vpop.permute.xlu0 %319
    %323 = vset.pattern.permute.xlu0 0
    %324 = vperm.xlu0 %323, %v77
    %v325 = vpop.permute.xlu0 %324
    %328 = vset.pattern.permute.xlu0 0
    %329 = vperm.xlu0 %328, %v78
    %v330 = vpop.permute.xlu0 %329
    %333 = vset.pattern.permute.xlu0 0
    %334 = vperm.xlu0 %333, %v79
    %v335 = vpop.permute.xlu0 %334
    %338 = vset.pattern.permute.xlu0 0
    %339 = vperm.xlu0 %338, %v80
    %v340 = vpop.permute.xlu0 %339
    %343 = vset.pattern.permute.xlu0 0
    %344 = vperm.xlu0 %343, %v81
    %v345 = vpop.permute.xlu0 %344
    %348 = vset.pattern.permute.xlu0 0
    %349 = vperm.xlu0 %348, %v82
    %v350 = vpop.permute.xlu0 %349
    %353 = vset.pattern.permute.xlu0 0
    %354 = vperm.xlu0 %353, %v83
    %v355 = vpop.permute.xlu0 %354
    %v357 = vlaneseq
    %v358 = vshrl.u32 %v357, 7
    %v359 = vsub.s32 0, %v358
    %v360 = vrot.slane %v116, %v359
    %v361 = vlaneseq
    %v362 = vshrl.u32 %v361, 7
    %v363 = vsub.s32 0, %v362
    %v364 = vrot.slane %v117, %v363
    %v365 = vlaneseq
    %v366 = vshrl.u32 %v365, 7
    %v367 = vsub.s32 0, %v366
    %v368 = vrot.slane %v118, %v367
    %v369 = vmul.f32 %v320, %v360
    %v370 = vmul.f32 %v320, %v364
    %v371 = vmul.f32 %v320, %v368
    %v372 = vmul.f32 %v325, %v360
    %v373 = vmul.f32 %v325, %v364
    %v374 = vmul.f32 %v325, %v368
    %v375 = vmul.f32 %v330, %v360
    %v376 = vmul.f32 %v330, %v364
    %v377 = vmul.f32 %v330, %v368
    %v378 = vmul.f32 %v335, %v360
    %v379 = vmul.f32 %v335, %v364
    %v380 = vmul.f32 %v335, %v368
    %v381 = vmul.f32 %v340, %v360
    %v382 = vmul.f32 %v340, %v364
    %v383 = vmul.f32 %v340, %v368
    %v384 = vmul.f32 %v345, %v360
    %v385 = vmul.f32 %v345, %v364
    %v386 = vmul.f32 %v345, %v368
    %v387 = vmul.f32 %v350, %v360
    %v388 = vmul.f32 %v350, %v364
    %v389 = vmul.f32 %v350, %v368
    %v390 = vmul.f32 %v355, %v360
    %v391 = vmul.f32 %v355, %v364
    %v392 = vmul.f32 %v355, %v368
    %v417 = vrot.slane %v372, 7
    %vm418 = vcmask 1041409
    %v419 = vsel %vm418, %v417, %v369
    %v420 = vrot.slane %v375, 6
    %vm421 = vcmask 1042434
    %v422 = vsel %vm421, %v420, %v419
    %v423 = vrot.slane %v378, 5
    %vm424 = vcmask 1043459
    %v425 = vsel %vm424, %v423, %v422
    %v426 = vrot.slane %v381, 4
    %vm427 = vcmask 1044484
    %v428 = vsel %vm427, %v426, %v425
    %v429 = vrot.slane %v384, 3
    %vm430 = vcmask 1045509
    %v431 = vsel %vm430, %v429, %v428
    %v432 = vrot.slane %v387, 2
    %vm433 = vcmask 1046534
    %v434 = vsel %vm433, %v432, %v431
    %v435 = vrot.slane %v390, 1
    %vm436 = vcmask 1047559
    %v437 = vsel %vm436, %v435, %v434
    %v438 = vrot.slane %v373, 7
    %v439 = vsel %vm418, %v438, %v370
    %v440 = vrot.slane %v376, 6
    %v441 = vsel %vm421, %v440, %v439
    %v442 = vrot.slane %v379, 5
    %v443 = vsel %vm424, %v442, %v441
    %v444 = vrot.slane %v382, 4
    %v445 = vsel %vm427, %v444, %v443
    %v446 = vrot.slane %v385, 3
    %v447 = vsel %vm430, %v446, %v445
    %v448 = vrot.slane %v388, 2
    %v449 = vsel %vm433, %v448, %v447
    %v450 = vrot.slane %v391, 1
    %v451 = vsel %vm436, %v450, %v449
    %v452 = vrot.slane %v374, 7
    %v453 = vsel %vm418, %v452, %v371
    %v454 = vrot.slane %v377, 6
    %v455 = vsel %vm421, %v454, %v453
    %v456 = vrot.slane %v380, 5
    %v457 = vsel %vm424, %v456, %v455
    %v458 = vrot.slane %v383, 4
    %v459 = vsel %vm427, %v458, %v457
    %v460 = vrot.slane %v386, 3
    %v461 = vsel %vm430, %v460, %v459
    %v462 = vrot.slane %v389, 2
    %v463 = vsel %vm433, %v462, %v461
    %v464 = vrot.slane %v392, 1
    %v465 = vsel %vm436, %v464, %v463
    %v469 = vadd.f32 %v243, %v437
    %v470 = vadd.f32 %v245, %v451
    %v471 = vadd.f32 %v314, %v465
    %472 = vset.pattern.permute.xlu0 1
    %473 = vperm.xlu0 %472, %v76
    %v474 = vpop.permute.xlu0 %473
    %476 = vset.pattern.permute.xlu0 1
    %477 = vperm.xlu0 %476, %v77
    %v478 = vpop.permute.xlu0 %477
    %480 = vset.pattern.permute.xlu0 1
    %481 = vperm.xlu0 %480, %v78
    %v482 = vpop.permute.xlu0 %481
    %484 = vset.pattern.permute.xlu0 1
    %485 = vperm.xlu0 %484, %v79
    %v486 = vpop.permute.xlu0 %485
    %488 = vset.pattern.permute.xlu0 1
    %489 = vperm.xlu0 %488, %v80
    %v490 = vpop.permute.xlu0 %489
    %492 = vset.pattern.permute.xlu0 1
    %493 = vperm.xlu0 %492, %v81
    %v494 = vpop.permute.xlu0 %493
    %496 = vset.pattern.permute.xlu0 1
    %497 = vperm.xlu0 %496, %v82
    %v498 = vpop.permute.xlu0 %497
    %500 = vset.pattern.permute.xlu0 1
    %501 = vperm.xlu0 %500, %v83
    %v502 = vpop.permute.xlu0 %501
    %v504 = vlaneseq
    %v505 = vshrl.u32 %v504, 7
    %v506 = vsub.s32 1, %v505
    %v507 = vrot.slane %v116, %v506
    %v508 = vlaneseq
    %v509 = vshrl.u32 %v508, 7
    %v510 = vsub.s32 1, %v509
    %v511 = vrot.slane %v117, %v510
    %v512 = vlaneseq
    %v513 = vshrl.u32 %v512, 7
    %v514 = vsub.s32 1, %v513
    %v515 = vrot.slane %v118, %v514
    %v516 = vmul.f32 %v474, %v507
    %v517 = vmul.f32 %v474, %v511
    %v518 = vmul.f32 %v474, %v515
    %v519 = vmul.f32 %v478, %v507
    %v520 = vmul.f32 %v478, %v511
    %v521 = vmul.f32 %v478, %v515
    %v522 = vmul.f32 %v482, %v507
    %v523 = vmul.f32 %v482, %v511
    %v524 = vmul.f32 %v482, %v515
    %v525 = vmul.f32 %v486, %v507
    %v526 = vmul.f32 %v486, %v511
    %v527 = vmul.f32 %v486, %v515
    %v528 = vmul.f32 %v490, %v507
    %v529 = vmul.f32 %v490, %v511
    %v530 = vmul.f32 %v490, %v515
    %v531 = vmul.f32 %v494, %v507
    %v532 = vmul.f32 %v494, %v511
    %v533 = vmul.f32 %v494, %v515
    %v534 = vmul.f32 %v498, %v507
    %v535 = vmul.f32 %v498, %v511
    %v536 = vmul.f32 %v498, %v515
    %v537 = vmul.f32 %v502, %v507
    %v538 = vmul.f32 %v502, %v511
    %v539 = vmul.f32 %v502, %v515
    %v564 = vrot.slane %v519, 7
    %v565 = vsel %vm418, %v564, %v516
    %v566 = vrot.slane %v522, 6
    %v567 = vsel %vm421, %v566, %v565
    %v568 = vrot.slane %v525, 5
    %v569 = vsel %vm424, %v568, %v567
    %v570 = vrot.slane %v528, 4
    %v571 = vsel %vm427, %v570, %v569
    %v572 = vrot.slane %v531, 3
    %v573 = vsel %vm430, %v572, %v571
    %v574 = vrot.slane %v534, 2
    %v575 = vsel %vm433, %v574, %v573
    %v576 = vrot.slane %v537, 1
    %v577 = vsel %vm436, %v576, %v575
    %v578 = vrot.slane %v520, 7
    %v579 = vsel %vm418, %v578, %v517
    %v580 = vrot.slane %v523, 6
    %v581 = vsel %vm421, %v580, %v579
    %v582 = vrot.slane %v526, 5
    %v583 = vsel %vm424, %v582, %v581
    %v584 = vrot.slane %v529, 4
    %v585 = vsel %vm427, %v584, %v583
    %v586 = vrot.slane %v532, 3
    %v587 = vsel %vm430, %v586, %v585
    %v588 = vrot.slane %v535, 2
    %v589 = vsel %vm433, %v588, %v587
    %v590 = vrot.slane %v538, 1
    %v591 = vsel %vm436, %v590, %v589
    %v592 = vrot.slane %v521, 7
    %v593 = vsel %vm418, %v592, %v518
    %v594 = vrot.slane %v524, 6
    %v595 = vsel %vm421, %v594, %v593
    %v596 = vrot.slane %v527, 5
    %v597 = vsel %vm424, %v596, %v595
    %v598 = vrot.slane %v530, 4
    %v599 = vsel %vm427, %v598, %v597
    %v600 = vrot.slane %v533, 3
    %v601 = vsel %vm430, %v600, %v599
    %v602 = vrot.slane %v536, 2
    %v603 = vsel %vm433, %v602, %v601
    %v604 = vrot.slane %v539, 1
    %v605 = vsel %vm436, %v604, %v603
    %v609 = vadd.f32 %v469, %v577
    %v610 = vadd.f32 %v470, %v591
    %v611 = vadd.f32 %v471, %v605
    %613 = vset.pattern.permute.xlu0 0
    %614 = vperm.xlu0 %613, %v84
    %v615 = vpop.permute.xlu0 %614
    %618 = vset.pattern.permute.xlu0 0
    %619 = vperm.xlu0 %618, %v86
    %v620 = vpop.permute.xlu0 %619
    %623 = vset.pattern.permute.xlu0 0
    %624 = vperm.xlu0 %623, %v88
    %v625 = vpop.permute.xlu0 %624
    %628 = vset.pattern.permute.xlu0 0
    %629 = vperm.xlu0 %628, %v90
    %v630 = vpop.permute.xlu0 %629
    %633 = vset.pattern.permute.xlu0 0
    %634 = vperm.xlu0 %633, %v92
    %v635 = vpop.permute.xlu0 %634
    %638 = vset.pattern.permute.xlu0 0
    %639 = vperm.xlu0 %638, %v94
    %v640 = vpop.permute.xlu0 %639
    %643 = vset.pattern.permute.xlu0 0
    %644 = vperm.xlu0 %643, %v96
    %v645 = vpop.permute.xlu0 %644
    %648 = vset.pattern.permute.xlu0 0
    %649 = vperm.xlu0 %648, %v98
    %v650 = vpop.permute.xlu0 %649
    %v652 = vlaneseq
    %v653 = vshrl.u32 %v652, 7
    %v654 = vsub.s32 2, %v653
    %v655 = vrot.slane %v116, %v654
    %v656 = vlaneseq
    %v657 = vshrl.u32 %v656, 7
    %v658 = vsub.s32 2, %v657
    %v659 = vrot.slane %v117, %v658
    %v660 = vlaneseq
    %v661 = vshrl.u32 %v660, 7
    %v662 = vsub.s32 2, %v661
    %v663 = vrot.slane %v118, %v662
    %v664 = vmul.f32 %v615, %v655
    %v665 = vmul.f32 %v615, %v659
    %v666 = vmul.f32 %v615, %v663
    %v667 = vmul.f32 %v620, %v655
    %v668 = vmul.f32 %v620, %v659
    %v669 = vmul.f32 %v620, %v663
    %v670 = vmul.f32 %v625, %v655
    %v671 = vmul.f32 %v625, %v659
    %v672 = vmul.f32 %v625, %v663
    %v673 = vmul.f32 %v630, %v655
    %v674 = vmul.f32 %v630, %v659
    %v675 = vmul.f32 %v630, %v663
    %v676 = vmul.f32 %v635, %v655
    %v677 = vmul.f32 %v635, %v659
    %v678 = vmul.f32 %v635, %v663
    %v679 = vmul.f32 %v640, %v655
    %v680 = vmul.f32 %v640, %v659
    %v681 = vmul.f32 %v640, %v663
    %v682 = vmul.f32 %v645, %v655
    %v683 = vmul.f32 %v645, %v659
    %v684 = vmul.f32 %v645, %v663
    %v685 = vmul.f32 %v650, %v655
    %v686 = vmul.f32 %v650, %v659
    %v687 = vmul.f32 %v650, %v663
    %v712 = vrot.slane %v667, 7
    %v713 = vsel %vm418, %v712, %v664
    %v714 = vrot.slane %v670, 6
    %v715 = vsel %vm421, %v714, %v713
    %v716 = vrot.slane %v673, 5
    %v717 = vsel %vm424, %v716, %v715
    %v718 = vrot.slane %v676, 4
    %v719 = vsel %vm427, %v718, %v717
    %v720 = vrot.slane %v679, 3
    %v721 = vsel %vm430, %v720, %v719
    %v722 = vrot.slane %v682, 2
    %v723 = vsel %vm433, %v722, %v721
    %v724 = vrot.slane %v685, 1
    %v725 = vsel %vm436, %v724, %v723
    %v726 = vrot.slane %v668, 7
    %v727 = vsel %vm418, %v726, %v665
    %v728 = vrot.slane %v671, 6
    %v729 = vsel %vm421, %v728, %v727
    %v730 = vrot.slane %v674, 5
    %v731 = vsel %vm424, %v730, %v729
    %v732 = vrot.slane %v677, 4
    %v733 = vsel %vm427, %v732, %v731
    %v734 = vrot.slane %v680, 3
    %v735 = vsel %vm430, %v734, %v733
    %v736 = vrot.slane %v683, 2
    %v737 = vsel %vm433, %v736, %v735
    %v738 = vrot.slane %v686, 1
    %v739 = vsel %vm436, %v738, %v737
    %v740 = vrot.slane %v669, 7
    %v741 = vsel %vm418, %v740, %v666
    %v742 = vrot.slane %v672, 6
    %v743 = vsel %vm421, %v742, %v741
    %v744 = vrot.slane %v675, 5
    %v745 = vsel %vm424, %v744, %v743
    %v746 = vrot.slane %v678, 4
    %v747 = vsel %vm427, %v746, %v745
    %v748 = vrot.slane %v681, 3
    %v749 = vsel %vm430, %v748, %v747
    %v750 = vrot.slane %v684, 2
    %v751 = vsel %vm433, %v750, %v749
    %v752 = vrot.slane %v687, 1
    %v753 = vsel %vm436, %v752, %v751
    %v757 = vadd.f32 %v609, %v725
    %v758 = vadd.f32 %v610, %v739
    %v759 = vadd.f32 %v611, %v753
    %760 = vset.pattern.permute.xlu0 1
    %761 = vperm.xlu0 %760, %v84
    %v762 = vpop.permute.xlu0 %761
    %764 = vset.pattern.permute.xlu0 1
    %765 = vperm.xlu0 %764, %v86
    %v766 = vpop.permute.xlu0 %765
    %768 = vset.pattern.permute.xlu0 1
    %769 = vperm.xlu0 %768, %v88
    %v770 = vpop.permute.xlu0 %769
    %772 = vset.pattern.permute.xlu0 1
    %773 = vperm.xlu0 %772, %v90
    %v774 = vpop.permute.xlu0 %773
    %776 = vset.pattern.permute.xlu0 1
    %777 = vperm.xlu0 %776, %v92
    %v778 = vpop.permute.xlu0 %777
    %780 = vset.pattern.permute.xlu0 1
    %781 = vperm.xlu0 %780, %v94
    %v782 = vpop.permute.xlu0 %781
    %784 = vset.pattern.permute.xlu0 1
    %785 = vperm.xlu0 %784, %v96
    %v786 = vpop.permute.xlu0 %785
    %788 = vset.pattern.permute.xlu0 1
    %789 = vperm.xlu0 %788, %v98
    %v790 = vpop.permute.xlu0 %789
    %v792 = vlaneseq
    %v793 = vshrl.u32 %v792, 7
    %v794 = vsub.s32 3, %v793
    %v795 = vrot.slane %v116, %v794
    %v796 = vlaneseq
    %v797 = vshrl.u32 %v796, 7
    %v798 = vsub.s32 3, %v797
    %v799 = vrot.slane %v117, %v798
    %v800 = vlaneseq
    %v801 = vshrl.u32 %v800, 7
    %v802 = vsub.s32 3, %v801
    %v803 = vrot.slane %v118, %v802
    %v804 = vmul.f32 %v762, %v795
    %v805 = vmul.f32 %v762, %v799
    %v806 = vmul.f32 %v762, %v803
    %v807 = vmul.f32 %v766, %v795
    %v808 = vmul.f32 %v766, %v799
    %v809 = vmul.f32 %v766, %v803
    %v810 = vmul.f32 %v770, %v795
    %v811 = vmul.f32 %v770, %v799
    %v812 = vmul.f32 %v770, %v803
    %v813 = vmul.f32 %v774, %v795
    %v814 = vmul.f32 %v774, %v799
    %v815 = vmul.f32 %v774, %v803
    %v816 = vmul.f32 %v778, %v795
    %v817 = vmul.f32 %v778, %v799
    %v818 = vmul.f32 %v778, %v803
    %v819 = vmul.f32 %v782, %v795
    %v820 = vmul.f32 %v782, %v799
    %v821 = vmul.f32 %v782, %v803
    %v822 = vmul.f32 %v786, %v795
    %v823 = vmul.f32 %v786, %v799
    %v824 = vmul.f32 %v786, %v803
    %v825 = vmul.f32 %v790, %v795
    %v826 = vmul.f32 %v790, %v799
    %v827 = vmul.f32 %v790, %v803
    %v852 = vrot.slane %v807, 7
    %v853 = vsel %vm418, %v852, %v804
    %v854 = vrot.slane %v810, 6
    %v855 = vsel %vm421, %v854, %v853
    %v856 = vrot.slane %v813, 5
    %v857 = vsel %vm424, %v856, %v855
    %v858 = vrot.slane %v816, 4
    %v859 = vsel %vm427, %v858, %v857
    %v860 = vrot.slane %v819, 3
    %v861 = vsel %vm430, %v860, %v859
    %v862 = vrot.slane %v822, 2
    %v863 = vsel %vm433, %v862, %v861
    %v864 = vrot.slane %v825, 1
    %v865 = vsel %vm436, %v864, %v863
    %v866 = vrot.slane %v808, 7
    %v867 = vsel %vm418, %v866, %v805
    %v868 = vrot.slane %v811, 6
    %v869 = vsel %vm421, %v868, %v867
    %v870 = vrot.slane %v814, 5
    %v871 = vsel %vm424, %v870, %v869
    %v872 = vrot.slane %v817, 4
    %v873 = vsel %vm427, %v872, %v871
    %v874 = vrot.slane %v820, 3
    %v875 = vsel %vm430, %v874, %v873
    %v876 = vrot.slane %v823, 2
    %v877 = vsel %vm433, %v876, %v875
    %v878 = vrot.slane %v826, 1
    %v879 = vsel %vm436, %v878, %v877
    %v880 = vrot.slane %v809, 7
    %v881 = vsel %vm418, %v880, %v806
    %v882 = vrot.slane %v812, 6
    %v883 = vsel %vm421, %v882, %v881
    %v884 = vrot.slane %v815, 5
    %v885 = vsel %vm424, %v884, %v883
    %v886 = vrot.slane %v818, 4
    %v887 = vsel %vm427, %v886, %v885
    %v888 = vrot.slane %v821, 3
    %v889 = vsel %vm430, %v888, %v887
    %v890 = vrot.slane %v824, 2
    %v891 = vsel %vm433, %v890, %v889
    %v892 = vrot.slane %v827, 1
    %v893 = vsel %vm436, %v892, %v891
    %v897 = vadd.f32 %v757, %v865
    %v898 = vadd.f32 %v758, %v879
    %v899 = vadd.f32 %v759, %v893
    %901 = vset.pattern.permute.xlu0 0
    %902 = vperm.xlu0 %901, %v100
    %v903 = vpop.permute.xlu0 %902
    %906 = vset.pattern.permute.xlu0 0
    %907 = vperm.xlu0 %906, %v102
    %v908 = vpop.permute.xlu0 %907
    %911 = vset.pattern.permute.xlu0 0
    %912 = vperm.xlu0 %911, %v104
    %v913 = vpop.permute.xlu0 %912
    %916 = vset.pattern.permute.xlu0 0
    %917 = vperm.xlu0 %916, %v106
    %v918 = vpop.permute.xlu0 %917
    %921 = vset.pattern.permute.xlu0 0
    %922 = vperm.xlu0 %921, %v108
    %v923 = vpop.permute.xlu0 %922
    %926 = vset.pattern.permute.xlu0 0
    %927 = vperm.xlu0 %926, %v110
    %v928 = vpop.permute.xlu0 %927
    %931 = vset.pattern.permute.xlu0 0
    %932 = vperm.xlu0 %931, %v112
    %v933 = vpop.permute.xlu0 %932
    %936 = vset.pattern.permute.xlu0 0
    %937 = vperm.xlu0 %936, %v114
    %v938 = vpop.permute.xlu0 %937
    %v940 = vlaneseq
    %v941 = vshrl.u32 %v940, 7
    %v942 = vsub.s32 4, %v941
    %v943 = vrot.slane %v116, %v942
    %v944 = vlaneseq
    %v945 = vshrl.u32 %v944, 7
    %v946 = vsub.s32 4, %v945
    %v947 = vrot.slane %v117, %v946
    %v948 = vlaneseq
    %v949 = vshrl.u32 %v948, 7
    %v950 = vsub.s32 4, %v949
    %v951 = vrot.slane %v118, %v950
    %v952 = vmul.f32 %v903, %v943
    %v953 = vmul.f32 %v903, %v947
    %v954 = vmul.f32 %v903, %v951
    %v955 = vmul.f32 %v908, %v943
    %v956 = vmul.f32 %v908, %v947
    %v957 = vmul.f32 %v908, %v951
    %v958 = vmul.f32 %v913, %v943
    %v959 = vmul.f32 %v913, %v947
    %v960 = vmul.f32 %v913, %v951
    %v961 = vmul.f32 %v918, %v943
    %v962 = vmul.f32 %v918, %v947
    %v963 = vmul.f32 %v918, %v951
    %v964 = vmul.f32 %v923, %v943
    %v965 = vmul.f32 %v923, %v947
    %v966 = vmul.f32 %v923, %v951
    %v967 = vmul.f32 %v928, %v943
    %v968 = vmul.f32 %v928, %v947
    %v969 = vmul.f32 %v928, %v951
    %v970 = vmul.f32 %v933, %v943
    %v971 = vmul.f32 %v933, %v947
    %v972 = vmul.f32 %v933, %v951
    %v973 = vmul.f32 %v938, %v943
    %v974 = vmul.f32 %v938, %v947
    %v975 = vmul.f32 %v938, %v951
    %v1000 = vrot.slane %v955, 7
    %v1001 = vsel %vm418, %v1000, %v952
    %v1002 = vrot.slane %v958, 6
    %v1003 = vsel %vm421, %v1002, %v1001
    %v1004 = vrot.slane %v961, 5
    %v1005 = vsel %vm424, %v1004, %v1003
    %v1006 = vrot.slane %v964, 4
    %v1007 = vsel %vm427, %v1006, %v1005
    %v1008 = vrot.slane %v967, 3
    %v1009 = vsel %vm430, %v1008, %v1007
    %v1010 = vrot.slane %v970, 2
    %v1011 = vsel %vm433, %v1010, %v1009
    %v1012 = vrot.slane %v973, 1
    %v1013 = vsel %vm436, %v1012, %v1011
    %v1014 = vrot.slane %v956, 7
    %v1015 = vsel %vm418, %v1014, %v953
    %v1016 = vrot.slane %v959, 6
    %v1017 = vsel %vm421, %v1016, %v1015
    %v1018 = vrot.slane %v962, 5
    %v1019 = vsel %vm424, %v1018, %v1017
    %v1020 = vrot.slane %v965, 4
    %v1021 = vsel %vm427, %v1020, %v1019
    %v1022 = vrot.slane %v968, 3
    %v1023 = vsel %vm430, %v1022, %v1021
    %v1024 = vrot.slane %v971, 2
    %v1025 = vsel %vm433, %v1024, %v1023
    %v1026 = vrot.slane %v974, 1
    %v1027 = vsel %vm436, %v1026, %v1025
    %v1028 = vrot.slane %v957, 7
    %v1029 = vsel %vm418, %v1028, %v954
    %v1030 = vrot.slane %v960, 6
    %v1031 = vsel %vm421, %v1030, %v1029
    %v1032 = vrot.slane %v963, 5
    %v1033 = vsel %vm424, %v1032, %v1031
    %v1034 = vrot.slane %v966, 4
    %v1035 = vsel %vm427, %v1034, %v1033
    %v1036 = vrot.slane %v969, 3
    %v1037 = vsel %vm430, %v1036, %v1035
    %v1038 = vrot.slane %v972, 2
    %v1039 = vsel %vm433, %v1038, %v1037
    %v1040 = vrot.slane %v975, 1
    %v1041 = vsel %vm436, %v1040, %v1039
    %v1045 = vadd.f32 %v897, %v1013
    %v1046 = vadd.f32 %v898, %v1027
    %v1047 = vadd.f32 %v899, %v1041
    %1048 = vset.pattern.permute.xlu0 1
    %1049 = vperm.xlu0 %1048, %v100
    %v1050 = vpop.permute.xlu0 %1049
    %1052 = vset.pattern.permute.xlu0 1
    %1053 = vperm.xlu0 %1052, %v102
    %v1054 = vpop.permute.xlu0 %1053
    %1056 = vset.pattern.permute.xlu0 1
    %1057 = vperm.xlu0 %1056, %v104
    %v1058 = vpop.permute.xlu0 %1057
    %1060 = vset.pattern.permute.xlu0 1
    %1061 = vperm.xlu0 %1060, %v106
    %v1062 = vpop.permute.xlu0 %1061
    %1064 = vset.pattern.permute.xlu0 1
    %1065 = vperm.xlu0 %1064, %v108
    %v1066 = vpop.permute.xlu0 %1065
    %1068 = vset.pattern.permute.xlu0 1
    %1069 = vperm.xlu0 %1068, %v110
    %v1070 = vpop.permute.xlu0 %1069
    %1072 = vset.pattern.permute.xlu0 1
    %1073 = vperm.xlu0 %1072, %v112
    %v1074 = vpop.permute.xlu0 %1073
    %1076 = vset.pattern.permute.xlu0 1
    %1077 = vperm.xlu0 %1076, %v114
    %v1078 = vpop.permute.xlu0 %1077
    %v1080 = vlaneseq
    %v1081 = vshrl.u32 %v1080, 7
    %v1082 = vsub.s32 5, %v1081
    %v1083 = vrot.slane %v116, %v1082
    %v1084 = vlaneseq
    %v1085 = vshrl.u32 %v1084, 7
    %v1086 = vsub.s32 5, %v1085
    %v1087 = vrot.slane %v117, %v1086
    %v1088 = vlaneseq
    %v1089 = vshrl.u32 %v1088, 7
    %v1090 = vsub.s32 5, %v1089
    %v1091 = vrot.slane %v118, %v1090
    %v1092 = vmul.f32 %v1050, %v1083
    %v1093 = vmul.f32 %v1050, %v1087
    %v1094 = vmul.f32 %v1050, %v1091
    %v1095 = vmul.f32 %v1054, %v1083
    %v1096 = vmul.f32 %v1054, %v1087
    %v1097 = vmul.f32 %v1054, %v1091
    %v1098 = vmul.f32 %v1058, %v1083
    %v1099 = vmul.f32 %v1058, %v1087
    %v1100 = vmul.f32 %v1058, %v1091
    %v1101 = vmul.f32 %v1062, %v1083
    %v1102 = vmul.f32 %v1062, %v1087
    %v1103 = vmul.f32 %v1062, %v1091
    %v1104 = vmul.f32 %v1066, %v1083
    %v1105 = vmul.f32 %v1066, %v1087
    %v1106 = vmul.f32 %v1066, %v1091
    %v1107 = vmul.f32 %v1070, %v1083
    %v1108 = vmul.f32 %v1070, %v1087
    %v1109 = vmul.f32 %v1070, %v1091
    %v1110 = vmul.f32 %v1074, %v1083
    %v1111 = vmul.f32 %v1074, %v1087
    %v1112 = vmul.f32 %v1074, %v1091
    %v1113 = vmul.f32 %v1078, %v1083
    %v1114 = vmul.f32 %v1078, %v1087
    %v1115 = vmul.f32 %v1078, %v1091
    %v1140 = vrot.slane %v1095, 7
    %v1141 = vsel %vm418, %v1140, %v1092
    %v1142 = vrot.slane %v1098, 6
    %v1143 = vsel %vm421, %v1142, %v1141
    %v1144 = vrot.slane %v1101, 5
    %v1145 = vsel %vm424, %v1144, %v1143
    %v1146 = vrot.slane %v1104, 4
    %v1147 = vsel %vm427, %v1146, %v1145
    %v1148 = vrot.slane %v1107, 3
    %v1149 = vsel %vm430, %v1148, %v1147
    %v1150 = vrot.slane %v1110, 2
    %v1151 = vsel %vm433, %v1150, %v1149
    %v1152 = vrot.slane %v1113, 1
    %v1153 = vsel %vm436, %v1152, %v1151
    %v1154 = vrot.slane %v1096, 7
    %v1155 = vsel %vm418, %v1154, %v1093
    %v1156 = vrot.slane %v1099, 6
    %v1157 = vsel %vm421, %v1156, %v1155
    %v1158 = vrot.slane %v1102, 5
    %v1159 = vsel %vm424, %v1158, %v1157
    %v1160 = vrot.slane %v1105, 4
    %v1161 = vsel %vm427, %v1160, %v1159
    %v1162 = vrot.slane %v1108, 3
    %v1163 = vsel %vm430, %v1162, %v1161
    %v1164 = vrot.slane %v1111, 2
    %v1165 = vsel %vm433, %v1164, %v1163
    %v1166 = vrot.slane %v1114, 1
    %v1167 = vsel %vm436, %v1166, %v1165
    %v1168 = vrot.slane %v1097, 7
    %v1169 = vsel %vm418, %v1168, %v1094
    %v1170 = vrot.slane %v1100, 6
    %v1171 = vsel %vm421, %v1170, %v1169
    %v1172 = vrot.slane %v1103, 5
    %v1173 = vsel %vm424, %v1172, %v1171
    %v1174 = vrot.slane %v1106, 4
    %v1175 = vsel %vm427, %v1174, %v1173
    %v1176 = vrot.slane %v1109, 3
    %v1177 = vsel %vm430, %v1176, %v1175
    %v1178 = vrot.slane %v1112, 2
    %v1179 = vsel %vm433, %v1178, %v1177
    %v1180 = vrot.slane %v1115, 1
    %v1181 = vsel %vm436, %v1180, %v1179
    %v1185 = vadd.f32 %v1045, %v1153
    %v1186 = vadd.f32 %v1046, %v1167
    %v1187 = vadd.f32 %v1047, %v1181
    %v1188 = vxor.u32 %v1185, 2147483648
    %v1189 = vxor.u32 %v1186, 2147483648
    %v1190 = vxor.u32 %v1187, 2147483648
    %v1191 = vmul.f32 %v1188, 1.442695
    %v1192 = vpow.pop %v1191
    %v1193 = vmul.f32 %v1189, 1.442695
    %v1194 = vpow.pop %v1193
    %v1195 = vmul.f32 %v1190, 1.442695
    %v1196 = vpow.pop %v1195
    %v1197 = vadd.f32 %v1192, 1.0
    %v1198 = vadd.f32 %v1194, 1.0
    %v1199 = vadd.f32 %v1196, 1.0
    %v1200 = vrcp.pop %v1197
    %v1201 = vmul.f32 1.0, %v1200
    %v1202 = vrcp.pop %v1198
    %v1203 = vmul.f32 1.0, %v1202
    %v1204 = vrcp.pop %v1199
    %v1205 = vmul.f32 1.0, %v1204
    %v1206 = vtanh.pop %v1187
    %v1207 = vmul.f32 %v1201, 0.0
    %v1208 = vmul.f32 %v1203, 0.0
    %1210 = vrot.lane.b32.xlu0 %v1206, 96
    %v1211 = vpop.permute.xlu0 %1210
    %v1213 = vmul.f32 %v1201, %v1211
    %1215 = vrot.lane.b32.xlu0 %v1213, 96
    %v1216 = vpop.permute.xlu0 %1215
    %v1218 = vadd.f32 %v1207, %v1216
    %v1219 = vadd.f32 %v1208, %v1216
    %v1220 = vtanh.pop %v1218
    %v1221 = vtanh.pop %v1219
    %1224 = vrot.lane.b32.xlu0 %v1220, 96
    %v1225 = vpop.permute.xlu0 %1224
    %1226 = vrot.lane.b32.xlu0 %v1221, 96
    %v1227 = vpop.permute.xlu0 %1226
    %v1228 = vsel %vm172, %v1225, %v1227
    %v1231 = vmul.f32 %v1203, %v1228
    %v1232 = vmul.f32 %v1205, %v1227
    %1235 = vrot.lane.b32.xlu0 %v1231, 64
    %v1236 = vpop.permute.xlu0 %1235
    %1237 = vrot.lane.b32.xlu0 %v1232, 64
    %v1238 = vpop.permute.xlu0 %1237
    %vm1239 = vcmask 523264
    %v1240 = vsel %vm1239, %v1236, %v1238
    %v1241 = vsel %vm172, %v1240, 0
    %1243 = vmatprep.subr.mxu0 0.0
    %1244 = vmatpush1.msra.mxu0 0.0
    %1245 = vmatprep.subr.mxu0 0.0
    %1246 = vmatpush1.msra.mxu0 0.0
    %1247 = vmatprep.subr.mxu0 0.0
    %1248 = vmatpush1.msra.mxu0 0.0
    %1249 = vmatprep.subr.mxu0 0.0
    %1250 = vmatpush1.msra.mxu0 0.0
    %1251 = vmatprep.subr.mxu0 %v154
    %1252 = vmatpush1.msra.mxu0 %v153
    %1253 = vmatprep.subr.mxu0 %v151
    %1254 = vmatpush1.msra.mxu0 %v150
    %1255 = vmatprep.subr.mxu0 %v148
    %1256 = vmatpush1.msra.mxu0 %v147
    %1257 = vmatprep.subr.mxu0 %v145
    %1258 = vmatpush1.msra.mxu0 %v144
    %1259 = vmatprep.subr.mxu0 %v142
    %1260 = vmatpush1.msra.mxu0 %v141
    %1261 = vmatprep.subr.mxu0 %v139
    %1262 = vmatpush1.msra.mxu0 %v138
    %1263 = vmatprep.subr.mxu0 %v136
    %1264 = vmatpush1.msra.mxu0 %v135
    %1265 = vmatprep.subr.mxu0 %v133
    %1266 = vmatpush1.msra.mxu0 %v132
    %1267 = vmatprep.subr.mxu0 %v130
    %1268 = vmatpush1.msra.mxu0 %v129
    %1269 = vmatprep.subr.mxu0 %v127
    %1270 = vmatpush1.msra.mxu0 %v126
    %1271 = vmatprep.subr.mxu0 %v124
    %1272 = vmatpush1.msra.mxu0 %v123
    %1273 = vmatprep.subr.mxu0 %v121
    %1274 = vmatpush1.msra.mxu0 %v120
    %1275 = vmatprep.subr.mxu0 0.0
    %1276 = vmatpush2.msra.mxu0 0.0
    %1277 = vmatprep.subr.mxu0 0.0
    %1278 = vmatpush2.msra.mxu0 0.0
    %1279 = vmatprep.subr.mxu0 0.0
    %1280 = vmatpush2.msra.mxu0 0.0
    %1281 = vmatprep.subr.mxu0 0.0
    %1282 = vmatpush2.msra.mxu0 0.0
    %1283 = vmatprep.subr.mxu0 0.0
    %1284 = vmatpush2.msra.mxu0 0.0
    %1285 = vmatprep.subr.mxu0 0.0
    %1286 = vmatpush2.msra.mxu0 0.0
    %1287 = vmatprep.subr.mxu0 0.0
    %1288 = vmatpush2.msra.mxu0 0.0
    %1289 = vmatprep.subr.mxu0 0.0
    %1290 = vmatpush2.msra.mxu0 0.0
    %1291 = vmatprep.subr.mxu0 0.0
    %1292 = vmatpush2.msra.mxu0 0.0
    %1293 = vmatprep.subr.mxu0 0.0
    %1294 = vmatpush2.msra.mxu0 0.0
    %1295 = vmatprep.subr.mxu0 0.0
    %1296 = vmatpush2.msra.mxu0 0.0
    %1297 = vmatprep.subr.mxu0 0.0
    %1298 = vmatpush2.msra.mxu0 0.0
    %1299 = vmatprep.subr.mxu0 0.0
    %1300 = vmatpush2.msra.mxu0 0.0
    %1301 = vmatprep.subr.mxu0 0.0
    %1302 = vmatpush2.msra.mxu0 0.0
    %1303 = vmatprep.subr.mxu0 0.0
    %1304 = vmatpush2.msra.mxu0 0.0
    %1305 = vmatprep.subr.mxu0 0.0
    %1306 = vmatpush2.msra.mxu0 0.0
    %1307 = vmatprep.mubr.f32.mxu0 0.0
    %1308 = vmatmul.mubr.f32.gmra.mxu0 %v1241
    %v1309 = vpop.f32.mrf.mxu0
    %v1310 = vadd.f32 %v160, %v1309
    %v1311 = vpop.f32.mrf.mxu0
    %v1312 = vadd.f32 %v164, %v1311
    %1313 = vdwg.mxu0
    %1314 = vmatprep.subr.mxu0 0.0
    %1315 = vmatpush1.msra.mxu0 0.0
    %1316 = vmatprep.subr.mxu0 0.0
    %1317 = vmatpush1.msra.mxu0 0.0
    %1318 = vmatprep.subr.mxu0 0.0
    %1319 = vmatpush1.msra.mxu0 0.0
    %1320 = vmatprep.subr.mxu0 0.0
    %1321 = vmatpush1.msra.mxu0 0.0
    %1322 = vmatprep.subr.mxu0 0.0
    %1323 = vmatpush1.msra.mxu0 %v155
    %1324 = vmatprep.subr.mxu0 0.0
    %1325 = vmatpush1.msra.mxu0 %v152
    %1326 = vmatprep.subr.mxu0 0.0
    %1327 = vmatpush1.msra.mxu0 %v149
    %1328 = vmatprep.subr.mxu0 0.0
    %1329 = vmatpush1.msra.mxu0 %v146
    %1330 = vmatprep.subr.mxu0 0.0
    %1331 = vmatpush1.msra.mxu0 %v143
    %1332 = vmatprep.subr.mxu0 0.0
    %1333 = vmatpush1.msra.mxu0 %v140
    %1334 = vmatprep.subr.mxu0 0.0
    %1335 = vmatpush1.msra.mxu0 %v137
    %1336 = vmatprep.subr.mxu0 0.0
    %1337 = vmatpush1.msra.mxu0 %v134
    %1338 = vmatprep.subr.mxu0 0.0
    %1339 = vmatpush1.msra.mxu0 %v131
    %1340 = vmatprep.subr.mxu0 0.0
    %1341 = vmatpush1.msra.mxu0 %v128
    %1342 = vmatprep.subr.mxu0 0.0
    %1343 = vmatpush1.msra.mxu0 %v125
    %1344 = vmatprep.subr.mxu0 0.0
    %1345 = vmatpush1.msra.mxu0 %v122
    %1346 = vmatprep.subr.mxu0 0.0
    %1347 = vmatpush2.msra.mxu0 0.0
    %1348 = vmatprep.subr.mxu0 0.0
    %1349 = vmatpush2.msra.mxu0 0.0
    %1350 = vmatprep.subr.mxu0 0.0
    %1351 = vmatpush2.msra.mxu0 0.0
    %1352 = vmatprep.subr.mxu0 0.0
    %1353 = vmatpush2.msra.mxu0 0.0
    %1354 = vmatprep.subr.mxu0 0.0
    %1355 = vmatpush2.msra.mxu0 0.0
    %1356 = vmatprep.subr.mxu0 0.0
    %1357 = vmatpush2.msra.mxu0 0.0
    %1358 = vmatprep.subr.mxu0 0.0
    %1359 = vmatpush2.msra.mxu0 0.0
    %1360 = vmatprep.subr.mxu0 0.0
    %1361 = vmatpush2.msra.mxu0 0.0
    %1362 = vmatprep.subr.mxu0 0.0
    %1363 = vmatpush2.msra.mxu0 0.0
    %1364 = vmatprep.subr.mxu0 0.0
    %1365 = vmatpush2.msra.mxu0 0.0
    %1366 = vmatprep.subr.mxu0 0.0
    %1367 = vmatpush2.msra.mxu0 0.0
    %1368 = vmatprep.subr.mxu0 0.0
    %1369 = vmatpush2.msra.mxu0 0.0
    %1370 = vmatprep.subr.mxu0 0.0
    %1371 = vmatpush2.msra.mxu0 0.0
    %1372 = vmatprep.subr.mxu0 0.0
    %1373 = vmatpush2.msra.mxu0 0.0
    %1374 = vmatprep.subr.mxu0 0.0
    %1375 = vmatpush2.msra.mxu0 0.0
    %1376 = vmatprep.subr.mxu0 0.0
    %1377 = vmatpush2.msra.mxu0 0.0
    %1378 = vmatprep.mubr.f32.mxu0 0.0
    %1379 = vmatmul.mubr.f32.gmra.mxu0 %v1241
    %v1380 = vpop.f32.mrf.mxu0
    %v1381 = vadd.f32 %v168, %v1380
    %v1382 = vpop.f32.mrf.mxu0
    %1383 = vdwg.mxu0
    %v1384 = vrot.slane %v369, 1
    %v1385 = vsel %vm418, %v372, %v1384
    %v1386 = vrot.slane %v375, 7
    %v1387 = vsel %vm421, %v1386, %v1385
    %v1388 = vrot.slane %v378, 6
    %v1389 = vsel %vm424, %v1388, %v1387
    %v1390 = vrot.slane %v381, 5
    %v1391 = vsel %vm427, %v1390, %v1389
    %v1392 = vrot.slane %v384, 4
    %v1393 = vsel %vm430, %v1392, %v1391
    %v1394 = vrot.slane %v387, 3
    %v1395 = vsel %vm433, %v1394, %v1393
    %v1396 = vrot.slane %v390, 2
    %v1397 = vsel %vm436, %v1396, %v1395
    %v1398 = vrot.slane %v370, 1
    %v1399 = vsel %vm418, %v373, %v1398
    %v1400 = vrot.slane %v376, 7
    %v1401 = vsel %vm421, %v1400, %v1399
    %v1402 = vrot.slane %v379, 6
    %v1403 = vsel %vm424, %v1402, %v1401
    %v1404 = vrot.slane %v382, 5
    %v1405 = vsel %vm427, %v1404, %v1403
    %v1406 = vrot.slane %v385, 4
    %v1407 = vsel %vm430, %v1406, %v1405
    %v1408 = vrot.slane %v388, 3
    %v1409 = vsel %vm433, %v1408, %v1407
    %v1410 = vrot.slane %v391, 2
    %v1411 = vsel %vm436, %v1410, %v1409
    %v1412 = vrot.slane %v371, 1
    %v1413 = vsel %vm418, %v374, %v1412
    %v1414 = vrot.slane %v377, 7
    %v1415 = vsel %vm421, %v1414, %v1413
    %v1416 = vrot.slane %v380, 6
    %v1417 = vsel %vm424, %v1416, %v1415
    %v1418 = vrot.slane %v383, 5
    %v1419 = vsel %vm427, %v1418, %v1417
    %v1420 = vrot.slane %v386, 4
    %v1421 = vsel %vm430, %v1420, %v1419
    %v1422 = vrot.slane %v389, 3
    %v1423 = vsel %vm433, %v1422, %v1421
    %v1424 = vrot.slane %v392, 2
    %v1425 = vsel %vm436, %v1424, %v1423
    %v1429 = vadd.f32 %v1310, %v1397
    %v1430 = vadd.f32 %v1312, %v1411
    %v1431 = vadd.f32 %v1381, %v1425
    %v1432 = vrot.slane %v516, 1
    %v1433 = vsel %vm418, %v519, %v1432
    %v1434 = vrot.slane %v522, 7
    %v1435 = vsel %vm421, %v1434, %v1433
    %v1436 = vrot.slane %v525, 6
    %v1437 = vsel %vm424, %v1436, %v1435
    %v1438 = vrot.slane %v528, 5
    %v1439 = vsel %vm427, %v1438, %v1437
    %v1440 = vrot.slane %v531, 4
    %v1441 = vsel %vm430, %v1440, %v1439
    %v1442 = vrot.slane %v534, 3
    %v1443 = vsel %vm433, %v1442, %v1441
    %v1444 = vrot.slane %v537, 2
    %v1445 = vsel %vm436, %v1444, %v1443
    %v1446 = vrot.slane %v517, 1
    %v1447 = vsel %vm418, %v520, %v1446
    %v1448 = vrot.slane %v523, 7
    %v1449 = vsel %vm421, %v1448, %v1447
    %v1450 = vrot.slane %v526, 6
    %v1451 = vsel %vm424, %v1450, %v1449
    %v1452 = vrot.slane %v529, 5
    %v1453 = vsel %vm427, %v1452, %v1451
    %v1454 = vrot.slane %v532, 4
    %v1455 = vsel %vm430, %v1454, %v1453
    %v1456 = vrot.slane %v535, 3
    %v1457 = vsel %vm433, %v1456, %v1455
    %v1458 = vrot.slane %v538, 2
    %v1459 = vsel %vm436, %v1458, %v1457
    %v1460 = vrot.slane %v518, 1
    %v1461 = vsel %vm418, %v521, %v1460
    %v1462 = vrot.slane %v524, 7
    %v1463 = vsel %vm421, %v1462, %v1461
    %v1464 = vrot.slane %v527, 6
    %v1465 = vsel %vm424, %v1464, %v1463
    %v1466 = vrot.slane %v530, 5
    %v1467 = vsel %vm427, %v1466, %v1465
    %v1468 = vrot.slane %v533, 4
    %v1469 = vsel %vm430, %v1468, %v1467
    %v1470 = vrot.slane %v536, 3
    %v1471 = vsel %vm433, %v1470, %v1469
    %v1472 = vrot.slane %v539, 2
    %v1473 = vsel %vm436, %v1472, %v1471
    %v1477 = vadd.f32 %v1429, %v1445
    %v1478 = vadd.f32 %v1430, %v1459
    %v1479 = vadd.f32 %v1431, %v1473
    %v1480 = vrot.slane %v664, 1
    %v1481 = vsel %vm418, %v667, %v1480
    %v1482 = vrot.slane %v670, 7
    %v1483 = vsel %vm421, %v1482, %v1481
    %v1484 = vrot.slane %v673, 6
    %v1485 = vsel %vm424, %v1484, %v1483
    %v1486 = vrot.slane %v676, 5
    %v1487 = vsel %vm427, %v1486, %v1485
    %v1488 = vrot.slane %v679, 4
    %v1489 = vsel %vm430, %v1488, %v1487
    %v1490 = vrot.slane %v682, 3
    %v1491 = vsel %vm433, %v1490, %v1489
    %v1492 = vrot.slane %v685, 2
    %v1493 = vsel %vm436, %v1492, %v1491
    %v1494 = vrot.slane %v665, 1
    %v1495 = vsel %vm418, %v668, %v1494
    %v1496 = vrot.slane %v671, 7
    %v1497 = vsel %vm421, %v1496, %v1495
    %v1498 = vrot.slane %v674, 6
    %v1499 = vsel %vm424, %v1498, %v1497
    %v1500 = vrot.slane %v677, 5
    %v1501 = vsel %vm427, %v1500, %v1499
    %v1502 = vrot.slane %v680, 4
    %v1503 = vsel %vm430, %v1502, %v1501
    %v1504 = vrot.slane %v683, 3
    %v1505 = vsel %vm433, %v1504, %v1503
    %v1506 = vrot.slane %v686, 2
    %v1507 = vsel %vm436, %v1506, %v1505
    %v1508 = vrot.slane %v666, 1
    %v1509 = vsel %vm418, %v669, %v1508
    %v1510 = vrot.slane %v672, 7
    %v1511 = vsel %vm421, %v1510, %v1509
    %v1512 = vrot.slane %v675, 6
    %v1513 = vsel %vm424, %v1512, %v1511
    %v1514 = vrot.slane %v678, 5
    %v1515 = vsel %vm427, %v1514, %v1513
    %v1516 = vrot.slane %v681, 4
    %v1517 = vsel %vm430, %v1516, %v1515
    %v1518 = vrot.slane %v684, 3
    %v1519 = vsel %vm433, %v1518, %v1517
    %v1520 = vrot.slane %v687, 2
    %v1521 = vsel %vm436, %v1520, %v1519
    %v1525 = vadd.f32 %v1477, %v1493
    %v1526 = vadd.f32 %v1478, %v1507
    %v1527 = vadd.f32 %v1479, %v1521
    %v1528 = vrot.slane %v804, 1
    %v1529 = vsel %vm418, %v807, %v1528
    %v1530 = vrot.slane %v810, 7
    %v1531 = vsel %vm421, %v1530, %v1529
    %v1532 = vrot.slane %v813, 6
    %v1533 = vsel %vm424, %v1532, %v1531
    %v1534 = vrot.slane %v816, 5
    %v1535 = vsel %vm427, %v1534, %v1533
    %v1536 = vrot.slane %v819, 4
    %v1537 = vsel %vm430, %v1536, %v1535
    %v1538 = vrot.slane %v822, 3
    %v1539 = vsel %vm433, %v1538, %v1537
    %v1540 = vrot.slane %v825, 2
    %v1541 = vsel %vm436, %v1540, %v1539
    %v1542 = vrot.slane %v805, 1
    %v1543 = vsel %vm418, %v808, %v1542
    %v1544 = vrot.slane %v811, 7
    %v1545 = vsel %vm421, %v1544, %v1543
    %v1546 = vrot.slane %v814, 6
    %v1547 = vsel %vm424, %v1546, %v1545
    %v1548 = vrot.slane %v817, 5
    %v1549 = vsel %vm427, %v1548, %v1547
    %v1550 = vrot.slane %v820, 4
    %v1551 = vsel %vm430, %v1550, %v1549
    %v1552 = vrot.slane %v823, 3
    %v1553 = vsel %vm433, %v1552, %v1551
    %v1554 = vrot.slane %v826, 2
    %v1555 = vsel %vm436, %v1554, %v1553
    %v1556 = vrot.slane %v806, 1
    %v1557 = vsel %vm418, %v809, %v1556
    %v1558 = vrot.slane %v812, 7
    %v1559 = vsel %vm421, %v1558, %v1557
    %v1560 = vrot.slane %v815, 6
    %v1561 = vsel %vm424, %v1560, %v1559
    %v1562 = vrot.slane %v818, 5
    %v1563 = vsel %vm427, %v1562, %v1561
    %v1564 = vrot.slane %v821, 4
    %v1565 = vsel %vm430, %v1564, %v1563
    %v1566 = vrot.slane %v824, 3
    %v1567 = vsel %vm433, %v1566, %v1565
    %v1568 = vrot.slane %v827, 2
    %v1569 = vsel %vm436, %v1568, %v1567
    %v1573 = vadd.f32 %v1525, %v1541
    %v1574 = vadd.f32 %v1526, %v1555
    %v1575 = vadd.f32 %v1527, %v1569
    %v1576 = vrot.slane %v952, 1
    %v1577 = vsel %vm418, %v955, %v1576
    %v1578 = vrot.slane %v958, 7
    %v1579 = vsel %vm421, %v1578, %v1577
    %v1580 = vrot.slane %v961, 6
    %v1581 = vsel %vm424, %v1580, %v1579
    %v1582 = vrot.slane %v964, 5
    %v1583 = vsel %vm427, %v1582, %v1581
    %v1584 = vrot.slane %v967, 4
    %v1585 = vsel %vm430, %v1584, %v1583
    %v1586 = vrot.slane %v970, 3
    %v1587 = vsel %vm433, %v1586, %v1585
    %v1588 = vrot.slane %v973, 2
    %v1589 = vsel %vm436, %v1588, %v1587
    %v1590 = vrot.slane %v953, 1
    %v1591 = vsel %vm418, %v956, %v1590
    %v1592 = vrot.slane %v959, 7
    %v1593 = vsel %vm421, %v1592, %v1591
    %v1594 = vrot.slane %v962, 6
    %v1595 = vsel %vm424, %v1594, %v1593
    %v1596 = vrot.slane %v965, 5
    %v1597 = vsel %vm427, %v1596, %v1595
    %v1598 = vrot.slane %v968, 4
    %v1599 = vsel %vm430, %v1598, %v1597
    %v1600 = vrot.slane %v971, 3
    %v1601 = vsel %vm433, %v1600, %v1599
    %v1602 = vrot.slane %v974, 2
    %v1603 = vsel %vm436, %v1602, %v1601
    %v1604 = vrot.slane %v954, 1
    %v1605 = vsel %vm418, %v957, %v1604
    %v1606 = vrot.slane %v960, 7
    %v1607 = vsel %vm421, %v1606, %v1605
    %v1608 = vrot.slane %v963, 6
    %v1609 = vsel %vm424, %v1608, %v1607
    %v1610 = vrot.slane %v966, 5
    %v1611 = vsel %vm427, %v1610, %v1609
    %v1612 = vrot.slane %v969, 4
    %v1613 = vsel %vm430, %v1612, %v1611
    %v1614 = vrot.slane %v972, 3
    %v1615 = vsel %vm433, %v1614, %v1613
    %v1616 = vrot.slane %v975, 2
    %v1617 = vsel %vm436, %v1616, %v1615
    %v1621 = vadd.f32 %v1573, %v1589
    %v1622 = vadd.f32 %v1574, %v1603
    %v1623 = vadd.f32 %v1575, %v1617
    %v1624 = vrot.slane %v1092, 1
    %v1625 = vsel %vm418, %v1095, %v1624
    %v1626 = vrot.slane %v1098, 7
    %v1627 = vsel %vm421, %v1626, %v1625
    %v1628 = vrot.slane %v1101, 6
    %v1629 = vsel %vm424, %v1628, %v1627
    %v1630 = vrot.slane %v1104, 5
    %v1631 = vsel %vm427, %v1630, %v1629
    %v1632 = vrot.slane %v1107, 4
    %v1633 = vsel %vm430, %v1632, %v1631
    %v1634 = vrot.slane %v1110, 3
    %v1635 = vsel %vm433, %v1634, %v1633
    %v1636 = vrot.slane %v1113, 2
    %v1637 = vsel %vm436, %v1636, %v1635
    %v1638 = vrot.slane %v1093, 1
    %v1639 = vsel %vm418, %v1096, %v1638
    %v1640 = vrot.slane %v1099, 7
    %v1641 = vsel %vm421, %v1640, %v1639
    %v1642 = vrot.slane %v1102, 6
    %v1643 = vsel %vm424, %v1642, %v1641
    %v1644 = vrot.slane %v1105, 5
    %v1645 = vsel %vm427, %v1644, %v1643
    %v1646 = vrot.slane %v1108, 4
    %v1647 = vsel %vm430, %v1646, %v1645
    %v1648 = vrot.slane %v1111, 3
    %v1649 = vsel %vm433, %v1648, %v1647
    %v1650 = vrot.slane %v1114, 2
    %v1651 = vsel %vm436, %v1650, %v1649
    %v1652 = vrot.slane %v1094, 1
    %v1653 = vsel %vm418, %v1097, %v1652
    %v1654 = vrot.slane %v1100, 7
    %v1655 = vsel %vm421, %v1654, %v1653
    %v1656 = vrot.slane %v1103, 6
    %v1657 = vsel %vm424, %v1656, %v1655
    %v1658 = vrot.slane %v1106, 5
    %v1659 = vsel %vm427, %v1658, %v1657
    %v1660 = vrot.slane %v1109, 4
    %v1661 = vsel %vm430, %v1660, %v1659
    %v1662 = vrot.slane %v1112, 3
    %v1663 = vsel %vm433, %v1662, %v1661
    %v1664 = vrot.slane %v1115, 2
    %v1665 = vsel %vm436, %v1664, %v1663
    %v1669 = vadd.f32 %v1621, %v1637
    %v1670 = vadd.f32 %v1622, %v1651
    %v1671 = vadd.f32 %v1623, %v1665
    %v1672 = vxor.u32 %v1669, 2147483648
    %v1673 = vxor.u32 %v1670, 2147483648
    %v1674 = vxor.u32 %v1671, 2147483648
    %v1675 = vmul.f32 %v1672, 1.442695
    %v1676 = vpow.pop %v1675
    %v1677 = vmul.f32 %v1673, 1.442695
    %v1678 = vpow.pop %v1677
    %v1679 = vmul.f32 %v1674, 1.442695
    %v1680 = vpow.pop %v1679
    %v1681 = vadd.f32 %v1676, 1.0
    %v1682 = vadd.f32 %v1678, 1.0
    %v1683 = vadd.f32 %v1680, 1.0
    %v1684 = vrcp.pop %v1681
    %v1685 = vmul.f32 1.0, %v1684
    %v1686 = vrcp.pop %v1682
    %v1687 = vmul.f32 1.0, %v1686
    %v1688 = vrcp.pop %v1683
    %v1689 = vmul.f32 1.0, %v1688
    %v1690 = vtanh.pop %v1671
    %v1691 = vmul.f32 %v1685, %v1218
    %v1692 = vmul.f32 %v1687, %v1219
    %1694 = vrot.lane.b32.xlu0 %v1690, 96
    %v1695 = vpop.permute.xlu0 %1694
    %v1697 = vmul.f32 %v1685, %v1695
    %1699 = vrot.lane.b32.xlu0 %v1697, 96
    %v1700 = vpop.permute.xlu0 %1699
    %v1702 = vadd.f32 %v1691, %v1700
    %v1703 = vadd.f32 %v1692, %v1700
    %v1704 = vtanh.pop %v1702
    %v1705 = vtanh.pop %v1703
    %1708 = vrot.lane.b32.xlu0 %v1704, 96
    %v1709 = vpop.permute.xlu0 %1708
    %1710 = vrot.lane.b32.xlu0 %v1705, 96
    %v1711 = vpop.permute.xlu0 %1710
    %v1712 = vsel %vm172, %v1709, %v1711
    %v1715 = vmul.f32 %v1687, %v1712
    %v1716 = vmul.f32 %v1689, %v1711
    %1719 = vrot.lane.b32.xlu0 %v1715, 64
    %v1720 = vpop.permute.xlu0 %1719
    %1721 = vrot.lane.b32.xlu0 %v1716, 64
    %v1722 = vpop.permute.xlu0 %1721
    %v1723 = vsel %vm1239, %v1720, %v1722
    %v1724 = vsel %vm172, %v1723, 0
    %1726 = vmatprep.subr.mxu0 0.0
    %1727 = vmatpush1.msra.mxu0 0.0
    %1728 = vmatprep.subr.mxu0 0.0
    %1729 = vmatpush1.msra.mxu0 0.0
    %1730 = vmatprep.subr.mxu0 0.0
    %1731 = vmatpush1.msra.mxu0 0.0
    %1732 = vmatprep.subr.mxu0 0.0
    %1733 = vmatpush1.msra.mxu0 0.0
    %1734 = vmatprep.subr.mxu0 %v154
    %1735 = vmatpush1.msra.mxu0 %v153
    %1736 = vmatprep.subr.mxu0 %v151
    %1737 = vmatpush1.msra.mxu0 %v150
    %1738 = vmatprep.subr.mxu0 %v148
    %1739 = vmatpush1.msra.mxu0 %v147
    %1740 = vmatprep.subr.mxu0 %v145
    %1741 = vmatpush1.msra.mxu0 %v144
    %1742 = vmatprep.subr.mxu0 %v142
    %1743 = vmatpush1.msra.mxu0 %v141
    %1744 = vmatprep.subr.mxu0 %v139
    %1745 = vmatpush1.msra.mxu0 %v138
    %1746 = vmatprep.subr.mxu0 %v136
    %1747 = vmatpush1.msra.mxu0 %v135
    %1748 = vmatprep.subr.mxu0 %v133
    %1749 = vmatpush1.msra.mxu0 %v132
    %1750 = vmatprep.subr.mxu0 %v130
    %1751 = vmatpush1.msra.mxu0 %v129
    %1752 = vmatprep.subr.mxu0 %v127
    %1753 = vmatpush1.msra.mxu0 %v126
    %1754 = vmatprep.subr.mxu0 %v124
    %1755 = vmatpush1.msra.mxu0 %v123
    %1756 = vmatprep.subr.mxu0 %v121
    %1757 = vmatpush1.msra.mxu0 %v120
    %1758 = vmatprep.subr.mxu0 0.0
    %1759 = vmatpush2.msra.mxu0 0.0
    %1760 = vmatprep.subr.mxu0 0.0
    %1761 = vmatpush2.msra.mxu0 0.0
    %1762 = vmatprep.subr.mxu0 0.0
    %1763 = vmatpush2.msra.mxu0 0.0
    %1764 = vmatprep.subr.mxu0 0.0
    %1765 = vmatpush2.msra.mxu0 0.0
    %1766 = vmatprep.subr.mxu0 0.0
    %1767 = vmatpush2.msra.mxu0 0.0
    %1768 = vmatprep.subr.mxu0 0.0
    %1769 = vmatpush2.msra.mxu0 0.0
    %1770 = vmatprep.subr.mxu0 0.0
    %1771 = vmatpush2.msra.mxu0 0.0
    %1772 = vmatprep.subr.mxu0 0.0
    %1773 = vmatpush2.msra.mxu0 0.0
    %1774 = vmatprep.subr.mxu0 0.0
    %1775 = vmatpush2.msra.mxu0 0.0
    %1776 = vmatprep.subr.mxu0 0.0
    %1777 = vmatpush2.msra.mxu0 0.0
    %1778 = vmatprep.subr.mxu0 0.0
    %1779 = vmatpush2.msra.mxu0 0.0
    %1780 = vmatprep.subr.mxu0 0.0
    %1781 = vmatpush2.msra.mxu0 0.0
    %1782 = vmatprep.subr.mxu0 0.0
    %1783 = vmatpush2.msra.mxu0 0.0
    %1784 = vmatprep.subr.mxu0 0.0
    %1785 = vmatpush2.msra.mxu0 0.0
    %1786 = vmatprep.subr.mxu0 0.0
    %1787 = vmatpush2.msra.mxu0 0.0
    %1788 = vmatprep.subr.mxu0 0.0
    %1789 = vmatpush2.msra.mxu0 0.0
    %1790 = vmatprep.mubr.f32.mxu0 0.0
    %1791 = vmatmul.mubr.f32.gmra.mxu0 %v1724
    %v1792 = vpop.f32.mrf.mxu0
    %v1793 = vadd.f32 %v160, %v1792
    %v1794 = vpop.f32.mrf.mxu0
    %v1795 = vadd.f32 %v164, %v1794
    %1796 = vdwg.mxu0
    %1797 = vmatprep.subr.mxu0 0.0
    %1798 = vmatpush1.msra.mxu0 0.0
    %1799 = vmatprep.subr.mxu0 0.0
    %1800 = vmatpush1.msra.mxu0 0.0
    %1801 = vmatprep.subr.mxu0 0.0
    %1802 = vmatpush1.msra.mxu0 0.0
    %1803 = vmatprep.subr.mxu0 0.0
    %1804 = vmatpush1.msra.mxu0 0.0
    %1805 = vmatprep.subr.mxu0 0.0
    %1806 = vmatpush1.msra.mxu0 %v155
    %1807 = vmatprep.subr.mxu0 0.0
    %1808 = vmatpush1.msra.mxu0 %v152
    %1809 = vmatprep.subr.mxu0 0.0
    %1810 = vmatpush1.msra.mxu0 %v149
    %1811 = vmatprep.subr.mxu0 0.0
    %1812 = vmatpush1.msra.mxu0 %v146
    %1813 = vmatprep.subr.mxu0 0.0
    %1814 = vmatpush1.msra.mxu0 %v143
    %1815 = vmatprep.subr.mxu0 0.0
    %1816 = vmatpush1.msra.mxu0 %v140
    %1817 = vmatprep.subr.mxu0 0.0
    %1818 = vmatpush1.msra.mxu0 %v137
    %1819 = vmatprep.subr.mxu0 0.0
    %1820 = vmatpush1.msra.mxu0 %v134
    %1821 = vmatprep.subr.mxu0 0.0
    %1822 = vmatpush1.msra.mxu0 %v131
    %1823 = vmatprep.subr.mxu0 0.0
    %1824 = vmatpush1.msra.mxu0 %v128
    %1825 = vmatprep.subr.mxu0 0.0
    %1826 = vmatpush1.msra.mxu0 %v125
    %1827 = vmatprep.subr.mxu0 0.0
    %1828 = vmatpush1.msra.mxu0 %v122
    %1829 = vmatprep.subr.mxu0 0.0
    %1830 = vmatpush2.msra.mxu0 0.0
    %1831 = vmatprep.subr.mxu0 0.0
    %1832 = vmatpush2.msra.mxu0 0.0
    %1833 = vmatprep.subr.mxu0 0.0
    %1834 = vmatpush2.msra.mxu0 0.0
    %1835 = vmatprep.subr.mxu0 0.0
    %1836 = vmatpush2.msra.mxu0 0.0
    %1837 = vmatprep.subr.mxu0 0.0
    %1838 = vmatpush2.msra.mxu0 0.0
    %1839 = vmatprep.subr.mxu0 0.0
    %1840 = vmatpush2.msra.mxu0 0.0
    %1841 = vmatprep.subr.mxu0 0.0
    %1842 = vmatpush2.msra.mxu0 0.0
    %1843 = vmatprep.subr.mxu0 0.0
    %1844 = vmatpush2.msra.mxu0 0.0
    %1845 = vmatprep.subr.mxu0 0.0
    %1846 = vmatpush2.msra.mxu0 0.0
    %1847 = vmatprep.subr.mxu0 0.0
    %1848 = vmatpush2.msra.mxu0 0.0
    %1849 = vmatprep.subr.mxu0 0.0
    %1850 = vmatpush2.msra.mxu0 0.0
    %1851 = vmatprep.subr.mxu0 0.0
    %1852 = vmatpush2.msra.mxu0 0.0
    %1853 = vmatprep.subr.mxu0 0.0
    %1854 = vmatpush2.msra.mxu0 0.0
    %1855 = vmatprep.subr.mxu0 0.0
    %1856 = vmatpush2.msra.mxu0 0.0
    %1857 = vmatprep.subr.mxu0 0.0
    %1858 = vmatpush2.msra.mxu0 0.0
    %1859 = vmatprep.subr.mxu0 0.0
    %1860 = vmatpush2.msra.mxu0 0.0
    %1861 = vmatprep.mubr.f32.mxu0 0.0
    %1862 = vmatmul.mubr.f32.gmra.mxu0 %v1724
    %v1863 = vpop.f32.mrf.mxu0
    %v1864 = vadd.f32 %v168, %v1863
    %v1865 = vpop.f32.mrf.mxu0
    %1866 = vdwg.mxu0
    %v1867 = vrot.slane %v369, 2
    %v1868 = vrot.slane %v372, 1
    %v1869 = vsel %vm418, %v1868, %v1867
    %v1870 = vsel %vm421, %v375, %v1869
    %v1871 = vrot.slane %v378, 7
    %v1872 = vsel %vm424, %v1871, %v1870
    %v1873 = vrot.slane %v381, 6
    %v1874 = vsel %vm427, %v1873, %v1872
    %v1875 = vrot.slane %v384, 5
    %v1876 = vsel %vm430, %v1875, %v1874
    %v1877 = vrot.slane %v387, 4
    %v1878 = vsel %vm433, %v1877, %v1876
    %v1879 = vrot.slane %v390, 3
    %v1880 = vsel %vm436, %v1879, %v1878
    %v1881 = vrot.slane %v370, 2
    %v1882 = vrot.slane %v373, 1
    %v1883 = vsel %vm418, %v1882, %v1881
    %v1884 = vsel %vm421, %v376, %v1883
    %v1885 = vrot.slane %v379, 7
    %v1886 = vsel %vm424, %v1885, %v1884
    %v1887 = vrot.slane %v382, 6
    %v1888 = vsel %vm427, %v1887, %v1886
    %v1889 = vrot.slane %v385, 5
    %v1890 = vsel %vm430, %v1889, %v1888
    %v1891 = vrot.slane %v388, 4
    %v1892 = vsel %vm433, %v1891, %v1890
    %v1893 = vrot.slane %v391, 3
    %v1894 = vsel %vm436, %v1893, %v1892
    %v1895 = vrot.slane %v371, 2
    %v1896 = vrot.slane %v374, 1
    %v1897 = vsel %vm418, %v1896, %v1895
    %v1898 = vsel %vm421, %v377, %v1897
    %v1899 = vrot.slane %v380, 7
    %v1900 = vsel %vm424, %v1899, %v1898
    %v1901 = vrot.slane %v383, 6
    %v1902 = vsel %vm427, %v1901, %v1900
    %v1903 = vrot.slane %v386, 5
    %v1904 = vsel %vm430, %v1903, %v1902
    %v1905 = vrot.slane %v389, 4
    %v1906 = vsel %vm433, %v1905, %v1904
    %v1907 = vrot.slane %v392, 3
    %v1908 = vsel %vm436, %v1907, %v1906
    %v1912 = vadd.f32 %v1793, %v1880
    %v1913 = vadd.f32 %v1795, %v1894
    %v1914 = vadd.f32 %v1864, %v1908
    %v1915 = vrot.slane %v516, 2
    %v1916 = vrot.slane %v519, 1
    %v1917 = vsel %vm418, %v1916, %v1915
    %v1918 = vsel %vm421, %v522, %v1917
    %v1919 = vrot.slane %v525, 7
    %v1920 = vsel %vm424, %v1919, %v1918
    %v1921 = vrot.slane %v528, 6
    %v1922 = vsel %vm427, %v1921, %v1920
    %v1923 = vrot.slane %v531, 5
    %v1924 = vsel %vm430, %v1923, %v1922
    %v1925 = vrot.slane %v534, 4
    %v1926 = vsel %vm433, %v1925, %v1924
    %v1927 = vrot.slane %v537, 3
    %v1928 = vsel %vm436, %v1927, %v1926
    %v1929 = vrot.slane %v517, 2
    %v1930 = vrot.slane %v520, 1
    %v1931 = vsel %vm418, %v1930, %v1929
    %v1932 = vsel %vm421, %v523, %v1931
    %v1933 = vrot.slane %v526, 7
    %v1934 = vsel %vm424, %v1933, %v1932
    %v1935 = vrot.slane %v529, 6
    %v1936 = vsel %vm427, %v1935, %v1934
    %v1937 = vrot.slane %v532, 5
    %v1938 = vsel %vm430, %v1937, %v1936
    %v1939 = vrot.slane %v535, 4
    %v1940 = vsel %vm433, %v1939, %v1938
    %v1941 = vrot.slane %v538, 3
    %v1942 = vsel %vm436, %v1941, %v1940
    %v1943 = vrot.slane %v518, 2
    %v1944 = vrot.slane %v521, 1
    %v1945 = vsel %vm418, %v1944, %v1943
    %v1946 = vsel %vm421, %v524, %v1945
    %v1947 = vrot.slane %v527, 7
    %v1948 = vsel %vm424, %v1947, %v1946
    %v1949 = vrot.slane %v530, 6
    %v1950 = vsel %vm427, %v1949, %v1948
    %v1951 = vrot.slane %v533, 5
    %v1952 = vsel %vm430, %v1951, %v1950
    %v1953 = vrot.slane %v536, 4
    %v1954 = vsel %vm433, %v1953, %v1952
    %v1955 = vrot.slane %v539, 3
    %v1956 = vsel %vm436, %v1955, %v1954
    %v1960 = vadd.f32 %v1912, %v1928
    %v1961 = vadd.f32 %v1913, %v1942
    %v1962 = vadd.f32 %v1914, %v1956
    %v1963 = vrot.slane %v664, 2
    %v1964 = vrot.slane %v667, 1
    %v1965 = vsel %vm418, %v1964, %v1963
    %v1966 = vsel %vm421, %v670, %v1965
    %v1967 = vrot.slane %v673, 7
    %v1968 = vsel %vm424, %v1967, %v1966
    %v1969 = vrot.slane %v676, 6
    %v1970 = vsel %vm427, %v1969, %v1968
    %v1971 = vrot.slane %v679, 5
    %v1972 = vsel %vm430, %v1971, %v1970
    %v1973 = vrot.slane %v682, 4
    %v1974 = vsel %vm433, %v1973, %v1972
    %v1975 = vrot.slane %v685, 3
    %v1976 = vsel %vm436, %v1975, %v1974
    %v1977 = vrot.slane %v665, 2
    %v1978 = vrot.slane %v668, 1
    %v1979 = vsel %vm418, %v1978, %v1977
    %v1980 = vsel %vm421, %v671, %v1979
    %v1981 = vrot.slane %v674, 7
    %v1982 = vsel %vm424, %v1981, %v1980
    %v1983 = vrot.slane %v677, 6
    %v1984 = vsel %vm427, %v1983, %v1982
    %v1985 = vrot.slane %v680, 5
    %v1986 = vsel %vm430, %v1985, %v1984
    %v1987 = vrot.slane %v683, 4
    %v1988 = vsel %vm433, %v1987, %v1986
    %v1989 = vrot.slane %v686, 3
    %v1990 = vsel %vm436, %v1989, %v1988
    %v1991 = vrot.slane %v666, 2
    %v1992 = vrot.slane %v669, 1
    %v1993 = vsel %vm418, %v1992, %v1991
    %v1994 = vsel %vm421, %v672, %v1993
    %v1995 = vrot.slane %v675, 7
    %v1996 = vsel %vm424, %v1995, %v1994
    %v1997 = vrot.slane %v678, 6
    %v1998 = vsel %vm427, %v1997, %v1996
    %v1999 = vrot.slane %v681, 5
    %v2000 = vsel %vm430, %v1999, %v1998
    %v2001 = vrot.slane %v684, 4
    %v2002 = vsel %vm433, %v2001, %v2000
    %v2003 = vrot.slane %v687, 3
    %v2004 = vsel %vm436, %v2003, %v2002
    %v2008 = vadd.f32 %v1960, %v1976
    %v2009 = vadd.f32 %v1961, %v1990
    %v2010 = vadd.f32 %v1962, %v2004
    %v2011 = vrot.slane %v804, 2
    %v2012 = vrot.slane %v807, 1
    %v2013 = vsel %vm418, %v2012, %v2011
    %v2014 = vsel %vm421, %v810, %v2013
    %v2015 = vrot.slane %v813, 7
    %v2016 = vsel %vm424, %v2015, %v2014
    %v2017 = vrot.slane %v816, 6
    %v2018 = vsel %vm427, %v2017, %v2016
    %v2019 = vrot.slane %v819, 5
    %v2020 = vsel %vm430, %v2019, %v2018
    %v2021 = vrot.slane %v822, 4
    %v2022 = vsel %vm433, %v2021, %v2020
    %v2023 = vrot.slane %v825, 3
    %v2024 = vsel %vm436, %v2023, %v2022
    %v2025 = vrot.slane %v805, 2
    %v2026 = vrot.slane %v808, 1
    %v2027 = vsel %vm418, %v2026, %v2025
    %v2028 = vsel %vm421, %v811, %v2027
    %v2029 = vrot.slane %v814, 7
    %v2030 = vsel %vm424, %v2029, %v2028
    %v2031 = vrot.slane %v817, 6
    %v2032 = vsel %vm427, %v2031, %v2030
    %v2033 = vrot.slane %v820, 5
    %v2034 = vsel %vm430, %v2033, %v2032
    %v2035 = vrot.slane %v823, 4
    %v2036 = vsel %vm433, %v2035, %v2034
    %v2037 = vrot.slane %v826, 3
    %v2038 = vsel %vm436, %v2037, %v2036
    %v2039 = vrot.slane %v806, 2
    %v2040 = vrot.slane %v809, 1
    %v2041 = vsel %vm418, %v2040, %v2039
    %v2042 = vsel %vm421, %v812, %v2041
    %v2043 = vrot.slane %v815, 7
    %v2044 = vsel %vm424, %v2043, %v2042
    %v2045 = vrot.slane %v818, 6
    %v2046 = vsel %vm427, %v2045, %v2044
    %v2047 = vrot.slane %v821, 5
    %v2048 = vsel %vm430, %v2047, %v2046
    %v2049 = vrot.slane %v824, 4
    %v2050 = vsel %vm433, %v2049, %v2048
    %v2051 = vrot.slane %v827, 3
    %v2052 = vsel %vm436, %v2051, %v2050
    %v2056 = vadd.f32 %v2008, %v2024
    %v2057 = vadd.f32 %v2009, %v2038
    %v2058 = vadd.f32 %v2010, %v2052
    %v2059 = vrot.slane %v952, 2
    %v2060 = vrot.slane %v955, 1
    %v2061 = vsel %vm418, %v2060, %v2059
    %v2062 = vsel %vm421, %v958, %v2061
    %v2063 = vrot.slane %v961, 7
    %v2064 = vsel %vm424, %v2063, %v2062
    %v2065 = vrot.slane %v964, 6
    %v2066 = vsel %vm427, %v2065, %v2064
    %v2067 = vrot.slane %v967, 5
    %v2068 = vsel %vm430, %v2067, %v2066
    %v2069 = vrot.slane %v970, 4
    %v2070 = vsel %vm433, %v2069, %v2068
    %v2071 = vrot.slane %v973, 3
    %v2072 = vsel %vm436, %v2071, %v2070
    %v2073 = vrot.slane %v953, 2
    %v2074 = vrot.slane %v956, 1
    %v2075 = vsel %vm418, %v2074, %v2073
    %v2076 = vsel %vm421, %v959, %v2075
    %v2077 = vrot.slane %v962, 7
    %v2078 = vsel %vm424, %v2077, %v2076
    %v2079 = vrot.slane %v965, 6
    %v2080 = vsel %vm427, %v2079, %v2078
    %v2081 = vrot.slane %v968, 5
    %v2082 = vsel %vm430, %v2081, %v2080
    %v2083 = vrot.slane %v971, 4
    %v2084 = vsel %vm433, %v2083, %v2082
    %v2085 = vrot.slane %v974, 3
    %v2086 = vsel %vm436, %v2085, %v2084
    %v2087 = vrot.slane %v954, 2
    %v2088 = vrot.slane %v957, 1
    %v2089 = vsel %vm418, %v2088, %v2087
    %v2090 = vsel %vm421, %v960, %v2089
    %v2091 = vrot.slane %v963, 7
    %v2092 = vsel %vm424, %v2091, %v2090
    %v2093 = vrot.slane %v966, 6
    %v2094 = vsel %vm427, %v2093, %v2092
    %v2095 = vrot.slane %v969, 5
    %v2096 = vsel %vm430, %v2095, %v2094
    %v2097 = vrot.slane %v972, 4
    %v2098 = vsel %vm433, %v2097, %v2096
    %v2099 = vrot.slane %v975, 3
    %v2100 = vsel %vm436, %v2099, %v2098
    %v2104 = vadd.f32 %v2056, %v2072
    %v2105 = vadd.f32 %v2057, %v2086
    %v2106 = vadd.f32 %v2058, %v2100
    %v2107 = vrot.slane %v1092, 2
    %v2108 = vrot.slane %v1095, 1
    %v2109 = vsel %vm418, %v2108, %v2107
    %v2110 = vsel %vm421, %v1098, %v2109
    %v2111 = vrot.slane %v1101, 7
    %v2112 = vsel %vm424, %v2111, %v2110
    %v2113 = vrot.slane %v1104, 6
    %v2114 = vsel %vm427, %v2113, %v2112
    %v2115 = vrot.slane %v1107, 5
    %v2116 = vsel %vm430, %v2115, %v2114
    %v2117 = vrot.slane %v1110, 4
    %v2118 = vsel %vm433, %v2117, %v2116
    %v2119 = vrot.slane %v1113, 3
    %v2120 = vsel %vm436, %v2119, %v2118
    %v2121 = vrot.slane %v1093, 2
    %v2122 = vrot.slane %v1096, 1
    %v2123 = vsel %vm418, %v2122, %v2121
    %v2124 = vsel %vm421, %v1099, %v2123
    %v2125 = vrot.slane %v1102, 7
    %v2126 = vsel %vm424, %v2125, %v2124
    %v2127 = vrot.slane %v1105, 6
    %v2128 = vsel %vm427, %v2127, %v2126
    %v2129 = vrot.slane %v1108, 5
    %v2130 = vsel %vm430, %v2129, %v2128
    %v2131 = vrot.slane %v1111, 4
    %v2132 = vsel %vm433, %v2131, %v2130
    %v2133 = vrot.slane %v1114, 3
    %v2134 = vsel %vm436, %v2133, %v2132
    %v2135 = vrot.slane %v1094, 2
    %v2136 = vrot.slane %v1097, 1
    %v2137 = vsel %vm418, %v2136, %v2135
    %v2138 = vsel %vm421, %v1100, %v2137
    %v2139 = vrot.slane %v1103, 7
    %v2140 = vsel %vm424, %v2139, %v2138
    %v2141 = vrot.slane %v1106, 6
    %v2142 = vsel %vm427, %v2141, %v2140
    %v2143 = vrot.slane %v1109, 5
    %v2144 = vsel %vm430, %v2143, %v2142
    %v2145 = vrot.slane %v1112, 4
    %v2146 = vsel %vm433, %v2145, %v2144
    %v2147 = vrot.slane %v1115, 3
    %v2148 = vsel %vm436, %v2147, %v2146
    %v2152 = vadd.f32 %v2104, %v2120
    %v2153 = vadd.f32 %v2105, %v2134
    %v2154 = vadd.f32 %v2106, %v2148
    %v2155 = vxor.u32 %v2152, 2147483648
    %v2156 = vxor.u32 %v2153, 2147483648
    %v2157 = vxor.u32 %v2154, 2147483648
    %v2158 = vmul.f32 %v2155, 1.442695
    %v2159 = vpow.pop %v2158
    %v2160 = vmul.f32 %v2156, 1.442695
    %v2161 = vpow.pop %v2160
    %v2162 = vmul.f32 %v2157, 1.442695
    %v2163 = vpow.pop %v2162
    %v2164 = vadd.f32 %v2159, 1.0
    %v2165 = vadd.f32 %v2161, 1.0
    %v2166 = vadd.f32 %v2163, 1.0
    %v2167 = vrcp.pop %v2164
    %v2168 = vmul.f32 1.0, %v2167
    %v2169 = vrcp.pop %v2165
    %v2170 = vmul.f32 1.0, %v2169
    %v2171 = vrcp.pop %v2166
    %v2172 = vmul.f32 1.0, %v2171
    %v2173 = vtanh.pop %v2154
    %v2174 = vmul.f32 %v2168, %v1702
    %v2175 = vmul.f32 %v2170, %v1703
    %2177 = vrot.lane.b32.xlu0 %v2173, 96
    %v2178 = vpop.permute.xlu0 %2177
    %v2180 = vmul.f32 %v2168, %v2178
    %2182 = vrot.lane.b32.xlu0 %v2180, 96
    %v2183 = vpop.permute.xlu0 %2182
    %v2185 = vadd.f32 %v2174, %v2183
    %v2186 = vadd.f32 %v2175, %v2183
    %v2187 = vtanh.pop %v2185
    %v2188 = vtanh.pop %v2186
    %2191 = vrot.lane.b32.xlu0 %v2187, 96
    %v2192 = vpop.permute.xlu0 %2191
    %2193 = vrot.lane.b32.xlu0 %v2188, 96
    %v2194 = vpop.permute.xlu0 %2193
    %v2195 = vsel %vm172, %v2192, %v2194
    %v2198 = vmul.f32 %v2170, %v2195
    %v2199 = vmul.f32 %v2172, %v2194
    %2202 = vrot.lane.b32.xlu0 %v2198, 64
    %v2203 = vpop.permute.xlu0 %2202
    %2204 = vrot.lane.b32.xlu0 %v2199, 64
    %v2205 = vpop.permute.xlu0 %2204
    %v2206 = vsel %vm1239, %v2203, %v2205
    %v2207 = vsel %vm172, %v2206, 0
    %2209 = vmatprep.subr.mxu0 0.0
    %2210 = vmatpush1.msra.mxu0 0.0
    %2211 = vmatprep.subr.mxu0 0.0
    %2212 = vmatpush1.msra.mxu0 0.0
    %2213 = vmatprep.subr.mxu0 0.0
    %2214 = vmatpush1.msra.mxu0 0.0
    %2215 = vmatprep.subr.mxu0 0.0
    %2216 = vmatpush1.msra.mxu0 0.0
    %2217 = vmatprep.subr.mxu0 %v154
    %2218 = vmatpush1.msra.mxu0 %v153
    %2219 = vmatprep.subr.mxu0 %v151
    %2220 = vmatpush1.msra.mxu0 %v150
    %2221 = vmatprep.subr.mxu0 %v148
    %2222 = vmatpush1.msra.mxu0 %v147
    %2223 = vmatprep.subr.mxu0 %v145
    %2224 = vmatpush1.msra.mxu0 %v144
    %2225 = vmatprep.subr.mxu0 %v142
    %2226 = vmatpush1.msra.mxu0 %v141
    %2227 = vmatprep.subr.mxu0 %v139
    %2228 = vmatpush1.msra.mxu0 %v138
    %2229 = vmatprep.subr.mxu0 %v136
    %2230 = vmatpush1.msra.mxu0 %v135
    %2231 = vmatprep.subr.mxu0 %v133
    %2232 = vmatpush1.msra.mxu0 %v132
    %2233 = vmatprep.subr.mxu0 %v130
    %2234 = vmatpush1.msra.mxu0 %v129
    %2235 = vmatprep.subr.mxu0 %v127
    %2236 = vmatpush1.msra.mxu0 %v126
    %2237 = vmatprep.subr.mxu0 %v124
    %2238 = vmatpush1.msra.mxu0 %v123
    %2239 = vmatprep.subr.mxu0 %v121
    %2240 = vmatpush1.msra.mxu0 %v120
    %2241 = vmatprep.subr.mxu0 0.0
    %2242 = vmatpush2.msra.mxu0 0.0
    %2243 = vmatprep.subr.mxu0 0.0
    %2244 = vmatpush2.msra.mxu0 0.0
    %2245 = vmatprep.subr.mxu0 0.0
    %2246 = vmatpush2.msra.mxu0 0.0
    %2247 = vmatprep.subr.mxu0 0.0
    %2248 = vmatpush2.msra.mxu0 0.0
    %2249 = vmatprep.subr.mxu0 0.0
    %2250 = vmatpush2.msra.mxu0 0.0
    %2251 = vmatprep.subr.mxu0 0.0
    %2252 = vmatpush2.msra.mxu0 0.0
    %2253 = vmatprep.subr.mxu0 0.0
    %2254 = vmatpush2.msra.mxu0 0.0
    %2255 = vmatprep.subr.mxu0 0.0
    %2256 = vmatpush2.msra.mxu0 0.0
    %2257 = vmatprep.subr.mxu0 0.0
    %2258 = vmatpush2.msra.mxu0 0.0
    %2259 = vmatprep.subr.mxu0 0.0
    %2260 = vmatpush2.msra.mxu0 0.0
    %2261 = vmatprep.subr.mxu0 0.0
    %2262 = vmatpush2.msra.mxu0 0.0
    %2263 = vmatprep.subr.mxu0 0.0
    %2264 = vmatpush2.msra.mxu0 0.0
    %2265 = vmatprep.subr.mxu0 0.0
    %2266 = vmatpush2.msra.mxu0 0.0
    %2267 = vmatprep.subr.mxu0 0.0
    %2268 = vmatpush2.msra.mxu0 0.0
    %2269 = vmatprep.subr.mxu0 0.0
    %2270 = vmatpush2.msra.mxu0 0.0
    %2271 = vmatprep.subr.mxu0 0.0
    %2272 = vmatpush2.msra.mxu0 0.0
    %2273 = vmatprep.mubr.f32.mxu0 0.0
    %2274 = vmatmul.mubr.f32.gmra.mxu0 %v2207
    %v2275 = vpop.f32.mrf.mxu0
    %v2276 = vadd.f32 %v160, %v2275
    %v2277 = vpop.f32.mrf.mxu0
    %v2278 = vadd.f32 %v164, %v2277
    %2279 = vdwg.mxu0
    %2280 = vmatprep.subr.mxu0 0.0
    %2281 = vmatpush1.msra.mxu0 0.0
    %2282 = vmatprep.subr.mxu0 0.0
    %2283 = vmatpush1.msra.mxu0 0.0
    %2284 = vmatprep.subr.mxu0 0.0
    %2285 = vmatpush1.msra.mxu0 0.0
    %2286 = vmatprep.subr.mxu0 0.0
    %2287 = vmatpush1.msra.mxu0 0.0
    %2288 = vmatprep.subr.mxu0 0.0
    %2289 = vmatpush1.msra.mxu0 %v155
    %2290 = vmatprep.subr.mxu0 0.0
    %2291 = vmatpush1.msra.mxu0 %v152
    %2292 = vmatprep.subr.mxu0 0.0
    %2293 = vmatpush1.msra.mxu0 %v149
    %2294 = vmatprep.subr.mxu0 0.0
    %2295 = vmatpush1.msra.mxu0 %v146
    %2296 = vmatprep.subr.mxu0 0.0
    %2297 = vmatpush1.msra.mxu0 %v143
    %2298 = vmatprep.subr.mxu0 0.0
    %2299 = vmatpush1.msra.mxu0 %v140
    %2300 = vmatprep.subr.mxu0 0.0
    %2301 = vmatpush1.msra.mxu0 %v137
    %2302 = vmatprep.subr.mxu0 0.0
    %2303 = vmatpush1.msra.mxu0 %v134
    %2304 = vmatprep.subr.mxu0 0.0
    %2305 = vmatpush1.msra.mxu0 %v131
    %2306 = vmatprep.subr.mxu0 0.0
    %2307 = vmatpush1.msra.mxu0 %v128
    %2308 = vmatprep.subr.mxu0 0.0
    %2309 = vmatpush1.msra.mxu0 %v125
    %2310 = vmatprep.subr.mxu0 0.0
    %2311 = vmatpush1.msra.mxu0 %v122
    %2312 = vmatprep.subr.mxu0 0.0
    %2313 = vmatpush2.msra.mxu0 0.0
    %2314 = vmatprep.subr.mxu0 0.0
    %2315 = vmatpush2.msra.mxu0 0.0
    %2316 = vmatprep.subr.mxu0 0.0
    %2317 = vmatpush2.msra.mxu0 0.0
    %2318 = vmatprep.subr.mxu0 0.0
    %2319 = vmatpush2.msra.mxu0 0.0
    %2320 = vmatprep.subr.mxu0 0.0
    %2321 = vmatpush2.msra.mxu0 0.0
    %2322 = vmatprep.subr.mxu0 0.0
    %2323 = vmatpush2.msra.mxu0 0.0
    %2324 = vmatprep.subr.mxu0 0.0
    %2325 = vmatpush2.msra.mxu0 0.0
    %2326 = vmatprep.subr.mxu0 0.0
    %2327 = vmatpush2.msra.mxu0 0.0
    %2328 = vmatprep.subr.mxu0 0.0
    %2329 = vmatpush2.msra.mxu0 0.0
    %2330 = vmatprep.subr.mxu0 0.0
    %2331 = vmatpush2.msra.mxu0 0.0
    %2332 = vmatprep.subr.mxu0 0.0
    %2333 = vmatpush2.msra.mxu0 0.0
    %2334 = vmatprep.subr.mxu0 0.0
    %2335 = vmatpush2.msra.mxu0 0.0
    %2336 = vmatprep.subr.mxu0 0.0
    %2337 = vmatpush2.msra.mxu0 0.0
    %2338 = vmatprep.subr.mxu0 0.0
    %2339 = vmatpush2.msra.mxu0 0.0
    %2340 = vmatprep.subr.mxu0 0.0
    %2341 = vmatpush2.msra.mxu0 0.0
    %2342 = vmatprep.subr.mxu0 0.0
    %2343 = vmatpush2.msra.mxu0 0.0
    %2344 = vmatprep.mubr.f32.mxu0 0.0
    %2345 = vmatmul.mubr.f32.gmra.mxu0 %v2207
    %v2346 = vpop.f32.mrf.mxu0
    %v2347 = vadd.f32 %v168, %v2346
    %v2348 = vpop.f32.mrf.mxu0
    %2349 = vdwg.mxu0
    %v2350 = vrot.slane %v369, 3
    %v2351 = vrot.slane %v372, 2
    %v2352 = vsel %vm418, %v2351, %v2350
    %v2353 = vrot.slane %v375, 1
    %v2354 = vsel %vm421, %v2353, %v2352
    %v2355 = vsel %vm424, %v378, %v2354
    %v2356 = vrot.slane %v381, 7
    %v2357 = vsel %vm427, %v2356, %v2355
    %v2358 = vrot.slane %v384, 6
    %v2359 = vsel %vm430, %v2358, %v2357
    %v2360 = vrot.slane %v387, 5
    %v2361 = vsel %vm433, %v2360, %v2359
    %v2362 = vrot.slane %v390, 4
    %v2363 = vsel %vm436, %v2362, %v2361
    %v2364 = vrot.slane %v370, 3
    %v2365 = vrot.slane %v373, 2
    %v2366 = vsel %vm418, %v2365, %v2364
    %v2367 = vrot.slane %v376, 1
    %v2368 = vsel %vm421, %v2367, %v2366
    %v2369 = vsel %vm424, %v379, %v2368
    %v2370 = vrot.slane %v382, 7
    %v2371 = vsel %vm427, %v2370, %v2369
    %v2372 = vrot.slane %v385, 6
    %v2373 = vsel %vm430, %v2372, %v2371
    %v2374 = vrot.slane %v388, 5
    %v2375 = vsel %vm433, %v2374, %v2373
    %v2376 = vrot.slane %v391, 4
    %v2377 = vsel %vm436, %v2376, %v2375
    %v2378 = vrot.slane %v371, 3
    %v2379 = vrot.slane %v374, 2
    %v2380 = vsel %vm418, %v2379, %v2378
    %v2381 = vrot.slane %v377, 1
    %v2382 = vsel %vm421, %v2381, %v2380
    %v2383 = vsel %vm424, %v380, %v2382
    %v2384 = vrot.slane %v383, 7
    %v2385 = vsel %vm427, %v2384, %v2383
    %v2386 = vrot.slane %v386, 6
    %v2387 = vsel %vm430, %v2386, %v2385
    %v2388 = vrot.slane %v389, 5
    %v2389 = vsel %vm433, %v2388, %v2387
    %v2390 = vrot.slane %v392, 4
    %v2391 = vsel %vm436, %v2390, %v2389
    %v2395 = vadd.f32 %v2276, %v2363
    %v2396 = vadd.f32 %v2278, %v2377
    %v2397 = vadd.f32 %v2347, %v2391
    %v2398 = vrot.slane %v516, 3
    %v2399 = vrot.slane %v519, 2
    %v2400 = vsel %vm418, %v2399, %v2398
    %v2401 = vrot.slane %v522, 1
    %v2402 = vsel %vm421, %v2401, %v2400
    %v2403 = vsel %vm424, %v525, %v2402
    %v2404 = vrot.slane %v528, 7
    %v2405 = vsel %vm427, %v2404, %v2403
    %v2406 = vrot.slane %v531, 6
    %v2407 = vsel %vm430, %v2406, %v2405
    %v2408 = vrot.slane %v534, 5
    %v2409 = vsel %vm433, %v2408, %v2407
    %v2410 = vrot.slane %v537, 4
    %v2411 = vsel %vm436, %v2410, %v2409
    %v2412 = vrot.slane %v517, 3
    %v2413 = vrot.slane %v520, 2
    %v2414 = vsel %vm418, %v2413, %v2412
    %v2415 = vrot.slane %v523, 1
    %v2416 = vsel %vm421, %v2415, %v2414
    %v2417 = vsel %vm424, %v526, %v2416
    %v2418 = vrot.slane %v529, 7
    %v2419 = vsel %vm427, %v2418, %v2417
    %v2420 = vrot.slane %v532, 6
    %v2421 = vsel %vm430, %v2420, %v2419
    %v2422 = vrot.slane %v535, 5
    %v2423 = vsel %vm433, %v2422, %v2421
    %v2424 = vrot.slane %v538, 4
    %v2425 = vsel %vm436, %v2424, %v2423
    %v2426 = vrot.slane %v518, 3
    %v2427 = vrot.slane %v521, 2
    %v2428 = vsel %vm418, %v2427, %v2426
    %v2429 = vrot.slane %v524, 1
    %v2430 = vsel %vm421, %v2429, %v2428
    %v2431 = vsel %vm424, %v527, %v2430
    %v2432 = vrot.slane %v530, 7
    %v2433 = vsel %vm427, %v2432, %v2431
    %v2434 = vrot.slane %v533, 6
    %v2435 = vsel %vm430, %v2434, %v2433
    %v2436 = vrot.slane %v536, 5
    %v2437 = vsel %vm433, %v2436, %v2435
    %v2438 = vrot.slane %v539, 4
    %v2439 = vsel %vm436, %v2438, %v2437
    %v2443 = vadd.f32 %v2395, %v2411
    %v2444 = vadd.f32 %v2396, %v2425
    %v2445 = vadd.f32 %v2397, %v2439
    %v2446 = vrot.slane %v664, 3
    %v2447 = vrot.slane %v667, 2
    %v2448 = vsel %vm418, %v2447, %v2446
    %v2449 = vrot.slane %v670, 1
    %v2450 = vsel %vm421, %v2449, %v2448
    %v2451 = vsel %vm424, %v673, %v2450
    %v2452 = vrot.slane %v676, 7
    %v2453 = vsel %vm427, %v2452, %v2451
    %v2454 = vrot.slane %v679, 6
    %v2455 = vsel %vm430, %v2454, %v2453
    %v2456 = vrot.slane %v682, 5
    %v2457 = vsel %vm433, %v2456, %v2455
    %v2458 = vrot.slane %v685, 4
    %v2459 = vsel %vm436, %v2458, %v2457
    %v2460 = vrot.slane %v665, 3
    %v2461 = vrot.slane %v668, 2
    %v2462 = vsel %vm418, %v2461, %v2460
    %v2463 = vrot.slane %v671, 1
    %v2464 = vsel %vm421, %v2463, %v2462
    %v2465 = vsel %vm424, %v674, %v2464
    %v2466 = vrot.slane %v677, 7
    %v2467 = vsel %vm427, %v2466, %v2465
    %v2468 = vrot.slane %v680, 6
    %v2469 = vsel %vm430, %v2468, %v2467
    %v2470 = vrot.slane %v683, 5
    %v2471 = vsel %vm433, %v2470, %v2469
    %v2472 = vrot.slane %v686, 4
    %v2473 = vsel %vm436, %v2472, %v2471
    %v2474 = vrot.slane %v666, 3
    %v2475 = vrot.slane %v669, 2
    %v2476 = vsel %vm418, %v2475, %v2474
    %v2477 = vrot.slane %v672, 1
    %v2478 = vsel %vm421, %v2477, %v2476
    %v2479 = vsel %vm424, %v675, %v2478
    %v2480 = vrot.slane %v678, 7
    %v2481 = vsel %vm427, %v2480, %v2479
    %v2482 = vrot.slane %v681, 6
    %v2483 = vsel %vm430, %v2482, %v2481
    %v2484 = vrot.slane %v684, 5
    %v2485 = vsel %vm433, %v2484, %v2483
    %v2486 = vrot.slane %v687, 4
    %v2487 = vsel %vm436, %v2486, %v2485
    %v2491 = vadd.f32 %v2443, %v2459
    %v2492 = vadd.f32 %v2444, %v2473
    %v2493 = vadd.f32 %v2445, %v2487
    %v2494 = vrot.slane %v804, 3
    %v2495 = vrot.slane %v807, 2
    %v2496 = vsel %vm418, %v2495, %v2494
    %v2497 = vrot.slane %v810, 1
    %v2498 = vsel %vm421, %v2497, %v2496
    %v2499 = vsel %vm424, %v813, %v2498
    %v2500 = vrot.slane %v816, 7
    %v2501 = vsel %vm427, %v2500, %v2499
    %v2502 = vrot.slane %v819, 6
    %v2503 = vsel %vm430, %v2502, %v2501
    %v2504 = vrot.slane %v822, 5
    %v2505 = vsel %vm433, %v2504, %v2503
    %v2506 = vrot.slane %v825, 4
    %v2507 = vsel %vm436, %v2506, %v2505
    %v2508 = vrot.slane %v805, 3
    %v2509 = vrot.slane %v808, 2
    %v2510 = vsel %vm418, %v2509, %v2508
    %v2511 = vrot.slane %v811, 1
    %v2512 = vsel %vm421, %v2511, %v2510
    %v2513 = vsel %vm424, %v814, %v2512
    %v2514 = vrot.slane %v817, 7
    %v2515 = vsel %vm427, %v2514, %v2513
    %v2516 = vrot.slane %v820, 6
    %v2517 = vsel %vm430, %v2516, %v2515
    %v2518 = vrot.slane %v823, 5
    %v2519 = vsel %vm433, %v2518, %v2517
    %v2520 = vrot.slane %v826, 4
    %v2521 = vsel %vm436, %v2520, %v2519
    %v2522 = vrot.slane %v806, 3
    %v2523 = vrot.slane %v809, 2
    %v2524 = vsel %vm418, %v2523, %v2522
    %v2525 = vrot.slane %v812, 1
    %v2526 = vsel %vm421, %v2525, %v2524
    %v2527 = vsel %vm424, %v815, %v2526
    %v2528 = vrot.slane %v818, 7
    %v2529 = vsel %vm427, %v2528, %v2527
    %v2530 = vrot.slane %v821, 6
    %v2531 = vsel %vm430, %v2530, %v2529
    %v2532 = vrot.slane %v824, 5
    %v2533 = vsel %vm433, %v2532, %v2531
    %v2534 = vrot.slane %v827, 4
    %v2535 = vsel %vm436, %v2534, %v2533
    %v2539 = vadd.f32 %v2491, %v2507
    %v2540 = vadd.f32 %v2492, %v2521
    %v2541 = vadd.f32 %v2493, %v2535
    %v2542 = vrot.slane %v952, 3
    %v2543 = vrot.slane %v955, 2
    %v2544 = vsel %vm418, %v2543, %v2542
    %v2545 = vrot.slane %v958, 1
    %v2546 = vsel %vm421, %v2545, %v2544
    %v2547 = vsel %vm424, %v961, %v2546
    %v2548 = vrot.slane %v964, 7
    %v2549 = vsel %vm427, %v2548, %v2547
    %v2550 = vrot.slane %v967, 6
    %v2551 = vsel %vm430, %v2550, %v2549
    %v2552 = vrot.slane %v970, 5
    %v2553 = vsel %vm433, %v2552, %v2551
    %v2554 = vrot.slane %v973, 4
    %v2555 = vsel %vm436, %v2554, %v2553
    %v2556 = vrot.slane %v953, 3
    %v2557 = vrot.slane %v956, 2
    %v2558 = vsel %vm418, %v2557, %v2556
    %v2559 = vrot.slane %v959, 1
    %v2560 = vsel %vm421, %v2559, %v2558
    %v2561 = vsel %vm424, %v962, %v2560
    %v2562 = vrot.slane %v965, 7
    %v2563 = vsel %vm427, %v2562, %v2561
    %v2564 = vrot.slane %v968, 6
    %v2565 = vsel %vm430, %v2564, %v2563
    %v2566 = vrot.slane %v971, 5
    %v2567 = vsel %vm433, %v2566, %v2565
    %v2568 = vrot.slane %v974, 4
    %v2569 = vsel %vm436, %v2568, %v2567
    %v2570 = vrot.slane %v954, 3
    %v2571 = vrot.slane %v957, 2
    %v2572 = vsel %vm418, %v2571, %v2570
    %v2573 = vrot.slane %v960, 1
    %v2574 = vsel %vm421, %v2573, %v2572
    %v2575 = vsel %vm424, %v963, %v2574
    %v2576 = vrot.slane %v966, 7
    %v2577 = vsel %vm427, %v2576, %v2575
    %v2578 = vrot.slane %v969, 6
    %v2579 = vsel %vm430, %v2578, %v2577
    %v2580 = vrot.slane %v972, 5
    %v2581 = vsel %vm433, %v2580, %v2579
    %v2582 = vrot.slane %v975, 4
    %v2583 = vsel %vm436, %v2582, %v2581
    %v2587 = vadd.f32 %v2539, %v2555
    %v2588 = vadd.f32 %v2540, %v2569
    %v2589 = vadd.f32 %v2541, %v2583
    %v2590 = vrot.slane %v1092, 3
    %v2591 = vrot.slane %v1095, 2
    %v2592 = vsel %vm418, %v2591, %v2590
    %v2593 = vrot.slane %v1098, 1
    %v2594 = vsel %vm421, %v2593, %v2592
    %v2595 = vsel %vm424, %v1101, %v2594
    %v2596 = vrot.slane %v1104, 7
    %v2597 = vsel %vm427, %v2596, %v2595
    %v2598 = vrot.slane %v1107, 6
    %v2599 = vsel %vm430, %v2598, %v2597
    %v2600 = vrot.slane %v1110, 5
    %v2601 = vsel %vm433, %v2600, %v2599
    %v2602 = vrot.slane %v1113, 4
    %v2603 = vsel %vm436, %v2602, %v2601
    %v2604 = vrot.slane %v1093, 3
    %v2605 = vrot.slane %v1096, 2
    %v2606 = vsel %vm418, %v2605, %v2604
    %v2607 = vrot.slane %v1099, 1
    %v2608 = vsel %vm421, %v2607, %v2606
    %v2609 = vsel %vm424, %v1102, %v2608
    %v2610 = vrot.slane %v1105, 7
    %v2611 = vsel %vm427, %v2610, %v2609
    %v2612 = vrot.slane %v1108, 6
    %v2613 = vsel %vm430, %v2612, %v2611
    %v2614 = vrot.slane %v1111, 5
    %v2615 = vsel %vm433, %v2614, %v2613
    %v2616 = vrot.slane %v1114, 4
    %v2617 = vsel %vm436, %v2616, %v2615
    %v2618 = vrot.slane %v1094, 3
    %v2619 = vrot.slane %v1097, 2
    %v2620 = vsel %vm418, %v2619, %v2618
    %v2621 = vrot.slane %v1100, 1
    %v2622 = vsel %vm421, %v2621, %v2620
    %v2623 = vsel %vm424, %v1103, %v2622
    %v2624 = vrot.slane %v1106, 7
    %v2625 = vsel %vm427, %v2624, %v2623
    %v2626 = vrot.slane %v1109, 6
    %v2627 = vsel %vm430, %v2626, %v2625
    %v2628 = vrot.slane %v1112, 5
    %v2629 = vsel %vm433, %v2628, %v2627
    %v2630 = vrot.slane %v1115, 4
    %v2631 = vsel %vm436, %v2630, %v2629
    %v2635 = vadd.f32 %v2587, %v2603
    %v2636 = vadd.f32 %v2588, %v2617
    %v2637 = vadd.f32 %v2589, %v2631
    %v2638 = vxor.u32 %v2635, 2147483648
    %v2639 = vxor.u32 %v2636, 2147483648
    %v2640 = vxor.u32 %v2637, 2147483648
    %v2641 = vmul.f32 %v2638, 1.442695
    %v2642 = vpow.pop %v2641
    %v2643 = vmul.f32 %v2639, 1.442695
    %v2644 = vpow.pop %v2643
    %v2645 = vmul.f32 %v2640, 1.442695
    %v2646 = vpow.pop %v2645
    %v2647 = vadd.f32 %v2642, 1.0
    %v2648 = vadd.f32 %v2644, 1.0
    %v2649 = vadd.f32 %v2646, 1.0
    %v2650 = vrcp.pop %v2647
    %v2651 = vmul.f32 1.0, %v2650
    %v2652 = vrcp.pop %v2648
    %v2653 = vmul.f32 1.0, %v2652
    %v2654 = vrcp.pop %v2649
    %v2655 = vmul.f32 1.0, %v2654
    %v2656 = vtanh.pop %v2637
    %v2657 = vmul.f32 %v2651, %v2185
    %v2658 = vmul.f32 %v2653, %v2186
    %2660 = vrot.lane.b32.xlu0 %v2656, 96
    %v2661 = vpop.permute.xlu0 %2660
    %v2663 = vmul.f32 %v2651, %v2661
    %2665 = vrot.lane.b32.xlu0 %v2663, 96
    %v2666 = vpop.permute.xlu0 %2665
    %v2668 = vadd.f32 %v2657, %v2666
    %v2669 = vadd.f32 %v2658, %v2666
    %v2670 = vtanh.pop %v2668
    %v2671 = vtanh.pop %v2669
    %2674 = vrot.lane.b32.xlu0 %v2670, 96
    %v2675 = vpop.permute.xlu0 %2674
    %2676 = vrot.lane.b32.xlu0 %v2671, 96
    %v2677 = vpop.permute.xlu0 %2676
    %v2678 = vsel %vm172, %v2675, %v2677
    %v2681 = vmul.f32 %v2653, %v2678
    %v2682 = vmul.f32 %v2655, %v2677
    %2685 = vrot.lane.b32.xlu0 %v2681, 64
    %v2686 = vpop.permute.xlu0 %2685
    %2687 = vrot.lane.b32.xlu0 %v2682, 64
    %v2688 = vpop.permute.xlu0 %2687
    %v2689 = vsel %vm1239, %v2686, %v2688
    %v2690 = vsel %vm172, %v2689, 0
    %2692 = vmatprep.subr.mxu0 0.0
    %2693 = vmatpush1.msra.mxu0 0.0
    %2694 = vmatprep.subr.mxu0 0.0
    %2695 = vmatpush1.msra.mxu0 0.0
    %2696 = vmatprep.subr.mxu0 0.0
    %2697 = vmatpush1.msra.mxu0 0.0
    %2698 = vmatprep.subr.mxu0 0.0
    %2699 = vmatpush1.msra.mxu0 0.0
    %2700 = vmatprep.subr.mxu0 %v154
    %2701 = vmatpush1.msra.mxu0 %v153
    %2702 = vmatprep.subr.mxu0 %v151
    %2703 = vmatpush1.msra.mxu0 %v150
    %2704 = vmatprep.subr.mxu0 %v148
    %2705 = vmatpush1.msra.mxu0 %v147
    %2706 = vmatprep.subr.mxu0 %v145
    %2707 = vmatpush1.msra.mxu0 %v144
    %2708 = vmatprep.subr.mxu0 %v142
    %2709 = vmatpush1.msra.mxu0 %v141
    %2710 = vmatprep.subr.mxu0 %v139
    %2711 = vmatpush1.msra.mxu0 %v138
    %2712 = vmatprep.subr.mxu0 %v136
    %2713 = vmatpush1.msra.mxu0 %v135
    %2714 = vmatprep.subr.mxu0 %v133
    %2715 = vmatpush1.msra.mxu0 %v132
    %2716 = vmatprep.subr.mxu0 %v130
    %2717 = vmatpush1.msra.mxu0 %v129
    %2718 = vmatprep.subr.mxu0 %v127
    %2719 = vmatpush1.msra.mxu0 %v126
    %2720 = vmatprep.subr.mxu0 %v124
    %2721 = vmatpush1.msra.mxu0 %v123
    %2722 = vmatprep.subr.mxu0 %v121
    %2723 = vmatpush1.msra.mxu0 %v120
    %2724 = vmatprep.subr.mxu0 0.0
    %2725 = vmatpush2.msra.mxu0 0.0
    %2726 = vmatprep.subr.mxu0 0.0
    %2727 = vmatpush2.msra.mxu0 0.0
    %2728 = vmatprep.subr.mxu0 0.0
    %2729 = vmatpush2.msra.mxu0 0.0
    %2730 = vmatprep.subr.mxu0 0.0
    %2731 = vmatpush2.msra.mxu0 0.0
    %2732 = vmatprep.subr.mxu0 0.0
    %2733 = vmatpush2.msra.mxu0 0.0
    %2734 = vmatprep.subr.mxu0 0.0
    %2735 = vmatpush2.msra.mxu0 0.0
    %2736 = vmatprep.subr.mxu0 0.0
    %2737 = vmatpush2.msra.mxu0 0.0
    %2738 = vmatprep.subr.mxu0 0.0
    %2739 = vmatpush2.msra.mxu0 0.0
    %2740 = vmatprep.subr.mxu0 0.0
    %2741 = vmatpush2.msra.mxu0 0.0
    %2742 = vmatprep.subr.mxu0 0.0
    %2743 = vmatpush2.msra.mxu0 0.0
    %2744 = vmatprep.subr.mxu0 0.0
    %2745 = vmatpush2.msra.mxu0 0.0
    %2746 = vmatprep.subr.mxu0 0.0
    %2747 = vmatpush2.msra.mxu0 0.0
    %2748 = vmatprep.subr.mxu0 0.0
    %2749 = vmatpush2.msra.mxu0 0.0
    %2750 = vmatprep.subr.mxu0 0.0
    %2751 = vmatpush2.msra.mxu0 0.0
    %2752 = vmatprep.subr.mxu0 0.0
    %2753 = vmatpush2.msra.mxu0 0.0
    %2754 = vmatprep.subr.mxu0 0.0
    %2755 = vmatpush2.msra.mxu0 0.0
    %2756 = vmatprep.mubr.f32.mxu0 0.0
    %2757 = vmatmul.mubr.f32.gmra.mxu0 %v2690
    %v2758 = vpop.f32.mrf.mxu0
    %v2759 = vadd.f32 %v160, %v2758
    %v2760 = vpop.f32.mrf.mxu0
    %v2761 = vadd.f32 %v164, %v2760
    %2762 = vdwg.mxu0
    %2763 = vmatprep.subr.mxu0 0.0
    %2764 = vmatpush1.msra.mxu0 0.0
    %2765 = vmatprep.subr.mxu0 0.0
    %2766 = vmatpush1.msra.mxu0 0.0
    %2767 = vmatprep.subr.mxu0 0.0
    %2768 = vmatpush1.msra.mxu0 0.0
    %2769 = vmatprep.subr.mxu0 0.0
    %2770 = vmatpush1.msra.mxu0 0.0
    %2771 = vmatprep.subr.mxu0 0.0
    %2772 = vmatpush1.msra.mxu0 %v155
    %2773 = vmatprep.subr.mxu0 0.0
    %2774 = vmatpush1.msra.mxu0 %v152
    %2775 = vmatprep.subr.mxu0 0.0
    %2776 = vmatpush1.msra.mxu0 %v149
    %2777 = vmatprep.subr.mxu0 0.0
    %2778 = vmatpush1.msra.mxu0 %v146
    %2779 = vmatprep.subr.mxu0 0.0
    %2780 = vmatpush1.msra.mxu0 %v143
    %2781 = vmatprep.subr.mxu0 0.0
    %2782 = vmatpush1.msra.mxu0 %v140
    %2783 = vmatprep.subr.mxu0 0.0
    %2784 = vmatpush1.msra.mxu0 %v137
    %2785 = vmatprep.subr.mxu0 0.0
    %2786 = vmatpush1.msra.mxu0 %v134
    %2787 = vmatprep.subr.mxu0 0.0
    %2788 = vmatpush1.msra.mxu0 %v131
    %2789 = vmatprep.subr.mxu0 0.0
    %2790 = vmatpush1.msra.mxu0 %v128
    %2791 = vmatprep.subr.mxu0 0.0
    %2792 = vmatpush1.msra.mxu0 %v125
    %2793 = vmatprep.subr.mxu0 0.0
    %2794 = vmatpush1.msra.mxu0 %v122
    %2795 = vmatprep.subr.mxu0 0.0
    %2796 = vmatpush2.msra.mxu0 0.0
    %2797 = vmatprep.subr.mxu0 0.0
    %2798 = vmatpush2.msra.mxu0 0.0
    %2799 = vmatprep.subr.mxu0 0.0
    %2800 = vmatpush2.msra.mxu0 0.0
    %2801 = vmatprep.subr.mxu0 0.0
    %2802 = vmatpush2.msra.mxu0 0.0
    %2803 = vmatprep.subr.mxu0 0.0
    %2804 = vmatpush2.msra.mxu0 0.0
    %2805 = vmatprep.subr.mxu0 0.0
    %2806 = vmatpush2.msra.mxu0 0.0
    %2807 = vmatprep.subr.mxu0 0.0
    %2808 = vmatpush2.msra.mxu0 0.0
    %2809 = vmatprep.subr.mxu0 0.0
    %2810 = vmatpush2.msra.mxu0 0.0
    %2811 = vmatprep.subr.mxu0 0.0
    %2812 = vmatpush2.msra.mxu0 0.0
    %2813 = vmatprep.subr.mxu0 0.0
    %2814 = vmatpush2.msra.mxu0 0.0
    %2815 = vmatprep.subr.mxu0 0.0
    %2816 = vmatpush2.msra.mxu0 0.0
    %2817 = vmatprep.subr.mxu0 0.0
    %2818 = vmatpush2.msra.mxu0 0.0
    %2819 = vmatprep.subr.mxu0 0.0
    %2820 = vmatpush2.msra.mxu0 0.0
    %2821 = vmatprep.subr.mxu0 0.0
    %2822 = vmatpush2.msra.mxu0 0.0
    %2823 = vmatprep.subr.mxu0 0.0
    %2824 = vmatpush2.msra.mxu0 0.0
    %2825 = vmatprep.subr.mxu0 0.0
    %2826 = vmatpush2.msra.mxu0 0.0
    %2827 = vmatprep.mubr.f32.mxu0 0.0
    %2828 = vmatmul.mubr.f32.gmra.mxu0 %v2690
    %v2829 = vpop.f32.mrf.mxu0
    %v2830 = vadd.f32 %v168, %v2829
    %v2831 = vpop.f32.mrf.mxu0
    %2832 = vdwg.mxu0
    %v2833 = vrot.slane %v369, 4
    %v2834 = vrot.slane %v372, 3
    %v2835 = vsel %vm418, %v2834, %v2833
    %v2836 = vrot.slane %v375, 2
    %v2837 = vsel %vm421, %v2836, %v2835
    %v2838 = vrot.slane %v378, 1
    %v2839 = vsel %vm424, %v2838, %v2837
    %v2840 = vsel %vm427, %v381, %v2839
    %v2841 = vrot.slane %v384, 7
    %v2842 = vsel %vm430, %v2841, %v2840
    %v2843 = vrot.slane %v387, 6
    %v2844 = vsel %vm433, %v2843, %v2842
    %v2845 = vrot.slane %v390, 5
    %v2846 = vsel %vm436, %v2845, %v2844
    %v2847 = vrot.slane %v370, 4
    %v2848 = vrot.slane %v373, 3
    %v2849 = vsel %vm418, %v2848, %v2847
    %v2850 = vrot.slane %v376, 2
    %v2851 = vsel %vm421, %v2850, %v2849
    %v2852 = vrot.slane %v379, 1
    %v2853 = vsel %vm424, %v2852, %v2851
    %v2854 = vsel %vm427, %v382, %v2853
    %v2855 = vrot.slane %v385, 7
    %v2856 = vsel %vm430, %v2855, %v2854
    %v2857 = vrot.slane %v388, 6
    %v2858 = vsel %vm433, %v2857, %v2856
    %v2859 = vrot.slane %v391, 5
    %v2860 = vsel %vm436, %v2859, %v2858
    %v2861 = vrot.slane %v371, 4
    %v2862 = vrot.slane %v374, 3
    %v2863 = vsel %vm418, %v2862, %v2861
    %v2864 = vrot.slane %v377, 2
    %v2865 = vsel %vm421, %v2864, %v2863
    %v2866 = vrot.slane %v380, 1
    %v2867 = vsel %vm424, %v2866, %v2865
    %v2868 = vsel %vm427, %v383, %v2867
    %v2869 = vrot.slane %v386, 7
    %v2870 = vsel %vm430, %v2869, %v2868
    %v2871 = vrot.slane %v389, 6
    %v2872 = vsel %vm433, %v2871, %v2870
    %v2873 = vrot.slane %v392, 5
    %v2874 = vsel %vm436, %v2873, %v2872
    %v2878 = vadd.f32 %v2759, %v2846
    %v2879 = vadd.f32 %v2761, %v2860
    %v2880 = vadd.f32 %v2830, %v2874
    %v2881 = vrot.slane %v516, 4
    %v2882 = vrot.slane %v519, 3
    %v2883 = vsel %vm418, %v2882, %v2881
    %v2884 = vrot.slane %v522, 2
    %v2885 = vsel %vm421, %v2884, %v2883
    %v2886 = vrot.slane %v525, 1
    %v2887 = vsel %vm424, %v2886, %v2885
    %v2888 = vsel %vm427, %v528, %v2887
    %v2889 = vrot.slane %v531, 7
    %v2890 = vsel %vm430, %v2889, %v2888
    %v2891 = vrot.slane %v534, 6
    %v2892 = vsel %vm433, %v2891, %v2890
    %v2893 = vrot.slane %v537, 5
    %v2894 = vsel %vm436, %v2893, %v2892
    %v2895 = vrot.slane %v517, 4
    %v2896 = vrot.slane %v520, 3
    %v2897 = vsel %vm418, %v2896, %v2895
    %v2898 = vrot.slane %v523, 2
    %v2899 = vsel %vm421, %v2898, %v2897
    %v2900 = vrot.slane %v526, 1
    %v2901 = vsel %vm424, %v2900, %v2899
    %v2902 = vsel %vm427, %v529, %v2901
    %v2903 = vrot.slane %v532, 7
    %v2904 = vsel %vm430, %v2903, %v2902
    %v2905 = vrot.slane %v535, 6
    %v2906 = vsel %vm433, %v2905, %v2904
    %v2907 = vrot.slane %v538, 5
    %v2908 = vsel %vm436, %v2907, %v2906
    %v2909 = vrot.slane %v518, 4
    %v2910 = vrot.slane %v521, 3
    %v2911 = vsel %vm418, %v2910, %v2909
    %v2912 = vrot.slane %v524, 2
    %v2913 = vsel %vm421, %v2912, %v2911
    %v2914 = vrot.slane %v527, 1
    %v2915 = vsel %vm424, %v2914, %v2913
    %v2916 = vsel %vm427, %v530, %v2915
    %v2917 = vrot.slane %v533, 7
    %v2918 = vsel %vm430, %v2917, %v2916
    %v2919 = vrot.slane %v536, 6
    %v2920 = vsel %vm433, %v2919, %v2918
    %v2921 = vrot.slane %v539, 5
    %v2922 = vsel %vm436, %v2921, %v2920
    %v2926 = vadd.f32 %v2878, %v2894
    %v2927 = vadd.f32 %v2879, %v2908
    %v2928 = vadd.f32 %v2880, %v2922
    %v2929 = vrot.slane %v664, 4
    %v2930 = vrot.slane %v667, 3
    %v2931 = vsel %vm418, %v2930, %v2929
    %v2932 = vrot.slane %v670, 2
    %v2933 = vsel %vm421, %v2932, %v2931
    %v2934 = vrot.slane %v673, 1
    %v2935 = vsel %vm424, %v2934, %v2933
    %v2936 = vsel %vm427, %v676, %v2935
    %v2937 = vrot.slane %v679, 7
    %v2938 = vsel %vm430, %v2937, %v2936
    %v2939 = vrot.slane %v682, 6
    %v2940 = vsel %vm433, %v2939, %v2938
    %v2941 = vrot.slane %v685, 5
    %v2942 = vsel %vm436, %v2941, %v2940
    %v2943 = vrot.slane %v665, 4
    %v2944 = vrot.slane %v668, 3
    %v2945 = vsel %vm418, %v2944, %v2943
    %v2946 = vrot.slane %v671, 2
    %v2947 = vsel %vm421, %v2946, %v2945
    %v2948 = vrot.slane %v674, 1
    %v2949 = vsel %vm424, %v2948, %v2947
    %v2950 = vsel %vm427, %v677, %v2949
    %v2951 = vrot.slane %v680, 7
    %v2952 = vsel %vm430, %v2951, %v2950
    %v2953 = vrot.slane %v683, 6
    %v2954 = vsel %vm433, %v2953, %v2952
    %v2955 = vrot.slane %v686, 5
    %v2956 = vsel %vm436, %v2955, %v2954
    %v2957 = vrot.slane %v666, 4
    %v2958 = vrot.slane %v669, 3
    %v2959 = vsel %vm418, %v2958, %v2957
    %v2960 = vrot.slane %v672, 2
    %v2961 = vsel %vm421, %v2960, %v2959
    %v2962 = vrot.slane %v675, 1
    %v2963 = vsel %vm424, %v2962, %v2961
    %v2964 = vsel %vm427, %v678, %v2963
    %v2965 = vrot.slane %v681, 7
    %v2966 = vsel %vm430, %v2965, %v2964
    %v2967 = vrot.slane %v684, 6
    %v2968 = vsel %vm433, %v2967, %v2966
    %v2969 = vrot.slane %v687, 5
    %v2970 = vsel %vm436, %v2969, %v2968
    %v2974 = vadd.f32 %v2926, %v2942
    %v2975 = vadd.f32 %v2927, %v2956
    %v2976 = vadd.f32 %v2928, %v2970
    %v2977 = vrot.slane %v804, 4
    %v2978 = vrot.slane %v807, 3
    %v2979 = vsel %vm418, %v2978, %v2977
    %v2980 = vrot.slane %v810, 2
    %v2981 = vsel %vm421, %v2980, %v2979
    %v2982 = vrot.slane %v813, 1
    %v2983 = vsel %vm424, %v2982, %v2981
    %v2984 = vsel %vm427, %v816, %v2983
    %v2985 = vrot.slane %v819, 7
    %v2986 = vsel %vm430, %v2985, %v2984
    %v2987 = vrot.slane %v822, 6
    %v2988 = vsel %vm433, %v2987, %v2986
    %v2989 = vrot.slane %v825, 5
    %v2990 = vsel %vm436, %v2989, %v2988
    %v2991 = vrot.slane %v805, 4
    %v2992 = vrot.slane %v808, 3
    %v2993 = vsel %vm418, %v2992, %v2991
    %v2994 = vrot.slane %v811, 2
    %v2995 = vsel %vm421, %v2994, %v2993
    %v2996 = vrot.slane %v814, 1
    %v2997 = vsel %vm424, %v2996, %v2995
    %v2998 = vsel %vm427, %v817, %v2997
    %v2999 = vrot.slane %v820, 7
    %v3000 = vsel %vm430, %v2999, %v2998
    %v3001 = vrot.slane %v823, 6
    %v3002 = vsel %vm433, %v3001, %v3000
    %v3003 = vrot.slane %v826, 5
    %v3004 = vsel %vm436, %v3003, %v3002
    %v3005 = vrot.slane %v806, 4
    %v3006 = vrot.slane %v809, 3
    %v3007 = vsel %vm418, %v3006, %v3005
    %v3008 = vrot.slane %v812, 2
    %v3009 = vsel %vm421, %v3008, %v3007
    %v3010 = vrot.slane %v815, 1
    %v3011 = vsel %vm424, %v3010, %v3009
    %v3012 = vsel %vm427, %v818, %v3011
    %v3013 = vrot.slane %v821, 7
    %v3014 = vsel %vm430, %v3013, %v3012
    %v3015 = vrot.slane %v824, 6
    %v3016 = vsel %vm433, %v3015, %v3014
    %v3017 = vrot.slane %v827, 5
    %v3018 = vsel %vm436, %v3017, %v3016
    %v3022 = vadd.f32 %v2974, %v2990
    %v3023 = vadd.f32 %v2975, %v3004
    %v3024 = vadd.f32 %v2976, %v3018
    %v3025 = vrot.slane %v952, 4
    %v3026 = vrot.slane %v955, 3
    %v3027 = vsel %vm418, %v3026, %v3025
    %v3028 = vrot.slane %v958, 2
    %v3029 = vsel %vm421, %v3028, %v3027
    %v3030 = vrot.slane %v961, 1
    %v3031 = vsel %vm424, %v3030, %v3029
    %v3032 = vsel %vm427, %v964, %v3031
    %v3033 = vrot.slane %v967, 7
    %v3034 = vsel %vm430, %v3033, %v3032
    %v3035 = vrot.slane %v970, 6
    %v3036 = vsel %vm433, %v3035, %v3034
    %v3037 = vrot.slane %v973, 5
    %v3038 = vsel %vm436, %v3037, %v3036
    %v3039 = vrot.slane %v953, 4
    %v3040 = vrot.slane %v956, 3
    %v3041 = vsel %vm418, %v3040, %v3039
    %v3042 = vrot.slane %v959, 2
    %v3043 = vsel %vm421, %v3042, %v3041
    %v3044 = vrot.slane %v962, 1
    %v3045 = vsel %vm424, %v3044, %v3043
    %v3046 = vsel %vm427, %v965, %v3045
    %v3047 = vrot.slane %v968, 7
    %v3048 = vsel %vm430, %v3047, %v3046
    %v3049 = vrot.slane %v971, 6
    %v3050 = vsel %vm433, %v3049, %v3048
    %v3051 = vrot.slane %v974, 5
    %v3052 = vsel %vm436, %v3051, %v3050
    %v3053 = vrot.slane %v954, 4
    %v3054 = vrot.slane %v957, 3
    %v3055 = vsel %vm418, %v3054, %v3053
    %v3056 = vrot.slane %v960, 2
    %v3057 = vsel %vm421, %v3056, %v3055
    %v3058 = vrot.slane %v963, 1
    %v3059 = vsel %vm424, %v3058, %v3057
    %v3060 = vsel %vm427, %v966, %v3059
    %v3061 = vrot.slane %v969, 7
    %v3062 = vsel %vm430, %v3061, %v3060
    %v3063 = vrot.slane %v972, 6
    %v3064 = vsel %vm433, %v3063, %v3062
    %v3065 = vrot.slane %v975, 5
    %v3066 = vsel %vm436, %v3065, %v3064
    %v3070 = vadd.f32 %v3022, %v3038
    %v3071 = vadd.f32 %v3023, %v3052
    %v3072 = vadd.f32 %v3024, %v3066
    %v3073 = vrot.slane %v1092, 4
    %v3074 = vrot.slane %v1095, 3
    %v3075 = vsel %vm418, %v3074, %v3073
    %v3076 = vrot.slane %v1098, 2
    %v3077 = vsel %vm421, %v3076, %v3075
    %v3078 = vrot.slane %v1101, 1
    %v3079 = vsel %vm424, %v3078, %v3077
    %v3080 = vsel %vm427, %v1104, %v3079
    %v3081 = vrot.slane %v1107, 7
    %v3082 = vsel %vm430, %v3081, %v3080
    %v3083 = vrot.slane %v1110, 6
    %v3084 = vsel %vm433, %v3083, %v3082
    %v3085 = vrot.slane %v1113, 5
    %v3086 = vsel %vm436, %v3085, %v3084
    %v3087 = vrot.slane %v1093, 4
    %v3088 = vrot.slane %v1096, 3
    %v3089 = vsel %vm418, %v3088, %v3087
    %v3090 = vrot.slane %v1099, 2
    %v3091 = vsel %vm421, %v3090, %v3089
    %v3092 = vrot.slane %v1102, 1
    %v3093 = vsel %vm424, %v3092, %v3091
    %v3094 = vsel %vm427, %v1105, %v3093
    %v3095 = vrot.slane %v1108, 7
    %v3096 = vsel %vm430, %v3095, %v3094
    %v3097 = vrot.slane %v1111, 6
    %v3098 = vsel %vm433, %v3097, %v3096
    %v3099 = vrot.slane %v1114, 5
    %v3100 = vsel %vm436, %v3099, %v3098
    %v3101 = vrot.slane %v1094, 4
    %v3102 = vrot.slane %v1097, 3
    %v3103 = vsel %vm418, %v3102, %v3101
    %v3104 = vrot.slane %v1100, 2
    %v3105 = vsel %vm421, %v3104, %v3103
    %v3106 = vrot.slane %v1103, 1
    %v3107 = vsel %vm424, %v3106, %v3105
    %v3108 = vsel %vm427, %v1106, %v3107
    %v3109 = vrot.slane %v1109, 7
    %v3110 = vsel %vm430, %v3109, %v3108
    %v3111 = vrot.slane %v1112, 6
    %v3112 = vsel %vm433, %v3111, %v3110
    %v3113 = vrot.slane %v1115, 5
    %v3114 = vsel %vm436, %v3113, %v3112
    %v3118 = vadd.f32 %v3070, %v3086
    %v3119 = vadd.f32 %v3071, %v3100
    %v3120 = vadd.f32 %v3072, %v3114
    %v3121 = vxor.u32 %v3118, 2147483648
    %v3122 = vxor.u32 %v3119, 2147483648
    %v3123 = vxor.u32 %v3120, 2147483648
    %v3124 = vmul.f32 %v3121, 1.442695
    %v3125 = vpow.pop %v3124
    %v3126 = vmul.f32 %v3122, 1.442695
    %v3127 = vpow.pop %v3126
    %v3128 = vmul.f32 %v3123, 1.442695
    %v3129 = vpow.pop %v3128
    %v3130 = vadd.f32 %v3125, 1.0
    %v3131 = vadd.f32 %v3127, 1.0
    %v3132 = vadd.f32 %v3129, 1.0
    %v3133 = vrcp.pop %v3130
    %v3134 = vmul.f32 1.0, %v3133
    %v3135 = vrcp.pop %v3131
    %v3136 = vmul.f32 1.0, %v3135
    %v3137 = vrcp.pop %v3132
    %v3138 = vmul.f32 1.0, %v3137
    %v3139 = vtanh.pop %v3120
    %v3140 = vmul.f32 %v3134, %v2668
    %v3141 = vmul.f32 %v3136, %v2669
    %3143 = vrot.lane.b32.xlu0 %v3139, 96
    %v3144 = vpop.permute.xlu0 %3143
    %v3146 = vmul.f32 %v3134, %v3144
    %3148 = vrot.lane.b32.xlu0 %v3146, 96
    %v3149 = vpop.permute.xlu0 %3148
    %v3151 = vadd.f32 %v3140, %v3149
    %v3152 = vadd.f32 %v3141, %v3149
    %v3153 = vtanh.pop %v3151
    %v3154 = vtanh.pop %v3152
    %3157 = vrot.lane.b32.xlu0 %v3153, 96
    %v3158 = vpop.permute.xlu0 %3157
    %3159 = vrot.lane.b32.xlu0 %v3154, 96
    %v3160 = vpop.permute.xlu0 %3159
    %v3161 = vsel %vm172, %v3158, %v3160
    %v3164 = vmul.f32 %v3136, %v3161
    %v3165 = vmul.f32 %v3138, %v3160
    %3168 = vrot.lane.b32.xlu0 %v3164, 64
    %v3169 = vpop.permute.xlu0 %3168
    %3170 = vrot.lane.b32.xlu0 %v3165, 64
    %v3171 = vpop.permute.xlu0 %3170
    %v3172 = vsel %vm1239, %v3169, %v3171
    %v3173 = vsel %vm172, %v3172, 0
    %3175 = vmatprep.subr.mxu0 0.0
    %3176 = vmatpush1.msra.mxu0 0.0
    %3177 = vmatprep.subr.mxu0 0.0
    %3178 = vmatpush1.msra.mxu0 0.0
    %3179 = vmatprep.subr.mxu0 0.0
    %3180 = vmatpush1.msra.mxu0 0.0
    %3181 = vmatprep.subr.mxu0 0.0
    %3182 = vmatpush1.msra.mxu0 0.0
    %3183 = vmatprep.subr.mxu0 %v154
    %3184 = vmatpush1.msra.mxu0 %v153
    %3185 = vmatprep.subr.mxu0 %v151
    %3186 = vmatpush1.msra.mxu0 %v150
    %3187 = vmatprep.subr.mxu0 %v148
    %3188 = vmatpush1.msra.mxu0 %v147
    %3189 = vmatprep.subr.mxu0 %v145
    %3190 = vmatpush1.msra.mxu0 %v144
    %3191 = vmatprep.subr.mxu0 %v142
    %3192 = vmatpush1.msra.mxu0 %v141
    %3193 = vmatprep.subr.mxu0 %v139
    %3194 = vmatpush1.msra.mxu0 %v138
    %3195 = vmatprep.subr.mxu0 %v136
    %3196 = vmatpush1.msra.mxu0 %v135
    %3197 = vmatprep.subr.mxu0 %v133
    %3198 = vmatpush1.msra.mxu0 %v132
    %3199 = vmatprep.subr.mxu0 %v130
    %3200 = vmatpush1.msra.mxu0 %v129
    %3201 = vmatprep.subr.mxu0 %v127
    %3202 = vmatpush1.msra.mxu0 %v126
    %3203 = vmatprep.subr.mxu0 %v124
    %3204 = vmatpush1.msra.mxu0 %v123
    %3205 = vmatprep.subr.mxu0 %v121
    %3206 = vmatpush1.msra.mxu0 %v120
    %3207 = vmatprep.subr.mxu0 0.0
    %3208 = vmatpush2.msra.mxu0 0.0
    %3209 = vmatprep.subr.mxu0 0.0
    %3210 = vmatpush2.msra.mxu0 0.0
    %3211 = vmatprep.subr.mxu0 0.0
    %3212 = vmatpush2.msra.mxu0 0.0
    %3213 = vmatprep.subr.mxu0 0.0
    %3214 = vmatpush2.msra.mxu0 0.0
    %3215 = vmatprep.subr.mxu0 0.0
    %3216 = vmatpush2.msra.mxu0 0.0
    %3217 = vmatprep.subr.mxu0 0.0
    %3218 = vmatpush2.msra.mxu0 0.0
    %3219 = vmatprep.subr.mxu0 0.0
    %3220 = vmatpush2.msra.mxu0 0.0
    %3221 = vmatprep.subr.mxu0 0.0
    %3222 = vmatpush2.msra.mxu0 0.0
    %3223 = vmatprep.subr.mxu0 0.0
    %3224 = vmatpush2.msra.mxu0 0.0
    %3225 = vmatprep.subr.mxu0 0.0
    %3226 = vmatpush2.msra.mxu0 0.0
    %3227 = vmatprep.subr.mxu0 0.0
    %3228 = vmatpush2.msra.mxu0 0.0
    %3229 = vmatprep.subr.mxu0 0.0
    %3230 = vmatpush2.msra.mxu0 0.0
    %3231 = vmatprep.subr.mxu0 0.0
    %3232 = vmatpush2.msra.mxu0 0.0
    %3233 = vmatprep.subr.mxu0 0.0
    %3234 = vmatpush2.msra.mxu0 0.0
    %3235 = vmatprep.subr.mxu0 0.0
    %3236 = vmatpush2.msra.mxu0 0.0
    %3237 = vmatprep.subr.mxu0 0.0
    %3238 = vmatpush2.msra.mxu0 0.0
    %3239 = vmatprep.mubr.f32.mxu0 0.0
    %3240 = vmatmul.mubr.f32.gmra.mxu0 %v3173
    %v3241 = vpop.f32.mrf.mxu0
    %v3242 = vadd.f32 %v160, %v3241
    %v3243 = vpop.f32.mrf.mxu0
    %v3244 = vadd.f32 %v164, %v3243
    %3245 = vdwg.mxu0
    %3246 = vmatprep.subr.mxu0 0.0
    %3247 = vmatpush1.msra.mxu0 0.0
    %3248 = vmatprep.subr.mxu0 0.0
    %3249 = vmatpush1.msra.mxu0 0.0
    %3250 = vmatprep.subr.mxu0 0.0
    %3251 = vmatpush1.msra.mxu0 0.0
    %3252 = vmatprep.subr.mxu0 0.0
    %3253 = vmatpush1.msra.mxu0 0.0
    %3254 = vmatprep.subr.mxu0 0.0
    %3255 = vmatpush1.msra.mxu0 %v155
    %3256 = vmatprep.subr.mxu0 0.0
    %3257 = vmatpush1.msra.mxu0 %v152
    %3258 = vmatprep.subr.mxu0 0.0
    %3259 = vmatpush1.msra.mxu0 %v149
    %3260 = vmatprep.subr.mxu0 0.0
    %3261 = vmatpush1.msra.mxu0 %v146
    %3262 = vmatprep.subr.mxu0 0.0
    %3263 = vmatpush1.msra.mxu0 %v143
    %3264 = vmatprep.subr.mxu0 0.0
    %3265 = vmatpush1.msra.mxu0 %v140
    %3266 = vmatprep.subr.mxu0 0.0
    %3267 = vmatpush1.msra.mxu0 %v137
    %3268 = vmatprep.subr.mxu0 0.0
    %3269 = vmatpush1.msra.mxu0 %v134
    %3270 = vmatprep.subr.mxu0 0.0
    %3271 = vmatpush1.msra.mxu0 %v131
    %3272 = vmatprep.subr.mxu0 0.0
    %3273 = vmatpush1.msra.mxu0 %v128
    %3274 = vmatprep.subr.mxu0 0.0
    %3275 = vmatpush1.msra.mxu0 %v125
    %3276 = vmatprep.subr.mxu0 0.0
    %3277 = vmatpush1.msra.mxu0 %v122
    %3278 = vmatprep.subr.mxu0 0.0
    %3279 = vmatpush2.msra.mxu0 0.0
    %3280 = vmatprep.subr.mxu0 0.0
    %3281 = vmatpush2.msra.mxu0 0.0
    %3282 = vmatprep.subr.mxu0 0.0
    %3283 = vmatpush2.msra.mxu0 0.0
    %3284 = vmatprep.subr.mxu0 0.0
    %3285 = vmatpush2.msra.mxu0 0.0
    %3286 = vmatprep.subr.mxu0 0.0
    %3287 = vmatpush2.msra.mxu0 0.0
    %3288 = vmatprep.subr.mxu0 0.0
    %3289 = vmatpush2.msra.mxu0 0.0
    %3290 = vmatprep.subr.mxu0 0.0
    %3291 = vmatpush2.msra.mxu0 0.0
    %3292 = vmatprep.subr.mxu0 0.0
    %3293 = vmatpush2.msra.mxu0 0.0
    %3294 = vmatprep.subr.mxu0 0.0
    %3295 = vmatpush2.msra.mxu0 0.0
    %3296 = vmatprep.subr.mxu0 0.0
    %3297 = vmatpush2.msra.mxu0 0.0
    %3298 = vmatprep.subr.mxu0 0.0
    %3299 = vmatpush2.msra.mxu0 0.0
    %3300 = vmatprep.subr.mxu0 0.0
    %3301 = vmatpush2.msra.mxu0 0.0
    %3302 = vmatprep.subr.mxu0 0.0
    %3303 = vmatpush2.msra.mxu0 0.0
    %3304 = vmatprep.subr.mxu0 0.0
    %3305 = vmatpush2.msra.mxu0 0.0
    %3306 = vmatprep.subr.mxu0 0.0
    %3307 = vmatpush2.msra.mxu0 0.0
    %3308 = vmatprep.subr.mxu0 0.0
    %3309 = vmatpush2.msra.mxu0 0.0
    %3310 = vmatprep.mubr.f32.mxu0 0.0
    %3311 = vmatmul.mubr.f32.gmra.mxu0 %v3173
    %v3312 = vpop.f32.mrf.mxu0
    %v3313 = vadd.f32 %v168, %v3312
    %v3314 = vpop.f32.mrf.mxu0
    %3315 = vdwg.mxu0
    %v3316 = vrot.slane %v369, 5
    %v3317 = vrot.slane %v372, 4
    %v3318 = vsel %vm418, %v3317, %v3316
    %v3319 = vrot.slane %v375, 3
    %v3320 = vsel %vm421, %v3319, %v3318
    %v3321 = vrot.slane %v378, 2
    %v3322 = vsel %vm424, %v3321, %v3320
    %v3323 = vrot.slane %v381, 1
    %v3324 = vsel %vm427, %v3323, %v3322
    %v3325 = vsel %vm430, %v384, %v3324
    %v3326 = vrot.slane %v387, 7
    %v3327 = vsel %vm433, %v3326, %v3325
    %v3328 = vrot.slane %v390, 6
    %v3329 = vsel %vm436, %v3328, %v3327
    %v3330 = vrot.slane %v370, 5
    %v3331 = vrot.slane %v373, 4
    %v3332 = vsel %vm418, %v3331, %v3330
    %v3333 = vrot.slane %v376, 3
    %v3334 = vsel %vm421, %v3333, %v3332
    %v3335 = vrot.slane %v379, 2
    %v3336 = vsel %vm424, %v3335, %v3334
    %v3337 = vrot.slane %v382, 1
    %v3338 = vsel %vm427, %v3337, %v3336
    %v3339 = vsel %vm430, %v385, %v3338
    %v3340 = vrot.slane %v388, 7
    %v3341 = vsel %vm433, %v3340, %v3339
    %v3342 = vrot.slane %v391, 6
    %v3343 = vsel %vm436, %v3342, %v3341
    %v3344 = vrot.slane %v371, 5
    %v3345 = vrot.slane %v374, 4
    %v3346 = vsel %vm418, %v3345, %v3344
    %v3347 = vrot.slane %v377, 3
    %v3348 = vsel %vm421, %v3347, %v3346
    %v3349 = vrot.slane %v380, 2
    %v3350 = vsel %vm424, %v3349, %v3348
    %v3351 = vrot.slane %v383, 1
    %v3352 = vsel %vm427, %v3351, %v3350
    %v3353 = vsel %vm430, %v386, %v3352
    %v3354 = vrot.slane %v389, 7
    %v3355 = vsel %vm433, %v3354, %v3353
    %v3356 = vrot.slane %v392, 6
    %v3357 = vsel %vm436, %v3356, %v3355
    %v3361 = vadd.f32 %v3242, %v3329
    %v3362 = vadd.f32 %v3244, %v3343
    %v3363 = vadd.f32 %v3313, %v3357
    %v3364 = vrot.slane %v516, 5
    %v3365 = vrot.slane %v519, 4
    %v3366 = vsel %vm418, %v3365, %v3364
    %v3367 = vrot.slane %v522, 3
    %v3368 = vsel %vm421, %v3367, %v3366
    %v3369 = vrot.slane %v525, 2
    %v3370 = vsel %vm424, %v3369, %v3368
    %v3371 = vrot.slane %v528, 1
    %v3372 = vsel %vm427, %v3371, %v3370
    %v3373 = vsel %vm430, %v531, %v3372
    %v3374 = vrot.slane %v534, 7
    %v3375 = vsel %vm433, %v3374, %v3373
    %v3376 = vrot.slane %v537, 6
    %v3377 = vsel %vm436, %v3376, %v3375
    %v3378 = vrot.slane %v517, 5
    %v3379 = vrot.slane %v520, 4
    %v3380 = vsel %vm418, %v3379, %v3378
    %v3381 = vrot.slane %v523, 3
    %v3382 = vsel %vm421, %v3381, %v3380
    %v3383 = vrot.slane %v526, 2
    %v3384 = vsel %vm424, %v3383, %v3382
    %v3385 = vrot.slane %v529, 1
    %v3386 = vsel %vm427, %v3385, %v3384
    %v3387 = vsel %vm430, %v532, %v3386
    %v3388 = vrot.slane %v535, 7
    %v3389 = vsel %vm433, %v3388, %v3387
    %v3390 = vrot.slane %v538, 6
    %v3391 = vsel %vm436, %v3390, %v3389
    %v3392 = vrot.slane %v518, 5
    %v3393 = vrot.slane %v521, 4
    %v3394 = vsel %vm418, %v3393, %v3392
    %v3395 = vrot.slane %v524, 3
    %v3396 = vsel %vm421, %v3395, %v3394
    %v3397 = vrot.slane %v527, 2
    %v3398 = vsel %vm424, %v3397, %v3396
    %v3399 = vrot.slane %v530, 1
    %v3400 = vsel %vm427, %v3399, %v3398
    %v3401 = vsel %vm430, %v533, %v3400
    %v3402 = vrot.slane %v536, 7
    %v3403 = vsel %vm433, %v3402, %v3401
    %v3404 = vrot.slane %v539, 6
    %v3405 = vsel %vm436, %v3404, %v3403
    %v3409 = vadd.f32 %v3361, %v3377
    %v3410 = vadd.f32 %v3362, %v3391
    %v3411 = vadd.f32 %v3363, %v3405
    %v3412 = vrot.slane %v664, 5
    %v3413 = vrot.slane %v667, 4
    %v3414 = vsel %vm418, %v3413, %v3412
    %v3415 = vrot.slane %v670, 3
    %v3416 = vsel %vm421, %v3415, %v3414
    %v3417 = vrot.slane %v673, 2
    %v3418 = vsel %vm424, %v3417, %v3416
    %v3419 = vrot.slane %v676, 1
    %v3420 = vsel %vm427, %v3419, %v3418
    %v3421 = vsel %vm430, %v679, %v3420
    %v3422 = vrot.slane %v682, 7
    %v3423 = vsel %vm433, %v3422, %v3421
    %v3424 = vrot.slane %v685, 6
    %v3425 = vsel %vm436, %v3424, %v3423
    %v3426 = vrot.slane %v665, 5
    %v3427 = vrot.slane %v668, 4
    %v3428 = vsel %vm418, %v3427, %v3426
    %v3429 = vrot.slane %v671, 3
    %v3430 = vsel %vm421, %v3429, %v3428
    %v3431 = vrot.slane %v674, 2
    %v3432 = vsel %vm424, %v3431, %v3430
    %v3433 = vrot.slane %v677, 1
    %v3434 = vsel %vm427, %v3433, %v3432
    %v3435 = vsel %vm430, %v680, %v3434
    %v3436 = vrot.slane %v683, 7
    %v3437 = vsel %vm433, %v3436, %v3435
    %v3438 = vrot.slane %v686, 6
    %v3439 = vsel %vm436, %v3438, %v3437
    %v3440 = vrot.slane %v666, 5
    %v3441 = vrot.slane %v669, 4
    %v3442 = vsel %vm418, %v3441, %v3440
    %v3443 = vrot.slane %v672, 3
    %v3444 = vsel %vm421, %v3443, %v3442
    %v3445 = vrot.slane %v675, 2
    %v3446 = vsel %vm424, %v3445, %v3444
    %v3447 = vrot.slane %v678, 1
    %v3448 = vsel %vm427, %v3447, %v3446
    %v3449 = vsel %vm430, %v681, %v3448
    %v3450 = vrot.slane %v684, 7
    %v3451 = vsel %vm433, %v3450, %v3449
    %v3452 = vrot.slane %v687, 6
    %v3453 = vsel %vm436, %v3452, %v3451
    %v3457 = vadd.f32 %v3409, %v3425
    %v3458 = vadd.f32 %v3410, %v3439
    %v3459 = vadd.f32 %v3411, %v3453
    %v3460 = vrot.slane %v804, 5
    %v3461 = vrot.slane %v807, 4
    %v3462 = vsel %vm418, %v3461, %v3460
    %v3463 = vrot.slane %v810, 3
    %v3464 = vsel %vm421, %v3463, %v3462
    %v3465 = vrot.slane %v813, 2
    %v3466 = vsel %vm424, %v3465, %v3464
    %v3467 = vrot.slane %v816, 1
    %v3468 = vsel %vm427, %v3467, %v3466
    %v3469 = vsel %vm430, %v819, %v3468
    %v3470 = vrot.slane %v822, 7
    %v3471 = vsel %vm433, %v3470, %v3469
    %v3472 = vrot.slane %v825, 6
    %v3473 = vsel %vm436, %v3472, %v3471
    %v3474 = vrot.slane %v805, 5
    %v3475 = vrot.slane %v808, 4
    %v3476 = vsel %vm418, %v3475, %v3474
    %v3477 = vrot.slane %v811, 3
    %v3478 = vsel %vm421, %v3477, %v3476
    %v3479 = vrot.slane %v814, 2
    %v3480 = vsel %vm424, %v3479, %v3478
    %v3481 = vrot.slane %v817, 1
    %v3482 = vsel %vm427, %v3481, %v3480
    %v3483 = vsel %vm430, %v820, %v3482
    %v3484 = vrot.slane %v823, 7
    %v3485 = vsel %vm433, %v3484, %v3483
    %v3486 = vrot.slane %v826, 6
    %v3487 = vsel %vm436, %v3486, %v3485
    %v3488 = vrot.slane %v806, 5
    %v3489 = vrot.slane %v809, 4
    %v3490 = vsel %vm418, %v3489, %v3488
    %v3491 = vrot.slane %v812, 3
    %v3492 = vsel %vm421, %v3491, %v3490
    %v3493 = vrot.slane %v815, 2
    %v3494 = vsel %vm424, %v3493, %v3492
    %v3495 = vrot.slane %v818, 1
    %v3496 = vsel %vm427, %v3495, %v3494
    %v3497 = vsel %vm430, %v821, %v3496
    %v3498 = vrot.slane %v824, 7
    %v3499 = vsel %vm433, %v3498, %v3497
    %v3500 = vrot.slane %v827, 6
    %v3501 = vsel %vm436, %v3500, %v3499
    %v3505 = vadd.f32 %v3457, %v3473
    %v3506 = vadd.f32 %v3458, %v3487
    %v3507 = vadd.f32 %v3459, %v3501
    %v3508 = vrot.slane %v952, 5
    %v3509 = vrot.slane %v955, 4
    %v3510 = vsel %vm418, %v3509, %v3508
    %v3511 = vrot.slane %v958, 3
    %v3512 = vsel %vm421, %v3511, %v3510
    %v3513 = vrot.slane %v961, 2
    %v3514 = vsel %vm424, %v3513, %v3512
    %v3515 = vrot.slane %v964, 1
    %v3516 = vsel %vm427, %v3515, %v3514
    %v3517 = vsel %vm430, %v967, %v3516
    %v3518 = vrot.slane %v970, 7
    %v3519 = vsel %vm433, %v3518, %v3517
    %v3520 = vrot.slane %v973, 6
    %v3521 = vsel %vm436, %v3520, %v3519
    %v3522 = vrot.slane %v953, 5
    %v3523 = vrot.slane %v956, 4
    %v3524 = vsel %vm418, %v3523, %v3522
    %v3525 = vrot.slane %v959, 3
    %v3526 = vsel %vm421, %v3525, %v3524
    %v3527 = vrot.slane %v962, 2
    %v3528 = vsel %vm424, %v3527, %v3526
    %v3529 = vrot.slane %v965, 1
    %v3530 = vsel %vm427, %v3529, %v3528
    %v3531 = vsel %vm430, %v968, %v3530
    %v3532 = vrot.slane %v971, 7
    %v3533 = vsel %vm433, %v3532, %v3531
    %v3534 = vrot.slane %v974, 6
    %v3535 = vsel %vm436, %v3534, %v3533
    %v3536 = vrot.slane %v954, 5
    %v3537 = vrot.slane %v957, 4
    %v3538 = vsel %vm418, %v3537, %v3536
    %v3539 = vrot.slane %v960, 3
    %v3540 = vsel %vm421, %v3539, %v3538
    %v3541 = vrot.slane %v963, 2
    %v3542 = vsel %vm424, %v3541, %v3540
    %v3543 = vrot.slane %v966, 1
    %v3544 = vsel %vm427, %v3543, %v3542
    %v3545 = vsel %vm430, %v969, %v3544
    %v3546 = vrot.slane %v972, 7
    %v3547 = vsel %vm433, %v3546, %v3545
    %v3548 = vrot.slane %v975, 6
    %v3549 = vsel %vm436, %v3548, %v3547
    %v3553 = vadd.f32 %v3505, %v3521
    %v3554 = vadd.f32 %v3506, %v3535
    %v3555 = vadd.f32 %v3507, %v3549
    %v3556 = vrot.slane %v1092, 5
    %v3557 = vrot.slane %v1095, 4
    %v3558 = vsel %vm418, %v3557, %v3556
    %v3559 = vrot.slane %v1098, 3
    %v3560 = vsel %vm421, %v3559, %v3558
    %v3561 = vrot.slane %v1101, 2
    %v3562 = vsel %vm424, %v3561, %v3560
    %v3563 = vrot.slane %v1104, 1
    %v3564 = vsel %vm427, %v3563, %v3562
    %v3565 = vsel %vm430, %v1107, %v3564
    %v3566 = vrot.slane %v1110, 7
    %v3567 = vsel %vm433, %v3566, %v3565
    %v3568 = vrot.slane %v1113, 6
    %v3569 = vsel %vm436, %v3568, %v3567
    %v3570 = vrot.slane %v1093, 5
    %v3571 = vrot.slane %v1096, 4
    %v3572 = vsel %vm418, %v3571, %v3570
    %v3573 = vrot.slane %v1099, 3
    %v3574 = vsel %vm421, %v3573, %v3572
    %v3575 = vrot.slane %v1102, 2
    %v3576 = vsel %vm424, %v3575, %v3574
    %v3577 = vrot.slane %v1105, 1
    %v3578 = vsel %vm427, %v3577, %v3576
    %v3579 = vsel %vm430, %v1108, %v3578
    %v3580 = vrot.slane %v1111, 7
    %v3581 = vsel %vm433, %v3580, %v3579
    %v3582 = vrot.slane %v1114, 6
    %v3583 = vsel %vm436, %v3582, %v3581
    %v3584 = vrot.slane %v1094, 5
    %v3585 = vrot.slane %v1097, 4
    %v3586 = vsel %vm418, %v3585, %v3584
    %v3587 = vrot.slane %v1100, 3
    %v3588 = vsel %vm421, %v3587, %v3586
    %v3589 = vrot.slane %v1103, 2
    %v3590 = vsel %vm424, %v3589, %v3588
    %v3591 = vrot.slane %v1106, 1
    %v3592 = vsel %vm427, %v3591, %v3590
    %v3593 = vsel %vm430, %v1109, %v3592
    %v3594 = vrot.slane %v1112, 7
    %v3595 = vsel %vm433, %v3594, %v3593
    %v3596 = vrot.slane %v1115, 6
    %v3597 = vsel %vm436, %v3596, %v3595
    %v3601 = vadd.f32 %v3553, %v3569
    %v3602 = vadd.f32 %v3554, %v3583
    %v3603 = vadd.f32 %v3555, %v3597
    %v3604 = vxor.u32 %v3601, 2147483648
    %v3605 = vxor.u32 %v3602, 2147483648
    %v3606 = vxor.u32 %v3603, 2147483648
    %v3607 = vmul.f32 %v3604, 1.442695
    %v3608 = vpow.pop %v3607
    %v3609 = vmul.f32 %v3605, 1.442695
    %v3610 = vpow.pop %v3609
    %v3611 = vmul.f32 %v3606, 1.442695
    %v3612 = vpow.pop %v3611
    %v3613 = vadd.f32 %v3608, 1.0
    %v3614 = vadd.f32 %v3610, 1.0
    %v3615 = vadd.f32 %v3612, 1.0
    %v3616 = vrcp.pop %v3613
    %v3617 = vmul.f32 1.0, %v3616
    %v3618 = vrcp.pop %v3614
    %v3619 = vmul.f32 1.0, %v3618
    %v3620 = vrcp.pop %v3615
    %v3621 = vmul.f32 1.0, %v3620
    %v3622 = vtanh.pop %v3603
    %v3623 = vmul.f32 %v3617, %v3151
    %v3624 = vmul.f32 %v3619, %v3152
    %3626 = vrot.lane.b32.xlu0 %v3622, 96
    %v3627 = vpop.permute.xlu0 %3626
    %v3629 = vmul.f32 %v3617, %v3627
    %3631 = vrot.lane.b32.xlu0 %v3629, 96
    %v3632 = vpop.permute.xlu0 %3631
    %v3634 = vadd.f32 %v3623, %v3632
    %v3635 = vadd.f32 %v3624, %v3632
    %v3636 = vtanh.pop %v3634
    %v3637 = vtanh.pop %v3635
    %3640 = vrot.lane.b32.xlu0 %v3636, 96
    %v3641 = vpop.permute.xlu0 %3640
    %3642 = vrot.lane.b32.xlu0 %v3637, 96
    %v3643 = vpop.permute.xlu0 %3642
    %v3644 = vsel %vm172, %v3641, %v3643
    %v3647 = vmul.f32 %v3619, %v3644
    %v3648 = vmul.f32 %v3621, %v3643
    %3651 = vrot.lane.b32.xlu0 %v3647, 64
    %v3652 = vpop.permute.xlu0 %3651
    %3653 = vrot.lane.b32.xlu0 %v3648, 64
    %v3654 = vpop.permute.xlu0 %3653
    %v3655 = vsel %vm1239, %v3652, %v3654
    %v3656 = vsel %vm172, %v3655, 0
    %3658 = vmatprep.subr.mxu0 0.0
    %3659 = vmatpush1.msra.mxu0 0.0
    %3660 = vmatprep.subr.mxu0 0.0
    %3661 = vmatpush1.msra.mxu0 0.0
    %3662 = vmatprep.subr.mxu0 0.0
    %3663 = vmatpush1.msra.mxu0 0.0
    %3664 = vmatprep.subr.mxu0 0.0
    %3665 = vmatpush1.msra.mxu0 0.0
    %3666 = vmatprep.subr.mxu0 %v154
    %3667 = vmatpush1.msra.mxu0 %v153
    %3668 = vmatprep.subr.mxu0 %v151
    %3669 = vmatpush1.msra.mxu0 %v150
    %3670 = vmatprep.subr.mxu0 %v148
    %3671 = vmatpush1.msra.mxu0 %v147
    %3672 = vmatprep.subr.mxu0 %v145
    %3673 = vmatpush1.msra.mxu0 %v144
    %3674 = vmatprep.subr.mxu0 %v142
    %3675 = vmatpush1.msra.mxu0 %v141
    %3676 = vmatprep.subr.mxu0 %v139
    %3677 = vmatpush1.msra.mxu0 %v138
    %3678 = vmatprep.subr.mxu0 %v136
    %3679 = vmatpush1.msra.mxu0 %v135
    %3680 = vmatprep.subr.mxu0 %v133
    %3681 = vmatpush1.msra.mxu0 %v132
    %3682 = vmatprep.subr.mxu0 %v130
    %3683 = vmatpush1.msra.mxu0 %v129
    %3684 = vmatprep.subr.mxu0 %v127
    %3685 = vmatpush1.msra.mxu0 %v126
    %3686 = vmatprep.subr.mxu0 %v124
    %3687 = vmatpush1.msra.mxu0 %v123
    %3688 = vmatprep.subr.mxu0 %v121
    %3689 = vmatpush1.msra.mxu0 %v120
    %3690 = vmatprep.subr.mxu0 0.0
    %3691 = vmatpush2.msra.mxu0 0.0
    %3692 = vmatprep.subr.mxu0 0.0
    %3693 = vmatpush2.msra.mxu0 0.0
    %3694 = vmatprep.subr.mxu0 0.0
    %3695 = vmatpush2.msra.mxu0 0.0
    %3696 = vmatprep.subr.mxu0 0.0
    %3697 = vmatpush2.msra.mxu0 0.0
    %3698 = vmatprep.subr.mxu0 0.0
    %3699 = vmatpush2.msra.mxu0 0.0
    %3700 = vmatprep.subr.mxu0 0.0
    %3701 = vmatpush2.msra.mxu0 0.0
    %3702 = vmatprep.subr.mxu0 0.0
    %3703 = vmatpush2.msra.mxu0 0.0
    %3704 = vmatprep.subr.mxu0 0.0
    %3705 = vmatpush2.msra.mxu0 0.0
    %3706 = vmatprep.subr.mxu0 0.0
    %3707 = vmatpush2.msra.mxu0 0.0
    %3708 = vmatprep.subr.mxu0 0.0
    %3709 = vmatpush2.msra.mxu0 0.0
    %3710 = vmatprep.subr.mxu0 0.0
    %3711 = vmatpush2.msra.mxu0 0.0
    %3712 = vmatprep.subr.mxu0 0.0
    %3713 = vmatpush2.msra.mxu0 0.0
    %3714 = vmatprep.subr.mxu0 0.0
    %3715 = vmatpush2.msra.mxu0 0.0
    %3716 = vmatprep.subr.mxu0 0.0
    %3717 = vmatpush2.msra.mxu0 0.0
    %3718 = vmatprep.subr.mxu0 0.0
    %3719 = vmatpush2.msra.mxu0 0.0
    %3720 = vmatprep.subr.mxu0 0.0
    %3721 = vmatpush2.msra.mxu0 0.0
    %3722 = vmatprep.mubr.f32.mxu0 0.0
    %3723 = vmatmul.mubr.f32.gmra.mxu0 %v3656
    %v3724 = vpop.f32.mrf.mxu0
    %v3725 = vadd.f32 %v160, %v3724
    %v3726 = vpop.f32.mrf.mxu0
    %v3727 = vadd.f32 %v164, %v3726
    %3728 = vdwg.mxu0
    %3729 = vmatprep.subr.mxu0 0.0
    %3730 = vmatpush1.msra.mxu0 0.0
    %3731 = vmatprep.subr.mxu0 0.0
    %3732 = vmatpush1.msra.mxu0 0.0
    %3733 = vmatprep.subr.mxu0 0.0
    %3734 = vmatpush1.msra.mxu0 0.0
    %3735 = vmatprep.subr.mxu0 0.0
    %3736 = vmatpush1.msra.mxu0 0.0
    %3737 = vmatprep.subr.mxu0 0.0
    %3738 = vmatpush1.msra.mxu0 %v155
    %3739 = vmatprep.subr.mxu0 0.0
    %3740 = vmatpush1.msra.mxu0 %v152
    %3741 = vmatprep.subr.mxu0 0.0
    %3742 = vmatpush1.msra.mxu0 %v149
    %3743 = vmatprep.subr.mxu0 0.0
    %3744 = vmatpush1.msra.mxu0 %v146
    %3745 = vmatprep.subr.mxu0 0.0
    %3746 = vmatpush1.msra.mxu0 %v143
    %3747 = vmatprep.subr.mxu0 0.0
    %3748 = vmatpush1.msra.mxu0 %v140
    %3749 = vmatprep.subr.mxu0 0.0
    %3750 = vmatpush1.msra.mxu0 %v137
    %3751 = vmatprep.subr.mxu0 0.0
    %3752 = vmatpush1.msra.mxu0 %v134
    %3753 = vmatprep.subr.mxu0 0.0
    %3754 = vmatpush1.msra.mxu0 %v131
    %3755 = vmatprep.subr.mxu0 0.0
    %3756 = vmatpush1.msra.mxu0 %v128
    %3757 = vmatprep.subr.mxu0 0.0
    %3758 = vmatpush1.msra.mxu0 %v125
    %3759 = vmatprep.subr.mxu0 0.0
    %3760 = vmatpush1.msra.mxu0 %v122
    %3761 = vmatprep.subr.mxu0 0.0
    %3762 = vmatpush2.msra.mxu0 0.0
    %3763 = vmatprep.subr.mxu0 0.0
    %3764 = vmatpush2.msra.mxu0 0.0
    %3765 = vmatprep.subr.mxu0 0.0
    %3766 = vmatpush2.msra.mxu0 0.0
    %3767 = vmatprep.subr.mxu0 0.0
    %3768 = vmatpush2.msra.mxu0 0.0
    %3769 = vmatprep.subr.mxu0 0.0
    %3770 = vmatpush2.msra.mxu0 0.0
    %3771 = vmatprep.subr.mxu0 0.0
    %3772 = vmatpush2.msra.mxu0 0.0
    %3773 = vmatprep.subr.mxu0 0.0
    %3774 = vmatpush2.msra.mxu0 0.0
    %3775 = vmatprep.subr.mxu0 0.0
    %3776 = vmatpush2.msra.mxu0 0.0
    %3777 = vmatprep.subr.mxu0 0.0
    %3778 = vmatpush2.msra.mxu0 0.0
    %3779 = vmatprep.subr.mxu0 0.0
    %3780 = vmatpush2.msra.mxu0 0.0
    %3781 = vmatprep.subr.mxu0 0.0
    %3782 = vmatpush2.msra.mxu0 0.0
    %3783 = vmatprep.subr.mxu0 0.0
    %3784 = vmatpush2.msra.mxu0 0.0
    %3785 = vmatprep.subr.mxu0 0.0
    %3786 = vmatpush2.msra.mxu0 0.0
    %3787 = vmatprep.subr.mxu0 0.0
    %3788 = vmatpush2.msra.mxu0 0.0
    %3789 = vmatprep.subr.mxu0 0.0
    %3790 = vmatpush2.msra.mxu0 0.0
    %3791 = vmatprep.subr.mxu0 0.0
    %3792 = vmatpush2.msra.mxu0 0.0
    %3793 = vmatprep.mubr.f32.mxu0 0.0
    %3794 = vmatmul.mubr.f32.gmra.mxu0 %v3656
    %v3795 = vpop.f32.mrf.mxu0
    %v3796 = vadd.f32 %v168, %v3795
    %v3797 = vpop.f32.mrf.mxu0
    %3798 = vdwg.mxu0
    %v3799 = vrot.slane %v369, 6
    %v3800 = vrot.slane %v372, 5
    %v3801 = vsel %vm418, %v3800, %v3799
    %v3802 = vrot.slane %v375, 4
    %v3803 = vsel %vm421, %v3802, %v3801
    %v3804 = vrot.slane %v378, 3
    %v3805 = vsel %vm424, %v3804, %v3803
    %v3806 = vrot.slane %v381, 2
    %v3807 = vsel %vm427, %v3806, %v3805
    %v3808 = vrot.slane %v384, 1
    %v3809 = vsel %vm430, %v3808, %v3807
    %v3810 = vsel %vm433, %v387, %v3809
    %v3811 = vrot.slane %v390, 7
    %v3812 = vsel %vm436, %v3811, %v3810
    %v3813 = vrot.slane %v370, 6
    %v3814 = vrot.slane %v373, 5
    %v3815 = vsel %vm418, %v3814, %v3813
    %v3816 = vrot.slane %v376, 4
    %v3817 = vsel %vm421, %v3816, %v3815
    %v3818 = vrot.slane %v379, 3
    %v3819 = vsel %vm424, %v3818, %v3817
    %v3820 = vrot.slane %v382, 2
    %v3821 = vsel %vm427, %v3820, %v3819
    %v3822 = vrot.slane %v385, 1
    %v3823 = vsel %vm430, %v3822, %v3821
    %v3824 = vsel %vm433, %v388, %v3823
    %v3825 = vrot.slane %v391, 7
    %v3826 = vsel %vm436, %v3825, %v3824
    %v3827 = vrot.slane %v371, 6
    %v3828 = vrot.slane %v374, 5
    %v3829 = vsel %vm418, %v3828, %v3827
    %v3830 = vrot.slane %v377, 4
    %v3831 = vsel %vm421, %v3830, %v3829
    %v3832 = vrot.slane %v380, 3
    %v3833 = vsel %vm424, %v3832, %v3831
    %v3834 = vrot.slane %v383, 2
    %v3835 = vsel %vm427, %v3834, %v3833
    %v3836 = vrot.slane %v386, 1
    %v3837 = vsel %vm430, %v3836, %v3835
    %v3838 = vsel %vm433, %v389, %v3837
    %v3839 = vrot.slane %v392, 7
    %v3840 = vsel %vm436, %v3839, %v3838
    %v3844 = vadd.f32 %v3725, %v3812
    %v3845 = vadd.f32 %v3727, %v3826
    %v3846 = vadd.f32 %v3796, %v3840
    %v3847 = vrot.slane %v516, 6
    %v3848 = vrot.slane %v519, 5
    %v3849 = vsel %vm418, %v3848, %v3847
    %v3850 = vrot.slane %v522, 4
    %v3851 = vsel %vm421, %v3850, %v3849
    %v3852 = vrot.slane %v525, 3
    %v3853 = vsel %vm424, %v3852, %v3851
    %v3854 = vrot.slane %v528, 2
    %v3855 = vsel %vm427, %v3854, %v3853
    %v3856 = vrot.slane %v531, 1
    %v3857 = vsel %vm430, %v3856, %v3855
    %v3858 = vsel %vm433, %v534, %v3857
    %v3859 = vrot.slane %v537, 7
    %v3860 = vsel %vm436, %v3859, %v3858
    %v3861 = vrot.slane %v517, 6
    %v3862 = vrot.slane %v520, 5
    %v3863 = vsel %vm418, %v3862, %v3861
    %v3864 = vrot.slane %v523, 4
    %v3865 = vsel %vm421, %v3864, %v3863
    %v3866 = vrot.slane %v526, 3
    %v3867 = vsel %vm424, %v3866, %v3865
    %v3868 = vrot.slane %v529, 2
    %v3869 = vsel %vm427, %v3868, %v3867
    %v3870 = vrot.slane %v532, 1
    %v3871 = vsel %vm430, %v3870, %v3869
    %v3872 = vsel %vm433, %v535, %v3871
    %v3873 = vrot.slane %v538, 7
    %v3874 = vsel %vm436, %v3873, %v3872
    %v3875 = vrot.slane %v518, 6
    %v3876 = vrot.slane %v521, 5
    %v3877 = vsel %vm418, %v3876, %v3875
    %v3878 = vrot.slane %v524, 4
    %v3879 = vsel %vm421, %v3878, %v3877
    %v3880 = vrot.slane %v527, 3
    %v3881 = vsel %vm424, %v3880, %v3879
    %v3882 = vrot.slane %v530, 2
    %v3883 = vsel %vm427, %v3882, %v3881
    %v3884 = vrot.slane %v533, 1
    %v3885 = vsel %vm430, %v3884, %v3883
    %v3886 = vsel %vm433, %v536, %v3885
    %v3887 = vrot.slane %v539, 7
    %v3888 = vsel %vm436, %v3887, %v3886
    %v3892 = vadd.f32 %v3844, %v3860
    %v3893 = vadd.f32 %v3845, %v3874
    %v3894 = vadd.f32 %v3846, %v3888
    %v3895 = vrot.slane %v664, 6
    %v3896 = vrot.slane %v667, 5
    %v3897 = vsel %vm418, %v3896, %v3895
    %v3898 = vrot.slane %v670, 4
    %v3899 = vsel %vm421, %v3898, %v3897
    %v3900 = vrot.slane %v673, 3
    %v3901 = vsel %vm424, %v3900, %v3899
    %v3902 = vrot.slane %v676, 2
    %v3903 = vsel %vm427, %v3902, %v3901
    %v3904 = vrot.slane %v679, 1
    %v3905 = vsel %vm430, %v3904, %v3903
    %v3906 = vsel %vm433, %v682, %v3905
    %v3907 = vrot.slane %v685, 7
    %v3908 = vsel %vm436, %v3907, %v3906
    %v3909 = vrot.slane %v665, 6
    %v3910 = vrot.slane %v668, 5
    %v3911 = vsel %vm418, %v3910, %v3909
    %v3912 = vrot.slane %v671, 4
    %v3913 = vsel %vm421, %v3912, %v3911
    %v3914 = vrot.slane %v674, 3
    %v3915 = vsel %vm424, %v3914, %v3913
    %v3916 = vrot.slane %v677, 2
    %v3917 = vsel %vm427, %v3916, %v3915
    %v3918 = vrot.slane %v680, 1
    %v3919 = vsel %vm430, %v3918, %v3917
    %v3920 = vsel %vm433, %v683, %v3919
    %v3921 = vrot.slane %v686, 7
    %v3922 = vsel %vm436, %v3921, %v3920
    %v3923 = vrot.slane %v666, 6
    %v3924 = vrot.slane %v669, 5
    %v3925 = vsel %vm418, %v3924, %v3923
    %v3926 = vrot.slane %v672, 4
    %v3927 = vsel %vm421, %v3926, %v3925
    %v3928 = vrot.slane %v675, 3
    %v3929 = vsel %vm424, %v3928, %v3927
    %v3930 = vrot.slane %v678, 2
    %v3931 = vsel %vm427, %v3930, %v3929
    %v3932 = vrot.slane %v681, 1
    %v3933 = vsel %vm430, %v3932, %v3931
    %v3934 = vsel %vm433, %v684, %v3933
    %v3935 = vrot.slane %v687, 7
    %v3936 = vsel %vm436, %v3935, %v3934
    %v3940 = vadd.f32 %v3892, %v3908
    %v3941 = vadd.f32 %v3893, %v3922
    %v3942 = vadd.f32 %v3894, %v3936
    %v3943 = vrot.slane %v804, 6
    %v3944 = vrot.slane %v807, 5
    %v3945 = vsel %vm418, %v3944, %v3943
    %v3946 = vrot.slane %v810, 4
    %v3947 = vsel %vm421, %v3946, %v3945
    %v3948 = vrot.slane %v813, 3
    %v3949 = vsel %vm424, %v3948, %v3947
    %v3950 = vrot.slane %v816, 2
    %v3951 = vsel %vm427, %v3950, %v3949
    %v3952 = vrot.slane %v819, 1
    %v3953 = vsel %vm430, %v3952, %v3951
    %v3954 = vsel %vm433, %v822, %v3953
    %v3955 = vrot.slane %v825, 7
    %v3956 = vsel %vm436, %v3955, %v3954
    %v3957 = vrot.slane %v805, 6
    %v3958 = vrot.slane %v808, 5
    %v3959 = vsel %vm418, %v3958, %v3957
    %v3960 = vrot.slane %v811, 4
    %v3961 = vsel %vm421, %v3960, %v3959
    %v3962 = vrot.slane %v814, 3
    %v3963 = vsel %vm424, %v3962, %v3961
    %v3964 = vrot.slane %v817, 2
    %v3965 = vsel %vm427, %v3964, %v3963
    %v3966 = vrot.slane %v820, 1
    %v3967 = vsel %vm430, %v3966, %v3965
    %v3968 = vsel %vm433, %v823, %v3967
    %v3969 = vrot.slane %v826, 7
    %v3970 = vsel %vm436, %v3969, %v3968
    %v3971 = vrot.slane %v806, 6
    %v3972 = vrot.slane %v809, 5
    %v3973 = vsel %vm418, %v3972, %v3971
    %v3974 = vrot.slane %v812, 4
    %v3975 = vsel %vm421, %v3974, %v3973
    %v3976 = vrot.slane %v815, 3
    %v3977 = vsel %vm424, %v3976, %v3975
    %v3978 = vrot.slane %v818, 2
    %v3979 = vsel %vm427, %v3978, %v3977
    %v3980 = vrot.slane %v821, 1
    %v3981 = vsel %vm430, %v3980, %v3979
    %v3982 = vsel %vm433, %v824, %v3981
    %v3983 = vrot.slane %v827, 7
    %v3984 = vsel %vm436, %v3983, %v3982
    %v3988 = vadd.f32 %v3940, %v3956
    %v3989 = vadd.f32 %v3941, %v3970
    %v3990 = vadd.f32 %v3942, %v3984
    %v3991 = vrot.slane %v952, 6
    %v3992 = vrot.slane %v955, 5
    %v3993 = vsel %vm418, %v3992, %v3991
    %v3994 = vrot.slane %v958, 4
    %v3995 = vsel %vm421, %v3994, %v3993
    %v3996 = vrot.slane %v961, 3
    %v3997 = vsel %vm424, %v3996, %v3995
    %v3998 = vrot.slane %v964, 2
    %v3999 = vsel %vm427, %v3998, %v3997
    %v4000 = vrot.slane %v967, 1
    %v4001 = vsel %vm430, %v4000, %v3999
    %v4002 = vsel %vm433, %v970, %v4001
    %v4003 = vrot.slane %v973, 7
    %v4004 = vsel %vm436, %v4003, %v4002
    %v4005 = vrot.slane %v953, 6
    %v4006 = vrot.slane %v956, 5
    %v4007 = vsel %vm418, %v4006, %v4005
    %v4008 = vrot.slane %v959, 4
    %v4009 = vsel %vm421, %v4008, %v4007
    %v4010 = vrot.slane %v962, 3
    %v4011 = vsel %vm424, %v4010, %v4009
    %v4012 = vrot.slane %v965, 2
    %v4013 = vsel %vm427, %v4012, %v4011
    %v4014 = vrot.slane %v968, 1
    %v4015 = vsel %vm430, %v4014, %v4013
    %v4016 = vsel %vm433, %v971, %v4015
    %v4017 = vrot.slane %v974, 7
    %v4018 = vsel %vm436, %v4017, %v4016
    %v4019 = vrot.slane %v954, 6
    %v4020 = vrot.slane %v957, 5
    %v4021 = vsel %vm418, %v4020, %v4019
    %v4022 = vrot.slane %v960, 4
    %v4023 = vsel %vm421, %v4022, %v4021
    %v4024 = vrot.slane %v963, 3
    %v4025 = vsel %vm424, %v4024, %v4023
    %v4026 = vrot.slane %v966, 2
    %v4027 = vsel %vm427, %v4026, %v4025
    %v4028 = vrot.slane %v969, 1
    %v4029 = vsel %vm430, %v4028, %v4027
    %v4030 = vsel %vm433, %v972, %v4029
    %v4031 = vrot.slane %v975, 7
    %v4032 = vsel %vm436, %v4031, %v4030
    %v4036 = vadd.f32 %v3988, %v4004
    %v4037 = vadd.f32 %v3989, %v4018
    %v4038 = vadd.f32 %v3990, %v4032
    %v4039 = vrot.slane %v1092, 6
    %v4040 = vrot.slane %v1095, 5
    %v4041 = vsel %vm418, %v4040, %v4039
    %v4042 = vrot.slane %v1098, 4
    %v4043 = vsel %vm421, %v4042, %v4041
    %v4044 = vrot.slane %v1101, 3
    %v4045 = vsel %vm424, %v4044, %v4043
    %v4046 = vrot.slane %v1104, 2
    %v4047 = vsel %vm427, %v4046, %v4045
    %v4048 = vrot.slane %v1107, 1
    %v4049 = vsel %vm430, %v4048, %v4047
    %v4050 = vsel %vm433, %v1110, %v4049
    %v4051 = vrot.slane %v1113, 7
    %v4052 = vsel %vm436, %v4051, %v4050
    %v4053 = vrot.slane %v1093, 6
    %v4054 = vrot.slane %v1096, 5
    %v4055 = vsel %vm418, %v4054, %v4053
    %v4056 = vrot.slane %v1099, 4
    %v4057 = vsel %vm421, %v4056, %v4055
    %v4058 = vrot.slane %v1102, 3
    %v4059 = vsel %vm424, %v4058, %v4057
    %v4060 = vrot.slane %v1105, 2
    %v4061 = vsel %vm427, %v4060, %v4059
    %v4062 = vrot.slane %v1108, 1
    %v4063 = vsel %vm430, %v4062, %v4061
    %v4064 = vsel %vm433, %v1111, %v4063
    %v4065 = vrot.slane %v1114, 7
    %v4066 = vsel %vm436, %v4065, %v4064
    %v4067 = vrot.slane %v1094, 6
    %v4068 = vrot.slane %v1097, 5
    %v4069 = vsel %vm418, %v4068, %v4067
    %v4070 = vrot.slane %v1100, 4
    %v4071 = vsel %vm421, %v4070, %v4069
    %v4072 = vrot.slane %v1103, 3
    %v4073 = vsel %vm424, %v4072, %v4071
    %v4074 = vrot.slane %v1106, 2
    %v4075 = vsel %vm427, %v4074, %v4073
    %v4076 = vrot.slane %v1109, 1
    %v4077 = vsel %vm430, %v4076, %v4075
    %v4078 = vsel %vm433, %v1112, %v4077
    %v4079 = vrot.slane %v1115, 7
    %v4080 = vsel %vm436, %v4079, %v4078
    %v4084 = vadd.f32 %v4036, %v4052
    %v4085 = vadd.f32 %v4037, %v4066
    %v4086 = vadd.f32 %v4038, %v4080
    %v4087 = vxor.u32 %v4084, 2147483648
    %v4088 = vxor.u32 %v4085, 2147483648
    %v4089 = vxor.u32 %v4086, 2147483648
    %v4090 = vmul.f32 %v4087, 1.442695
    %v4091 = vpow.pop %v4090
    %v4092 = vmul.f32 %v4088, 1.442695
    %v4093 = vpow.pop %v4092
    %v4094 = vmul.f32 %v4089, 1.442695
    %v4095 = vpow.pop %v4094
    %v4096 = vadd.f32 %v4091, 1.0
    %v4097 = vadd.f32 %v4093, 1.0
    %v4098 = vadd.f32 %v4095, 1.0
    %v4099 = vrcp.pop %v4096
    %v4100 = vmul.f32 1.0, %v4099
    %v4101 = vrcp.pop %v4097
    %v4102 = vmul.f32 1.0, %v4101
    %v4103 = vrcp.pop %v4098
    %v4104 = vmul.f32 1.0, %v4103
    %v4105 = vtanh.pop %v4086
    %v4106 = vmul.f32 %v4100, %v3634
    %v4107 = vmul.f32 %v4102, %v3635
    %4109 = vrot.lane.b32.xlu0 %v4105, 96
    %v4110 = vpop.permute.xlu0 %4109
    %v4112 = vmul.f32 %v4100, %v4110
    %4114 = vrot.lane.b32.xlu0 %v4112, 96
    %v4115 = vpop.permute.xlu0 %4114
    %v4117 = vadd.f32 %v4106, %v4115
    %v4118 = vadd.f32 %v4107, %v4115
    %v4119 = vtanh.pop %v4117
    %v4120 = vtanh.pop %v4118
    %4123 = vrot.lane.b32.xlu0 %v4119, 96
    %v4124 = vpop.permute.xlu0 %4123
    %4125 = vrot.lane.b32.xlu0 %v4120, 96
    %v4126 = vpop.permute.xlu0 %4125
    %v4127 = vsel %vm172, %v4124, %v4126
    %v4130 = vmul.f32 %v4102, %v4127
    %v4131 = vmul.f32 %v4104, %v4126
    %4134 = vrot.lane.b32.xlu0 %v4130, 64
    %v4135 = vpop.permute.xlu0 %4134
    %4136 = vrot.lane.b32.xlu0 %v4131, 64
    %v4137 = vpop.permute.xlu0 %4136
    %v4138 = vsel %vm1239, %v4135, %v4137
    %v4139 = vsel %vm172, %v4138, 0
    %4141 = vmatprep.subr.mxu0 0.0
    %4142 = vmatpush1.msra.mxu0 0.0
    %4143 = vmatprep.subr.mxu0 0.0
    %4144 = vmatpush1.msra.mxu0 0.0
    %4145 = vmatprep.subr.mxu0 0.0
    %4146 = vmatpush1.msra.mxu0 0.0
    %4147 = vmatprep.subr.mxu0 0.0
    %4148 = vmatpush1.msra.mxu0 0.0
    %4149 = vmatprep.subr.mxu0 %v154
    %4150 = vmatpush1.msra.mxu0 %v153
    %4151 = vmatprep.subr.mxu0 %v151
    %4152 = vmatpush1.msra.mxu0 %v150
    %4153 = vmatprep.subr.mxu0 %v148
    %4154 = vmatpush1.msra.mxu0 %v147
    %4155 = vmatprep.subr.mxu0 %v145
    %4156 = vmatpush1.msra.mxu0 %v144
    %4157 = vmatprep.subr.mxu0 %v142
    %4158 = vmatpush1.msra.mxu0 %v141
    %4159 = vmatprep.subr.mxu0 %v139
    %4160 = vmatpush1.msra.mxu0 %v138
    %4161 = vmatprep.subr.mxu0 %v136
    %4162 = vmatpush1.msra.mxu0 %v135
    %4163 = vmatprep.subr.mxu0 %v133
    %4164 = vmatpush1.msra.mxu0 %v132
    %4165 = vmatprep.subr.mxu0 %v130
    %4166 = vmatpush1.msra.mxu0 %v129
    %4167 = vmatprep.subr.mxu0 %v127
    %4168 = vmatpush1.msra.mxu0 %v126
    %4169 = vmatprep.subr.mxu0 %v124
    %4170 = vmatpush1.msra.mxu0 %v123
    %4171 = vmatprep.subr.mxu0 %v121
    %4172 = vmatpush1.msra.mxu0 %v120
    %4173 = vmatprep.subr.mxu0 0.0
    %4174 = vmatpush2.msra.mxu0 0.0
    %4175 = vmatprep.subr.mxu0 0.0
    %4176 = vmatpush2.msra.mxu0 0.0
    %4177 = vmatprep.subr.mxu0 0.0
    %4178 = vmatpush2.msra.mxu0 0.0
    %4179 = vmatprep.subr.mxu0 0.0
    %4180 = vmatpush2.msra.mxu0 0.0
    %4181 = vmatprep.subr.mxu0 0.0
    %4182 = vmatpush2.msra.mxu0 0.0
    %4183 = vmatprep.subr.mxu0 0.0
    %4184 = vmatpush2.msra.mxu0 0.0
    %4185 = vmatprep.subr.mxu0 0.0
    %4186 = vmatpush2.msra.mxu0 0.0
    %4187 = vmatprep.subr.mxu0 0.0
    %4188 = vmatpush2.msra.mxu0 0.0
    %4189 = vmatprep.subr.mxu0 0.0
    %4190 = vmatpush2.msra.mxu0 0.0
    %4191 = vmatprep.subr.mxu0 0.0
    %4192 = vmatpush2.msra.mxu0 0.0
    %4193 = vmatprep.subr.mxu0 0.0
    %4194 = vmatpush2.msra.mxu0 0.0
    %4195 = vmatprep.subr.mxu0 0.0
    %4196 = vmatpush2.msra.mxu0 0.0
    %4197 = vmatprep.subr.mxu0 0.0
    %4198 = vmatpush2.msra.mxu0 0.0
    %4199 = vmatprep.subr.mxu0 0.0
    %4200 = vmatpush2.msra.mxu0 0.0
    %4201 = vmatprep.subr.mxu0 0.0
    %4202 = vmatpush2.msra.mxu0 0.0
    %4203 = vmatprep.subr.mxu0 0.0
    %4204 = vmatpush2.msra.mxu0 0.0
    %4205 = vmatprep.mubr.f32.mxu0 0.0
    %4206 = vmatmul.mubr.f32.gmra.mxu0 %v4139
    %v4207 = vpop.f32.mrf.mxu0
    %v4208 = vadd.f32 %v160, %v4207
    %v4209 = vpop.f32.mrf.mxu0
    %v4210 = vadd.f32 %v164, %v4209
    %4211 = vdwg.mxu0
    %4212 = vmatprep.subr.mxu0 0.0
    %4213 = vmatpush1.msra.mxu0 0.0
    %4214 = vmatprep.subr.mxu0 0.0
    %4215 = vmatpush1.msra.mxu0 0.0
    %4216 = vmatprep.subr.mxu0 0.0
    %4217 = vmatpush1.msra.mxu0 0.0
    %4218 = vmatprep.subr.mxu0 0.0
    %4219 = vmatpush1.msra.mxu0 0.0
    %4220 = vmatprep.subr.mxu0 0.0
    %4221 = vmatpush1.msra.mxu0 %v155
    %4222 = vmatprep.subr.mxu0 0.0
    %4223 = vmatpush1.msra.mxu0 %v152
    %4224 = vmatprep.subr.mxu0 0.0
    %4225 = vmatpush1.msra.mxu0 %v149
    %4226 = vmatprep.subr.mxu0 0.0
    %4227 = vmatpush1.msra.mxu0 %v146
    %4228 = vmatprep.subr.mxu0 0.0
    %4229 = vmatpush1.msra.mxu0 %v143
    %4230 = vmatprep.subr.mxu0 0.0
    %4231 = vmatpush1.msra.mxu0 %v140
    %4232 = vmatprep.subr.mxu0 0.0
    %4233 = vmatpush1.msra.mxu0 %v137
    %4234 = vmatprep.subr.mxu0 0.0
    %4235 = vmatpush1.msra.mxu0 %v134
    %4236 = vmatprep.subr.mxu0 0.0
    %4237 = vmatpush1.msra.mxu0 %v131
    %4238 = vmatprep.subr.mxu0 0.0
    %4239 = vmatpush1.msra.mxu0 %v128
    %4240 = vmatprep.subr.mxu0 0.0
    %4241 = vmatpush1.msra.mxu0 %v125
    %4242 = vmatprep.subr.mxu0 0.0
    %4243 = vmatpush1.msra.mxu0 %v122
    %4244 = vmatprep.subr.mxu0 0.0
    %4245 = vmatpush2.msra.mxu0 0.0
    %4246 = vmatprep.subr.mxu0 0.0
    %4247 = vmatpush2.msra.mxu0 0.0
    %4248 = vmatprep.subr.mxu0 0.0
    %4249 = vmatpush2.msra.mxu0 0.0
    %4250 = vmatprep.subr.mxu0 0.0
    %4251 = vmatpush2.msra.mxu0 0.0
    %4252 = vmatprep.subr.mxu0 0.0
    %4253 = vmatpush2.msra.mxu0 0.0
    %4254 = vmatprep.subr.mxu0 0.0
    %4255 = vmatpush2.msra.mxu0 0.0
    %4256 = vmatprep.subr.mxu0 0.0
    %4257 = vmatpush2.msra.mxu0 0.0
    %4258 = vmatprep.subr.mxu0 0.0
    %4259 = vmatpush2.msra.mxu0 0.0
    %4260 = vmatprep.subr.mxu0 0.0
    %4261 = vmatpush2.msra.mxu0 0.0
    %4262 = vmatprep.subr.mxu0 0.0
    %4263 = vmatpush2.msra.mxu0 0.0
    %4264 = vmatprep.subr.mxu0 0.0
    %4265 = vmatpush2.msra.mxu0 0.0
    %4266 = vmatprep.subr.mxu0 0.0
    %4267 = vmatpush2.msra.mxu0 0.0
    %4268 = vmatprep.subr.mxu0 0.0
    %4269 = vmatpush2.msra.mxu0 0.0
    %4270 = vmatprep.subr.mxu0 0.0
    %4271 = vmatpush2.msra.mxu0 0.0
    %4272 = vmatprep.subr.mxu0 0.0
    %4273 = vmatpush2.msra.mxu0 0.0
    %4274 = vmatprep.subr.mxu0 0.0
    %4275 = vmatpush2.msra.mxu0 0.0
    %4276 = vmatprep.mubr.f32.mxu0 0.0
    %4277 = vmatmul.mubr.f32.gmra.mxu0 %v4139
    %v4278 = vpop.f32.mrf.mxu0
    %v4279 = vadd.f32 %v168, %v4278
    %v4280 = vpop.f32.mrf.mxu0
    %4281 = vdwg.mxu0
    %v4282 = vrot.slane %v369, 7
    %v4283 = vrot.slane %v372, 6
    %v4284 = vsel %vm418, %v4283, %v4282
    %v4285 = vrot.slane %v375, 5
    %v4286 = vsel %vm421, %v4285, %v4284
    %v4287 = vrot.slane %v378, 4
    %v4288 = vsel %vm424, %v4287, %v4286
    %v4289 = vrot.slane %v381, 3
    %v4290 = vsel %vm427, %v4289, %v4288
    %v4291 = vrot.slane %v384, 2
    %v4292 = vsel %vm430, %v4291, %v4290
    %v4293 = vrot.slane %v387, 1
    %v4294 = vsel %vm433, %v4293, %v4292
    %v4295 = vsel %vm436, %v390, %v4294
    %v4296 = vrot.slane %v370, 7
    %v4297 = vrot.slane %v373, 6
    %v4298 = vsel %vm418, %v4297, %v4296
    %v4299 = vrot.slane %v376, 5
    %v4300 = vsel %vm421, %v4299, %v4298
    %v4301 = vrot.slane %v379, 4
    %v4302 = vsel %vm424, %v4301, %v4300
    %v4303 = vrot.slane %v382, 3
    %v4304 = vsel %vm427, %v4303, %v4302
    %v4305 = vrot.slane %v385, 2
    %v4306 = vsel %vm430, %v4305, %v4304
    %v4307 = vrot.slane %v388, 1
    %v4308 = vsel %vm433, %v4307, %v4306
    %v4309 = vsel %vm436, %v391, %v4308
    %v4310 = vrot.slane %v371, 7
    %v4311 = vrot.slane %v374, 6
    %v4312 = vsel %vm418, %v4311, %v4310
    %v4313 = vrot.slane %v377, 5
    %v4314 = vsel %vm421, %v4313, %v4312
    %v4315 = vrot.slane %v380, 4
    %v4316 = vsel %vm424, %v4315, %v4314
    %v4317 = vrot.slane %v383, 3
    %v4318 = vsel %vm427, %v4317, %v4316
    %v4319 = vrot.slane %v386, 2
    %v4320 = vsel %vm430, %v4319, %v4318
    %v4321 = vrot.slane %v389, 1
    %v4322 = vsel %vm433, %v4321, %v4320
    %v4323 = vsel %vm436, %v392, %v4322
    %v4327 = vadd.f32 %v4208, %v4295
    %v4328 = vadd.f32 %v4210, %v4309
    %v4329 = vadd.f32 %v4279, %v4323
    %v4330 = vrot.slane %v516, 7
    %v4331 = vrot.slane %v519, 6
    %v4332 = vsel %vm418, %v4331, %v4330
    %v4333 = vrot.slane %v522, 5
    %v4334 = vsel %vm421, %v4333, %v4332
    %v4335 = vrot.slane %v525, 4
    %v4336 = vsel %vm424, %v4335, %v4334
    %v4337 = vrot.slane %v528, 3
    %v4338 = vsel %vm427, %v4337, %v4336
    %v4339 = vrot.slane %v531, 2
    %v4340 = vsel %vm430, %v4339, %v4338
    %v4341 = vrot.slane %v534, 1
    %v4342 = vsel %vm433, %v4341, %v4340
    %v4343 = vsel %vm436, %v537, %v4342
    %v4344 = vrot.slane %v517, 7
    %v4345 = vrot.slane %v520, 6
    %v4346 = vsel %vm418, %v4345, %v4344
    %v4347 = vrot.slane %v523, 5
    %v4348 = vsel %vm421, %v4347, %v4346
    %v4349 = vrot.slane %v526, 4
    %v4350 = vsel %vm424, %v4349, %v4348
    %v4351 = vrot.slane %v529, 3
    %v4352 = vsel %vm427, %v4351, %v4350
    %v4353 = vrot.slane %v532, 2
    %v4354 = vsel %vm430, %v4353, %v4352
    %v4355 = vrot.slane %v535, 1
    %v4356 = vsel %vm433, %v4355, %v4354
    %v4357 = vsel %vm436, %v538, %v4356
    %v4358 = vrot.slane %v518, 7
    %v4359 = vrot.slane %v521, 6
    %v4360 = vsel %vm418, %v4359, %v4358
    %v4361 = vrot.slane %v524, 5
    %v4362 = vsel %vm421, %v4361, %v4360
    %v4363 = vrot.slane %v527, 4
    %v4364 = vsel %vm424, %v4363, %v4362
    %v4365 = vrot.slane %v530, 3
    %v4366 = vsel %vm427, %v4365, %v4364
    %v4367 = vrot.slane %v533, 2
    %v4368 = vsel %vm430, %v4367, %v4366
    %v4369 = vrot.slane %v536, 1
    %v4370 = vsel %vm433, %v4369, %v4368
    %v4371 = vsel %vm436, %v539, %v4370
    %v4375 = vadd.f32 %v4327, %v4343
    %v4376 = vadd.f32 %v4328, %v4357
    %v4377 = vadd.f32 %v4329, %v4371
    %v4378 = vrot.slane %v664, 7
    %v4379 = vrot.slane %v667, 6
    %v4380 = vsel %vm418, %v4379, %v4378
    %v4381 = vrot.slane %v670, 5
    %v4382 = vsel %vm421, %v4381, %v4380
    %v4383 = vrot.slane %v673, 4
    %v4384 = vsel %vm424, %v4383, %v4382
    %v4385 = vrot.slane %v676, 3
    %v4386 = vsel %vm427, %v4385, %v4384
    %v4387 = vrot.slane %v679, 2
    %v4388 = vsel %vm430, %v4387, %v4386
    %v4389 = vrot.slane %v682, 1
    %v4390 = vsel %vm433, %v4389, %v4388
    %v4391 = vsel %vm436, %v685, %v4390
    %v4392 = vrot.slane %v665, 7
    %v4393 = vrot.slane %v668, 6
    %v4394 = vsel %vm418, %v4393, %v4392
    %v4395 = vrot.slane %v671, 5
    %v4396 = vsel %vm421, %v4395, %v4394
    %v4397 = vrot.slane %v674, 4
    %v4398 = vsel %vm424, %v4397, %v4396
    %v4399 = vrot.slane %v677, 3
    %v4400 = vsel %vm427, %v4399, %v4398
    %v4401 = vrot.slane %v680, 2
    %v4402 = vsel %vm430, %v4401, %v4400
    %v4403 = vrot.slane %v683, 1
    %v4404 = vsel %vm433, %v4403, %v4402
    %v4405 = vsel %vm436, %v686, %v4404
    %v4406 = vrot.slane %v666, 7
    %v4407 = vrot.slane %v669, 6
    %v4408 = vsel %vm418, %v4407, %v4406
    %v4409 = vrot.slane %v672, 5
    %v4410 = vsel %vm421, %v4409, %v4408
    %v4411 = vrot.slane %v675, 4
    %v4412 = vsel %vm424, %v4411, %v4410
    %v4413 = vrot.slane %v678, 3
    %v4414 = vsel %vm427, %v4413, %v4412
    %v4415 = vrot.slane %v681, 2
    %v4416 = vsel %vm430, %v4415, %v4414
    %v4417 = vrot.slane %v684, 1
    %v4418 = vsel %vm433, %v4417, %v4416
    %v4419 = vsel %vm436, %v687, %v4418
    %v4423 = vadd.f32 %v4375, %v4391
    %v4424 = vadd.f32 %v4376, %v4405
    %v4425 = vadd.f32 %v4377, %v4419
    %v4426 = vrot.slane %v804, 7
    %v4427 = vrot.slane %v807, 6
    %v4428 = vsel %vm418, %v4427, %v4426
    %v4429 = vrot.slane %v810, 5
    %v4430 = vsel %vm421, %v4429, %v4428
    %v4431 = vrot.slane %v813, 4
    %v4432 = vsel %vm424, %v4431, %v4430
    %v4433 = vrot.slane %v816, 3
    %v4434 = vsel %vm427, %v4433, %v4432
    %v4435 = vrot.slane %v819, 2
    %v4436 = vsel %vm430, %v4435, %v4434
    %v4437 = vrot.slane %v822, 1
    %v4438 = vsel %vm433, %v4437, %v4436
    %v4439 = vsel %vm436, %v825, %v4438
    %v4440 = vrot.slane %v805, 7
    %v4441 = vrot.slane %v808, 6
    %v4442 = vsel %vm418, %v4441, %v4440
    %v4443 = vrot.slane %v811, 5
    %v4444 = vsel %vm421, %v4443, %v4442
    %v4445 = vrot.slane %v814, 4
    %v4446 = vsel %vm424, %v4445, %v4444
    %v4447 = vrot.slane %v817, 3
    %v4448 = vsel %vm427, %v4447, %v4446
    %v4449 = vrot.slane %v820, 2
    %v4450 = vsel %vm430, %v4449, %v4448
    %v4451 = vrot.slane %v823, 1
    %v4452 = vsel %vm433, %v4451, %v4450
    %v4453 = vsel %vm436, %v826, %v4452
    %v4454 = vrot.slane %v806, 7
    %v4455 = vrot.slane %v809, 6
    %v4456 = vsel %vm418, %v4455, %v4454
    %v4457 = vrot.slane %v812, 5
    %v4458 = vsel %vm421, %v4457, %v4456
    %v4459 = vrot.slane %v815, 4
    %v4460 = vsel %vm424, %v4459, %v4458
    %v4461 = vrot.slane %v818, 3
    %v4462 = vsel %vm427, %v4461, %v4460
    %v4463 = vrot.slane %v821, 2
    %v4464 = vsel %vm430, %v4463, %v4462
    %v4465 = vrot.slane %v824, 1
    %v4466 = vsel %vm433, %v4465, %v4464
    %v4467 = vsel %vm436, %v827, %v4466
    %v4471 = vadd.f32 %v4423, %v4439
    %v4472 = vadd.f32 %v4424, %v4453
    %v4473 = vadd.f32 %v4425, %v4467
    %v4474 = vrot.slane %v952, 7
    %v4475 = vrot.slane %v955, 6
    %v4476 = vsel %vm418, %v4475, %v4474
    %v4477 = vrot.slane %v958, 5
    %v4478 = vsel %vm421, %v4477, %v4476
    %v4479 = vrot.slane %v961, 4
    %v4480 = vsel %vm424, %v4479, %v4478
    %v4481 = vrot.slane %v964, 3
    %v4482 = vsel %vm427, %v4481, %v4480
    %v4483 = vrot.slane %v967, 2
    %v4484 = vsel %vm430, %v4483, %v4482
    %v4485 = vrot.slane %v970, 1
    %v4486 = vsel %vm433, %v4485, %v4484
    %v4487 = vsel %vm436, %v973, %v4486
    %v4488 = vrot.slane %v953, 7
    %v4489 = vrot.slane %v956, 6
    %v4490 = vsel %vm418, %v4489, %v4488
    %v4491 = vrot.slane %v959, 5
    %v4492 = vsel %vm421, %v4491, %v4490
    %v4493 = vrot.slane %v962, 4
    %v4494 = vsel %vm424, %v4493, %v4492
    %v4495 = vrot.slane %v965, 3
    %v4496 = vsel %vm427, %v4495, %v4494
    %v4497 = vrot.slane %v968, 2
    %v4498 = vsel %vm430, %v4497, %v4496
    %v4499 = vrot.slane %v971, 1
    %v4500 = vsel %vm433, %v4499, %v4498
    %v4501 = vsel %vm436, %v974, %v4500
    %v4502 = vrot.slane %v954, 7
    %v4503 = vrot.slane %v957, 6
    %v4504 = vsel %vm418, %v4503, %v4502
    %v4505 = vrot.slane %v960, 5
    %v4506 = vsel %vm421, %v4505, %v4504
    %v4507 = vrot.slane %v963, 4
    %v4508 = vsel %vm424, %v4507, %v4506
    %v4509 = vrot.slane %v966, 3
    %v4510 = vsel %vm427, %v4509, %v4508
    %v4511 = vrot.slane %v969, 2
    %v4512 = vsel %vm430, %v4511, %v4510
    %v4513 = vrot.slane %v972, 1
    %v4514 = vsel %vm433, %v4513, %v4512
    %v4515 = vsel %vm436, %v975, %v4514
    %v4519 = vadd.f32 %v4471, %v4487
    %v4520 = vadd.f32 %v4472, %v4501
    %v4521 = vadd.f32 %v4473, %v4515
    %v4522 = vrot.slane %v1092, 7
    %v4523 = vrot.slane %v1095, 6
    %v4524 = vsel %vm418, %v4523, %v4522
    %v4525 = vrot.slane %v1098, 5
    %v4526 = vsel %vm421, %v4525, %v4524
    %v4527 = vrot.slane %v1101, 4
    %v4528 = vsel %vm424, %v4527, %v4526
    %v4529 = vrot.slane %v1104, 3
    %v4530 = vsel %vm427, %v4529, %v4528
    %v4531 = vrot.slane %v1107, 2
    %v4532 = vsel %vm430, %v4531, %v4530
    %v4533 = vrot.slane %v1110, 1
    %v4534 = vsel %vm433, %v4533, %v4532
    %v4535 = vsel %vm436, %v1113, %v4534
    %v4536 = vrot.slane %v1093, 7
    %v4537 = vrot.slane %v1096, 6
    %v4538 = vsel %vm418, %v4537, %v4536
    %v4539 = vrot.slane %v1099, 5
    %v4540 = vsel %vm421, %v4539, %v4538
    %v4541 = vrot.slane %v1102, 4
    %v4542 = vsel %vm424, %v4541, %v4540
    %v4543 = vrot.slane %v1105, 3
    %v4544 = vsel %vm427, %v4543, %v4542
    %v4545 = vrot.slane %v1108, 2
    %v4546 = vsel %vm430, %v4545, %v4544
    %v4547 = vrot.slane %v1111, 1
    %v4548 = vsel %vm433, %v4547, %v4546
    %v4549 = vsel %vm436, %v1114, %v4548
    %v4550 = vrot.slane %v1094, 7
    %v4551 = vrot.slane %v1097, 6
    %v4552 = vsel %vm418, %v4551, %v4550
    %v4553 = vrot.slane %v1100, 5
    %v4554 = vsel %vm421, %v4553, %v4552
    %v4555 = vrot.slane %v1103, 4
    %v4556 = vsel %vm424, %v4555, %v4554
    %v4557 = vrot.slane %v1106, 3
    %v4558 = vsel %vm427, %v4557, %v4556
    %v4559 = vrot.slane %v1109, 2
    %v4560 = vsel %vm430, %v4559, %v4558
    %v4561 = vrot.slane %v1112, 1
    %v4562 = vsel %vm433, %v4561, %v4560
    %v4563 = vsel %vm436, %v1115, %v4562
    %v4567 = vadd.f32 %v4519, %v4535
    %v4568 = vadd.f32 %v4520, %v4549
    %v4569 = vadd.f32 %v4521, %v4563
    %v4570 = vxor.u32 %v4567, 2147483648
    %v4571 = vxor.u32 %v4568, 2147483648
    %v4572 = vxor.u32 %v4569, 2147483648
    %v4573 = vmul.f32 %v4570, 1.442695
    %v4574 = vpow.pop %v4573
    %v4575 = vmul.f32 %v4571, 1.442695
    %v4576 = vpow.pop %v4575
    %v4577 = vmul.f32 %v4572, 1.442695
    %v4578 = vpow.pop %v4577
    %v4579 = vadd.f32 %v4574, 1.0
    %v4580 = vadd.f32 %v4576, 1.0
    %v4581 = vadd.f32 %v4578, 1.0
    %v4582 = vrcp.pop %v4579
    %v4583 = vmul.f32 1.0, %v4582
    %v4584 = vrcp.pop %v4580
    %v4585 = vmul.f32 1.0, %v4584
    %v4586 = vrcp.pop %v4581
    %v4587 = vmul.f32 1.0, %v4586
    %v4588 = vtanh.pop %v4569
    %v4589 = vmul.f32 %v4583, %v4117
    %v4590 = vmul.f32 %v4585, %v4118
    %4592 = vrot.lane.b32.xlu0 %v4588, 96
    %v4593 = vpop.permute.xlu0 %4592
    %v4595 = vmul.f32 %v4583, %v4593
    %4597 = vrot.lane.b32.xlu0 %v4595, 96
    %v4598 = vpop.permute.xlu0 %4597
    %v4600 = vadd.f32 %v4589, %v4598
    %v4601 = vadd.f32 %v4590, %v4598
    %v4602 = vtanh.pop %v4600
    %v4603 = vtanh.pop %v4601
    %4606 = vrot.lane.b32.xlu0 %v4602, 96
    %v4607 = vpop.permute.xlu0 %4606
    %4608 = vrot.lane.b32.xlu0 %v4603, 96
    %v4609 = vpop.permute.xlu0 %4608
    %v4610 = vsel %vm172, %v4607, %v4609
    %v4613 = vmul.f32 %v4585, %v4610
    %v4614 = vmul.f32 %v4587, %v4609
    %4617 = vrot.lane.b32.xlu0 %v4613, 64
    %v4618 = vpop.permute.xlu0 %4617
    %4619 = vrot.lane.b32.xlu0 %v4614, 64
    %v4620 = vpop.permute.xlu0 %4619
    %v4621 = vsel %vm1239, %v4618, %v4620
    %v4622 = vsel %vm172, %v4621, 0
    %4624 = vmatprep.subr.mxu0 0.0
    %4625 = vmatpush1.msra.mxu0 0.0
    %4626 = vmatprep.subr.mxu0 0.0
    %4627 = vmatpush1.msra.mxu0 0.0
    %4628 = vmatprep.subr.mxu0 0.0
    %4629 = vmatpush1.msra.mxu0 0.0
    %4630 = vmatprep.subr.mxu0 0.0
    %4631 = vmatpush1.msra.mxu0 0.0
    %4632 = vmatprep.subr.mxu0 %v154
    %4633 = vmatpush1.msra.mxu0 %v153
    %4634 = vmatprep.subr.mxu0 %v151
    %4635 = vmatpush1.msra.mxu0 %v150
    %4636 = vmatprep.subr.mxu0 %v148
    %4637 = vmatpush1.msra.mxu0 %v147
    %4638 = vmatprep.subr.mxu0 %v145
    %4639 = vmatpush1.msra.mxu0 %v144
    %4640 = vmatprep.subr.mxu0 %v142
    %4641 = vmatpush1.msra.mxu0 %v141
    %4642 = vmatprep.subr.mxu0 %v139
    %4643 = vmatpush1.msra.mxu0 %v138
    %4644 = vmatprep.subr.mxu0 %v136
    %4645 = vmatpush1.msra.mxu0 %v135
    %4646 = vmatprep.subr.mxu0 %v133
    %4647 = vmatpush1.msra.mxu0 %v132
    %4648 = vmatprep.subr.mxu0 %v130
    %4649 = vmatpush1.msra.mxu0 %v129
    %4650 = vmatprep.subr.mxu0 %v127
    %4651 = vmatpush1.msra.mxu0 %v126
    %4652 = vmatprep.subr.mxu0 %v124
    %4653 = vmatpush1.msra.mxu0 %v123
    %4654 = vmatprep.subr.mxu0 %v121
    %4655 = vmatpush1.msra.mxu0 %v120
    %4656 = vmatprep.subr.mxu0 0.0
    %4657 = vmatpush2.msra.mxu0 0.0
    %4658 = vmatprep.subr.mxu0 0.0
    %4659 = vmatpush2.msra.mxu0 0.0
    %4660 = vmatprep.subr.mxu0 0.0
    %4661 = vmatpush2.msra.mxu0 0.0
    %4662 = vmatprep.subr.mxu0 0.0
    %4663 = vmatpush2.msra.mxu0 0.0
    %4664 = vmatprep.subr.mxu0 0.0
    %4665 = vmatpush2.msra.mxu0 0.0
    %4666 = vmatprep.subr.mxu0 0.0
    %4667 = vmatpush2.msra.mxu0 0.0
    %4668 = vmatprep.subr.mxu0 0.0
    %4669 = vmatpush2.msra.mxu0 0.0
    %4670 = vmatprep.subr.mxu0 0.0
    %4671 = vmatpush2.msra.mxu0 0.0
    %4672 = vmatprep.subr.mxu0 0.0
    %4673 = vmatpush2.msra.mxu0 0.0
    %4674 = vmatprep.subr.mxu0 0.0
    %4675 = vmatpush2.msra.mxu0 0.0
    %4676 = vmatprep.subr.mxu0 0.0
    %4677 = vmatpush2.msra.mxu0 0.0
    %4678 = vmatprep.subr.mxu0 0.0
    %4679 = vmatpush2.msra.mxu0 0.0
    %4680 = vmatprep.subr.mxu0 0.0
    %4681 = vmatpush2.msra.mxu0 0.0
    %4682 = vmatprep.subr.mxu0 0.0
    %4683 = vmatpush2.msra.mxu0 0.0
    %4684 = vmatprep.subr.mxu0 0.0
    %4685 = vmatpush2.msra.mxu0 0.0
    %4686 = vmatprep.subr.mxu0 0.0
    %4687 = vmatpush2.msra.mxu0 0.0
    %4688 = vmatprep.mubr.f32.mxu0 0.0
    %4689 = vmatmul.mubr.f32.gmra.mxu0 %v4622
    %v4690 = vpop.f32.mrf.mxu0
    %v4691 = vadd.f32 %v160, %v4690
    %v4692 = vpop.f32.mrf.mxu0
    %v4693 = vadd.f32 %v164, %v4692
    %4694 = vdwg.mxu0
    %4695 = vmatprep.subr.mxu0 0.0
    %4696 = vmatpush1.msra.mxu0 0.0
    %4697 = vmatprep.subr.mxu0 0.0
    %4698 = vmatpush1.msra.mxu0 0.0
    %4699 = vmatprep.subr.mxu0 0.0
    %4700 = vmatpush1.msra.mxu0 0.0
    %4701 = vmatprep.subr.mxu0 0.0
    %4702 = vmatpush1.msra.mxu0 0.0
    %4703 = vmatprep.subr.mxu0 0.0
    %4704 = vmatpush1.msra.mxu0 %v155
    %4705 = vmatprep.subr.mxu0 0.0
    %4706 = vmatpush1.msra.mxu0 %v152
    %4707 = vmatprep.subr.mxu0 0.0
    %4708 = vmatpush1.msra.mxu0 %v149
    %4709 = vmatprep.subr.mxu0 0.0
    %4710 = vmatpush1.msra.mxu0 %v146
    %4711 = vmatprep.subr.mxu0 0.0
    %4712 = vmatpush1.msra.mxu0 %v143
    %4713 = vmatprep.subr.mxu0 0.0
    %4714 = vmatpush1.msra.mxu0 %v140
    %4715 = vmatprep.subr.mxu0 0.0
    %4716 = vmatpush1.msra.mxu0 %v137
    %4717 = vmatprep.subr.mxu0 0.0
    %4718 = vmatpush1.msra.mxu0 %v134
    %4719 = vmatprep.subr.mxu0 0.0
    %4720 = vmatpush1.msra.mxu0 %v131
    %4721 = vmatprep.subr.mxu0 0.0
    %4722 = vmatpush1.msra.mxu0 %v128
    %4723 = vmatprep.subr.mxu0 0.0
    %4724 = vmatpush1.msra.mxu0 %v125
    %4725 = vmatprep.subr.mxu0 0.0
    %4726 = vmatpush1.msra.mxu0 %v122
    %4727 = vmatprep.subr.mxu0 0.0
    %4728 = vmatpush2.msra.mxu0 0.0
    %4729 = vmatprep.subr.mxu0 0.0
    %4730 = vmatpush2.msra.mxu0 0.0
    %4731 = vmatprep.subr.mxu0 0.0
    %4732 = vmatpush2.msra.mxu0 0.0
    %4733 = vmatprep.subr.mxu0 0.0
    %4734 = vmatpush2.msra.mxu0 0.0
    %4735 = vmatprep.subr.mxu0 0.0
    %4736 = vmatpush2.msra.mxu0 0.0
    %4737 = vmatprep.subr.mxu0 0.0
    %4738 = vmatpush2.msra.mxu0 0.0
    %4739 = vmatprep.subr.mxu0 0.0
    %4740 = vmatpush2.msra.mxu0 0.0
    %4741 = vmatprep.subr.mxu0 0.0
    %4742 = vmatpush2.msra.mxu0 0.0
    %4743 = vmatprep.subr.mxu0 0.0
    %4744 = vmatpush2.msra.mxu0 0.0
    %4745 = vmatprep.subr.mxu0 0.0
    %4746 = vmatpush2.msra.mxu0 0.0
    %4747 = vmatprep.subr.mxu0 0.0
    %4748 = vmatpush2.msra.mxu0 0.0
    %4749 = vmatprep.subr.mxu0 0.0
    %4750 = vmatpush2.msra.mxu0 0.0
    %4751 = vmatprep.subr.mxu0 0.0
    %4752 = vmatpush2.msra.mxu0 0.0
    %4753 = vmatprep.subr.mxu0 0.0
    %4754 = vmatpush2.msra.mxu0 0.0
    %4755 = vmatprep.subr.mxu0 0.0
    %4756 = vmatpush2.msra.mxu0 0.0
    %4757 = vmatprep.subr.mxu0 0.0
    %4758 = vmatpush2.msra.mxu0 0.0
    %4759 = vmatprep.mubr.f32.mxu0 0.0
    %4760 = vmatmul.mubr.f32.gmra.mxu0 %v4622
    %v4761 = vpop.f32.mrf.mxu0
    %v4762 = vadd.f32 %v168, %v4761
    %v4763 = vpop.f32.mrf.mxu0
    %4764 = vdwg.mxu0
    %4766 = vset.pattern.permute.xlu0 0
    %4767 = vperm.xlu0 %4766, %v85
    %v4768 = vpop.permute.xlu0 %4767
    %4771 = vset.pattern.permute.xlu0 0
    %4772 = vperm.xlu0 %4771, %v87
    %v4773 = vpop.permute.xlu0 %4772
    %4776 = vset.pattern.permute.xlu0 0
    %4777 = vperm.xlu0 %4776, %v89
    %v4778 = vpop.permute.xlu0 %4777
    %4781 = vset.pattern.permute.xlu0 0
    %4782 = vperm.xlu0 %4781, %v91
    %v4783 = vpop.permute.xlu0 %4782
    %4786 = vset.pattern.permute.xlu0 0
    %4787 = vperm.xlu0 %4786, %v93
    %v4788 = vpop.permute.xlu0 %4787
    %4791 = vset.pattern.permute.xlu0 0
    %4792 = vperm.xlu0 %4791, %v95
    %v4793 = vpop.permute.xlu0 %4792
    %4796 = vset.pattern.permute.xlu0 0
    %4797 = vperm.xlu0 %4796, %v97
    %v4798 = vpop.permute.xlu0 %4797
    %4801 = vset.pattern.permute.xlu0 0
    %4802 = vperm.xlu0 %4801, %v99
    %v4803 = vpop.permute.xlu0 %4802
    %v4805 = vmul.f32 %v4768, %v655
    %v4806 = vmul.f32 %v4768, %v659
    %v4807 = vmul.f32 %v4768, %v663
    %v4808 = vmul.f32 %v4773, %v655
    %v4809 = vmul.f32 %v4773, %v659
    %v4810 = vmul.f32 %v4773, %v663
    %v4811 = vmul.f32 %v4778, %v655
    %v4812 = vmul.f32 %v4778, %v659
    %v4813 = vmul.f32 %v4778, %v663
    %v4814 = vmul.f32 %v4783, %v655
    %v4815 = vmul.f32 %v4783, %v659
    %v4816 = vmul.f32 %v4783, %v663
    %v4817 = vmul.f32 %v4788, %v655
    %v4818 = vmul.f32 %v4788, %v659
    %v4819 = vmul.f32 %v4788, %v663
    %v4820 = vmul.f32 %v4793, %v655
    %v4821 = vmul.f32 %v4793, %v659
    %v4822 = vmul.f32 %v4793, %v663
    %v4823 = vmul.f32 %v4798, %v655
    %v4824 = vmul.f32 %v4798, %v659
    %v4825 = vmul.f32 %v4798, %v663
    %v4826 = vmul.f32 %v4803, %v655
    %v4827 = vmul.f32 %v4803, %v659
    %v4828 = vmul.f32 %v4803, %v663
    %v4853 = vrot.slane %v4808, 7
    %v4854 = vsel %vm418, %v4853, %v4805
    %v4855 = vrot.slane %v4811, 6
    %v4856 = vsel %vm421, %v4855, %v4854
    %v4857 = vrot.slane %v4814, 5
    %v4858 = vsel %vm424, %v4857, %v4856
    %v4859 = vrot.slane %v4817, 4
    %v4860 = vsel %vm427, %v4859, %v4858
    %v4861 = vrot.slane %v4820, 3
    %v4862 = vsel %vm430, %v4861, %v4860
    %v4863 = vrot.slane %v4823, 2
    %v4864 = vsel %vm433, %v4863, %v4862
    %v4865 = vrot.slane %v4826, 1
    %v4866 = vsel %vm436, %v4865, %v4864
    %v4867 = vrot.slane %v4809, 7
    %v4868 = vsel %vm418, %v4867, %v4806
    %v4869 = vrot.slane %v4812, 6
    %v4870 = vsel %vm421, %v4869, %v4868
    %v4871 = vrot.slane %v4815, 5
    %v4872 = vsel %vm424, %v4871, %v4870
    %v4873 = vrot.slane %v4818, 4
    %v4874 = vsel %vm427, %v4873, %v4872
    %v4875 = vrot.slane %v4821, 3
    %v4876 = vsel %vm430, %v4875, %v4874
    %v4877 = vrot.slane %v4824, 2
    %v4878 = vsel %vm433, %v4877, %v4876
    %v4879 = vrot.slane %v4827, 1
    %v4880 = vsel %vm436, %v4879, %v4878
    %v4881 = vrot.slane %v4810, 7
    %v4882 = vsel %vm418, %v4881, %v4807
    %v4883 = vrot.slane %v4813, 6
    %v4884 = vsel %vm421, %v4883, %v4882
    %v4885 = vrot.slane %v4816, 5
    %v4886 = vsel %vm424, %v4885, %v4884
    %v4887 = vrot.slane %v4819, 4
    %v4888 = vsel %vm427, %v4887, %v4886
    %v4889 = vrot.slane %v4822, 3
    %v4890 = vsel %vm430, %v4889, %v4888
    %v4891 = vrot.slane %v4825, 2
    %v4892 = vsel %vm433, %v4891, %v4890
    %v4893 = vrot.slane %v4828, 1
    %v4894 = vsel %vm436, %v4893, %v4892
    %v4898 = vadd.f32 %v4691, %v4866
    %v4899 = vadd.f32 %v4693, %v4880
    %v4900 = vadd.f32 %v4762, %v4894
    %4901 = vset.pattern.permute.xlu0 1
    %4902 = vperm.xlu0 %4901, %v85
    %v4903 = vpop.permute.xlu0 %4902
    %4905 = vset.pattern.permute.xlu0 1
    %4906 = vperm.xlu0 %4905, %v87
    %v4907 = vpop.permute.xlu0 %4906
    %4909 = vset.pattern.permute.xlu0 1
    %4910 = vperm.xlu0 %4909, %v89
    %v4911 = vpop.permute.xlu0 %4910
    %4913 = vset.pattern.permute.xlu0 1
    %4914 = vperm.xlu0 %4913, %v91
    %v4915 = vpop.permute.xlu0 %4914
    %4917 = vset.pattern.permute.xlu0 1
    %4918 = vperm.xlu0 %4917, %v93
    %v4919 = vpop.permute.xlu0 %4918
    %4921 = vset.pattern.permute.xlu0 1
    %4922 = vperm.xlu0 %4921, %v95
    %v4923 = vpop.permute.xlu0 %4922
    %4925 = vset.pattern.permute.xlu0 1
    %4926 = vperm.xlu0 %4925, %v97
    %v4927 = vpop.permute.xlu0 %4926
    %4929 = vset.pattern.permute.xlu0 1
    %4930 = vperm.xlu0 %4929, %v99
    %v4931 = vpop.permute.xlu0 %4930
    %v4933 = vmul.f32 %v4903, %v795
    %v4934 = vmul.f32 %v4903, %v799
    %v4935 = vmul.f32 %v4903, %v803
    %v4936 = vmul.f32 %v4907, %v795
    %v4937 = vmul.f32 %v4907, %v799
    %v4938 = vmul.f32 %v4907, %v803
    %v4939 = vmul.f32 %v4911, %v795
    %v4940 = vmul.f32 %v4911, %v799
    %v4941 = vmul.f32 %v4911, %v803
    %v4942 = vmul.f32 %v4915, %v795
    %v4943 = vmul.f32 %v4915, %v799
    %v4944 = vmul.f32 %v4915, %v803
    %v4945 = vmul.f32 %v4919, %v795
    %v4946 = vmul.f32 %v4919, %v799
    %v4947 = vmul.f32 %v4919, %v803
    %v4948 = vmul.f32 %v4923, %v795
    %v4949 = vmul.f32 %v4923, %v799
    %v4950 = vmul.f32 %v4923, %v803
    %v4951 = vmul.f32 %v4927, %v795
    %v4952 = vmul.f32 %v4927, %v799
    %v4953 = vmul.f32 %v4927, %v803
    %v4954 = vmul.f32 %v4931, %v795
    %v4955 = vmul.f32 %v4931, %v799
    %v4956 = vmul.f32 %v4931, %v803
    %v4981 = vrot.slane %v4936, 7
    %v4982 = vsel %vm418, %v4981, %v4933
    %v4983 = vrot.slane %v4939, 6
    %v4984 = vsel %vm421, %v4983, %v4982
    %v4985 = vrot.slane %v4942, 5
    %v4986 = vsel %vm424, %v4985, %v4984
    %v4987 = vrot.slane %v4945, 4
    %v4988 = vsel %vm427, %v4987, %v4986
    %v4989 = vrot.slane %v4948, 3
    %v4990 = vsel %vm430, %v4989, %v4988
    %v4991 = vrot.slane %v4951, 2
    %v4992 = vsel %vm433, %v4991, %v4990
    %v4993 = vrot.slane %v4954, 1
    %v4994 = vsel %vm436, %v4993, %v4992
    %v4995 = vrot.slane %v4937, 7
    %v4996 = vsel %vm418, %v4995, %v4934
    %v4997 = vrot.slane %v4940, 6
    %v4998 = vsel %vm421, %v4997, %v4996
    %v4999 = vrot.slane %v4943, 5
    %v5000 = vsel %vm424, %v4999, %v4998
    %v5001 = vrot.slane %v4946, 4
    %v5002 = vsel %vm427, %v5001, %v5000
    %v5003 = vrot.slane %v4949, 3
    %v5004 = vsel %vm430, %v5003, %v5002
    %v5005 = vrot.slane %v4952, 2
    %v5006 = vsel %vm433, %v5005, %v5004
    %v5007 = vrot.slane %v4955, 1
    %v5008 = vsel %vm436, %v5007, %v5006
    %v5009 = vrot.slane %v4938, 7
    %v5010 = vsel %vm418, %v5009, %v4935
    %v5011 = vrot.slane %v4941, 6
    %v5012 = vsel %vm421, %v5011, %v5010
    %v5013 = vrot.slane %v4944, 5
    %v5014 = vsel %vm424, %v5013, %v5012
    %v5015 = vrot.slane %v4947, 4
    %v5016 = vsel %vm427, %v5015, %v5014
    %v5017 = vrot.slane %v4950, 3
    %v5018 = vsel %vm430, %v5017, %v5016
    %v5019 = vrot.slane %v4953, 2
    %v5020 = vsel %vm433, %v5019, %v5018
    %v5021 = vrot.slane %v4956, 1
    %v5022 = vsel %vm436, %v5021, %v5020
    %v5026 = vadd.f32 %v4898, %v4994
    %v5027 = vadd.f32 %v4899, %v5008
    %v5028 = vadd.f32 %v4900, %v5022
    %5030 = vset.pattern.permute.xlu0 0
    %5031 = vperm.xlu0 %5030, %v101
    %v5032 = vpop.permute.xlu0 %5031
    %5035 = vset.pattern.permute.xlu0 0
    %5036 = vperm.xlu0 %5035, %v103
    %v5037 = vpop.permute.xlu0 %5036
    %5040 = vset.pattern.permute.xlu0 0
    %5041 = vperm.xlu0 %5040, %v105
    %v5042 = vpop.permute.xlu0 %5041
    %5045 = vset.pattern.permute.xlu0 0
    %5046 = vperm.xlu0 %5045, %v107
    %v5047 = vpop.permute.xlu0 %5046
    %5050 = vset.pattern.permute.xlu0 0
    %5051 = vperm.xlu0 %5050, %v109
    %v5052 = vpop.permute.xlu0 %5051
    %5055 = vset.pattern.permute.xlu0 0
    %5056 = vperm.xlu0 %5055, %v111
    %v5057 = vpop.permute.xlu0 %5056
    %5060 = vset.pattern.permute.xlu0 0
    %5061 = vperm.xlu0 %5060, %v113
    %v5062 = vpop.permute.xlu0 %5061
    %5065 = vset.pattern.permute.xlu0 0
    %5066 = vperm.xlu0 %5065, %v115
    %v5067 = vpop.permute.xlu0 %5066
    %v5069 = vmul.f32 %v5032, %v943
    %v5070 = vmul.f32 %v5032, %v947
    %v5071 = vmul.f32 %v5032, %v951
    %v5072 = vmul.f32 %v5037, %v943
    %v5073 = vmul.f32 %v5037, %v947
    %v5074 = vmul.f32 %v5037, %v951
    %v5075 = vmul.f32 %v5042, %v943
    %v5076 = vmul.f32 %v5042, %v947
    %v5077 = vmul.f32 %v5042, %v951
    %v5078 = vmul.f32 %v5047, %v943
    %v5079 = vmul.f32 %v5047, %v947
    %v5080 = vmul.f32 %v5047, %v951
    %v5081 = vmul.f32 %v5052, %v943
    %v5082 = vmul.f32 %v5052, %v947
    %v5083 = vmul.f32 %v5052, %v951
    %v5084 = vmul.f32 %v5057, %v943
    %v5085 = vmul.f32 %v5057, %v947
    %v5086 = vmul.f32 %v5057, %v951
    %v5087 = vmul.f32 %v5062, %v943
    %v5088 = vmul.f32 %v5062, %v947
    %v5089 = vmul.f32 %v5062, %v951
    %v5090 = vmul.f32 %v5067, %v943
    %v5091 = vmul.f32 %v5067, %v947
    %v5092 = vmul.f32 %v5067, %v951
    %v5117 = vrot.slane %v5072, 7
    %v5118 = vsel %vm418, %v5117, %v5069
    %v5119 = vrot.slane %v5075, 6
    %v5120 = vsel %vm421, %v5119, %v5118
    %v5121 = vrot.slane %v5078, 5
    %v5122 = vsel %vm424, %v5121, %v5120
    %v5123 = vrot.slane %v5081, 4
    %v5124 = vsel %vm427, %v5123, %v5122
    %v5125 = vrot.slane %v5084, 3
    %v5126 = vsel %vm430, %v5125, %v5124
    %v5127 = vrot.slane %v5087, 2
    %v5128 = vsel %vm433, %v5127, %v5126
    %v5129 = vrot.slane %v5090, 1
    %v5130 = vsel %vm436, %v5129, %v5128
    %v5131 = vrot.slane %v5073, 7
    %v5132 = vsel %vm418, %v5131, %v5070
    %v5133 = vrot.slane %v5076, 6
    %v5134 = vsel %vm421, %v5133, %v5132
    %v5135 = vrot.slane %v5079, 5
    %v5136 = vsel %vm424, %v5135, %v5134
    %v5137 = vrot.slane %v5082, 4
    %v5138 = vsel %vm427, %v5137, %v5136
    %v5139 = vrot.slane %v5085, 3
    %v5140 = vsel %vm430, %v5139, %v5138
    %v5141 = vrot.slane %v5088, 2
    %v5142 = vsel %vm433, %v5141, %v5140
    %v5143 = vrot.slane %v5091, 1
    %v5144 = vsel %vm436, %v5143, %v5142
    %v5145 = vrot.slane %v5074, 7
    %v5146 = vsel %vm418, %v5145, %v5071
    %v5147 = vrot.slane %v5077, 6
    %v5148 = vsel %vm421, %v5147, %v5146
    %v5149 = vrot.slane %v5080, 5
    %v5150 = vsel %vm424, %v5149, %v5148
    %v5151 = vrot.slane %v5083, 4
    %v5152 = vsel %vm427, %v5151, %v5150
    %v5153 = vrot.slane %v5086, 3
    %v5154 = vsel %vm430, %v5153, %v5152
    %v5155 = vrot.slane %v5089, 2
    %v5156 = vsel %vm433, %v5155, %v5154
    %v5157 = vrot.slane %v5092, 1
    %v5158 = vsel %vm436, %v5157, %v5156
    %v5162 = vadd.f32 %v5026, %v5130
    %v5163 = vadd.f32 %v5027, %v5144
    %v5164 = vadd.f32 %v5028, %v5158
    %5165 = vset.pattern.permute.xlu0 1
    %5166 = vperm.xlu0 %5165, %v101
    %v5167 = vpop.permute.xlu0 %5166
    %5169 = vset.pattern.permute.xlu0 1
    %5170 = vperm.xlu0 %5169, %v103
    %v5171 = vpop.permute.xlu0 %5170
    %5173 = vset.pattern.permute.xlu0 1
    %5174 = vperm.xlu0 %5173, %v105
    %v5175 = vpop.permute.xlu0 %5174
    %5177 = vset.pattern.permute.xlu0 1
    %5178 = vperm.xlu0 %5177, %v107
    %v5179 = vpop.permute.xlu0 %5178
    %5181 = vset.pattern.permute.xlu0 1
    %5182 = vperm.xlu0 %5181, %v109
    %v5183 = vpop.permute.xlu0 %5182
    %5185 = vset.pattern.permute.xlu0 1
    %5186 = vperm.xlu0 %5185, %v111
    %v5187 = vpop.permute.xlu0 %5186
    %5189 = vset.pattern.permute.xlu0 1
    %5190 = vperm.xlu0 %5189, %v113
    %v5191 = vpop.permute.xlu0 %5190
    %5193 = vset.pattern.permute.xlu0 1
    %5194 = vperm.xlu0 %5193, %v115
    %v5195 = vpop.permute.xlu0 %5194
    %v5197 = vmul.f32 %v5167, %v1083
    %v5198 = vmul.f32 %v5167, %v1087
    %v5199 = vmul.f32 %v5167, %v1091
    %v5200 = vmul.f32 %v5171, %v1083
    %v5201 = vmul.f32 %v5171, %v1087
    %v5202 = vmul.f32 %v5171, %v1091
    %v5203 = vmul.f32 %v5175, %v1083
    %v5204 = vmul.f32 %v5175, %v1087
    %v5205 = vmul.f32 %v5175, %v1091
    %v5206 = vmul.f32 %v5179, %v1083
    %v5207 = vmul.f32 %v5179, %v1087
    %v5208 = vmul.f32 %v5179, %v1091
    %v5209 = vmul.f32 %v5183, %v1083
    %v5210 = vmul.f32 %v5183, %v1087
    %v5211 = vmul.f32 %v5183, %v1091
    %v5212 = vmul.f32 %v5187, %v1083
    %v5213 = vmul.f32 %v5187, %v1087
    %v5214 = vmul.f32 %v5187, %v1091
    %v5215 = vmul.f32 %v5191, %v1083
    %v5216 = vmul.f32 %v5191, %v1087
    %v5217 = vmul.f32 %v5191, %v1091
    %v5218 = vmul.f32 %v5195, %v1083
    %v5219 = vmul.f32 %v5195, %v1087
    %v5220 = vmul.f32 %v5195, %v1091
    %v5245 = vrot.slane %v5200, 7
    %v5246 = vsel %vm418, %v5245, %v5197
    %v5247 = vrot.slane %v5203, 6
    %v5248 = vsel %vm421, %v5247, %v5246
    %v5249 = vrot.slane %v5206, 5
    %v5250 = vsel %vm424, %v5249, %v5248
    %v5251 = vrot.slane %v5209, 4
    %v5252 = vsel %vm427, %v5251, %v5250
    %v5253 = vrot.slane %v5212, 3
    %v5254 = vsel %vm430, %v5253, %v5252
    %v5255 = vrot.slane %v5215, 2
    %v5256 = vsel %vm433, %v5255, %v5254
    %v5257 = vrot.slane %v5218, 1
    %v5258 = vsel %vm436, %v5257, %v5256
    %v5259 = vrot.slane %v5201, 7
    %v5260 = vsel %vm418, %v5259, %v5198
    %v5261 = vrot.slane %v5204, 6
    %v5262 = vsel %vm421, %v5261, %v5260
    %v5263 = vrot.slane %v5207, 5
    %v5264 = vsel %vm424, %v5263, %v5262
    %v5265 = vrot.slane %v5210, 4
    %v5266 = vsel %vm427, %v5265, %v5264
    %v5267 = vrot.slane %v5213, 3
    %v5268 = vsel %vm430, %v5267, %v5266
    %v5269 = vrot.slane %v5216, 2
    %v5270 = vsel %vm433, %v5269, %v5268
    %v5271 = vrot.slane %v5219, 1
    %v5272 = vsel %vm436, %v5271, %v5270
    %v5273 = vrot.slane %v5202, 7
    %v5274 = vsel %vm418, %v5273, %v5199
    %v5275 = vrot.slane %v5205, 6
    %v5276 = vsel %vm421, %v5275, %v5274
    %v5277 = vrot.slane %v5208, 5
    %v5278 = vsel %vm424, %v5277, %v5276
    %v5279 = vrot.slane %v5211, 4
    %v5280 = vsel %vm427, %v5279, %v5278
    %v5281 = vrot.slane %v5214, 3
    %v5282 = vsel %vm430, %v5281, %v5280
    %v5283 = vrot.slane %v5217, 2
    %v5284 = vsel %vm433, %v5283, %v5282
    %v5285 = vrot.slane %v5220, 1
    %v5286 = vsel %vm436, %v5285, %v5284
    %v5290 = vadd.f32 %v5162, %v5258
    %v5291 = vadd.f32 %v5163, %v5272
    %v5292 = vadd.f32 %v5164, %v5286
    %v5293 = vxor.u32 %v5290, 2147483648
    %v5294 = vxor.u32 %v5291, 2147483648
    %v5295 = vxor.u32 %v5292, 2147483648
    %v5296 = vmul.f32 %v5293, 1.442695
    %v5297 = vpow.pop %v5296
    %v5298 = vmul.f32 %v5294, 1.442695
    %v5299 = vpow.pop %v5298
    %v5300 = vmul.f32 %v5295, 1.442695
    %v5301 = vpow.pop %v5300
    %v5302 = vadd.f32 %v5297, 1.0
    %v5303 = vadd.f32 %v5299, 1.0
    %v5304 = vadd.f32 %v5301, 1.0
    %v5305 = vrcp.pop %v5302
    %v5306 = vmul.f32 1.0, %v5305
    %v5307 = vrcp.pop %v5303
    %v5308 = vmul.f32 1.0, %v5307
    %v5309 = vrcp.pop %v5304
    %v5310 = vmul.f32 1.0, %v5309
    %v5311 = vtanh.pop %v5292
    %v5312 = vmul.f32 %v5306, %v4600
    %v5313 = vmul.f32 %v5308, %v4601
    %5315 = vrot.lane.b32.xlu0 %v5311, 96
    %v5316 = vpop.permute.xlu0 %5315
    %v5318 = vmul.f32 %v5306, %v5316
    %5320 = vrot.lane.b32.xlu0 %v5318, 96
    %v5321 = vpop.permute.xlu0 %5320
    %v5323 = vadd.f32 %v5312, %v5321
    %v5324 = vadd.f32 %v5313, %v5321
    %v5325 = vtanh.pop %v5323
    %v5326 = vtanh.pop %v5324
    %5329 = vrot.lane.b32.xlu0 %v5325, 96
    %v5330 = vpop.permute.xlu0 %5329
    %5331 = vrot.lane.b32.xlu0 %v5326, 96
    %v5332 = vpop.permute.xlu0 %5331
    %v5333 = vsel %vm172, %v5330, %v5332
    %v5336 = vmul.f32 %v5308, %v5333
    %v5337 = vmul.f32 %v5310, %v5332
    %5340 = vrot.lane.b32.xlu0 %v5336, 64
    %v5341 = vpop.permute.xlu0 %5340
    %5342 = vrot.lane.b32.xlu0 %v5337, 64
    %v5343 = vpop.permute.xlu0 %5342
    %v5344 = vsel %vm1239, %v5341, %v5343
    %v5345 = vsel %vm172, %v5344, 0
    %5347 = vmatprep.subr.mxu0 0.0
    %5348 = vmatpush1.msra.mxu0 0.0
    %5349 = vmatprep.subr.mxu0 0.0
    %5350 = vmatpush1.msra.mxu0 0.0
    %5351 = vmatprep.subr.mxu0 0.0
    %5352 = vmatpush1.msra.mxu0 0.0
    %5353 = vmatprep.subr.mxu0 0.0
    %5354 = vmatpush1.msra.mxu0 0.0
    %5355 = vmatprep.subr.mxu0 %v154
    %5356 = vmatpush1.msra.mxu0 %v153
    %5357 = vmatprep.subr.mxu0 %v151
    %5358 = vmatpush1.msra.mxu0 %v150
    %5359 = vmatprep.subr.mxu0 %v148
    %5360 = vmatpush1.msra.mxu0 %v147
    %5361 = vmatprep.subr.mxu0 %v145
    %5362 = vmatpush1.msra.mxu0 %v144
    %5363 = vmatprep.subr.mxu0 %v142
    %5364 = vmatpush1.msra.mxu0 %v141
    %5365 = vmatprep.subr.mxu0 %v139
    %5366 = vmatpush1.msra.mxu0 %v138
    %5367 = vmatprep.subr.mxu0 %v136
    %5368 = vmatpush1.msra.mxu0 %v135
    %5369 = vmatprep.subr.mxu0 %v133
    %5370 = vmatpush1.msra.mxu0 %v132
    %5371 = vmatprep.subr.mxu0 %v130
    %5372 = vmatpush1.msra.mxu0 %v129
    %5373 = vmatprep.subr.mxu0 %v127
    %5374 = vmatpush1.msra.mxu0 %v126
    %5375 = vmatprep.subr.mxu0 %v124
    %5376 = vmatpush1.msra.mxu0 %v123
    %5377 = vmatprep.subr.mxu0 %v121
    %5378 = vmatpush1.msra.mxu0 %v120
    %5379 = vmatprep.subr.mxu0 0.0
    %5380 = vmatpush2.msra.mxu0 0.0
    %5381 = vmatprep.subr.mxu0 0.0
    %5382 = vmatpush2.msra.mxu0 0.0
    %5383 = vmatprep.subr.mxu0 0.0
    %5384 = vmatpush2.msra.mxu0 0.0
    %5385 = vmatprep.subr.mxu0 0.0
    %5386 = vmatpush2.msra.mxu0 0.0
    %5387 = vmatprep.subr.mxu0 0.0
    %5388 = vmatpush2.msra.mxu0 0.0
    %5389 = vmatprep.subr.mxu0 0.0
    %5390 = vmatpush2.msra.mxu0 0.0
    %5391 = vmatprep.subr.mxu0 0.0
    %5392 = vmatpush2.msra.mxu0 0.0
    %5393 = vmatprep.subr.mxu0 0.0
    %5394 = vmatpush2.msra.mxu0 0.0
    %5395 = vmatprep.subr.mxu0 0.0
    %5396 = vmatpush2.msra.mxu0 0.0
    %5397 = vmatprep.subr.mxu0 0.0
    %5398 = vmatpush2.msra.mxu0 0.0
    %5399 = vmatprep.subr.mxu0 0.0
    %5400 = vmatpush2.msra.mxu0 0.0
    %5401 = vmatprep.subr.mxu0 0.0
    %5402 = vmatpush2.msra.mxu0 0.0
    %5403 = vmatprep.subr.mxu0 0.0
    %5404 = vmatpush2.msra.mxu0 0.0
    %5405 = vmatprep.subr.mxu0 0.0
    %5406 = vmatpush2.msra.mxu0 0.0
    %5407 = vmatprep.subr.mxu0 0.0
    %5408 = vmatpush2.msra.mxu0 0.0
    %5409 = vmatprep.subr.mxu0 0.0
    %5410 = vmatpush2.msra.mxu0 0.0
    %5411 = vmatprep.mubr.f32.mxu0 0.0
    %5412 = vmatmul.mubr.f32.gmra.mxu0 %v5345
    %v5413 = vpop.f32.mrf.mxu0
    %v5414 = vadd.f32 %v160, %v5413
    %v5415 = vpop.f32.mrf.mxu0
    %v5416 = vadd.f32 %v164, %v5415
    %5417 = vdwg.mxu0
    %5418 = vmatprep.subr.mxu0 0.0
    %5419 = vmatpush1.msra.mxu0 0.0
    %5420 = vmatprep.subr.mxu0 0.0
    %5421 = vmatpush1.msra.mxu0 0.0
    %5422 = vmatprep.subr.mxu0 0.0
    %5423 = vmatpush1.msra.mxu0 0.0
    %5424 = vmatprep.subr.mxu0 0.0
    %5425 = vmatpush1.msra.mxu0 0.0
    %5426 = vmatprep.subr.mxu0 0.0
    %5427 = vmatpush1.msra.mxu0 %v155
    %5428 = vmatprep.subr.mxu0 0.0
    %5429 = vmatpush1.msra.mxu0 %v152
    %5430 = vmatprep.subr.mxu0 0.0
    %5431 = vmatpush1.msra.mxu0 %v149
    %5432 = vmatprep.subr.mxu0 0.0
    %5433 = vmatpush1.msra.mxu0 %v146
    %5434 = vmatprep.subr.mxu0 0.0
    %5435 = vmatpush1.msra.mxu0 %v143
    %5436 = vmatprep.subr.mxu0 0.0
    %5437 = vmatpush1.msra.mxu0 %v140
    %5438 = vmatprep.subr.mxu0 0.0
    %5439 = vmatpush1.msra.mxu0 %v137
    %5440 = vmatprep.subr.mxu0 0.0
    %5441 = vmatpush1.msra.mxu0 %v134
    %5442 = vmatprep.subr.mxu0 0.0
    %5443 = vmatpush1.msra.mxu0 %v131
    %5444 = vmatprep.subr.mxu0 0.0
    %5445 = vmatpush1.msra.mxu0 %v128
    %5446 = vmatprep.subr.mxu0 0.0
    %5447 = vmatpush1.msra.mxu0 %v125
    %5448 = vmatprep.subr.mxu0 0.0
    %5449 = vmatpush1.msra.mxu0 %v122
    %5450 = vmatprep.subr.mxu0 0.0
    %5451 = vmatpush2.msra.mxu0 0.0
    %5452 = vmatprep.subr.mxu0 0.0
    %5453 = vmatpush2.msra.mxu0 0.0
    %5454 = vmatprep.subr.mxu0 0.0
    %5455 = vmatpush2.msra.mxu0 0.0
    %5456 = vmatprep.subr.mxu0 0.0
    %5457 = vmatpush2.msra.mxu0 0.0
    %5458 = vmatprep.subr.mxu0 0.0
    %5459 = vmatpush2.msra.mxu0 0.0
    %5460 = vmatprep.subr.mxu0 0.0
    %5461 = vmatpush2.msra.mxu0 0.0
    %5462 = vmatprep.subr.mxu0 0.0
    %5463 = vmatpush2.msra.mxu0 0.0
    %5464 = vmatprep.subr.mxu0 0.0
    %5465 = vmatpush2.msra.mxu0 0.0
    %5466 = vmatprep.subr.mxu0 0.0
    %5467 = vmatpush2.msra.mxu0 0.0
    %5468 = vmatprep.subr.mxu0 0.0
    %5469 = vmatpush2.msra.mxu0 0.0
    %5470 = vmatprep.subr.mxu0 0.0
    %5471 = vmatpush2.msra.mxu0 0.0
    %5472 = vmatprep.subr.mxu0 0.0
    %5473 = vmatpush2.msra.mxu0 0.0
    %5474 = vmatprep.subr.mxu0 0.0
    %5475 = vmatpush2.msra.mxu0 0.0
    %5476 = vmatprep.subr.mxu0 0.0
    %5477 = vmatpush2.msra.mxu0 0.0
    %5478 = vmatprep.subr.mxu0 0.0
    %5479 = vmatpush2.msra.mxu0 0.0
    %5480 = vmatprep.subr.mxu0 0.0
    %5481 = vmatpush2.msra.mxu0 0.0
    %5482 = vmatprep.mubr.f32.mxu0 0.0
    %5483 = vmatmul.mubr.f32.gmra.mxu0 %v5345
    %v5484 = vpop.f32.mrf.mxu0
    %v5485 = vadd.f32 %v168, %v5484
    %v5486 = vpop.f32.mrf.mxu0
    %5487 = vdwg.mxu0
    %v5488 = vrot.slane %v4805, 1
    %v5489 = vsel %vm418, %v4808, %v5488
    %v5490 = vrot.slane %v4811, 7
    %v5491 = vsel %vm421, %v5490, %v5489
    %v5492 = vrot.slane %v4814, 6
    %v5493 = vsel %vm424, %v5492, %v5491
    %v5494 = vrot.slane %v4817, 5
    %v5495 = vsel %vm427, %v5494, %v5493
    %v5496 = vrot.slane %v4820, 4
    %v5497 = vsel %vm430, %v5496, %v5495
    %v5498 = vrot.slane %v4823, 3
    %v5499 = vsel %vm433, %v5498, %v5497
    %v5500 = vrot.slane %v4826, 2
    %v5501 = vsel %vm436, %v5500, %v5499
    %v5502 = vrot.slane %v4806, 1
    %v5503 = vsel %vm418, %v4809, %v5502
    %v5504 = vrot.slane %v4812, 7
    %v5505 = vsel %vm421, %v5504, %v5503
    %v5506 = vrot.slane %v4815, 6
    %v5507 = vsel %vm424, %v5506, %v5505
    %v5508 = vrot.slane %v4818, 5
    %v5509 = vsel %vm427, %v5508, %v5507
    %v5510 = vrot.slane %v4821, 4
    %v5511 = vsel %vm430, %v5510, %v5509
    %v5512 = vrot.slane %v4824, 3
    %v5513 = vsel %vm433, %v5512, %v5511
    %v5514 = vrot.slane %v4827, 2
    %v5515 = vsel %vm436, %v5514, %v5513
    %v5516 = vrot.slane %v4807, 1
    %v5517 = vsel %vm418, %v4810, %v5516
    %v5518 = vrot.slane %v4813, 7
    %v5519 = vsel %vm421, %v5518, %v5517
    %v5520 = vrot.slane %v4816, 6
    %v5521 = vsel %vm424, %v5520, %v5519
    %v5522 = vrot.slane %v4819, 5
    %v5523 = vsel %vm427, %v5522, %v5521
    %v5524 = vrot.slane %v4822, 4
    %v5525 = vsel %vm430, %v5524, %v5523
    %v5526 = vrot.slane %v4825, 3
    %v5527 = vsel %vm433, %v5526, %v5525
    %v5528 = vrot.slane %v4828, 2
    %v5529 = vsel %vm436, %v5528, %v5527
    %v5533 = vadd.f32 %v5414, %v5501
    %v5534 = vadd.f32 %v5416, %v5515
    %v5535 = vadd.f32 %v5485, %v5529
    %v5536 = vrot.slane %v4933, 1
    %v5537 = vsel %vm418, %v4936, %v5536
    %v5538 = vrot.slane %v4939, 7
    %v5539 = vsel %vm421, %v5538, %v5537
    %v5540 = vrot.slane %v4942, 6
    %v5541 = vsel %vm424, %v5540, %v5539
    %v5542 = vrot.slane %v4945, 5
    %v5543 = vsel %vm427, %v5542, %v5541
    %v5544 = vrot.slane %v4948, 4
    %v5545 = vsel %vm430, %v5544, %v5543
    %v5546 = vrot.slane %v4951, 3
    %v5547 = vsel %vm433, %v5546, %v5545
    %v5548 = vrot.slane %v4954, 2
    %v5549 = vsel %vm436, %v5548, %v5547
    %v5550 = vrot.slane %v4934, 1
    %v5551 = vsel %vm418, %v4937, %v5550
    %v5552 = vrot.slane %v4940, 7
    %v5553 = vsel %vm421, %v5552, %v5551
    %v5554 = vrot.slane %v4943, 6
    %v5555 = vsel %vm424, %v5554, %v5553
    %v5556 = vrot.slane %v4946, 5
    %v5557 = vsel %vm427, %v5556, %v5555
    %v5558 = vrot.slane %v4949, 4
    %v5559 = vsel %vm430, %v5558, %v5557
    %v5560 = vrot.slane %v4952, 3
    %v5561 = vsel %vm433, %v5560, %v5559
    %v5562 = vrot.slane %v4955, 2
    %v5563 = vsel %vm436, %v5562, %v5561
    %v5564 = vrot.slane %v4935, 1
    %v5565 = vsel %vm418, %v4938, %v5564
    %v5566 = vrot.slane %v4941, 7
    %v5567 = vsel %vm421, %v5566, %v5565
    %v5568 = vrot.slane %v4944, 6
    %v5569 = vsel %vm424, %v5568, %v5567
    %v5570 = vrot.slane %v4947, 5
    %v5571 = vsel %vm427, %v5570, %v5569
    %v5572 = vrot.slane %v4950, 4
    %v5573 = vsel %vm430, %v5572, %v5571
    %v5574 = vrot.slane %v4953, 3
    %v5575 = vsel %vm433, %v5574, %v5573
    %v5576 = vrot.slane %v4956, 2
    %v5577 = vsel %vm436, %v5576, %v5575
    %v5581 = vadd.f32 %v5533, %v5549
    %v5582 = vadd.f32 %v5534, %v5563
    %v5583 = vadd.f32 %v5535, %v5577
    %v5584 = vrot.slane %v5069, 1
    %v5585 = vsel %vm418, %v5072, %v5584
    %v5586 = vrot.slane %v5075, 7
    %v5587 = vsel %vm421, %v5586, %v5585
    %v5588 = vrot.slane %v5078, 6
    %v5589 = vsel %vm424, %v5588, %v5587
    %v5590 = vrot.slane %v5081, 5
    %v5591 = vsel %vm427, %v5590, %v5589
    %v5592 = vrot.slane %v5084, 4
    %v5593 = vsel %vm430, %v5592, %v5591
    %v5594 = vrot.slane %v5087, 3
    %v5595 = vsel %vm433, %v5594, %v5593
    %v5596 = vrot.slane %v5090, 2
    %v5597 = vsel %vm436, %v5596, %v5595
    %v5598 = vrot.slane %v5070, 1
    %v5599 = vsel %vm418, %v5073, %v5598
    %v5600 = vrot.slane %v5076, 7
    %v5601 = vsel %vm421, %v5600, %v5599
    %v5602 = vrot.slane %v5079, 6
    %v5603 = vsel %vm424, %v5602, %v5601
    %v5604 = vrot.slane %v5082, 5
    %v5605 = vsel %vm427, %v5604, %v5603
    %v5606 = vrot.slane %v5085, 4
    %v5607 = vsel %vm430, %v5606, %v5605
    %v5608 = vrot.slane %v5088, 3
    %v5609 = vsel %vm433, %v5608, %v5607
    %v5610 = vrot.slane %v5091, 2
    %v5611 = vsel %vm436, %v5610, %v5609
    %v5612 = vrot.slane %v5071, 1
    %v5613 = vsel %vm418, %v5074, %v5612
    %v5614 = vrot.slane %v5077, 7
    %v5615 = vsel %vm421, %v5614, %v5613
    %v5616 = vrot.slane %v5080, 6
    %v5617 = vsel %vm424, %v5616, %v5615
    %v5618 = vrot.slane %v5083, 5
    %v5619 = vsel %vm427, %v5618, %v5617
    %v5620 = vrot.slane %v5086, 4
    %v5621 = vsel %vm430, %v5620, %v5619
    %v5622 = vrot.slane %v5089, 3
    %v5623 = vsel %vm433, %v5622, %v5621
    %v5624 = vrot.slane %v5092, 2
    %v5625 = vsel %vm436, %v5624, %v5623
    %v5629 = vadd.f32 %v5581, %v5597
    %v5630 = vadd.f32 %v5582, %v5611
    %v5631 = vadd.f32 %v5583, %v5625
    %v5632 = vrot.slane %v5197, 1
    %v5633 = vsel %vm418, %v5200, %v5632
    %v5634 = vrot.slane %v5203, 7
    %v5635 = vsel %vm421, %v5634, %v5633
    %v5636 = vrot.slane %v5206, 6
    %v5637 = vsel %vm424, %v5636, %v5635
    %v5638 = vrot.slane %v5209, 5
    %v5639 = vsel %vm427, %v5638, %v5637
    %v5640 = vrot.slane %v5212, 4
    %v5641 = vsel %vm430, %v5640, %v5639
    %v5642 = vrot.slane %v5215, 3
    %v5643 = vsel %vm433, %v5642, %v5641
    %v5644 = vrot.slane %v5218, 2
    %v5645 = vsel %vm436, %v5644, %v5643
    %v5646 = vrot.slane %v5198, 1
    %v5647 = vsel %vm418, %v5201, %v5646
    %v5648 = vrot.slane %v5204, 7
    %v5649 = vsel %vm421, %v5648, %v5647
    %v5650 = vrot.slane %v5207, 6
    %v5651 = vsel %vm424, %v5650, %v5649
    %v5652 = vrot.slane %v5210, 5
    %v5653 = vsel %vm427, %v5652, %v5651
    %v5654 = vrot.slane %v5213, 4
    %v5655 = vsel %vm430, %v5654, %v5653
    %v5656 = vrot.slane %v5216, 3
    %v5657 = vsel %vm433, %v5656, %v5655
    %v5658 = vrot.slane %v5219, 2
    %v5659 = vsel %vm436, %v5658, %v5657
    %v5660 = vrot.slane %v5199, 1
    %v5661 = vsel %vm418, %v5202, %v5660
    %v5662 = vrot.slane %v5205, 7
    %v5663 = vsel %vm421, %v5662, %v5661
    %v5664 = vrot.slane %v5208, 6
    %v5665 = vsel %vm424, %v5664, %v5663
    %v5666 = vrot.slane %v5211, 5
    %v5667 = vsel %vm427, %v5666, %v5665
    %v5668 = vrot.slane %v5214, 4
    %v5669 = vsel %vm430, %v5668, %v5667
    %v5670 = vrot.slane %v5217, 3
    %v5671 = vsel %vm433, %v5670, %v5669
    %v5672 = vrot.slane %v5220, 2
    %v5673 = vsel %vm436, %v5672, %v5671
    %v5677 = vadd.f32 %v5629, %v5645
    %v5678 = vadd.f32 %v5630, %v5659
    %v5679 = vadd.f32 %v5631, %v5673
    %v5680 = vxor.u32 %v5677, 2147483648
    %v5681 = vxor.u32 %v5678, 2147483648
    %v5682 = vxor.u32 %v5679, 2147483648
    %v5683 = vmul.f32 %v5680, 1.442695
    %v5684 = vpow.pop %v5683
    %v5685 = vmul.f32 %v5681, 1.442695
    %v5686 = vpow.pop %v5685
    %v5687 = vmul.f32 %v5682, 1.442695
    %v5688 = vpow.pop %v5687
    %v5689 = vadd.f32 %v5684, 1.0
    %v5690 = vadd.f32 %v5686, 1.0
    %v5691 = vadd.f32 %v5688, 1.0
    %v5692 = vrcp.pop %v5689
    %v5693 = vmul.f32 1.0, %v5692
    %v5694 = vrcp.pop %v5690
    %v5695 = vmul.f32 1.0, %v5694
    %v5696 = vrcp.pop %v5691
    %v5697 = vmul.f32 1.0, %v5696
    %v5698 = vtanh.pop %v5679
    %v5699 = vmul.f32 %v5693, %v5323
    %v5700 = vmul.f32 %v5695, %v5324
    %5702 = vrot.lane.b32.xlu0 %v5698, 96
    %v5703 = vpop.permute.xlu0 %5702
    %v5705 = vmul.f32 %v5693, %v5703
    %5707 = vrot.lane.b32.xlu0 %v5705, 96
    %v5708 = vpop.permute.xlu0 %5707
    %v5710 = vadd.f32 %v5699, %v5708
    %v5711 = vadd.f32 %v5700, %v5708
    %v5712 = vtanh.pop %v5710
    %v5713 = vtanh.pop %v5711
    %5716 = vrot.lane.b32.xlu0 %v5712, 96
    %v5717 = vpop.permute.xlu0 %5716
    %5718 = vrot.lane.b32.xlu0 %v5713, 96
    %v5719 = vpop.permute.xlu0 %5718
    %v5720 = vsel %vm172, %v5717, %v5719
    %v5723 = vmul.f32 %v5695, %v5720
    %v5724 = vmul.f32 %v5697, %v5719
    %5727 = vrot.lane.b32.xlu0 %v5723, 64
    %v5728 = vpop.permute.xlu0 %5727
    %5729 = vrot.lane.b32.xlu0 %v5724, 64
    %v5730 = vpop.permute.xlu0 %5729
    %v5731 = vsel %vm1239, %v5728, %v5730
    %v5732 = vsel %vm172, %v5731, 0
    %5734 = vmatprep.subr.mxu0 0.0
    %5735 = vmatpush1.msra.mxu0 0.0
    %5736 = vmatprep.subr.mxu0 0.0
    %5737 = vmatpush1.msra.mxu0 0.0
    %5738 = vmatprep.subr.mxu0 0.0
    %5739 = vmatpush1.msra.mxu0 0.0
    %5740 = vmatprep.subr.mxu0 0.0
    %5741 = vmatpush1.msra.mxu0 0.0
    %5742 = vmatprep.subr.mxu0 %v154
    %5743 = vmatpush1.msra.mxu0 %v153
    %5744 = vmatprep.subr.mxu0 %v151
    %5745 = vmatpush1.msra.mxu0 %v150
    %5746 = vmatprep.subr.mxu0 %v148
    %5747 = vmatpush1.msra.mxu0 %v147
    %5748 = vmatprep.subr.mxu0 %v145
    %5749 = vmatpush1.msra.mxu0 %v144
    %5750 = vmatprep.subr.mxu0 %v142
    %5751 = vmatpush1.msra.mxu0 %v141
    %5752 = vmatprep.subr.mxu0 %v139
    %5753 = vmatpush1.msra.mxu0 %v138
    %5754 = vmatprep.subr.mxu0 %v136
    %5755 = vmatpush1.msra.mxu0 %v135
    %5756 = vmatprep.subr.mxu0 %v133
    %5757 = vmatpush1.msra.mxu0 %v132
    %5758 = vmatprep.subr.mxu0 %v130
    %5759 = vmatpush1.msra.mxu0 %v129
    %5760 = vmatprep.subr.mxu0 %v127
    %5761 = vmatpush1.msra.mxu0 %v126
    %5762 = vmatprep.subr.mxu0 %v124
    %5763 = vmatpush1.msra.mxu0 %v123
    %5764 = vmatprep.subr.mxu0 %v121
    %5765 = vmatpush1.msra.mxu0 %v120
    %5766 = vmatprep.subr.mxu0 0.0
    %5767 = vmatpush2.msra.mxu0 0.0
    %5768 = vmatprep.subr.mxu0 0.0
    %5769 = vmatpush2.msra.mxu0 0.0
    %5770 = vmatprep.subr.mxu0 0.0
    %5771 = vmatpush2.msra.mxu0 0.0
    %5772 = vmatprep.subr.mxu0 0.0
    %5773 = vmatpush2.msra.mxu0 0.0
    %5774 = vmatprep.subr.mxu0 0.0
    %5775 = vmatpush2.msra.mxu0 0.0
    %5776 = vmatprep.subr.mxu0 0.0
    %5777 = vmatpush2.msra.mxu0 0.0
    %5778 = vmatprep.subr.mxu0 0.0
    %5779 = vmatpush2.msra.mxu0 0.0
    %5780 = vmatprep.subr.mxu0 0.0
    %5781 = vmatpush2.msra.mxu0 0.0
    %5782 = vmatprep.subr.mxu0 0.0
    %5783 = vmatpush2.msra.mxu0 0.0
    %5784 = vmatprep.subr.mxu0 0.0
    %5785 = vmatpush2.msra.mxu0 0.0
    %5786 = vmatprep.subr.mxu0 0.0
    %5787 = vmatpush2.msra.mxu0 0.0
    %5788 = vmatprep.subr.mxu0 0.0
    %5789 = vmatpush2.msra.mxu0 0.0
    %5790 = vmatprep.subr.mxu0 0.0
    %5791 = vmatpush2.msra.mxu0 0.0
    %5792 = vmatprep.subr.mxu0 0.0
    %5793 = vmatpush2.msra.mxu0 0.0
    %5794 = vmatprep.subr.mxu0 0.0
    %5795 = vmatpush2.msra.mxu0 0.0
    %5796 = vmatprep.subr.mxu0 0.0
    %5797 = vmatpush2.msra.mxu0 0.0
    %5798 = vmatprep.mubr.f32.mxu0 0.0
    %5799 = vmatmul.mubr.f32.gmra.mxu0 %v5732
    %v5800 = vpop.f32.mrf.mxu0
    %v5801 = vadd.f32 %v160, %v5800
    %v5802 = vpop.f32.mrf.mxu0
    %v5803 = vadd.f32 %v164, %v5802
    %5804 = vdwg.mxu0
    %5805 = vmatprep.subr.mxu0 0.0
    %5806 = vmatpush1.msra.mxu0 0.0
    %5807 = vmatprep.subr.mxu0 0.0
    %5808 = vmatpush1.msra.mxu0 0.0
    %5809 = vmatprep.subr.mxu0 0.0
    %5810 = vmatpush1.msra.mxu0 0.0
    %5811 = vmatprep.subr.mxu0 0.0
    %5812 = vmatpush1.msra.mxu0 0.0
    %5813 = vmatprep.subr.mxu0 0.0
    %5814 = vmatpush1.msra.mxu0 %v155
    %5815 = vmatprep.subr.mxu0 0.0
    %5816 = vmatpush1.msra.mxu0 %v152
    %5817 = vmatprep.subr.mxu0 0.0
    %5818 = vmatpush1.msra.mxu0 %v149
    %5819 = vmatprep.subr.mxu0 0.0
    %5820 = vmatpush1.msra.mxu0 %v146
    %5821 = vmatprep.subr.mxu0 0.0
    %5822 = vmatpush1.msra.mxu0 %v143
    %5823 = vmatprep.subr.mxu0 0.0
    %5824 = vmatpush1.msra.mxu0 %v140
    %5825 = vmatprep.subr.mxu0 0.0
    %5826 = vmatpush1.msra.mxu0 %v137
    %5827 = vmatprep.subr.mxu0 0.0
    %5828 = vmatpush1.msra.mxu0 %v134
    %5829 = vmatprep.subr.mxu0 0.0
    %5830 = vmatpush1.msra.mxu0 %v131
    %5831 = vmatprep.subr.mxu0 0.0
    %5832 = vmatpush1.msra.mxu0 %v128
    %5833 = vmatprep.subr.mxu0 0.0
    %5834 = vmatpush1.msra.mxu0 %v125
    %5835 = vmatprep.subr.mxu0 0.0
    %5836 = vmatpush1.msra.mxu0 %v122
    %5837 = vmatprep.subr.mxu0 0.0
    %5838 = vmatpush2.msra.mxu0 0.0
    %5839 = vmatprep.subr.mxu0 0.0
    %5840 = vmatpush2.msra.mxu0 0.0
    %5841 = vmatprep.subr.mxu0 0.0
    %5842 = vmatpush2.msra.mxu0 0.0
    %5843 = vmatprep.subr.mxu0 0.0
    %5844 = vmatpush2.msra.mxu0 0.0
    %5845 = vmatprep.subr.mxu0 0.0
    %5846 = vmatpush2.msra.mxu0 0.0
    %5847 = vmatprep.subr.mxu0 0.0
    %5848 = vmatpush2.msra.mxu0 0.0
    %5849 = vmatprep.subr.mxu0 0.0
    %5850 = vmatpush2.msra.mxu0 0.0
    %5851 = vmatprep.subr.mxu0 0.0
    %5852 = vmatpush2.msra.mxu0 0.0
    %5853 = vmatprep.subr.mxu0 0.0
    %5854 = vmatpush2.msra.mxu0 0.0
    %5855 = vmatprep.subr.mxu0 0.0
    %5856 = vmatpush2.msra.mxu0 0.0
    %5857 = vmatprep.subr.mxu0 0.0
    %5858 = vmatpush2.msra.mxu0 0.0
    %5859 = vmatprep.subr.mxu0 0.0
    %5860 = vmatpush2.msra.mxu0 0.0
    %5861 = vmatprep.subr.mxu0 0.0
    %5862 = vmatpush2.msra.mxu0 0.0
    %5863 = vmatprep.subr.mxu0 0.0
    %5864 = vmatpush2.msra.mxu0 0.0
    %5865 = vmatprep.subr.mxu0 0.0
    %5866 = vmatpush2.msra.mxu0 0.0
    %5867 = vmatprep.subr.mxu0 0.0
    %5868 = vmatpush2.msra.mxu0 0.0
    %5869 = vmatprep.mubr.f32.mxu0 0.0
    %5870 = vmatmul.mubr.f32.gmra.mxu0 %v5732
    %v5871 = vpop.f32.mrf.mxu0
    %v5872 = vadd.f32 %v168, %v5871
    %v5873 = vpop.f32.mrf.mxu0
    %5874 = vdwg.mxu0
    %v5875 = vrot.slane %v4805, 2
    %v5876 = vrot.slane %v4808, 1
    %v5877 = vsel %vm418, %v5876, %v5875
    %v5878 = vsel %vm421, %v4811, %v5877
    %v5879 = vrot.slane %v4814, 7
    %v5880 = vsel %vm424, %v5879, %v5878
    %v5881 = vrot.slane %v4817, 6
    %v5882 = vsel %vm427, %v5881, %v5880
    %v5883 = vrot.slane %v4820, 5
    %v5884 = vsel %vm430, %v5883, %v5882
    %v5885 = vrot.slane %v4823, 4
    %v5886 = vsel %vm433, %v5885, %v5884
    %v5887 = vrot.slane %v4826, 3
    %v5888 = vsel %vm436, %v5887, %v5886
    %v5889 = vrot.slane %v4806, 2
    %v5890 = vrot.slane %v4809, 1
    %v5891 = vsel %vm418, %v5890, %v5889
    %v5892 = vsel %vm421, %v4812, %v5891
    %v5893 = vrot.slane %v4815, 7
    %v5894 = vsel %vm424, %v5893, %v5892
    %v5895 = vrot.slane %v4818, 6
    %v5896 = vsel %vm427, %v5895, %v5894
    %v5897 = vrot.slane %v4821, 5
    %v5898 = vsel %vm430, %v5897, %v5896
    %v5899 = vrot.slane %v4824, 4
    %v5900 = vsel %vm433, %v5899, %v5898
    %v5901 = vrot.slane %v4827, 3
    %v5902 = vsel %vm436, %v5901, %v5900
    %v5903 = vrot.slane %v4807, 2
    %v5904 = vrot.slane %v4810, 1
    %v5905 = vsel %vm418, %v5904, %v5903
    %v5906 = vsel %vm421, %v4813, %v5905
    %v5907 = vrot.slane %v4816, 7
    %v5908 = vsel %vm424, %v5907, %v5906
    %v5909 = vrot.slane %v4819, 6
    %v5910 = vsel %vm427, %v5909, %v5908
    %v5911 = vrot.slane %v4822, 5
    %v5912 = vsel %vm430, %v5911, %v5910
    %v5913 = vrot.slane %v4825, 4
    %v5914 = vsel %vm433, %v5913, %v5912
    %v5915 = vrot.slane %v4828, 3
    %v5916 = vsel %vm436, %v5915, %v5914
    %v5920 = vadd.f32 %v5801, %v5888
    %v5921 = vadd.f32 %v5803, %v5902
    %v5922 = vadd.f32 %v5872, %v5916
    %v5923 = vrot.slane %v4933, 2
    %v5924 = vrot.slane %v4936, 1
    %v5925 = vsel %vm418, %v5924, %v5923
    %v5926 = vsel %vm421, %v4939, %v5925
    %v5927 = vrot.slane %v4942, 7
    %v5928 = vsel %vm424, %v5927, %v5926
    %v5929 = vrot.slane %v4945, 6
    %v5930 = vsel %vm427, %v5929, %v5928
    %v5931 = vrot.slane %v4948, 5
    %v5932 = vsel %vm430, %v5931, %v5930
    %v5933 = vrot.slane %v4951, 4
    %v5934 = vsel %vm433, %v5933, %v5932
    %v5935 = vrot.slane %v4954, 3
    %v5936 = vsel %vm436, %v5935, %v5934
    %v5937 = vrot.slane %v4934, 2
    %v5938 = vrot.slane %v4937, 1
    %v5939 = vsel %vm418, %v5938, %v5937
    %v5940 = vsel %vm421, %v4940, %v5939
    %v5941 = vrot.slane %v4943, 7
    %v5942 = vsel %vm424, %v5941, %v5940
    %v5943 = vrot.slane %v4946, 6
    %v5944 = vsel %vm427, %v5943, %v5942
    %v5945 = vrot.slane %v4949, 5
    %v5946 = vsel %vm430, %v5945, %v5944
    %v5947 = vrot.slane %v4952, 4
    %v5948 = vsel %vm433, %v5947, %v5946
    %v5949 = vrot.slane %v4955, 3
    %v5950 = vsel %vm436, %v5949, %v5948
    %v5951 = vrot.slane %v4935, 2
    %v5952 = vrot.slane %v4938, 1
    %v5953 = vsel %vm418, %v5952, %v5951
    %v5954 = vsel %vm421, %v4941, %v5953
    %v5955 = vrot.slane %v4944, 7
    %v5956 = vsel %vm424, %v5955, %v5954
    %v5957 = vrot.slane %v4947, 6
    %v5958 = vsel %vm427, %v5957, %v5956
    %v5959 = vrot.slane %v4950, 5
    %v5960 = vsel %vm430, %v5959, %v5958
    %v5961 = vrot.slane %v4953, 4
    %v5962 = vsel %vm433, %v5961, %v5960
    %v5963 = vrot.slane %v4956, 3
    %v5964 = vsel %vm436, %v5963, %v5962
    %v5968 = vadd.f32 %v5920, %v5936
    %v5969 = vadd.f32 %v5921, %v5950
    %v5970 = vadd.f32 %v5922, %v5964
    %v5971 = vrot.slane %v5069, 2
    %v5972 = vrot.slane %v5072, 1
    %v5973 = vsel %vm418, %v5972, %v5971
    %v5974 = vsel %vm421, %v5075, %v5973
    %v5975 = vrot.slane %v5078, 7
    %v5976 = vsel %vm424, %v5975, %v5974
    %v5977 = vrot.slane %v5081, 6
    %v5978 = vsel %vm427, %v5977, %v5976
    %v5979 = vrot.slane %v5084, 5
    %v5980 = vsel %vm430, %v5979, %v5978
    %v5981 = vrot.slane %v5087, 4
    %v5982 = vsel %vm433, %v5981, %v5980
    %v5983 = vrot.slane %v5090, 3
    %v5984 = vsel %vm436, %v5983, %v5982
    %v5985 = vrot.slane %v5070, 2
    %v5986 = vrot.slane %v5073, 1
    %v5987 = vsel %vm418, %v5986, %v5985
    %v5988 = vsel %vm421, %v5076, %v5987
    %v5989 = vrot.slane %v5079, 7
    %v5990 = vsel %vm424, %v5989, %v5988
    %v5991 = vrot.slane %v5082, 6
    %v5992 = vsel %vm427, %v5991, %v5990
    %v5993 = vrot.slane %v5085, 5
    %v5994 = vsel %vm430, %v5993, %v5992
    %v5995 = vrot.slane %v5088, 4
    %v5996 = vsel %vm433, %v5995, %v5994
    %v5997 = vrot.slane %v5091, 3
    %v5998 = vsel %vm436, %v5997, %v5996
    %v5999 = vrot.slane %v5071, 2
    %v6000 = vrot.slane %v5074, 1
    %v6001 = vsel %vm418, %v6000, %v5999
    %v6002 = vsel %vm421, %v5077, %v6001
    %v6003 = vrot.slane %v5080, 7
    %v6004 = vsel %vm424, %v6003, %v6002
    %v6005 = vrot.slane %v5083, 6
    %v6006 = vsel %vm427, %v6005, %v6004
    %v6007 = vrot.slane %v5086, 5
    %v6008 = vsel %vm430, %v6007, %v6006
    %v6009 = vrot.slane %v5089, 4
    %v6010 = vsel %vm433, %v6009, %v6008
    %v6011 = vrot.slane %v5092, 3
    %v6012 = vsel %vm436, %v6011, %v6010
    %v6016 = vadd.f32 %v5968, %v5984
    %v6017 = vadd.f32 %v5969, %v5998
    %v6018 = vadd.f32 %v5970, %v6012
    %v6019 = vrot.slane %v5197, 2
    %v6020 = vrot.slane %v5200, 1
    %v6021 = vsel %vm418, %v6020, %v6019
    %v6022 = vsel %vm421, %v5203, %v6021
    %v6023 = vrot.slane %v5206, 7
    %v6024 = vsel %vm424, %v6023, %v6022
    %v6025 = vrot.slane %v5209, 6
    %v6026 = vsel %vm427, %v6025, %v6024
    %v6027 = vrot.slane %v5212, 5
    %v6028 = vsel %vm430, %v6027, %v6026
    %v6029 = vrot.slane %v5215, 4
    %v6030 = vsel %vm433, %v6029, %v6028
    %v6031 = vrot.slane %v5218, 3
    %v6032 = vsel %vm436, %v6031, %v6030
    %v6033 = vrot.slane %v5198, 2
    %v6034 = vrot.slane %v5201, 1
    %v6035 = vsel %vm418, %v6034, %v6033
    %v6036 = vsel %vm421, %v5204, %v6035
    %v6037 = vrot.slane %v5207, 7
    %v6038 = vsel %vm424, %v6037, %v6036
    %v6039 = vrot.slane %v5210, 6
    %v6040 = vsel %vm427, %v6039, %v6038
    %v6041 = vrot.slane %v5213, 5
    %v6042 = vsel %vm430, %v6041, %v6040
    %v6043 = vrot.slane %v5216, 4
    %v6044 = vsel %vm433, %v6043, %v6042
    %v6045 = vrot.slane %v5219, 3
    %v6046 = vsel %vm436, %v6045, %v6044
    %v6047 = vrot.slane %v5199, 2
    %v6048 = vrot.slane %v5202, 1
    %v6049 = vsel %vm418, %v6048, %v6047
    %v6050 = vsel %vm421, %v5205, %v6049
    %v6051 = vrot.slane %v5208, 7
    %v6052 = vsel %vm424, %v6051, %v6050
    %v6053 = vrot.slane %v5211, 6
    %v6054 = vsel %vm427, %v6053, %v6052
    %v6055 = vrot.slane %v5214, 5
    %v6056 = vsel %vm430, %v6055, %v6054
    %v6057 = vrot.slane %v5217, 4
    %v6058 = vsel %vm433, %v6057, %v6056
    %v6059 = vrot.slane %v5220, 3
    %v6060 = vsel %vm436, %v6059, %v6058
    %v6064 = vadd.f32 %v6016, %v6032
    %v6065 = vadd.f32 %v6017, %v6046
    %v6066 = vadd.f32 %v6018, %v6060
    %v6067 = vxor.u32 %v6064, 2147483648
    %v6068 = vxor.u32 %v6065, 2147483648
    %v6069 = vxor.u32 %v6066, 2147483648
    %v6070 = vmul.f32 %v6067, 1.442695
    %v6071 = vpow.pop %v6070
    %v6072 = vmul.f32 %v6068, 1.442695
    %v6073 = vpow.pop %v6072
    %v6074 = vmul.f32 %v6069, 1.442695
    %v6075 = vpow.pop %v6074
    %v6076 = vadd.f32 %v6071, 1.0
    %v6077 = vadd.f32 %v6073, 1.0
    %v6078 = vadd.f32 %v6075, 1.0
    %v6079 = vrcp.pop %v6076
    %v6080 = vmul.f32 1.0, %v6079
    %v6081 = vrcp.pop %v6077
    %v6082 = vmul.f32 1.0, %v6081
    %v6083 = vrcp.pop %v6078
    %v6084 = vmul.f32 1.0, %v6083
    %v6085 = vtanh.pop %v6066
    %v6086 = vmul.f32 %v6080, %v5710
    %v6087 = vmul.f32 %v6082, %v5711
    %6089 = vrot.lane.b32.xlu0 %v6085, 96
    %v6090 = vpop.permute.xlu0 %6089
    %v6092 = vmul.f32 %v6080, %v6090
    %6094 = vrot.lane.b32.xlu0 %v6092, 96
    %v6095 = vpop.permute.xlu0 %6094
    %v6097 = vadd.f32 %v6086, %v6095
    %v6098 = vadd.f32 %v6087, %v6095
    %v6099 = vtanh.pop %v6097
    %v6100 = vtanh.pop %v6098
    %6103 = vrot.lane.b32.xlu0 %v6099, 96
    %v6104 = vpop.permute.xlu0 %6103
    %6105 = vrot.lane.b32.xlu0 %v6100, 96
    %v6106 = vpop.permute.xlu0 %6105
    %v6107 = vsel %vm172, %v6104, %v6106
    %v6110 = vmul.f32 %v6082, %v6107
    %v6111 = vmul.f32 %v6084, %v6106
    %6114 = vrot.lane.b32.xlu0 %v6110, 64
    %v6115 = vpop.permute.xlu0 %6114
    %6116 = vrot.lane.b32.xlu0 %v6111, 64
    %v6117 = vpop.permute.xlu0 %6116
    %v6118 = vsel %vm1239, %v6115, %v6117
    %v6119 = vsel %vm172, %v6118, 0
    %6121 = vmatprep.subr.mxu0 0.0
    %6122 = vmatpush1.msra.mxu0 0.0
    %6123 = vmatprep.subr.mxu0 0.0
    %6124 = vmatpush1.msra.mxu0 0.0
    %6125 = vmatprep.subr.mxu0 0.0
    %6126 = vmatpush1.msra.mxu0 0.0
    %6127 = vmatprep.subr.mxu0 0.0
    %6128 = vmatpush1.msra.mxu0 0.0
    %6129 = vmatprep.subr.mxu0 %v154
    %6130 = vmatpush1.msra.mxu0 %v153
    %6131 = vmatprep.subr.mxu0 %v151
    %6132 = vmatpush1.msra.mxu0 %v150
    %6133 = vmatprep.subr.mxu0 %v148
    %6134 = vmatpush1.msra.mxu0 %v147
    %6135 = vmatprep.subr.mxu0 %v145
    %6136 = vmatpush1.msra.mxu0 %v144
    %6137 = vmatprep.subr.mxu0 %v142
    %6138 = vmatpush1.msra.mxu0 %v141
    %6139 = vmatprep.subr.mxu0 %v139
    %6140 = vmatpush1.msra.mxu0 %v138
    %6141 = vmatprep.subr.mxu0 %v136
    %6142 = vmatpush1.msra.mxu0 %v135
    %6143 = vmatprep.subr.mxu0 %v133
    %6144 = vmatpush1.msra.mxu0 %v132
    %6145 = vmatprep.subr.mxu0 %v130
    %6146 = vmatpush1.msra.mxu0 %v129
    %6147 = vmatprep.subr.mxu0 %v127
    %6148 = vmatpush1.msra.mxu0 %v126
    %6149 = vmatprep.subr.mxu0 %v124
    %6150 = vmatpush1.msra.mxu0 %v123
    %6151 = vmatprep.subr.mxu0 %v121
    %6152 = vmatpush1.msra.mxu0 %v120
    %6153 = vmatprep.subr.mxu0 0.0
    %6154 = vmatpush2.msra.mxu0 0.0
    %6155 = vmatprep.subr.mxu0 0.0
    %6156 = vmatpush2.msra.mxu0 0.0
    %6157 = vmatprep.subr.mxu0 0.0
    %6158 = vmatpush2.msra.mxu0 0.0
    %6159 = vmatprep.subr.mxu0 0.0
    %6160 = vmatpush2.msra.mxu0 0.0
    %6161 = vmatprep.subr.mxu0 0.0
    %6162 = vmatpush2.msra.mxu0 0.0
    %6163 = vmatprep.subr.mxu0 0.0
    %6164 = vmatpush2.msra.mxu0 0.0
    %6165 = vmatprep.subr.mxu0 0.0
    %6166 = vmatpush2.msra.mxu0 0.0
    %6167 = vmatprep.subr.mxu0 0.0
    %6168 = vmatpush2.msra.mxu0 0.0
    %6169 = vmatprep.subr.mxu0 0.0
    %6170 = vmatpush2.msra.mxu0 0.0
    %6171 = vmatprep.subr.mxu0 0.0
    %6172 = vmatpush2.msra.mxu0 0.0
    %6173 = vmatprep.subr.mxu0 0.0
    %6174 = vmatpush2.msra.mxu0 0.0
    %6175 = vmatprep.subr.mxu0 0.0
    %6176 = vmatpush2.msra.mxu0 0.0
    %6177 = vmatprep.subr.mxu0 0.0
    %6178 = vmatpush2.msra.mxu0 0.0
    %6179 = vmatprep.subr.mxu0 0.0
    %6180 = vmatpush2.msra.mxu0 0.0
    %6181 = vmatprep.subr.mxu0 0.0
    %6182 = vmatpush2.msra.mxu0 0.0
    %6183 = vmatprep.subr.mxu0 0.0
    %6184 = vmatpush2.msra.mxu0 0.0
    %6185 = vmatprep.mubr.f32.mxu0 0.0
    %6186 = vmatmul.mubr.f32.gmra.mxu0 %v6119
    %v6187 = vpop.f32.mrf.mxu0
    %v6188 = vadd.f32 %v160, %v6187
    %v6189 = vpop.f32.mrf.mxu0
    %v6190 = vadd.f32 %v164, %v6189
    %6191 = vdwg.mxu0
    %6192 = vmatprep.subr.mxu0 0.0
    %6193 = vmatpush1.msra.mxu0 0.0
    %6194 = vmatprep.subr.mxu0 0.0
    %6195 = vmatpush1.msra.mxu0 0.0
    %6196 = vmatprep.subr.mxu0 0.0
    %6197 = vmatpush1.msra.mxu0 0.0
    %6198 = vmatprep.subr.mxu0 0.0
    %6199 = vmatpush1.msra.mxu0 0.0
    %6200 = vmatprep.subr.mxu0 0.0
    %6201 = vmatpush1.msra.mxu0 %v155
    %6202 = vmatprep.subr.mxu0 0.0
    %6203 = vmatpush1.msra.mxu0 %v152
    %6204 = vmatprep.subr.mxu0 0.0
    %6205 = vmatpush1.msra.mxu0 %v149
    %6206 = vmatprep.subr.mxu0 0.0
    %6207 = vmatpush1.msra.mxu0 %v146
    %6208 = vmatprep.subr.mxu0 0.0
    %6209 = vmatpush1.msra.mxu0 %v143
    %6210 = vmatprep.subr.mxu0 0.0
    %6211 = vmatpush1.msra.mxu0 %v140
    %6212 = vmatprep.subr.mxu0 0.0
    %6213 = vmatpush1.msra.mxu0 %v137
    %6214 = vmatprep.subr.mxu0 0.0
    %6215 = vmatpush1.msra.mxu0 %v134
    %6216 = vmatprep.subr.mxu0 0.0
    %6217 = vmatpush1.msra.mxu0 %v131
    %6218 = vmatprep.subr.mxu0 0.0
    %6219 = vmatpush1.msra.mxu0 %v128
    %6220 = vmatprep.subr.mxu0 0.0
    %6221 = vmatpush1.msra.mxu0 %v125
    %6222 = vmatprep.subr.mxu0 0.0
    %6223 = vmatpush1.msra.mxu0 %v122
    %6224 = vmatprep.subr.mxu0 0.0
    %6225 = vmatpush2.msra.mxu0 0.0
    %6226 = vmatprep.subr.mxu0 0.0
    %6227 = vmatpush2.msra.mxu0 0.0
    %6228 = vmatprep.subr.mxu0 0.0
    %6229 = vmatpush2.msra.mxu0 0.0
    %6230 = vmatprep.subr.mxu0 0.0
    %6231 = vmatpush2.msra.mxu0 0.0
    %6232 = vmatprep.subr.mxu0 0.0
    %6233 = vmatpush2.msra.mxu0 0.0
    %6234 = vmatprep.subr.mxu0 0.0
    %6235 = vmatpush2.msra.mxu0 0.0
    %6236 = vmatprep.subr.mxu0 0.0
    %6237 = vmatpush2.msra.mxu0 0.0
    %6238 = vmatprep.subr.mxu0 0.0
    %6239 = vmatpush2.msra.mxu0 0.0
    %6240 = vmatprep.subr.mxu0 0.0
    %6241 = vmatpush2.msra.mxu0 0.0
    %6242 = vmatprep.subr.mxu0 0.0
    %6243 = vmatpush2.msra.mxu0 0.0
    %6244 = vmatprep.subr.mxu0 0.0
    %6245 = vmatpush2.msra.mxu0 0.0
    %6246 = vmatprep.subr.mxu0 0.0
    %6247 = vmatpush2.msra.mxu0 0.0
    %6248 = vmatprep.subr.mxu0 0.0
    %6249 = vmatpush2.msra.mxu0 0.0
    %6250 = vmatprep.subr.mxu0 0.0
    %6251 = vmatpush2.msra.mxu0 0.0
    %6252 = vmatprep.subr.mxu0 0.0
    %6253 = vmatpush2.msra.mxu0 0.0
    %6254 = vmatprep.subr.mxu0 0.0
    %6255 = vmatpush2.msra.mxu0 0.0
    %6256 = vmatprep.mubr.f32.mxu0 0.0
    %6257 = vmatmul.mubr.f32.gmra.mxu0 %v6119
    %v6258 = vpop.f32.mrf.mxu0
    %v6259 = vadd.f32 %v168, %v6258
    %v6260 = vpop.f32.mrf.mxu0
    %6261 = vdwg.mxu0
    %v6262 = vrot.slane %v4805, 3
    %v6263 = vrot.slane %v4808, 2
    %v6264 = vsel %vm418, %v6263, %v6262
    %v6265 = vrot.slane %v4811, 1
    %v6266 = vsel %vm421, %v6265, %v6264
    %v6267 = vsel %vm424, %v4814, %v6266
    %v6268 = vrot.slane %v4817, 7
    %v6269 = vsel %vm427, %v6268, %v6267
    %v6270 = vrot.slane %v4820, 6
    %v6271 = vsel %vm430, %v6270, %v6269
    %v6272 = vrot.slane %v4823, 5
    %v6273 = vsel %vm433, %v6272, %v6271
    %v6274 = vrot.slane %v4826, 4
    %v6275 = vsel %vm436, %v6274, %v6273
    %v6276 = vrot.slane %v4806, 3
    %v6277 = vrot.slane %v4809, 2
    %v6278 = vsel %vm418, %v6277, %v6276
    %v6279 = vrot.slane %v4812, 1
    %v6280 = vsel %vm421, %v6279, %v6278
    %v6281 = vsel %vm424, %v4815, %v6280
    %v6282 = vrot.slane %v4818, 7
    %v6283 = vsel %vm427, %v6282, %v6281
    %v6284 = vrot.slane %v4821, 6
    %v6285 = vsel %vm430, %v6284, %v6283
    %v6286 = vrot.slane %v4824, 5
    %v6287 = vsel %vm433, %v6286, %v6285
    %v6288 = vrot.slane %v4827, 4
    %v6289 = vsel %vm436, %v6288, %v6287
    %v6290 = vrot.slane %v4807, 3
    %v6291 = vrot.slane %v4810, 2
    %v6292 = vsel %vm418, %v6291, %v6290
    %v6293 = vrot.slane %v4813, 1
    %v6294 = vsel %vm421, %v6293, %v6292
    %v6295 = vsel %vm424, %v4816, %v6294
    %v6296 = vrot.slane %v4819, 7
    %v6297 = vsel %vm427, %v6296, %v6295
    %v6298 = vrot.slane %v4822, 6
    %v6299 = vsel %vm430, %v6298, %v6297
    %v6300 = vrot.slane %v4825, 5
    %v6301 = vsel %vm433, %v6300, %v6299
    %v6302 = vrot.slane %v4828, 4
    %v6303 = vsel %vm436, %v6302, %v6301
    %v6307 = vadd.f32 %v6188, %v6275
    %v6308 = vadd.f32 %v6190, %v6289
    %v6309 = vadd.f32 %v6259, %v6303
    %v6310 = vrot.slane %v4933, 3
    %v6311 = vrot.slane %v4936, 2
    %v6312 = vsel %vm418, %v6311, %v6310
    %v6313 = vrot.slane %v4939, 1
    %v6314 = vsel %vm421, %v6313, %v6312
    %v6315 = vsel %vm424, %v4942, %v6314
    %v6316 = vrot.slane %v4945, 7
    %v6317 = vsel %vm427, %v6316, %v6315
    %v6318 = vrot.slane %v4948, 6
    %v6319 = vsel %vm430, %v6318, %v6317
    %v6320 = vrot.slane %v4951, 5
    %v6321 = vsel %vm433, %v6320, %v6319
    %v6322 = vrot.slane %v4954, 4
    %v6323 = vsel %vm436, %v6322, %v6321
    %v6324 = vrot.slane %v4934, 3
    %v6325 = vrot.slane %v4937, 2
    %v6326 = vsel %vm418, %v6325, %v6324
    %v6327 = vrot.slane %v4940, 1
    %v6328 = vsel %vm421, %v6327, %v6326
    %v6329 = vsel %vm424, %v4943, %v6328
    %v6330 = vrot.slane %v4946, 7
    %v6331 = vsel %vm427, %v6330, %v6329
    %v6332 = vrot.slane %v4949, 6
    %v6333 = vsel %vm430, %v6332, %v6331
    %v6334 = vrot.slane %v4952, 5
    %v6335 = vsel %vm433, %v6334, %v6333
    %v6336 = vrot.slane %v4955, 4
    %v6337 = vsel %vm436, %v6336, %v6335
    %v6338 = vrot.slane %v4935, 3
    %v6339 = vrot.slane %v4938, 2
    %v6340 = vsel %vm418, %v6339, %v6338
    %v6341 = vrot.slane %v4941, 1
    %v6342 = vsel %vm421, %v6341, %v6340
    %v6343 = vsel %vm424, %v4944, %v6342
    %v6344 = vrot.slane %v4947, 7
    %v6345 = vsel %vm427, %v6344, %v6343
    %v6346 = vrot.slane %v4950, 6
    %v6347 = vsel %vm430, %v6346, %v6345
    %v6348 = vrot.slane %v4953, 5
    %v6349 = vsel %vm433, %v6348, %v6347
    %v6350 = vrot.slane %v4956, 4
    %v6351 = vsel %vm436, %v6350, %v6349
    %v6355 = vadd.f32 %v6307, %v6323
    %v6356 = vadd.f32 %v6308, %v6337
    %v6357 = vadd.f32 %v6309, %v6351
    %v6358 = vrot.slane %v5069, 3
    %v6359 = vrot.slane %v5072, 2
    %v6360 = vsel %vm418, %v6359, %v6358
    %v6361 = vrot.slane %v5075, 1
    %v6362 = vsel %vm421, %v6361, %v6360
    %v6363 = vsel %vm424, %v5078, %v6362
    %v6364 = vrot.slane %v5081, 7
    %v6365 = vsel %vm427, %v6364, %v6363
    %v6366 = vrot.slane %v5084, 6
    %v6367 = vsel %vm430, %v6366, %v6365
    %v6368 = vrot.slane %v5087, 5
    %v6369 = vsel %vm433, %v6368, %v6367
    %v6370 = vrot.slane %v5090, 4
    %v6371 = vsel %vm436, %v6370, %v6369
    %v6372 = vrot.slane %v5070, 3
    %v6373 = vrot.slane %v5073, 2
    %v6374 = vsel %vm418, %v6373, %v6372
    %v6375 = vrot.slane %v5076, 1
    %v6376 = vsel %vm421, %v6375, %v6374
    %v6377 = vsel %vm424, %v5079, %v6376
    %v6378 = vrot.slane %v5082, 7
    %v6379 = vsel %vm427, %v6378, %v6377
    %v6380 = vrot.slane %v5085, 6
    %v6381 = vsel %vm430, %v6380, %v6379
    %v6382 = vrot.slane %v5088, 5
    %v6383 = vsel %vm433, %v6382, %v6381
    %v6384 = vrot.slane %v5091, 4
    %v6385 = vsel %vm436, %v6384, %v6383
    %v6386 = vrot.slane %v5071, 3
    %v6387 = vrot.slane %v5074, 2
    %v6388 = vsel %vm418, %v6387, %v6386
    %v6389 = vrot.slane %v5077, 1
    %v6390 = vsel %vm421, %v6389, %v6388
    %v6391 = vsel %vm424, %v5080, %v6390
    %v6392 = vrot.slane %v5083, 7
    %v6393 = vsel %vm427, %v6392, %v6391
    %v6394 = vrot.slane %v5086, 6
    %v6395 = vsel %vm430, %v6394, %v6393
    %v6396 = vrot.slane %v5089, 5
    %v6397 = vsel %vm433, %v6396, %v6395
    %v6398 = vrot.slane %v5092, 4
    %v6399 = vsel %vm436, %v6398, %v6397
    %v6403 = vadd.f32 %v6355, %v6371
    %v6404 = vadd.f32 %v6356, %v6385
    %v6405 = vadd.f32 %v6357, %v6399
    %v6406 = vrot.slane %v5197, 3
    %v6407 = vrot.slane %v5200, 2
    %v6408 = vsel %vm418, %v6407, %v6406
    %v6409 = vrot.slane %v5203, 1
    %v6410 = vsel %vm421, %v6409, %v6408
    %v6411 = vsel %vm424, %v5206, %v6410
    %v6412 = vrot.slane %v5209, 7
    %v6413 = vsel %vm427, %v6412, %v6411
    %v6414 = vrot.slane %v5212, 6
    %v6415 = vsel %vm430, %v6414, %v6413
    %v6416 = vrot.slane %v5215, 5
    %v6417 = vsel %vm433, %v6416, %v6415
    %v6418 = vrot.slane %v5218, 4
    %v6419 = vsel %vm436, %v6418, %v6417
    %v6420 = vrot.slane %v5198, 3
    %v6421 = vrot.slane %v5201, 2
    %v6422 = vsel %vm418, %v6421, %v6420
    %v6423 = vrot.slane %v5204, 1
    %v6424 = vsel %vm421, %v6423, %v6422
    %v6425 = vsel %vm424, %v5207, %v6424
    %v6426 = vrot.slane %v5210, 7
    %v6427 = vsel %vm427, %v6426, %v6425
    %v6428 = vrot.slane %v5213, 6
    %v6429 = vsel %vm430, %v6428, %v6427
    %v6430 = vrot.slane %v5216, 5
    %v6431 = vsel %vm433, %v6430, %v6429
    %v6432 = vrot.slane %v5219, 4
    %v6433 = vsel %vm436, %v6432, %v6431
    %v6434 = vrot.slane %v5199, 3
    %v6435 = vrot.slane %v5202, 2
    %v6436 = vsel %vm418, %v6435, %v6434
    %v6437 = vrot.slane %v5205, 1
    %v6438 = vsel %vm421, %v6437, %v6436
    %v6439 = vsel %vm424, %v5208, %v6438
    %v6440 = vrot.slane %v5211, 7
    %v6441 = vsel %vm427, %v6440, %v6439
    %v6442 = vrot.slane %v5214, 6
    %v6443 = vsel %vm430, %v6442, %v6441
    %v6444 = vrot.slane %v5217, 5
    %v6445 = vsel %vm433, %v6444, %v6443
    %v6446 = vrot.slane %v5220, 4
    %v6447 = vsel %vm436, %v6446, %v6445
    %v6451 = vadd.f32 %v6403, %v6419
    %v6452 = vadd.f32 %v6404, %v6433
    %v6453 = vadd.f32 %v6405, %v6447
    %v6454 = vxor.u32 %v6451, 2147483648
    %v6455 = vxor.u32 %v6452, 2147483648
    %v6456 = vxor.u32 %v6453, 2147483648
    %v6457 = vmul.f32 %v6454, 1.442695
    %v6458 = vpow.pop %v6457
    %v6459 = vmul.f32 %v6455, 1.442695
    %v6460 = vpow.pop %v6459
    %v6461 = vmul.f32 %v6456, 1.442695
    %v6462 = vpow.pop %v6461
    %v6463 = vadd.f32 %v6458, 1.0
    %v6464 = vadd.f32 %v6460, 1.0
    %v6465 = vadd.f32 %v6462, 1.0
    %v6466 = vrcp.pop %v6463
    %v6467 = vmul.f32 1.0, %v6466
    %v6468 = vrcp.pop %v6464
    %v6469 = vmul.f32 1.0, %v6468
    %v6470 = vrcp.pop %v6465
    %v6471 = vmul.f32 1.0, %v6470
    %v6472 = vtanh.pop %v6453
    %v6473 = vmul.f32 %v6467, %v6097
    %v6474 = vmul.f32 %v6469, %v6098
    %6476 = vrot.lane.b32.xlu0 %v6472, 96
    %v6477 = vpop.permute.xlu0 %6476
    %v6479 = vmul.f32 %v6467, %v6477
    %6481 = vrot.lane.b32.xlu0 %v6479, 96
    %v6482 = vpop.permute.xlu0 %6481
    %v6484 = vadd.f32 %v6473, %v6482
    %v6485 = vadd.f32 %v6474, %v6482
    %v6486 = vtanh.pop %v6484
    %v6487 = vtanh.pop %v6485
    %6490 = vrot.lane.b32.xlu0 %v6486, 96
    %v6491 = vpop.permute.xlu0 %6490
    %6492 = vrot.lane.b32.xlu0 %v6487, 96
    %v6493 = vpop.permute.xlu0 %6492
    %v6494 = vsel %vm172, %v6491, %v6493
    %v6497 = vmul.f32 %v6469, %v6494
    %v6498 = vmul.f32 %v6471, %v6493
    %6501 = vrot.lane.b32.xlu0 %v6497, 64
    %v6502 = vpop.permute.xlu0 %6501
    %6505 = vrot.lane.b32.xlu0 %v6498, 64
    %v6506 = vpop.permute.xlu0 %6505
    %vm6508 = vcmask 261120
    %v6509 = vsel %vm6508, %v4618, %v6502
    %v6510 = vsel %vm1239, %v6509, %v6506
    %v6511 = vld [vmem:[%s6] sm:$0xff]
    %v6512 = vld [vmem:[%s6 + $0x8] sm:$0xff]
    %v6513 = vld [vmem:[%s6 + $0x10] sm:$0xff]
    %v6514 = vld [vmem:[%s6 + $0x18] sm:$0xff]
    %v6515 = vld [vmem:[%s6 + $0x20] sm:$0xff]
    %v6516 = vld [vmem:[%s6 + $0x28] sm:$0xff]
    %v6517 = vld [vmem:[%s6 + $0x30] sm:$0xff]
    %v6518 = vld [vmem:[%s6 + $0x38] sm:$0xff]
    %v6519 = vld [vmem:[%s6 + $0x40] sm:$0xff]
    %v6520 = vld [vmem:[%s6 + $0x48] sm:$0xff]
    %v6521 = vld [vmem:[%s6 + $0x50] sm:$0xff]
    %v6522 = vld [vmem:[%s6 + $0x58] sm:$0xff]
    %v6523 = vld [vmem:[%s7] sm:$0x1]
    %v6525 = vlaneseq
    %v6526 = vshrl.u32 %v6525, 7
    %v6527 = vsub.s32 0, %v6526
    %v6528 = vrot.slane %v6523, %v6527
    %v6531 = vsel %vm172, %v6510, 0
    %6533 = vmatprep.subr.mxu0 0.0
    %6534 = vmatpush1.msra.mxu0 0.0
    %6535 = vmatprep.subr.mxu0 0.0
    %6536 = vmatpush1.msra.mxu0 0.0
    %6537 = vmatprep.subr.mxu0 0.0
    %6538 = vmatpush1.msra.mxu0 0.0
    %6539 = vmatprep.subr.mxu0 0.0
    %6540 = vmatpush1.msra.mxu0 0.0
    %6541 = vmatprep.subr.mxu0 0.0
    %6542 = vmatpush1.msra.mxu0 %v6522
    %6543 = vmatprep.subr.mxu0 0.0
    %6544 = vmatpush1.msra.mxu0 %v6521
    %6545 = vmatprep.subr.mxu0 0.0
    %6546 = vmatpush1.msra.mxu0 %v6520
    %6547 = vmatprep.subr.mxu0 0.0
    %6548 = vmatpush1.msra.mxu0 %v6519
    %6549 = vmatprep.subr.mxu0 0.0
    %6550 = vmatpush1.msra.mxu0 %v6518
    %6551 = vmatprep.subr.mxu0 0.0
    %6552 = vmatpush1.msra.mxu0 %v6517
    %6553 = vmatprep.subr.mxu0 0.0
    %6554 = vmatpush1.msra.mxu0 %v6516
    %6555 = vmatprep.subr.mxu0 0.0
    %6556 = vmatpush1.msra.mxu0 %v6515
    %6557 = vmatprep.subr.mxu0 0.0
    %6558 = vmatpush1.msra.mxu0 %v6514
    %6559 = vmatprep.subr.mxu0 0.0
    %6560 = vmatpush1.msra.mxu0 %v6513
    %6561 = vmatprep.subr.mxu0 0.0
    %6562 = vmatpush1.msra.mxu0 %v6512
    %6563 = vmatprep.subr.mxu0 0.0
    %6564 = vmatpush1.msra.mxu0 %v6511
    %6565 = vmatprep.subr.mxu0 0.0
    %6566 = vmatpush2.msra.mxu0 0.0
    %6567 = vmatprep.subr.mxu0 0.0
    %6568 = vmatpush2.msra.mxu0 0.0
    %6569 = vmatprep.subr.mxu0 0.0
    %6570 = vmatpush2.msra.mxu0 0.0
    %6571 = vmatprep.subr.mxu0 0.0
    %6572 = vmatpush2.msra.mxu0 0.0
    %6573 = vmatprep.subr.mxu0 0.0
    %6574 = vmatpush2.msra.mxu0 0.0
    %6575 = vmatprep.subr.mxu0 0.0
    %6576 = vmatpush2.msra.mxu0 0.0
    %6577 = vmatprep.subr.mxu0 0.0
    %6578 = vmatpush2.msra.mxu0 0.0
    %6579 = vmatprep.subr.mxu0 0.0
    %6580 = vmatpush2.msra.mxu0 0.0
    %6581 = vmatprep.subr.mxu0 0.0
    %6582 = vmatpush2.msra.mxu0 0.0
    %6583 = vmatprep.subr.mxu0 0.0
    %6584 = vmatpush2.msra.mxu0 0.0
    %6585 = vmatprep.subr.mxu0 0.0
    %6586 = vmatpush2.msra.mxu0 0.0
    %6587 = vmatprep.subr.mxu0 0.0
    %6588 = vmatpush2.msra.mxu0 0.0
    %6589 = vmatprep.subr.mxu0 0.0
    %6590 = vmatpush2.msra.mxu0 0.0
    %6591 = vmatprep.subr.mxu0 0.0
    %6592 = vmatpush2.msra.mxu0 0.0
    %6593 = vmatprep.subr.mxu0 0.0
    %6594 = vmatpush2.msra.mxu0 0.0
    %6595 = vmatprep.subr.mxu0 0.0
    %6596 = vmatpush2.msra.mxu0 0.0
    %6597 = vmatprep.mubr.f32.mxu0 0.0
    %6598 = vmatmul.mubr.f32.gmra.mxu0 %v6531
    %v6599 = vpop.f32.mrf.mxu0
    %v6600 = vadd.f32 %v6528, %v6599
    %v6601 = vpop.f32.mrf.mxu0
    %6602 = vdwg.mxu0
    %v6603 = vmax.f32 %v6600, 0.0
    %v6604 = vld [vmem:[%s8] sm:$0xff]
    %v6605 = vld [vmem:[%s8 + $0x8] sm:$0xff]
    %v6606 = vld [vmem:[%s8 + $0x10] sm:$0xff]
    %v6607 = vld [vmem:[%s8 + $0x18] sm:$0xff]
    %v6608 = vld [vmem:[%s9] sm:$0x1]
    %v6610 = vlaneseq
    %v6611 = vshrl.u32 %v6610, 7
    %v6612 = vsub.s32 0, %v6611
    %v6613 = vrot.slane %v6608, %v6612
    %v6616 = vsel %vm6508, %v6603, 0
    %6618 = vmatprep.subr.mxu0 0.0
    %6619 = vmatpush1.msra.mxu0 0.0
    %6620 = vmatprep.subr.mxu0 0.0
    %6621 = vmatpush1.msra.mxu0 0.0
    %6622 = vmatprep.subr.mxu0 0.0
    %6623 = vmatpush1.msra.mxu0 0.0
    %6624 = vmatprep.subr.mxu0 0.0
    %6625 = vmatpush1.msra.mxu0 0.0
    %6626 = vmatprep.subr.mxu0 0.0
    %6627 = vmatpush1.msra.mxu0 0.0
    %6628 = vmatprep.subr.mxu0 0.0
    %6629 = vmatpush1.msra.mxu0 0.0
    %6630 = vmatprep.subr.mxu0 0.0
    %6631 = vmatpush1.msra.mxu0 0.0
    %6632 = vmatprep.subr.mxu0 0.0
    %6633 = vmatpush1.msra.mxu0 0.0
    %6634 = vmatprep.subr.mxu0 0.0
    %6635 = vmatpush1.msra.mxu0 0.0
    %6636 = vmatprep.subr.mxu0 0.0
    %6637 = vmatpush1.msra.mxu0 0.0
    %6638 = vmatprep.subr.mxu0 0.0
    %6639 = vmatpush1.msra.mxu0 0.0
    %6640 = vmatprep.subr.mxu0 0.0
    %6641 = vmatpush1.msra.mxu0 0.0
    %6642 = vmatprep.subr.mxu0 0.0
    %6643 = vmatpush1.msra.mxu0 %v6607
    %6644 = vmatprep.subr.mxu0 0.0
    %6645 = vmatpush1.msra.mxu0 %v6606
    %6646 = vmatprep.subr.mxu0 0.0
    %6647 = vmatpush1.msra.mxu0 %v6605
    %6648 = vmatprep.subr.mxu0 0.0
    %6649 = vmatpush1.msra.mxu0 %v6604
    %6650 = vmatprep.subr.mxu0 0.0
    %6651 = vmatpush2.msra.mxu0 0.0
    %6652 = vmatprep.subr.mxu0 0.0
    %6653 = vmatpush2.msra.mxu0 0.0
    %6654 = vmatprep.subr.mxu0 0.0
    %6655 = vmatpush2.msra.mxu0 0.0
    %6656 = vmatprep.subr.mxu0 0.0
    %6657 = vmatpush2.msra.mxu0 0.0
    %6658 = vmatprep.subr.mxu0 0.0
    %6659 = vmatpush2.msra.mxu0 0.0
    %6660 = vmatprep.subr.mxu0 0.0
    %6661 = vmatpush2.msra.mxu0 0.0
    %6662 = vmatprep.subr.mxu0 0.0
    %6663 = vmatpush2.msra.mxu0 0.0
    %6664 = vmatprep.subr.mxu0 0.0
    %6665 = vmatpush2.msra.mxu0 0.0
    %6666 = vmatprep.subr.mxu0 0.0
    %6667 = vmatpush2.msra.mxu0 0.0
    %6668 = vmatprep.subr.mxu0 0.0
    %6669 = vmatpush2.msra.mxu0 0.0
    %6670 = vmatprep.subr.mxu0 0.0
    %6671 = vmatpush2.msra.mxu0 0.0
    %6672 = vmatprep.subr.mxu0 0.0
    %6673 = vmatpush2.msra.mxu0 0.0
    %6674 = vmatprep.subr.mxu0 0.0
    %6675 = vmatpush2.msra.mxu0 0.0
    %6676 = vmatprep.subr.mxu0 0.0
    %6677 = vmatpush2.msra.mxu0 0.0
    %6678 = vmatprep.subr.mxu0 0.0
    %6679 = vmatpush2.msra.mxu0 0.0
    %6680 = vmatprep.subr.mxu0 0.0
    %6681 = vmatpush2.msra.mxu0 0.0
    %6682 = vmatprep.mubr.f32.mxu0 0.0
    %6683 = vmatmul.mubr.f32.gmra.mxu0 %v6616
    %v6684 = vpop.f32.mrf.mxu0
    %v6685 = vadd.f32 %v6613, %v6684
    %v6686 = vpop.f32.mrf.mxu0
    %6687 = vdwg.mxu0
    %vm6688 = vcmask 31744
    %v6689 = vsel %vm6688, %v6685, -inf
    %6690 = vmax.xlane.f32.xlu0 %v6689
    %v6691 = vpop.xlane.xlu0 %6690
    %v6692 = vsub.f32 %v6685, %v6691
    %v6693 = vmul.f32 %v6692, 1.442695
    %v6694 = vpow.pop %v6693
    %v6695 = vsel %vm6688, %v6694, 0.0
    %6696 = vadd.xlane.f32.xlu0 %v6695
    %v6697 = vpop.xlane.xlu0 %6696
    %v6698 = vrcp.pop %v6697
    %v6699 = vmul.f32 %v6694, %v6698
    %6700 = vst.msk [vmem:[%s21] sm:$0xff] %vm6688, %v6699
    %v6701 = vld [vmem:[%s10] sm:$0xff]
    %v6702 = vld [vmem:[%s10 + $0x8] sm:$0xff]
    %v6703 = vld [vmem:[%s10 + $0x10] sm:$0xff]
    %v6704 = vld [vmem:[%s10 + $0x18] sm:$0xff]
    %v6705 = vld [vmem:[%s11] sm:$0x1]
    %v6707 = vlaneseq
    %v6708 = vshrl.u32 %v6707, 7
    %v6709 = vsub.s32 0, %v6708
    %v6710 = vrot.slane %v6705, %v6709
    %v6712 = vsel %vm6508, %v4618, 0
    %6714 = vmatprep.subr.mxu0 0.0
    %6715 = vmatpush1.msra.mxu0 0.0
    %6716 = vmatprep.subr.mxu0 0.0
    %6717 = vmatpush1.msra.mxu0 0.0
    %6718 = vmatprep.subr.mxu0 0.0
    %6719 = vmatpush1.msra.mxu0 0.0
    %6720 = vmatprep.subr.mxu0 0.0
    %6721 = vmatpush1.msra.mxu0 0.0
    %6722 = vmatprep.subr.mxu0 0.0
    %6723 = vmatpush1.msra.mxu0 0.0
    %6724 = vmatprep.subr.mxu0 0.0
    %6725 = vmatpush1.msra.mxu0 0.0
    %6726 = vmatprep.subr.mxu0 0.0
    %6727 = vmatpush1.msra.mxu0 0.0
    %6728 = vmatprep.subr.mxu0 0.0
    %6729 = vmatpush1.msra.mxu0 0.0
    %6730 = vmatprep.subr.mxu0 0.0
    %6731 = vmatpush1.msra.mxu0 0.0
    %6732 = vmatprep.subr.mxu0 0.0
    %6733 = vmatpush1.msra.mxu0 0.0
    %6734 = vmatprep.subr.mxu0 0.0
    %6735 = vmatpush1.msra.mxu0 0.0
    %6736 = vmatprep.subr.mxu0 0.0
    %6737 = vmatpush1.msra.mxu0 0.0
    %6738 = vmatprep.subr.mxu0 0.0
    %6739 = vmatpush1.msra.mxu0 %v6704
    %6740 = vmatprep.subr.mxu0 0.0
    %6741 = vmatpush1.msra.mxu0 %v6703
    %6742 = vmatprep.subr.mxu0 0.0
    %6743 = vmatpush1.msra.mxu0 %v6702
    %6744 = vmatprep.subr.mxu0 0.0
    %6745 = vmatpush1.msra.mxu0 %v6701
    %6746 = vmatprep.subr.mxu0 0.0
    %6747 = vmatpush2.msra.mxu0 0.0
    %6748 = vmatprep.subr.mxu0 0.0
    %6749 = vmatpush2.msra.mxu0 0.0
    %6750 = vmatprep.subr.mxu0 0.0
    %6751 = vmatpush2.msra.mxu0 0.0
    %6752 = vmatprep.subr.mxu0 0.0
    %6753 = vmatpush2.msra.mxu0 0.0
    %6754 = vmatprep.subr.mxu0 0.0
    %6755 = vmatpush2.msra.mxu0 0.0
    %6756 = vmatprep.subr.mxu0 0.0
    %6757 = vmatpush2.msra.mxu0 0.0
    %6758 = vmatprep.subr.mxu0 0.0
    %6759 = vmatpush2.msra.mxu0 0.0
    %6760 = vmatprep.subr.mxu0 0.0
    %6761 = vmatpush2.msra.mxu0 0.0
    %6762 = vmatprep.subr.mxu0 0.0
    %6763 = vmatpush2.msra.mxu0 0.0
    %6764 = vmatprep.subr.mxu0 0.0
    %6765 = vmatpush2.msra.mxu0 0.0
    %6766 = vmatprep.subr.mxu0 0.0
    %6767 = vmatpush2.msra.mxu0 0.0
    %6768 = vmatprep.subr.mxu0 0.0
    %6769 = vmatpush2.msra.mxu0 0.0
    %6770 = vmatprep.subr.mxu0 0.0
    %6771 = vmatpush2.msra.mxu0 0.0
    %6772 = vmatprep.subr.mxu0 0.0
    %6773 = vmatpush2.msra.mxu0 0.0
    %6774 = vmatprep.subr.mxu0 0.0
    %6775 = vmatpush2.msra.mxu0 0.0
    %6776 = vmatprep.subr.mxu0 0.0
    %6777 = vmatpush2.msra.mxu0 0.0
    %6778 = vmatprep.mubr.f32.mxu0 0.0
    %6779 = vmatmul.mubr.f32.gmra.mxu0 %v6712
    %v6780 = vpop.f32.mrf.mxu0
    %v6781 = vadd.f32 %v6710, %v6780
    %v6782 = vpop.f32.mrf.mxu0
    %6783 = vdwg.mxu0
    %v6784 = vmax.f32 %v6781, 0.0
    %v6785 = vld [vmem:[%s12] sm:$0xff]
    %v6786 = vld [vmem:[%s12 + $0x8] sm:$0xff]
    %v6787 = vld [vmem:[%s12 + $0x10] sm:$0xff]
    %v6788 = vld [vmem:[%s12 + $0x18] sm:$0xff]
    %v6789 = vld [vmem:[#allocation2] sm:$0x1]
    %v6791 = vlaneseq
    %v6792 = vshrl.u32 %v6791, 7
    %v6793 = vsub.s32 0, %v6792
    %v6794 = vrot.slane %v6789, %v6793
    %v6797 = vsel %vm6508, %v6784, 0
    %6799 = vmatprep.subr.mxu0 0.0
    %6800 = vmatpush1.msra.mxu0 0.0
    %6801 = vmatprep.subr.mxu0 0.0
    %6802 = vmatpush1.msra.mxu0 0.0
    %6803 = vmatprep.subr.mxu0 0.0
    %6804 = vmatpush1.msra.mxu0 0.0
    %6805 = vmatprep.subr.mxu0 0.0
    %6806 = vmatpush1.msra.mxu0 0.0
    %6807 = vmatprep.subr.mxu0 0.0
    %6808 = vmatpush1.msra.mxu0 0.0
    %6809 = vmatprep.subr.mxu0 0.0
    %6810 = vmatpush1.msra.mxu0 0.0
    %6811 = vmatprep.subr.mxu0 0.0
    %6812 = vmatpush1.msra.mxu0 0.0
    %6813 = vmatprep.subr.mxu0 0.0
    %6814 = vmatpush1.msra.mxu0 0.0
    %6815 = vmatprep.subr.mxu0 0.0
    %6816 = vmatpush1.msra.mxu0 0.0
    %6817 = vmatprep.subr.mxu0 0.0
    %6818 = vmatpush1.msra.mxu0 0.0
    %6819 = vmatprep.subr.mxu0 0.0
    %6820 = vmatpush1.msra.mxu0 0.0
    %6821 = vmatprep.subr.mxu0 0.0
    %6822 = vmatpush1.msra.mxu0 0.0
    %6823 = vmatprep.subr.mxu0 0.0
    %6824 = vmatpush1.msra.mxu0 %v6788
    %6825 = vmatprep.subr.mxu0 0.0
    %6826 = vmatpush1.msra.mxu0 %v6787
    %6827 = vmatprep.subr.mxu0 0.0
    %6828 = vmatpush1.msra.mxu0 %v6786
    %6829 = vmatprep.subr.mxu0 0.0
    %6830 = vmatpush1.msra.mxu0 %v6785
    %6831 = vmatprep.subr.mxu0 0.0
    %6832 = vmatpush2.msra.mxu0 0.0
    %6833 = vmatprep.subr.mxu0 0.0
    %6834 = vmatpush2.msra.mxu0 0.0
    %6835 = vmatprep.subr.mxu0 0.0
    %6836 = vmatpush2.msra.mxu0 0.0
    %6837 = vmatprep.subr.mxu0 0.0
    %6838 = vmatpush2.msra.mxu0 0.0
    %6839 = vmatprep.subr.mxu0 0.0
    %6840 = vmatpush2.msra.mxu0 0.0
    %6841 = vmatprep.subr.mxu0 0.0
    %6842 = vmatpush2.msra.mxu0 0.0
    %6843 = vmatprep.subr.mxu0 0.0
    %6844 = vmatpush2.msra.mxu0 0.0
    %6845 = vmatprep.subr.mxu0 0.0
    %6846 = vmatpush2.msra.mxu0 0.0
    %6847 = vmatprep.subr.mxu0 0.0
    %6848 = vmatpush2.msra.mxu0 0.0
    %6849 = vmatprep.subr.mxu0 0.0
    %6850 = vmatpush2.msra.mxu0 0.0
    %6851 = vmatprep.subr.mxu0 0.0
    %6852 = vmatpush2.msra.mxu0 0.0
    %6853 = vmatprep.subr.mxu0 0.0
    %6854 = vmatpush2.msra.mxu0 0.0
    %6855 = vmatprep.subr.mxu0 0.0
    %6856 = vmatpush2.msra.mxu0 0.0
    %6857 = vmatprep.subr.mxu0 0.0
    %6858 = vmatpush2.msra.mxu0 0.0
    %6859 = vmatprep.subr.mxu0 0.0
    %6860 = vmatpush2.msra.mxu0 0.0
    %6861 = vmatprep.subr.mxu0 0.0
    %6862 = vmatpush2.msra.mxu0 0.0
    %6863 = vmatprep.mubr.f32.mxu0 0.0
    %6864 = vmatmul.mubr.f32.gmra.mxu0 %v6797
    %v6865 = vpop.f32.mrf.mxu0
    %v6866 = vadd.f32 %v6794, %v6865
    %v6867 = vpop.f32.mrf.mxu0
    %6868 = vdwg.mxu0
    %v6869 = vxor.u32 %v6866, 2147483648
    %v6870 = vmul.f32 %v6869, 1.442695
    %v6871 = vpow.pop %v6870
    %v6872 = vadd.f32 %v6871, 1.0
    %v6873 = vrcp.pop %v6872
    %v6874 = vmul.f32 1.0, %v6873
    %v6875 = vmul.f32 %v6874, 60.0
    %vm6876 = vcmask 7168
    %6877 = vst.msk [vmem:[%s22] sm:$0xff] %vm6876, %v6875
    %v6878 = vld [vmem:[%s14] sm:$0xff]
    %v6879 = vld [vmem:[%s14 + $0x8] sm:$0xff]
    %v6880 = vld [vmem:[%s14 + $0x10] sm:$0xff]
    %v6881 = vld [vmem:[%s14 + $0x18] sm:$0xff]
    %v6882 = vld [vmem:[%s14 + $0x20] sm:$0xff]
    %v6883 = vld [vmem:[%s14 + $0x28] sm:$0xff]
    %v6884 = vld [vmem:[%s14 + $0x30] sm:$0xff]
    %v6885 = vld [vmem:[%s14 + $0x38] sm:$0xff]
    %v6886 = vld [vmem:[%s14 + $0x40] sm:$0xff]
    %v6887 = vld [vmem:[%s14 + $0x48] sm:$0xff]
    %v6888 = vld [vmem:[%s14 + $0x50] sm:$0xff]
    %v6889 = vld [vmem:[%s14 + $0x58] sm:$0xff]
    %v6890 = vld [vmem:[%s15] sm:$0x1]
    %v6892 = vlaneseq
    %v6893 = vshrl.u32 %v6892, 7
    %v6894 = vsub.s32 0, %v6893
    %v6895 = vrot.slane %v6890, %v6894
    %6897 = vmatprep.subr.mxu0 0.0
    %6898 = vmatpush1.msra.mxu0 0.0
    %6899 = vmatprep.subr.mxu0 0.0
    %6900 = vmatpush1.msra.mxu0 0.0
    %6901 = vmatprep.subr.mxu0 0.0
    %6902 = vmatpush1.msra.mxu0 0.0
    %6903 = vmatprep.subr.mxu0 0.0
    %6904 = vmatpush1.msra.mxu0 0.0
    %6905 = vmatprep.subr.mxu0 0.0
    %6906 = vmatpush1.msra.mxu0 %v6889
    %6907 = vmatprep.subr.mxu0 0.0
    %6908 = vmatpush1.msra.mxu0 %v6888
    %6909 = vmatprep.subr.mxu0 0.0
    %6910 = vmatpush1.msra.mxu0 %v6887
    %6911 = vmatprep.subr.mxu0 0.0
    %6912 = vmatpush1.msra.mxu0 %v6886
    %6913 = vmatprep.subr.mxu0 0.0
    %6914 = vmatpush1.msra.mxu0 %v6885
    %6915 = vmatprep.subr.mxu0 0.0
    %6916 = vmatpush1.msra.mxu0 %v6884
    %6917 = vmatprep.subr.mxu0 0.0
    %6918 = vmatpush1.msra.mxu0 %v6883
    %6919 = vmatprep.subr.mxu0 0.0
    %6920 = vmatpush1.msra.mxu0 %v6882
    %6921 = vmatprep.subr.mxu0 0.0
    %6922 = vmatpush1.msra.mxu0 %v6881
    %6923 = vmatprep.subr.mxu0 0.0
    %6924 = vmatpush1.msra.mxu0 %v6880
    %6925 = vmatprep.subr.mxu0 0.0
    %6926 = vmatpush1.msra.mxu0 %v6879
    %6927 = vmatprep.subr.mxu0 0.0
    %6928 = vmatpush1.msra.mxu0 %v6878
    %6929 = vmatprep.subr.mxu0 0.0
    %6930 = vmatpush2.msra.mxu0 0.0
    %6931 = vmatprep.subr.mxu0 0.0
    %6932 = vmatpush2.msra.mxu0 0.0
    %6933 = vmatprep.subr.mxu0 0.0
    %6934 = vmatpush2.msra.mxu0 0.0
    %6935 = vmatprep.subr.mxu0 0.0
    %6936 = vmatpush2.msra.mxu0 0.0
    %6937 = vmatprep.subr.mxu0 0.0
    %6938 = vmatpush2.msra.mxu0 0.0
    %6939 = vmatprep.subr.mxu0 0.0
    %6940 = vmatpush2.msra.mxu0 0.0
    %6941 = vmatprep.subr.mxu0 0.0
    %6942 = vmatpush2.msra.mxu0 0.0
    %6943 = vmatprep.subr.mxu0 0.0
    %6944 = vmatpush2.msra.mxu0 0.0
    %6945 = vmatprep.subr.mxu0 0.0
    %6946 = vmatpush2.msra.mxu0 0.0
    %6947 = vmatprep.subr.mxu0 0.0
    %6948 = vmatpush2.msra.mxu0 0.0
    %6949 = vmatprep.subr.mxu0 0.0
    %6950 = vmatpush2.msra.mxu0 0.0
    %6951 = vmatprep.subr.mxu0 0.0
    %6952 = vmatpush2.msra.mxu0 0.0
    %6953 = vmatprep.subr.mxu0 0.0
    %6954 = vmatpush2.msra.mxu0 0.0
    %6955 = vmatprep.subr.mxu0 0.0
    %6956 = vmatpush2.msra.mxu0 0.0
    %6957 = vmatprep.subr.mxu0 0.0
    %6958 = vmatpush2.msra.mxu0 0.0
    %6959 = vmatprep.subr.mxu0 0.0
    %6960 = vmatpush2.msra.mxu0 0.0
    %6961 = vmatprep.mubr.f32.mxu0 0.0
    %6962 = vmatmul.mubr.f32.gmra.mxu0 %v6531
    %v6963 = vpop.f32.mrf.mxu0
    %v6964 = vadd.f32 %v6895, %v6963
    %v6965 = vpop.f32.mrf.mxu0
    %6966 = vdwg.mxu0
    %v6967 = vmax.f32 %v6964, 0.0
    %v6968 = vld [vmem:[%s18] sm:$0xff]
    %v6969 = vld [vmem:[%s18 + $0x8] sm:$0xff]
    %v6970 = vld [vmem:[%s18 + $0x10] sm:$0xff]
    %v6971 = vld [vmem:[%s18 + $0x18] sm:$0xff]
    %v6972 = vld [vmem:[%s19] sm:$0x1]
    %v6973 = vld [vmem:[%s16] sm:$0xff]
    %v6974 = vld [vmem:[%s16 + $0x8] sm:$0xff]
    %v6975 = vld [vmem:[%s17] sm:$0x1]
    %v6977 = vlaneseq
    %v6978 = vshrl.u32 %v6977, 7
    %v6979 = vsub.s32 0, %v6978
    %v6980 = vrot.slane %v6975, %v6979
    %vm6982 = vcmask 130048
    %v6984 = vsel %vm6982, %v6967, 0
    %6986 = vmatprep.subr.mxu0 0.0
    %6987 = vmatpush1.msra.mxu0 0.0
    %6988 = vmatprep.subr.mxu0 0.0
    %6989 = vmatpush1.msra.mxu0 0.0
    %6990 = vmatprep.subr.mxu0 0.0
    %6991 = vmatpush1.msra.mxu0 0.0
    %6992 = vmatprep.subr.mxu0 0.0
    %6993 = vmatpush1.msra.mxu0 0.0
    %6994 = vmatprep.subr.mxu0 0.0
    %6995 = vmatpush1.msra.mxu0 0.0
    %6996 = vmatprep.subr.mxu0 0.0
    %6997 = vmatpush1.msra.mxu0 0.0
    %6998 = vmatprep.subr.mxu0 0.0
    %6999 = vmatpush1.msra.mxu0 0.0
    %7000 = vmatprep.subr.mxu0 0.0
    %7001 = vmatpush1.msra.mxu0 0.0
    %7002 = vmatprep.subr.mxu0 0.0
    %7003 = vmatpush1.msra.mxu0 0.0
    %7004 = vmatprep.subr.mxu0 0.0
    %7005 = vmatpush1.msra.mxu0 0.0
    %7006 = vmatprep.subr.mxu0 0.0
    %7007 = vmatpush1.msra.mxu0 0.0
    %7008 = vmatprep.subr.mxu0 0.0
    %7009 = vmatpush1.msra.mxu0 0.0
    %7010 = vmatprep.subr.mxu0 0.0
    %7011 = vmatpush1.msra.mxu0 0.0
    %7012 = vmatprep.subr.mxu0 0.0
    %7013 = vmatpush1.msra.mxu0 0.0
    %7014 = vmatprep.subr.mxu0 0.0
    %7015 = vmatpush1.msra.mxu0 %v6974
    %7016 = vmatprep.subr.mxu0 0.0
    %7017 = vmatpush1.msra.mxu0 %v6973
    %7018 = vmatprep.subr.mxu0 0.0
    %7019 = vmatpush2.msra.mxu0 0.0
    %7020 = vmatprep.subr.mxu0 0.0
    %7021 = vmatpush2.msra.mxu0 0.0
    %7022 = vmatprep.subr.mxu0 0.0
    %7023 = vmatpush2.msra.mxu0 0.0
    %7024 = vmatprep.subr.mxu0 0.0
    %7025 = vmatpush2.msra.mxu0 0.0
    %7026 = vmatprep.subr.mxu0 0.0
    %7027 = vmatpush2.msra.mxu0 0.0
    %7028 = vmatprep.subr.mxu0 0.0
    %7029 = vmatpush2.msra.mxu0 0.0
    %7030 = vmatprep.subr.mxu0 0.0
    %7031 = vmatpush2.msra.mxu0 0.0
    %7032 = vmatprep.subr.mxu0 0.0
    %7033 = vmatpush2.msra.mxu0 0.0
    %7034 = vmatprep.subr.mxu0 0.0
    %7035 = vmatpush2.msra.mxu0 0.0
    %7036 = vmatprep.subr.mxu0 0.0
    %7037 = vmatpush2.msra.mxu0 0.0
    %7038 = vmatprep.subr.mxu0 0.0
    %7039 = vmatpush2.msra.mxu0 0.0
    %7040 = vmatprep.subr.mxu0 0.0
    %7041 = vmatpush2.msra.mxu0 0.0
    %7042 = vmatprep.subr.mxu0 0.0
    %7043 = vmatpush2.msra.mxu0 0.0
    %7044 = vmatprep.subr.mxu0 0.0
    %7045 = vmatpush2.msra.mxu0 0.0
    %7046 = vmatprep.subr.mxu0 0.0
    %7047 = vmatpush2.msra.mxu0 0.0
    %7048 = vmatprep.subr.mxu0 0.0
    %7049 = vmatpush2.msra.mxu0 0.0
    %7050 = vmatprep.mubr.f32.mxu0 0.0
    %7051 = vmatmul.mubr.f32.gmra.mxu0 %v6984
    %v7052 = vpop.f32.mrf.mxu0
    %v7053 = vadd.f32 %v6980, %v7052
    %v7054 = vpop.f32.mrf.mxu0
    %7055 = vdwg.mxu0
    %v7056 = vsel %vm6508, 0.0, 0
    %7058 = vmatprep.subr.mxu0 0.0
    %7059 = vmatpush1.msra.mxu0 0.0
    %7060 = vmatprep.subr.mxu0 0.0
    %7061 = vmatpush1.msra.mxu0 0.0
    %7062 = vmatprep.subr.mxu0 0.0
    %7063 = vmatpush1.msra.mxu0 0.0
    %7064 = vmatprep.subr.mxu0 0.0
    %7065 = vmatpush1.msra.mxu0 0.0
    %7066 = vmatprep.subr.mxu0 0.0
    %7067 = vmatpush1.msra.mxu0 0.0
    %7068 = vmatprep.subr.mxu0 0.0
    %7069 = vmatpush1.msra.mxu0 0.0
    %7070 = vmatprep.subr.mxu0 0.0
    %7071 = vmatpush1.msra.mxu0 0.0
    %7072 = vmatprep.subr.mxu0 0.0
    %7073 = vmatpush1.msra.mxu0 0.0
    %7074 = vmatprep.subr.mxu0 0.0
    %7075 = vmatpush1.msra.mxu0 0.0
    %7076 = vmatprep.subr.mxu0 0.0
    %7077 = vmatpush1.msra.mxu0 0.0
    %7078 = vmatprep.subr.mxu0 0.0
    %7079 = vmatpush1.msra.mxu0 0.0
    %7080 = vmatprep.subr.mxu0 0.0
    %7081 = vmatpush1.msra.mxu0 0.0
    %7082 = vmatprep.subr.mxu0 0.0
    %7083 = vmatpush1.msra.mxu0 %v6971
    %7084 = vmatprep.subr.mxu0 0.0
    %7085 = vmatpush1.msra.mxu0 %v6970
    %7086 = vmatprep.subr.mxu0 0.0
    %7087 = vmatpush1.msra.mxu0 %v6969
    %7088 = vmatprep.subr.mxu0 0.0
    %7089 = vmatpush1.msra.mxu0 %v6968
    %7090 = vmatprep.subr.mxu0 0.0
    %7091 = vmatpush2.msra.mxu0 0.0
    %7092 = vmatprep.subr.mxu0 0.0
    %7093 = vmatpush2.msra.mxu0 0.0
    %7094 = vmatprep.subr.mxu0 0.0
    %7095 = vmatpush2.msra.mxu0 0.0
    %7096 = vmatprep.subr.mxu0 0.0
    %7097 = vmatpush2.msra.mxu0 0.0
    %7098 = vmatprep.subr.mxu0 0.0
    %7099 = vmatpush2.msra.mxu0 0.0
    %7100 = vmatprep.subr.mxu0 0.0
    %7101 = vmatpush2.msra.mxu0 0.0
    %7102 = vmatprep.subr.mxu0 0.0
    %7103 = vmatpush2.msra.mxu0 0.0
    %7104 = vmatprep.subr.mxu0 0.0
    %7105 = vmatpush2.msra.mxu0 0.0
    %7106 = vmatprep.subr.mxu0 0.0
    %7107 = vmatpush2.msra.mxu0 0.0
    %7108 = vmatprep.subr.mxu0 0.0
    %7109 = vmatpush2.msra.mxu0 0.0
    %7110 = vmatprep.subr.mxu0 0.0
    %7111 = vmatpush2.msra.mxu0 0.0
    %7112 = vmatprep.subr.mxu0 0.0
    %7113 = vmatpush2.msra.mxu0 0.0
    %7114 = vmatprep.subr.mxu0 0.0
    %7115 = vmatpush2.msra.mxu0 0.0
    %7116 = vmatprep.subr.mxu0 0.0
    %7117 = vmatpush2.msra.mxu0 0.0
    %7118 = vmatprep.subr.mxu0 0.0
    %7119 = vmatpush2.msra.mxu0 0.0
    %7120 = vmatprep.subr.mxu0 0.0
    %7121 = vmatpush2.msra.mxu0 0.0
    %7122 = vmatprep.mubr.f32.mxu0 0.0
    %7123 = vmatmul.mubr.f32.gmra.mxu0 %v7056
    %v7124 = vpop.f32.mrf.mxu0
    %v7125 = vadd.f32 0.0, %v7124
    %v7126 = vpop.f32.mrf.mxu0
    %7127 = vdwg.mxu0
    %v7128 = vadd.f32 %v7053, %v7125
    %v7129 = vxor.u32 %v7128, 2147483648
    %v7130 = vmul.f32 %v7129, 1.442695
    %v7131 = vpow.pop %v7130
    %v7132 = vadd.f32 %v7131, 1.0
    %v7133 = vrcp.pop %v7132
    %v7134 = vmul.f32 1.0, %v7133
    %v7135 = vtanh.pop %v7128
    %v7136 = vmul.f32 %v7134, 0.0
    %7138 = vrot.lane.b32.xlu0 %v7135, 32
    %v7139 = vpop.permute.xlu0 %7138
    %v7141 = vmul.f32 %v7134, %v7139
    %7143 = vrot.lane.b32.xlu0 %v7141, 32
    %v7144 = vpop.permute.xlu0 %7143
    %v7146 = vadd.f32 %v7136, %v7144
    %v7147 = vtanh.pop %v7146
    %7149 = vrot.lane.b32.xlu0 %v7147, 32
    %v7150 = vpop.permute.xlu0 %7149
    %v7152 = vmul.f32 %v7134, %v7150
    %v7153 = vmax.f32 %v7152, 0.0
    %v7155 = vlaneseq
    %v7156 = vshrl.u32 %v7155, 7
    %v7157 = vsub.s32 0, %v7156
    %v7158 = vrot.slane %v6972, %v7157
    %7159 = vrot.lane.b32.xlu0 %v7158, 64
    %v7160 = vpop.permute.xlu0 %7159
    %v7162 = vmul.f32 %v7153, %v7160
    %7164 = vrot.lane.b32.xlu0 %v7162, 64
    %v7165 = vpop.permute.xlu0 %7164
    %v7167 = vsel %vm6508, %v7165, 0.0
    %7168 = vadd.xlane.f32.xlu0 %v7167
    %v7169 = vpop.xlane.xlu0 %7168
    %7171 = vrot.lane.b32.xlu0 %v7152, 64
    %v7172 = vpop.permute.xlu0 %7171
    %v7173 = vsel %vm6508, %v7172, 0
    %7175 = vmatprep.subr.mxu0 0.0
    %7176 = vmatpush1.msra.mxu0 0.0
    %7177 = vmatprep.subr.mxu0 0.0
    %7178 = vmatpush1.msra.mxu0 0.0
    %7179 = vmatprep.subr.mxu0 0.0
    %7180 = vmatpush1.msra.mxu0 0.0
    %7181 = vmatprep.subr.mxu0 0.0
    %7182 = vmatpush1.msra.mxu0 0.0
    %7183 = vmatprep.subr.mxu0 0.0
    %7184 = vmatpush1.msra.mxu0 0.0
    %7185 = vmatprep.subr.mxu0 0.0
    %7186 = vmatpush1.msra.mxu0 0.0
    %7187 = vmatprep.subr.mxu0 0.0
    %7188 = vmatpush1.msra.mxu0 0.0
    %7189 = vmatprep.subr.mxu0 0.0
    %7190 = vmatpush1.msra.mxu0 0.0
    %7191 = vmatprep.subr.mxu0 0.0
    %7192 = vmatpush1.msra.mxu0 0.0
    %7193 = vmatprep.subr.mxu0 0.0
    %7194 = vmatpush1.msra.mxu0 0.0
    %7195 = vmatprep.subr.mxu0 0.0
    %7196 = vmatpush1.msra.mxu0 0.0
    %7197 = vmatprep.subr.mxu0 0.0
    %7198 = vmatpush1.msra.mxu0 0.0
    %7199 = vmatprep.subr.mxu0 0.0
    %7200 = vmatpush1.msra.mxu0 %v6971
    %7201 = vmatprep.subr.mxu0 0.0
    %7202 = vmatpush1.msra.mxu0 %v6970
    %7203 = vmatprep.subr.mxu0 0.0
    %7204 = vmatpush1.msra.mxu0 %v6969
    %7205 = vmatprep.subr.mxu0 0.0
    %7206 = vmatpush1.msra.mxu0 %v6968
    %7207 = vmatprep.subr.mxu0 0.0
    %7208 = vmatpush2.msra.mxu0 0.0
    %7209 = vmatprep.subr.mxu0 0.0
    %7210 = vmatpush2.msra.mxu0 0.0
    %7211 = vmatprep.subr.mxu0 0.0
    %7212 = vmatpush2.msra.mxu0 0.0
    %7213 = vmatprep.subr.mxu0 0.0
    %7214 = vmatpush2.msra.mxu0 0.0
    %7215 = vmatprep.subr.mxu0 0.0
    %7216 = vmatpush2.msra.mxu0 0.0
    %7217 = vmatprep.subr.mxu0 0.0
    %7218 = vmatpush2.msra.mxu0 0.0
    %7219 = vmatprep.subr.mxu0 0.0
    %7220 = vmatpush2.msra.mxu0 0.0
    %7221 = vmatprep.subr.mxu0 0.0
    %7222 = vmatpush2.msra.mxu0 0.0
    %7223 = vmatprep.subr.mxu0 0.0
    %7224 = vmatpush2.msra.mxu0 0.0
    %7225 = vmatprep.subr.mxu0 0.0
    %7226 = vmatpush2.msra.mxu0 0.0
    %7227 = vmatprep.subr.mxu0 0.0
    %7228 = vmatpush2.msra.mxu0 0.0
    %7229 = vmatprep.subr.mxu0 0.0
    %7230 = vmatpush2.msra.mxu0 0.0
    %7231 = vmatprep.subr.mxu0 0.0
    %7232 = vmatpush2.msra.mxu0 0.0
    %7233 = vmatprep.subr.mxu0 0.0
    %7234 = vmatpush2.msra.mxu0 0.0
    %7235 = vmatprep.subr.mxu0 0.0
    %7236 = vmatpush2.msra.mxu0 0.0
    %7237 = vmatprep.subr.mxu0 0.0
    %7238 = vmatpush2.msra.mxu0 0.0
    %7239 = vmatprep.mubr.f32.mxu0 0.0
    %7240 = vmatmul.mubr.f32.gmra.mxu0 %v7173
    %v7241 = vpop.f32.mrf.mxu0
    %v7242 = vadd.f32 0.0, %v7241
    %v7243 = vpop.f32.mrf.mxu0
    %7244 = vdwg.mxu0
    %v7245 = vadd.f32 %v7053, %v7242
    %v7246 = vxor.u32 %v7245, 2147483648
    %v7247 = vmul.f32 %v7246, 1.442695
    %v7248 = vpow.pop %v7247
    %v7249 = vadd.f32 %v7248, 1.0
    %v7250 = vrcp.pop %v7249
    %v7251 = vmul.f32 1.0, %v7250
    %v7252 = vtanh.pop %v7245
    %v7253 = vmul.f32 %v7251, %v7146
    %7255 = vrot.lane.b32.xlu0 %v7252, 32
    %v7256 = vpop.permute.xlu0 %7255
    %v7258 = vmul.f32 %v7251, %v7256
    %7260 = vrot.lane.b32.xlu0 %v7258, 32
    %v7261 = vpop.permute.xlu0 %7260
    %v7263 = vadd.f32 %v7253, %v7261
    %v7264 = vtanh.pop %v7263
    %7266 = vrot.lane.b32.xlu0 %v7264, 32
    %v7267 = vpop.permute.xlu0 %7266
    %v7269 = vmul.f32 %v7251, %v7267
    %v7270 = vmax.f32 %v7269, 0.0
    %v7271 = vmul.f32 %v7270, %v7160
    %7273 = vrot.lane.b32.xlu0 %v7271, 64
    %v7274 = vpop.permute.xlu0 %7273
    %v7276 = vsel %vm6508, %v7274, 0.0
    %7277 = vadd.xlane.f32.xlu0 %v7276
    %v7278 = vpop.xlane.xlu0 %7277
    %7280 = vrot.lane.b32.xlu0 %v7269, 64
    %v7281 = vpop.permute.xlu0 %7280
    %v7282 = vsel %vm6508, %v7281, 0
    %7284 = vmatprep.subr.mxu0 0.0
    %7285 = vmatpush1.msra.mxu0 0.0
    %7286 = vmatprep.subr.mxu0 0.0
    %7287 = vmatpush1.msra.mxu0 0.0
    %7288 = vmatprep.subr.mxu0 0.0
    %7289 = vmatpush1.msra.mxu0 0.0
    %7290 = vmatprep.subr.mxu0 0.0
    %7291 = vmatpush1.msra.mxu0 0.0
    %7292 = vmatprep.subr.mxu0 0.0
    %7293 = vmatpush1.msra.mxu0 0.0
    %7294 = vmatprep.subr.mxu0 0.0
    %7295 = vmatpush1.msra.mxu0 0.0
    %7296 = vmatprep.subr.mxu0 0.0
    %7297 = vmatpush1.msra.mxu0 0.0
    %7298 = vmatprep.subr.mxu0 0.0
    %7299 = vmatpush1.msra.mxu0 0.0
    %7300 = vmatprep.subr.mxu0 0.0
    %7301 = vmatpush1.msra.mxu0 0.0
    %7302 = vmatprep.subr.mxu0 0.0
    %7303 = vmatpush1.msra.mxu0 0.0
    %7304 = vmatprep.subr.mxu0 0.0
    %7305 = vmatpush1.msra.mxu0 0.0
    %7306 = vmatprep.subr.mxu0 0.0
    %7307 = vmatpush1.msra.mxu0 0.0
    %7308 = vmatprep.subr.mxu0 0.0
    %7309 = vmatpush1.msra.mxu0 %v6971
    %7310 = vmatprep.subr.mxu0 0.0
    %7311 = vmatpush1.msra.mxu0 %v6970
    %7312 = vmatprep.subr.mxu0 0.0
    %7313 = vmatpush1.msra.mxu0 %v6969
    %7314 = vmatprep.subr.mxu0 0.0
    %7315 = vmatpush1.msra.mxu0 %v6968
    %7316 = vmatprep.subr.mxu0 0.0
    %7317 = vmatpush2.msra.mxu0 0.0
    %7318 = vmatprep.subr.mxu0 0.0
    %7319 = vmatpush2.msra.mxu0 0.0
    %7320 = vmatprep.subr.mxu0 0.0
    %7321 = vmatpush2.msra.mxu0 0.0
    %7322 = vmatprep.subr.mxu0 0.0
    %7323 = vmatpush2.msra.mxu0 0.0
    %7324 = vmatprep.subr.mxu0 0.0
    %7325 = vmatpush2.msra.mxu0 0.0
    %7326 = vmatprep.subr.mxu0 0.0
    %7327 = vmatpush2.msra.mxu0 0.0
    %7328 = vmatprep.subr.mxu0 0.0
    %7329 = vmatpush2.msra.mxu0 0.0
    %7330 = vmatprep.subr.mxu0 0.0
    %7331 = vmatpush2.msra.mxu0 0.0
    %7332 = vmatprep.subr.mxu0 0.0
    %7333 = vmatpush2.msra.mxu0 0.0
    %7334 = vmatprep.subr.mxu0 0.0
    %7335 = vmatpush2.msra.mxu0 0.0
    %7336 = vmatprep.subr.mxu0 0.0
    %7337 = vmatpush2.msra.mxu0 0.0
    %7338 = vmatprep.subr.mxu0 0.0
    %7339 = vmatpush2.msra.mxu0 0.0
    %7340 = vmatprep.subr.mxu0 0.0
    %7341 = vmatpush2.msra.mxu0 0.0
    %7342 = vmatprep.subr.mxu0 0.0
    %7343 = vmatpush2.msra.mxu0 0.0
    %7344 = vmatprep.subr.mxu0 0.0
    %7345 = vmatpush2.msra.mxu0 0.0
    %7346 = vmatprep.subr.mxu0 0.0
    %7347 = vmatpush2.msra.mxu0 0.0
    %7348 = vmatprep.mubr.f32.mxu0 0.0
    %7349 = vmatmul.mubr.f32.gmra.mxu0 %v7282
    %v7350 = vpop.f32.mrf.mxu0
    %v7351 = vadd.f32 0.0, %v7350
    %v7352 = vpop.f32.mrf.mxu0
    %7353 = vdwg.mxu0
    %v7354 = vadd.f32 %v7053, %v7351
    %v7355 = vxor.u32 %v7354, 2147483648
    %v7356 = vmul.f32 %v7355, 1.442695
    %v7357 = vpow.pop %v7356
    %v7358 = vadd.f32 %v7357, 1.0
    %v7359 = vrcp.pop %v7358
    %v7360 = vmul.f32 1.0, %v7359
    %v7361 = vtanh.pop %v7354
    %v7362 = vmul.f32 %v7360, %v7263
    %7364 = vrot.lane.b32.xlu0 %v7361, 32
    %v7365 = vpop.permute.xlu0 %7364
    %v7367 = vmul.f32 %v7360, %v7365
    %7369 = vrot.lane.b32.xlu0 %v7367, 32
    %v7370 = vpop.permute.xlu0 %7369
    %v7372 = vadd.f32 %v7362, %v7370
    %v7373 = vtanh.pop %v7372
    %7375 = vrot.lane.b32.xlu0 %v7373, 32
    %v7376 = vpop.permute.xlu0 %7375
    %v7378 = vmul.f32 %v7360, %v7376
    %v7379 = vmax.f32 %v7378, 0.0
    %v7380 = vmul.f32 %v7379, %v7160
    %7382 = vrot.lane.b32.xlu0 %v7380, 64
    %v7383 = vpop.permute.xlu0 %7382
    %v7385 = vsel %vm6508, %v7383, 0.0
    %7386 = vadd.xlane.f32.xlu0 %v7385
    %v7387 = vpop.xlane.xlu0 %7386
    %7389 = vrot.lane.b32.xlu0 %v7378, 64
    %v7390 = vpop.permute.xlu0 %7389
    %v7391 = vsel %vm6508, %v7390, 0
    %7393 = vmatprep.subr.mxu0 0.0
    %7394 = vmatpush1.msra.mxu0 0.0
    %7395 = vmatprep.subr.mxu0 0.0
    %7396 = vmatpush1.msra.mxu0 0.0
    %7397 = vmatprep.subr.mxu0 0.0
    %7398 = vmatpush1.msra.mxu0 0.0
    %7399 = vmatprep.subr.mxu0 0.0
    %7400 = vmatpush1.msra.mxu0 0.0
    %7401 = vmatprep.subr.mxu0 0.0
    %7402 = vmatpush1.msra.mxu0 0.0
    %7403 = vmatprep.subr.mxu0 0.0
    %7404 = vmatpush1.msra.mxu0 0.0
    %7405 = vmatprep.subr.mxu0 0.0
    %7406 = vmatpush1.msra.mxu0 0.0
    %7407 = vmatprep.subr.mxu0 0.0
    %7408 = vmatpush1.msra.mxu0 0.0
    %7409 = vmatprep.subr.mxu0 0.0
    %7410 = vmatpush1.msra.mxu0 0.0
    %7411 = vmatprep.subr.mxu0 0.0
    %7412 = vmatpush1.msra.mxu0 0.0
    %7413 = vmatprep.subr.mxu0 0.0
    %7414 = vmatpush1.msra.mxu0 0.0
    %7415 = vmatprep.subr.mxu0 0.0
    %7416 = vmatpush1.msra.mxu0 0.0
    %7417 = vmatprep.subr.mxu0 0.0
    %7418 = vmatpush1.msra.mxu0 %v6971
    %7419 = vmatprep.subr.mxu0 0.0
    %7420 = vmatpush1.msra.mxu0 %v6970
    %7421 = vmatprep.subr.mxu0 0.0
    %7422 = vmatpush1.msra.mxu0 %v6969
    %7423 = vmatprep.subr.mxu0 0.0
    %7424 = vmatpush1.msra.mxu0 %v6968
    %7425 = vmatprep.subr.mxu0 0.0
    %7426 = vmatpush2.msra.mxu0 0.0
    %7427 = vmatprep.subr.mxu0 0.0
    %7428 = vmatpush2.msra.mxu0 0.0
    %7429 = vmatprep.subr.mxu0 0.0
    %7430 = vmatpush2.msra.mxu0 0.0
    %7431 = vmatprep.subr.mxu0 0.0
    %7432 = vmatpush2.msra.mxu0 0.0
    %7433 = vmatprep.subr.mxu0 0.0
    %7434 = vmatpush2.msra.mxu0 0.0
    %7435 = vmatprep.subr.mxu0 0.0
    %7436 = vmatpush2.msra.mxu0 0.0
    %7437 = vmatprep.subr.mxu0 0.0
    %7438 = vmatpush2.msra.mxu0 0.0
    %7439 = vmatprep.subr.mxu0 0.0
    %7440 = vmatpush2.msra.mxu0 0.0
    %7441 = vmatprep.subr.mxu0 0.0
    %7442 = vmatpush2.msra.mxu0 0.0
    %7443 = vmatprep.subr.mxu0 0.0
    %7444 = vmatpush2.msra.mxu0 0.0
    %7445 = vmatprep.subr.mxu0 0.0
    %7446 = vmatpush2.msra.mxu0 0.0
    %7447 = vmatprep.subr.mxu0 0.0
    %7448 = vmatpush2.msra.mxu0 0.0
    %7449 = vmatprep.subr.mxu0 0.0
    %7450 = vmatpush2.msra.mxu0 0.0
    %7451 = vmatprep.subr.mxu0 0.0
    %7452 = vmatpush2.msra.mxu0 0.0
    %7453 = vmatprep.subr.mxu0 0.0
    %7454 = vmatpush2.msra.mxu0 0.0
    %7455 = vmatprep.subr.mxu0 0.0
    %7456 = vmatpush2.msra.mxu0 0.0
    %7457 = vmatprep.mubr.f32.mxu0 0.0
    %7458 = vmatmul.mubr.f32.gmra.mxu0 %v7391
    %v7459 = vpop.f32.mrf.mxu0
    %v7460 = vadd.f32 0.0, %v7459
    %v7461 = vpop.f32.mrf.mxu0
    %7462 = vdwg.mxu0
    %v7463 = vadd.f32 %v7053, %v7460
    %v7464 = vxor.u32 %v7463, 2147483648
    %v7465 = vmul.f32 %v7464, 1.442695
    %v7466 = vpow.pop %v7465
    %v7467 = vadd.f32 %v7466, 1.0
    %v7468 = vrcp.pop %v7467
    %v7469 = vmul.f32 1.0, %v7468
    %v7470 = vtanh.pop %v7463
    %v7471 = vmul.f32 %v7469, %v7372
    %7473 = vrot.lane.b32.xlu0 %v7470, 32
    %v7474 = vpop.permute.xlu0 %7473
    %v7476 = vmul.f32 %v7469, %v7474
    %7478 = vrot.lane.b32.xlu0 %v7476, 32
    %v7479 = vpop.permute.xlu0 %7478
    %v7481 = vadd.f32 %v7471, %v7479
    %v7482 = vtanh.pop %v7481
    %7484 = vrot.lane.b32.xlu0 %v7482, 32
    %v7485 = vpop.permute.xlu0 %7484
    %v7487 = vmul.f32 %v7469, %v7485
    %v7488 = vmax.f32 %v7487, 0.0
    %v7489 = vmul.f32 %v7488, %v7160
    %7491 = vrot.lane.b32.xlu0 %v7489, 64
    %v7492 = vpop.permute.xlu0 %7491
    %v7494 = vsel %vm6508, %v7492, 0.0
    %7495 = vadd.xlane.f32.xlu0 %v7494
    %v7496 = vpop.xlane.xlu0 %7495
    %7498 = vrot.lane.b32.xlu0 %v7487, 64
    %v7499 = vpop.permute.xlu0 %7498
    %v7500 = vsel %vm6508, %v7499, 0
    %7502 = vmatprep.subr.mxu0 0.0
    %7503 = vmatpush1.msra.mxu0 0.0
    %7504 = vmatprep.subr.mxu0 0.0
    %7505 = vmatpush1.msra.mxu0 0.0
    %7506 = vmatprep.subr.mxu0 0.0
    %7507 = vmatpush1.msra.mxu0 0.0
    %7508 = vmatprep.subr.mxu0 0.0
    %7509 = vmatpush1.msra.mxu0 0.0
    %7510 = vmatprep.subr.mxu0 0.0
    %7511 = vmatpush1.msra.mxu0 0.0
    %7512 = vmatprep.subr.mxu0 0.0
    %7513 = vmatpush1.msra.mxu0 0.0
    %7514 = vmatprep.subr.mxu0 0.0
    %7515 = vmatpush1.msra.mxu0 0.0
    %7516 = vmatprep.subr.mxu0 0.0
    %7517 = vmatpush1.msra.mxu0 0.0
    %7518 = vmatprep.subr.mxu0 0.0
    %7519 = vmatpush1.msra.mxu0 0.0
    %7520 = vmatprep.subr.mxu0 0.0
    %7521 = vmatpush1.msra.mxu0 0.0
    %7522 = vmatprep.subr.mxu0 0.0
    %7523 = vmatpush1.msra.mxu0 0.0
    %7524 = vmatprep.subr.mxu0 0.0
    %7525 = vmatpush1.msra.mxu0 0.0
    %7526 = vmatprep.subr.mxu0 0.0
    %7527 = vmatpush1.msra.mxu0 %v6971
    %7528 = vmatprep.subr.mxu0 0.0
    %7529 = vmatpush1.msra.mxu0 %v6970
    %7530 = vmatprep.subr.mxu0 0.0
    %7531 = vmatpush1.msra.mxu0 %v6969
    %7532 = vmatprep.subr.mxu0 0.0
    %7533 = vmatpush1.msra.mxu0 %v6968
    %7534 = vmatprep.subr.mxu0 0.0
    %7535 = vmatpush2.msra.mxu0 0.0
    %7536 = vmatprep.subr.mxu0 0.0
    %7537 = vmatpush2.msra.mxu0 0.0
    %7538 = vmatprep.subr.mxu0 0.0
    %7539 = vmatpush2.msra.mxu0 0.0
    %7540 = vmatprep.subr.mxu0 0.0
    %7541 = vmatpush2.msra.mxu0 0.0
    %7542 = vmatprep.subr.mxu0 0.0
    %7543 = vmatpush2.msra.mxu0 0.0
    %7544 = vmatprep.subr.mxu0 0.0
    %7545 = vmatpush2.msra.mxu0 0.0
    %7546 = vmatprep.subr.mxu0 0.0
    %7547 = vmatpush2.msra.mxu0 0.0
    %7548 = vmatprep.subr.mxu0 0.0
    %7549 = vmatpush2.msra.mxu0 0.0
    %7550 = vmatprep.subr.mxu0 0.0
    %7551 = vmatpush2.msra.mxu0 0.0
    %7552 = vmatprep.subr.mxu0 0.0
    %7553 = vmatpush2.msra.mxu0 0.0
    %7554 = vmatprep.subr.mxu0 0.0
    %7555 = vmatpush2.msra.mxu0 0.0
    %7556 = vmatprep.subr.mxu0 0.0
    %7557 = vmatpush2.msra.mxu0 0.0
    %7558 = vmatprep.subr.mxu0 0.0
    %7559 = vmatpush2.msra.mxu0 0.0
    %7560 = vmatprep.subr.mxu0 0.0
    %7561 = vmatpush2.msra.mxu0 0.0
    %7562 = vmatprep.subr.mxu0 0.0
    %7563 = vmatpush2.msra.mxu0 0.0
    %7564 = vmatprep.subr.mxu0 0.0
    %7565 = vmatpush2.msra.mxu0 0.0
    %7566 = vmatprep.mubr.f32.mxu0 0.0
    %7567 = vmatmul.mubr.f32.gmra.mxu0 %v7500
    %v7568 = vpop.f32.mrf.mxu0
    %v7569 = vadd.f32 0.0, %v7568
    %v7570 = vpop.f32.mrf.mxu0
    %7571 = vdwg.mxu0
    %v7572 = vadd.f32 %v7053, %v7569
    %v7573 = vxor.u32 %v7572, 2147483648
    %v7574 = vmul.f32 %v7573, 1.442695
    %v7575 = vpow.pop %v7574
    %v7576 = vadd.f32 %v7575, 1.0
    %v7577 = vrcp.pop %v7576
    %v7578 = vmul.f32 1.0, %v7577
    %v7579 = vtanh.pop %v7572
    %v7580 = vmul.f32 %v7578, %v7481
    %7582 = vrot.lane.b32.xlu0 %v7579, 32
    %v7583 = vpop.permute.xlu0 %7582
    %v7585 = vmul.f32 %v7578, %v7583
    %7587 = vrot.lane.b32.xlu0 %v7585, 32
    %v7588 = vpop.permute.xlu0 %7587
    %v7590 = vadd.f32 %v7580, %v7588
    %v7591 = vtanh.pop %v7590
    %7593 = vrot.lane.b32.xlu0 %v7591, 32
    %v7594 = vpop.permute.xlu0 %7593
    %v7596 = vmul.f32 %v7578, %v7594
    %v7597 = vmax.f32 %v7596, 0.0
    %v7598 = vmul.f32 %v7597, %v7160
    %7600 = vrot.lane.b32.xlu0 %v7598, 64
    %v7601 = vpop.permute.xlu0 %7600
    %v7603 = vsel %vm6508, %v7601, 0.0
    %7604 = vadd.xlane.f32.xlu0 %v7603
    %v7605 = vpop.xlane.xlu0 %7604
    %7607 = vrot.lane.b32.xlu0 %v7596, 64
    %v7608 = vpop.permute.xlu0 %7607
    %v7609 = vsel %vm6508, %v7608, 0
    %7611 = vmatprep.subr.mxu0 0.0
    %7612 = vmatpush1.msra.mxu0 0.0
    %7613 = vmatprep.subr.mxu0 0.0
    %7614 = vmatpush1.msra.mxu0 0.0
    %7615 = vmatprep.subr.mxu0 0.0
    %7616 = vmatpush1.msra.mxu0 0.0
    %7617 = vmatprep.subr.mxu0 0.0
    %7618 = vmatpush1.msra.mxu0 0.0
    %7619 = vmatprep.subr.mxu0 0.0
    %7620 = vmatpush1.msra.mxu0 0.0
    %7621 = vmatprep.subr.mxu0 0.0
    %7622 = vmatpush1.msra.mxu0 0.0
    %7623 = vmatprep.subr.mxu0 0.0
    %7624 = vmatpush1.msra.mxu0 0.0
    %7625 = vmatprep.subr.mxu0 0.0
    %7626 = vmatpush1.msra.mxu0 0.0
    %7627 = vmatprep.subr.mxu0 0.0
    %7628 = vmatpush1.msra.mxu0 0.0
    %7629 = vmatprep.subr.mxu0 0.0
    %7630 = vmatpush1.msra.mxu0 0.0
    %7631 = vmatprep.subr.mxu0 0.0
    %7632 = vmatpush1.msra.mxu0 0.0
    %7633 = vmatprep.subr.mxu0 0.0
    %7634 = vmatpush1.msra.mxu0 0.0
    %7635 = vmatprep.subr.mxu0 0.0
    %7636 = vmatpush1.msra.mxu0 %v6971
    %7637 = vmatprep.subr.mxu0 0.0
    %7638 = vmatpush1.msra.mxu0 %v6970
    %7639 = vmatprep.subr.mxu0 0.0
    %7640 = vmatpush1.msra.mxu0 %v6969
    %7641 = vmatprep.subr.mxu0 0.0
    %7642 = vmatpush1.msra.mxu0 %v6968
    %7643 = vmatprep.subr.mxu0 0.0
    %7644 = vmatpush2.msra.mxu0 0.0
    %7645 = vmatprep.subr.mxu0 0.0
    %7646 = vmatpush2.msra.mxu0 0.0
    %7647 = vmatprep.subr.mxu0 0.0
    %7648 = vmatpush2.msra.mxu0 0.0
    %7649 = vmatprep.subr.mxu0 0.0
    %7650 = vmatpush2.msra.mxu0 0.0
    %7651 = vmatprep.subr.mxu0 0.0
    %7652 = vmatpush2.msra.mxu0 0.0
    %7653 = vmatprep.subr.mxu0 0.0
    %7654 = vmatpush2.msra.mxu0 0.0
    %7655 = vmatprep.subr.mxu0 0.0
    %7656 = vmatpush2.msra.mxu0 0.0
    %7657 = vmatprep.subr.mxu0 0.0
    %7658 = vmatpush2.msra.mxu0 0.0
    %7659 = vmatprep.subr.mxu0 0.0
    %7660 = vmatpush2.msra.mxu0 0.0
    %7661 = vmatprep.subr.mxu0 0.0
    %7662 = vmatpush2.msra.mxu0 0.0
    %7663 = vmatprep.subr.mxu0 0.0
    %7664 = vmatpush2.msra.mxu0 0.0
    %7665 = vmatprep.subr.mxu0 0.0
    %7666 = vmatpush2.msra.mxu0 0.0
    %7667 = vmatprep.subr.mxu0 0.0
    %7668 = vmatpush2.msra.mxu0 0.0
    %7669 = vmatprep.subr.mxu0 0.0
    %7670 = vmatpush2.msra.mxu0 0.0
    %7671 = vmatprep.subr.mxu0 0.0
    %7672 = vmatpush2.msra.mxu0 0.0
    %7673 = vmatprep.subr.mxu0 0.0
    %7674 = vmatpush2.msra.mxu0 0.0
    %7675 = vmatprep.mubr.f32.mxu0 0.0
    %7676 = vmatmul.mubr.f32.gmra.mxu0 %v7609
    %v7677 = vpop.f32.mrf.mxu0
    %v7678 = vadd.f32 0.0, %v7677
    %v7679 = vpop.f32.mrf.mxu0
    %7680 = vdwg.mxu0
    %v7681 = vadd.f32 %v7053, %v7678
    %v7682 = vxor.u32 %v7681, 2147483648
    %v7683 = vmul.f32 %v7682, 1.442695
    %v7684 = vpow.pop %v7683
    %v7685 = vadd.f32 %v7684, 1.0
    %v7686 = vrcp.pop %v7685
    %v7687 = vmul.f32 1.0, %v7686
    %v7688 = vtanh.pop %v7681
    %v7689 = vmul.f32 %v7687, %v7590
    %7691 = vrot.lane.b32.xlu0 %v7688, 32
    %v7692 = vpop.permute.xlu0 %7691
    %v7694 = vmul.f32 %v7687, %v7692
    %7696 = vrot.lane.b32.xlu0 %v7694, 32
    %v7697 = vpop.permute.xlu0 %7696
    %v7699 = vadd.f32 %v7689, %v7697
    %v7700 = vtanh.pop %v7699
    %7702 = vrot.lane.b32.xlu0 %v7700, 32
    %v7703 = vpop.permute.xlu0 %7702
    %v7705 = vmul.f32 %v7687, %v7703
    %v7706 = vmax.f32 %v7705, 0.0
    %v7707 = vmul.f32 %v7706, %v7160
    %7709 = vrot.lane.b32.xlu0 %v7707, 64
    %v7710 = vpop.permute.xlu0 %7709
    %v7712 = vsel %vm6508, %v7710, 0.0
    %7713 = vadd.xlane.f32.xlu0 %v7712
    %v7714 = vpop.xlane.xlu0 %7713
    %7716 = vrot.lane.b32.xlu0 %v7705, 64
    %v7717 = vpop.permute.xlu0 %7716
    %v7718 = vsel %vm6508, %v7717, 0
    %7720 = vmatprep.subr.mxu0 0.0
    %7721 = vmatpush1.msra.mxu0 0.0
    %7722 = vmatprep.subr.mxu0 0.0
    %7723 = vmatpush1.msra.mxu0 0.0
    %7724 = vmatprep.subr.mxu0 0.0
    %7725 = vmatpush1.msra.mxu0 0.0
    %7726 = vmatprep.subr.mxu0 0.0
    %7727 = vmatpush1.msra.mxu0 0.0
    %7728 = vmatprep.subr.mxu0 0.0
    %7729 = vmatpush1.msra.mxu0 0.0
    %7730 = vmatprep.subr.mxu0 0.0
    %7731 = vmatpush1.msra.mxu0 0.0
    %7732 = vmatprep.subr.mxu0 0.0
    %7733 = vmatpush1.msra.mxu0 0.0
    %7734 = vmatprep.subr.mxu0 0.0
    %7735 = vmatpush1.msra.mxu0 0.0
    %7736 = vmatprep.subr.mxu0 0.0
    %7737 = vmatpush1.msra.mxu0 0.0
    %7738 = vmatprep.subr.mxu0 0.0
    %7739 = vmatpush1.msra.mxu0 0.0
    %7740 = vmatprep.subr.mxu0 0.0
    %7741 = vmatpush1.msra.mxu0 0.0
    %7742 = vmatprep.subr.mxu0 0.0
    %7743 = vmatpush1.msra.mxu0 0.0
    %7744 = vmatprep.subr.mxu0 0.0
    %7745 = vmatpush1.msra.mxu0 %v6971
    %7746 = vmatprep.subr.mxu0 0.0
    %7747 = vmatpush1.msra.mxu0 %v6970
    %7748 = vmatprep.subr.mxu0 0.0
    %7749 = vmatpush1.msra.mxu0 %v6969
    %7750 = vmatprep.subr.mxu0 0.0
    %7751 = vmatpush1.msra.mxu0 %v6968
    %7752 = vmatprep.subr.mxu0 0.0
    %7753 = vmatpush2.msra.mxu0 0.0
    %7754 = vmatprep.subr.mxu0 0.0
    %7755 = vmatpush2.msra.mxu0 0.0
    %7756 = vmatprep.subr.mxu0 0.0
    %7757 = vmatpush2.msra.mxu0 0.0
    %7758 = vmatprep.subr.mxu0 0.0
    %7759 = vmatpush2.msra.mxu0 0.0
    %7760 = vmatprep.subr.mxu0 0.0
    %7761 = vmatpush2.msra.mxu0 0.0
    %7762 = vmatprep.subr.mxu0 0.0
    %7763 = vmatpush2.msra.mxu0 0.0
    %7764 = vmatprep.subr.mxu0 0.0
    %7765 = vmatpush2.msra.mxu0 0.0
    %7766 = vmatprep.subr.mxu0 0.0
    %7767 = vmatpush2.msra.mxu0 0.0
    %7768 = vmatprep.subr.mxu0 0.0
    %7769 = vmatpush2.msra.mxu0 0.0
    %7770 = vmatprep.subr.mxu0 0.0
    %7771 = vmatpush2.msra.mxu0 0.0
    %7772 = vmatprep.subr.mxu0 0.0
    %7773 = vmatpush2.msra.mxu0 0.0
    %7774 = vmatprep.subr.mxu0 0.0
    %7775 = vmatpush2.msra.mxu0 0.0
    %7776 = vmatprep.subr.mxu0 0.0
    %7777 = vmatpush2.msra.mxu0 0.0
    %7778 = vmatprep.subr.mxu0 0.0
    %7779 = vmatpush2.msra.mxu0 0.0
    %7780 = vmatprep.subr.mxu0 0.0
    %7781 = vmatpush2.msra.mxu0 0.0
    %7782 = vmatprep.subr.mxu0 0.0
    %7783 = vmatpush2.msra.mxu0 0.0
    %7784 = vmatprep.mubr.f32.mxu0 0.0
    %7785 = vmatmul.mubr.f32.gmra.mxu0 %v7718
    %v7786 = vpop.f32.mrf.mxu0
    %v7787 = vadd.f32 0.0, %v7786
    %v7788 = vpop.f32.mrf.mxu0
    %7789 = vdwg.mxu0
    %v7790 = vadd.f32 %v7053, %v7787
    %v7791 = vxor.u32 %v7790, 2147483648
    %v7792 = vmul.f32 %v7791, 1.442695
    %v7793 = vpow.pop %v7792
    %v7794 = vadd.f32 %v7793, 1.0
    %v7795 = vrcp.pop %v7794
    %v7796 = vmul.f32 1.0, %v7795
    %v7797 = vtanh.pop %v7790
    %v7798 = vmul.f32 %v7796, %v7699
    %7800 = vrot.lane.b32.xlu0 %v7797, 32
    %v7801 = vpop.permute.xlu0 %7800
    %v7803 = vmul.f32 %v7796, %v7801
    %7805 = vrot.lane.b32.xlu0 %v7803, 32
    %v7806 = vpop.permute.xlu0 %7805
    %v7808 = vadd.f32 %v7798, %v7806
    %v7809 = vtanh.pop %v7808
    %7811 = vrot.lane.b32.xlu0 %v7809, 32
    %v7812 = vpop.permute.xlu0 %7811
    %v7814 = vmul.f32 %v7796, %v7812
    %v7815 = vmax.f32 %v7814, 0.0
    %v7816 = vmul.f32 %v7815, %v7160
    %7818 = vrot.lane.b32.xlu0 %v7816, 64
    %v7819 = vpop.permute.xlu0 %7818
    %v7821 = vsel %vm6508, %v7819, 0.0
    %7822 = vadd.xlane.f32.xlu0 %v7821
    %v7823 = vpop.xlane.xlu0 %7822
    %7825 = vrot.lane.b32.xlu0 %v7814, 64
    %v7826 = vpop.permute.xlu0 %7825
    %v7827 = vsel %vm6508, %v7826, 0
    %7829 = vmatprep.subr.mxu0 0.0
    %7830 = vmatpush1.msra.mxu0 0.0
    %7831 = vmatprep.subr.mxu0 0.0
    %7832 = vmatpush1.msra.mxu0 0.0
    %7833 = vmatprep.subr.mxu0 0.0
    %7834 = vmatpush1.msra.mxu0 0.0
    %7835 = vmatprep.subr.mxu0 0.0
    %7836 = vmatpush1.msra.mxu0 0.0
    %7837 = vmatprep.subr.mxu0 0.0
    %7838 = vmatpush1.msra.mxu0 0.0
    %7839 = vmatprep.subr.mxu0 0.0
    %7840 = vmatpush1.msra.mxu0 0.0
    %7841 = vmatprep.subr.mxu0 0.0
    %7842 = vmatpush1.msra.mxu0 0.0
    %7843 = vmatprep.subr.mxu0 0.0
    %7844 = vmatpush1.msra.mxu0 0.0
    %7845 = vmatprep.subr.mxu0 0.0
    %7846 = vmatpush1.msra.mxu0 0.0
    %7847 = vmatprep.subr.mxu0 0.0
    %7848 = vmatpush1.msra.mxu0 0.0
    %7849 = vmatprep.subr.mxu0 0.0
    %7850 = vmatpush1.msra.mxu0 0.0
    %7851 = vmatprep.subr.mxu0 0.0
    %7852 = vmatpush1.msra.mxu0 0.0
    %7853 = vmatprep.subr.mxu0 0.0
    %7854 = vmatpush1.msra.mxu0 %v6971
    %7855 = vmatprep.subr.mxu0 0.0
    %7856 = vmatpush1.msra.mxu0 %v6970
    %7857 = vmatprep.subr.mxu0 0.0
    %7858 = vmatpush1.msra.mxu0 %v6969
    %7859 = vmatprep.subr.mxu0 0.0
    %7860 = vmatpush1.msra.mxu0 %v6968
    %7861 = vmatprep.subr.mxu0 0.0
    %7862 = vmatpush2.msra.mxu0 0.0
    %7863 = vmatprep.subr.mxu0 0.0
    %7864 = vmatpush2.msra.mxu0 0.0
    %7865 = vmatprep.subr.mxu0 0.0
    %7866 = vmatpush2.msra.mxu0 0.0
    %7867 = vmatprep.subr.mxu0 0.0
    %7868 = vmatpush2.msra.mxu0 0.0
    %7869 = vmatprep.subr.mxu0 0.0
    %7870 = vmatpush2.msra.mxu0 0.0
    %7871 = vmatprep.subr.mxu0 0.0
    %7872 = vmatpush2.msra.mxu0 0.0
    %7873 = vmatprep.subr.mxu0 0.0
    %7874 = vmatpush2.msra.mxu0 0.0
    %7875 = vmatprep.subr.mxu0 0.0
    %7876 = vmatpush2.msra.mxu0 0.0
    %7877 = vmatprep.subr.mxu0 0.0
    %7878 = vmatpush2.msra.mxu0 0.0
    %7879 = vmatprep.subr.mxu0 0.0
    %7880 = vmatpush2.msra.mxu0 0.0
    %7881 = vmatprep.subr.mxu0 0.0
    %7882 = vmatpush2.msra.mxu0 0.0
    %7883 = vmatprep.subr.mxu0 0.0
    %7884 = vmatpush2.msra.mxu0 0.0
    %7885 = vmatprep.subr.mxu0 0.0
    %7886 = vmatpush2.msra.mxu0 0.0
    %7887 = vmatprep.subr.mxu0 0.0
    %7888 = vmatpush2.msra.mxu0 0.0
    %7889 = vmatprep.subr.mxu0 0.0
    %7890 = vmatpush2.msra.mxu0 0.0
    %7891 = vmatprep.subr.mxu0 0.0
    %7892 = vmatpush2.msra.mxu0 0.0
    %7893 = vmatprep.mubr.f32.mxu0 0.0
    %7894 = vmatmul.mubr.f32.gmra.mxu0 %v7827
    %v7895 = vpop.f32.mrf.mxu0
    %v7896 = vadd.f32 0.0, %v7895
    %v7897 = vpop.f32.mrf.mxu0
    %7898 = vdwg.mxu0
    %v7899 = vadd.f32 %v7053, %v7896
    %v7900 = vxor.u32 %v7899, 2147483648
    %v7901 = vmul.f32 %v7900, 1.442695
    %v7902 = vpow.pop %v7901
    %v7903 = vadd.f32 %v7902, 1.0
    %v7904 = vrcp.pop %v7903
    %v7905 = vmul.f32 1.0, %v7904
    %v7906 = vtanh.pop %v7899
    %v7907 = vmul.f32 %v7905, %v7808
    %7909 = vrot.lane.b32.xlu0 %v7906, 32
    %v7910 = vpop.permute.xlu0 %7909
    %v7912 = vmul.f32 %v7905, %v7910
    %7914 = vrot.lane.b32.xlu0 %v7912, 32
    %v7915 = vpop.permute.xlu0 %7914
    %v7917 = vadd.f32 %v7907, %v7915
    %v7918 = vtanh.pop %v7917
    %7920 = vrot.lane.b32.xlu0 %v7918, 32
    %v7921 = vpop.permute.xlu0 %7920
    %v7923 = vmul.f32 %v7905, %v7921
    %v7924 = vmax.f32 %v7923, 0.0
    %v7925 = vmul.f32 %v7924, %v7160
    %7927 = vrot.lane.b32.xlu0 %v7925, 64
    %v7928 = vpop.permute.xlu0 %7927
    %v7930 = vsel %vm6508, %v7928, 0.0
    %7931 = vadd.xlane.f32.xlu0 %v7930
    %v7932 = vpop.xlane.xlu0 %7931
    %v7933 = vsel %vm6876, %v7169, %v7278
    %vm7934 = vcmask 15360
    %v7935 = vsel %vm7934, %v7933, %v7387
    %vm7936 = vcmask 23552
    %v7937 = vsel %vm7936, %v7935, %v7496
    %v7938 = vsel %vm6688, %v7937, %v7605
    %vm7939 = vcmask 39936
    %v7940 = vsel %vm7939, %v7938, %v7714
    %vm7941 = vcmask 48128
    %v7942 = vsel %vm7941, %v7940, %v7823
    %vm7943 = vcmask 56320
    %v7944 = vsel %vm7943, %v7942, %v7932
    %v7945 = vld [vmem:[#allocation3] sm:$0x1]
    %v7947 = vlaneseq
    %v7948 = vshrl.u32 %v7947, 7
    %v7949 = vsub.s32 0, %v7948
    %v7950 = vrot.slane %v7945, %v7949
    %7951 = vset.pattern.permute.xlu0 0
    %7952 = vperm.xlu0 %7951, %v7950
    %v7953 = vpop.permute.xlu0 %7952
    %v7955 = vadd.f32 %v7944, %v7953
    %v7956 = vtanh.pop %v7955
    %v7957 = vmul.f32 %v7956, 10.0
    %vm7958 = vcmask 64512
    %7959 = vst.msk [vmem:[#allocation4] sm:$0xff] %vm7958, %v7957
    // Predicated region
    $region86: #{forward.1} parent=1 // pred_check
      _
    $region87: #{forward.1} parent=1 // pred_check_branch
      %7961 = sbr.rel (0) target = $region89
    $region88: #{forward.1} parent=1 // pred_region
      _
    $region89: #{forward.1} parent=1 // pred_fallthru
      _
    // Predicated region
    $region90: #{forward.1} parent=1 // pred_check
      _
    $region91: #{forward.1} parent=1 // pred_check_branch
      %7963 = sbr.rel (0) target = $region93
    $region92: #{forward.1} parent=1 // pred_region
      _
    $region93: #{forward.1} parent=1 // pred_fallthru
      _
    // Predicated region
    $region94: #{forward.1} parent=1 // pred_check
      _
    $region95: #{forward.1} parent=1 // pred_check_branch
      %7965 = sbr.rel (0) target = $region97
    $region96: #{forward.1} parent=1 // pred_region
      %s7967 = ssub.s32 128, 128
      %7968 = vsyncadd [#allocation5], %s7967
      %s7970 = sshll.u32 [#allocation4], 4
      %s7971 = int_to_ptr.vmem [resolvable:$true] %s7970
      %7973 = dma.vmem_to_hbm [thread:$0]  %s7971, 128, %s23, [#allocation5]
    $region97: #{forward.1} parent=1 // pred_fallthru
      _
    // Predicated region
    $region98: #{forward.1} parent=1 // pred_check
      _
    $region99: #{forward.1} parent=1 // pred_check_branch
      %7975 = sbr.rel (0) target = $region101
    $region100: #{forward.1} parent=1 // pred_region
      _
    $region101: #{forward.1} parent=1 // pred_fallthru
      _
    // Predicated region
    $region102: #{forward.1} parent=1 // pred_check
      _
    $region103: #{forward.1} parent=1 // pred_check_branch
      %7977 = sbr.rel (0) target = $region105
    $region104: #{forward.1} parent=1 // pred_region
      _
    $region105: #{forward.1} parent=1 // pred_fallthru
      _
    // Predicated region
    $region106: #{forward.1} parent=1 // pred_check
      _
    $region107: #{forward.1} parent=1 // pred_check_branch
      %7979 = sbr.rel (0) target = $region109
    $region108: #{forward.1} parent=1 // pred_region
      %7980 = dma.done [#allocation5], 128
    $region109: #{forward.1} parent=1 // pred_fallthru
      _
    %7981 = vsyncpa [#allocation5], 1

</llo_original>
